<compile_context>
chip_gen: v7x
topology: tpu7x:2x2x1
jax: 0.10.0
libtpu: 0.0.40
codegen_flags: <defaults>
</compile_context>

<pallas_src>
import numpy as np
import jax
import jax.numpy as jnp
from jax import lax
from jax.experimental import pallas as pl
from jax.experimental.pallas import tpu as pltpu


_TAPS_3X3 = tuple((kh, kw) for kh in range(3) for kw in range(3))
_LANE = 128
_SMALL_CIN = 64     # below this, gather taps into a K=9*Cin VMEM scratch


# ------------------------------ small helpers ------------------------------ #

def _round_up(x, m):
    return -(-x // m) * m


def _vmem_limit_bytes():
    """Generation-aware scoped-VMEM budget: ~3/4 of physical, capped at 100MiB
    (v5e/v6e: 128 MiB physical -> 96 MiB; v7x: 64 MiB -> 48 MiB)."""
    cap = None
    try:
        cap = getattr(pltpu.get_tpu_info(), "vmem_capacity_bytes", None)
    except Exception:
        cap = None
    if not cap:
        cap = 64 * 1024 * 1024          # conservative fallback (v7x per-core)
    return int(min(100 * 1024 * 1024, cap * 3 // 4))


def _compiler_params():
    return pltpu.CompilerParams(
        dimension_semantics=("parallel",),
        vmem_limit_bytes=_vmem_limit_bytes())


def _pick_images_per_step(n, m_img, max_rows=4096):
    """Images per grid step.  Prefers >= 4 grid steps (2 per TensorCore on
    dual-TC chips), keeps the M tile 8-row aligned and <= max_rows."""
    divisors = [d for d in range(1, n + 1) if n % d == 0]
    valid = [d for d in divisors if (d * m_img) % 8 == 0] or [n]
    for min_steps in (4, 2, 1):
        cands = [d for d in valid if n // d >= min_steps]
        if cands:
            break
    under = [d for d in cands if d * m_img <= max_rows]
    return max(under) if under else min(cands)


# ------------------------------ Pallas kernels ------------------------------ #

def _make_conv1_kernel(stride, hout, wout, nb, cin, use_scratch):
    """3x3 conv (implicit, stride-phase input) + folded-BN bias + ReLU.

    x_ref: (nb, s, s, Hph, Wph, Cin)  bf16 phase-rearranged padded input
    w_ref: (9*Cin, Cp)                bf16 BN-scale-folded weights (tap-major)
    b_ref: (1, Cp)                    f32 folded BN bias
    o_ref: (nb, hout+2, wout+2, Cp)   bf16, per-image halo-padded output
    """
    m = nb * hout * wout

    def tap_slice(x_ref, kh, kw):
        t = x_ref[:, kh % stride, kw % stride,
                  kh // stride: kh // stride + hout,
                  kw // stride: kw // stride + wout, :]
        return t.reshape(m, cin)

    def kernel(x_ref, w_ref, b_ref, o_ref, *scratch):
        if use_scratch:
            # tiny Cin: stage the 9 taps side by side in VMEM, one matmul.
            p_ref, = scratch
            for t, (kh, kw) in enumerate(_TAPS_3X3):
                p_ref[:, t * cin:(t + 1) * cin] = tap_slice(x_ref, kh, kw)
            acc = jnp.dot(p_ref[...], w_ref[...],
                          preferred_element_type=jnp.float32)
        else:
            # realistic Cin: 9 per-tap matmuls into one f32 accumulator
            # (no (M, 9*Cin) activation copy through the store slot).
            acc = None
            for t, (kh, kw) in enumerate(_TAPS_3X3):
                d = jnp.dot(tap_slice(x_ref, kh, kw),
                            w_ref[t * cin:(t + 1) * cin, :],
                            preferred_element_type=jnp.float32)
                acc = d if acc is None else acc + d

        acc = jnp.maximum(acc + b_ref[...], 0.0)
        cp = o_ref.shape[-1]
        # Halo-padded output: zero the block, then write the interior so the
        # next conv needs no XLA-side pad/re-layout.
        o_ref[...] = jnp.zeros_like(o_ref)
        o_ref[:, 1:1 + hout, 1:1 + wout, :] = (
            acc.reshape(nb, hout, wout, cp).astype(o_ref.dtype))

    return kernel


def _make_conv2_kernel(hout, wout, nb, cp, shortcut_kind, sc_stride, sc_cin):
    """3x3 stride-1 conv over the halo-padded activation + folded-BN bias,
    fused with the shortcut (1x1 conv or identity), residual add and ReLU.

    y_ref:   (nb, hout+2, wout+2, Cp)  bf16 (conv1 output, halo-padded)
    w_ref:   (9*Cp, Cp) bf16, b_ref: (1, Cp) f32
    conv shortcut:  xs_ref (nb, s, s, Hph, Wph, Cin) bf16,
                    wsc_ref (Cin, Cp) bf16, bsc_ref (1, Cp) f32
    identity:       r_ref (M, Cp) f32
    o_ref:   (M, Cp) f32
    """
    m = nb * hout * wout

    def kernel(*refs):
        if shortcut_kind == "conv":
            y_ref, w_ref, b_ref, xs_ref, wsc_ref, bsc_ref, o_ref = refs
        else:
            y_ref, w_ref, b_ref, r_ref, o_ref = refs

        acc = None
        for t, (kh, kw) in enumerate(_TAPS_3X3):
            tap = y_ref[:, kh:kh + hout, kw:kw + wout, :].reshape(m, cp)
            d = jnp.dot(tap, w_ref[t * cp:(t + 1) * cp, :],
                        preferred_element_type=jnp.float32)
            acc = d if acc is None else acc + d
        acc = acc + b_ref[...]

        if shortcut_kind == "conv":
            s = sc_stride
            xs = xs_ref[:, 1 % s, 1 % s,
                        1 // s: 1 // s + hout,
                        1 // s: 1 // s + wout, :].reshape(m, sc_cin)
            acc = acc + jnp.dot(xs, wsc_ref[...],
                                preferred_element_type=jnp.float32)
            acc = acc + bsc_ref[...]
        else:
            acc = acc + r_ref[...].astype(jnp.float32)

        o_ref[...] = jnp.maximum(acc, 0.0).astype(o_ref.dtype)

    return kernel


# ------------------------------ pallas_call wrappers ----------------------- #

def conv1_call(xr, w, b, hout, wout, stride):
    """conv1 + bn1(folded) + ReLU -> halo-padded bf16 activation."""
    n, s, _, hph, wph, cin = xr.shape
    cp = w.shape[-1]
    m_img = hout * wout
    nb = _pick_images_per_step(n, m_img)
    use_scratch = cin < _SMALL_CIN
    scratch = ([pltpu.VMEM((nb * m_img, 9 * cin), jnp.bfloat16)]
               if use_scratch else [])

    return pl.pallas_call(
        _make_conv1_kernel(stride, hout, wout, nb, cin, use_scratch),
        out_shape=jax.ShapeDtypeStruct((n, hout + 2, wout + 2, cp),
                                       jnp.bfloat16),
        grid=(n // nb,),
        in_specs=[
            pl.BlockSpec((nb, s, s, hph, wph, cin),
                         lambda i: (i, 0, 0, 0, 0, 0)),
            pl.BlockSpec((9 * cin, cp), lambda i: (0, 0)),
            pl.BlockSpec((1, cp), lambda i: (0, 0)),
        ],
        out_specs=pl.BlockSpec((nb, hout + 2, wout + 2, cp),
                               lambda i: (i, 0, 0, 0)),
        scratch_shapes=scratch,
        compiler_params=_compiler_params(),
    )(xr, w, b)


def conv2_call(y_pad, w2, b2, hout, wout, *, xr_sc=None, wsc=None, bsc=None,
               sc_stride=1, residual=None):
    """conv2 + bn2(folded) + shortcut(1x1 conv or identity) + add + ReLU."""
    n = y_pad.shape[0]
    cp = w2.shape[-1]
    m_img = hout * wout
    nb = _pick_images_per_step(n, m_img)
    m_tile = nb * m_img

    in_specs = [
        pl.BlockSpec((nb, hout + 2, wout + 2, cp), lambda i: (i, 0, 0, 0)),
        pl.BlockSpec((9 * cp, cp), lambda i: (0, 0)),
        pl.BlockSpec((1, cp), lambda i: (0, 0)),
    ]
    args = [y_pad, w2, b2]
    if xr_sc is not None:
        _, s, _, hph, wph, cin = xr_sc.shape
        in_specs += [
            pl.BlockSpec((nb, s, s, hph, wph, cin),
                         lambda i: (i, 0, 0, 0, 0, 0)),
            pl.BlockSpec((cin, cp), lambda i: (0, 0)),
            pl.BlockSpec((1, cp), lambda i: (0, 0)),
        ]
        args += [xr_sc, wsc, bsc]
        kind, sc_cin = "conv", cin
    else:
        in_specs += [pl.BlockSpec((m_tile, cp), lambda i: (i, 0))]
        args += [residual]
        kind, sc_cin = "identity", cp

    return pl.pallas_call(
        _make_conv2_kernel(hout, wout, nb, cp, kind, sc_stride, sc_cin),
        out_shape=jax.ShapeDtypeStruct((n * m_img, cp), jnp.float32),
        grid=(n // nb,),
        in_specs=in_specs,
        out_specs=pl.BlockSpec((m_tile, cp), lambda i: (i, 0)),
        compiler_params=_compiler_params(),
    )(*args)


# ------------------------------- JAX glue ----------------------------------- #

def _phase_rearrange(x_nhwc, pad, stride):
    """Pad spatially and split into stride phases so every conv tap becomes a
    contiguous static slice in the kernel.  Returns (N, s, s, Hph, Wph, C)
    with phase[ph, pw][i, j] == x_padded[i*stride + ph, j*stride + pw]."""
    n, h, w, c = x_nhwc.shape
    hp, wp = h + 2 * pad, w + 2 * pad
    hph = -(-hp // stride)
    wph = -(-wp // stride)
    xp = jnp.pad(x_nhwc, ((0, 0),
                          (pad, pad + hph * stride - hp),
                          (pad, pad + wph * stride - wp),
                          (0, 0)))
    xr = xp.reshape(n, hph, stride, wph, stride, c)
    return jnp.transpose(xr, (0, 2, 4, 1, 3, 5))


def _prep_weight(w_oihw, bn, cout_pad, cin_pad=None, eps=1e-5):
    """Fold BN scale into conv weights.  Returns tap-major, channel-padded
    ((K*Cin_pad, Cout_pad) bf16, (1, Cout_pad) f32)."""
    scale = bn["gamma"] / jnp.sqrt(bn["var"] + eps)
    bias = bn["beta"] - bn["mean"] * scale
    o, i, kh, kw = w_oihw.shape
    w = w_oihw * scale[:, None, None, None]
    w = jnp.transpose(w, (2, 3, 1, 0))                       # (kh, kw, in, out)
    ip = cin_pad if cin_pad is not None else i
    w = jnp.pad(w, ((0, 0), (0, 0), (0, ip - i), (0, cout_pad - o)))
    b = jnp.pad(bias, (0, cout_pad - o))
    return (w.reshape(kh * kw * ip, cout_pad).astype(jnp.bfloat16),
            b.reshape(1, cout_pad).astype(jnp.float32))


def basic_block_forward(x_nchw, params, stride):
    x = jnp.transpose(x_nchw, (0, 2, 3, 1))                  # NCHW -> NHWC
    n, h, w, in_planes = x.shape
    planes = params["w1"].shape[0]
    cp = _round_up(planes, _LANE)                            # lane-dense Cout
    hout = (h + 2 - 3) // stride + 1
    wout = (w + 2 - 3) // stride + 1

    # conv1 + bn1 + relu -> halo-padded bf16 activation (no re-layout between
    # the two convs).
    w1, b1 = _prep_weight(params["w1"], params["bn1"], cp)
    xr1 = _phase_rearrange(x.astype(jnp.bfloat16), pad=1, stride=stride)
    out1p = conv1_call(xr1, w1, b1, hout, wout, stride)

    # conv2 + bn2 + shortcut (1x1 conv reuses xr1, tap (1,1)) + add + relu.
    w2, b2 = _prep_weight(params["w2"], params["bn2"], cp, cin_pad=cp)
    if "w_sc" in params:
        wsc, bsc = _prep_weight(params["w_sc"], params["bn_sc"], cp)
        out = conv2_call(out1p, w2, b2, hout, wout,
                         xr_sc=xr1, wsc=wsc, bsc=bsc, sc_stride=stride)
    else:
        res = jnp.pad(x, ((0, 0), (0, 0), (0, 0), (0, cp - in_planes)))
        res = res.reshape(n * h * w, cp)
        out = conv2_call(out1p, w2, b2, hout, wout, residual=res)

    out = out.reshape(n, hout, wout, cp)[..., :planes]
    return jnp.transpose(out, (0, 3, 1, 2))


# ------------------------------ parameters ---------------------------------- #

def init_basic_block_params(key, in_planes, planes, stride):
    ks = jax.random.split(key, 12)

    def conv_w(k, cout, cin, ksz):
        fan = cin * ksz * ksz
        return (jax.random.normal(k, (cout, cin, ksz, ksz), jnp.float32)
                / np.sqrt(fan))

    def bn_p(k1, k2, k3, k4, c):
        return dict(
            gamma=jax.random.uniform(k1, (c,), minval=0.5, maxval=1.5),
            beta=0.1 * jax.random.normal(k2, (c,)),
            mean=0.1 * jax.random.normal(k3, (c,)),
            var=jax.random.uniform(k4, (c,), minval=0.5, maxval=1.5),
        )

    params = dict(
        w1=conv_w(ks[0], planes, in_planes, 3),
        bn1=bn_p(ks[1], ks[2], ks[3], ks[4], planes),
        w2=conv_w(ks[5], planes, planes, 3),
        bn2=bn_p(ks[6], ks[7], ks[8], ks[9], planes),
    )
    if stride != 1 or in_planes != planes:
        params["w_sc"] = conv_w(ks[10], planes, in_planes, 1)
        k_sc = jax.random.split(ks[11], 4)
        params["bn_sc"] = bn_p(k_sc[0], k_sc[1], k_sc[2], k_sc[3], planes)
    return params


# ---------------------------- pure-JAX reference ----------------------------- #

def ref_basic_block(x, params, stride, eps=1e-5):
    hi = lax.Precision.HIGHEST

    def conv(x_, w_, s, p):
        return lax.conv_general_dilated(
            x_, w_, (s, s), [(p, p), (p, p)],
            dimension_numbers=("NCHW", "OIHW", "NCHW"), precision=hi)

    def bn(x_, d):
        g, b, m, v = d["gamma"], d["beta"], d["mean"], d["var"]
        sc = (g / jnp.sqrt(v + eps))[None, :, None, None]
        return (x_ - m[None, :, None, None]) * sc + b[None, :, None, None]

    out = jax.nn.relu(bn(conv(x, params["w1"], stride, 1), params["bn1"]))
    out = bn(conv(out, params["w2"], 1, 1), params["bn2"])
    if "w_sc" in params:
        sc = bn(conv(x, params["w_sc"], stride, 0), params["bn_sc"])
    else:
        sc = x
    return jax.nn.relu(out + sc)


if __name__ == "__main__":
    key = jax.random.PRNGKey(0)
    forward = jax.jit(basic_block_forward, static_argnums=2)

    configs = [
        (4, 8, 1),   # channel change -> 1x1-conv shortcut, stride 1
        (4, 8, 2),   # strided block  -> 1x1-conv shortcut, stride 2
        (8, 8, 1),   # identity shortcut
    ]
    for idx, (in_planes, planes, stride) in enumerate(configs):
        kx, kp = jax.random.split(jax.random.fold_in(key, idx))
        x = jax.random.normal(kx, (2, in_planes, 16, 16), jnp.float32)
        params = init_basic_block_params(kp, in_planes, planes, stride)
        out = jax.block_until_ready(forward(x, params, stride))
        ref = ref_basic_block(x, params, stride)
        # bf16 MXU inputs (f32 accumulation) -> slightly looser tolerance.
        np.testing.assert_allclose(np.asarray(out), np.asarray(ref),
                                   rtol=3e-2, atol=3e-2)
    print("KERNEL_OK")
</pallas_src>

<mosaic_0001>
module attributes {stable_mosaic.version = 11 : i64} {
  func.func @kernel(%arg0: i32, %arg1: memref<1x1x1x18x18x4xbf16, #tpu.memory_space<vmem>>, %arg2: memref<36x128xbf16, #tpu.memory_space<vmem>>, %arg3: memref<1x128xf32, #tpu.memory_space<vmem>>, %arg4: memref<1x18x18x128xbf16, #tpu.memory_space<vmem>>, %arg5: memref<256x36xbf16, #tpu.memory_space<vmem>>) attributes {dimension_semantics = [#tpu.dimension_semantics<parallel>], iteration_bounds = array<i64: 2>, scalar_prefetch = 0 : i64, scratch_operands = 1 : i64, tpu.core_type = #tpu.core_type<tc>, window_params = [{transform_indices = @transform_0, window_bounds = array<i64: 1, 1, 1, 18, 18, 4>}, {pipeline_mode = #tpu.pipeline_mode<synchronous>, transform_indices = @transform_1, window_bounds = array<i64: 36, 128>}, {pipeline_mode = #tpu.pipeline_mode<synchronous>, transform_indices = @transform_2, window_bounds = array<i64: 1, 128>}, {transform_indices = @transform_3, window_bounds = array<i64: 1, 18, 18, 128>}]} {
    %c0 = arith.constant 0 : index
    %c0_0 = arith.constant 0 : index
    %c0_1 = arith.constant 0 : index
    %c0_2 = arith.constant 0 : index
    %c0_3 = arith.constant 0 : index
    %c0_4 = arith.constant 0 : index
    %0 = vector.load %arg1[%c0, %c0_0, %c0_1, %c0_2, %c0_3, %c0_4] : memref<1x1x1x18x18x4xbf16, #tpu.memory_space<vmem>>, vector<1x1x1x16x16x4xbf16>
    %1 = vector.shape_cast %0 : vector<1x1x1x16x16x4xbf16> to vector<1x16x16x4xbf16>
    %2 = vector.shape_cast %1 : vector<1x16x16x4xbf16> to vector<256x4xbf16>
    %c0_5 = arith.constant 0 : index
    %c0_6 = arith.constant 0 : index
    %3 = vector.load %arg5[%c0_5, %c0_6] : memref<256x36xbf16, #tpu.memory_space<vmem>>, vector<256x4xbf16>
    tpu.vector_store %arg5[%c0_5, %c0_6], %2 {strides = array<i32>} : memref<256x36xbf16, #tpu.memory_space<vmem>>, vector<256x4xbf16>,
    %c0_7 = arith.constant 0 : index
    %c0_8 = arith.constant 0 : index
    %c0_9 = arith.constant 0 : index
    %c0_10 = arith.constant 0 : index
    %c1 = arith.constant 1 : index
    %c0_11 = arith.constant 0 : index
    %4 = vector.load %arg1[%c0_7, %c0_8, %c0_9, %c0_10, %c1, %c0_11] : memref<1x1x1x18x18x4xbf16, #tpu.memory_space<vmem>>, vector<1x1x1x16x16x4xbf16>
    %5 = vector.shape_cast %4 : vector<1x1x1x16x16x4xbf16> to vector<1x16x16x4xbf16>
    %6 = vector.shape_cast %5 : vector<1x16x16x4xbf16> to vector<256x4xbf16>
    %c0_12 = arith.constant 0 : index
    %c4 = arith.constant 4 : index
    %7 = vector.load %arg5[%c0_12, %c4] : memref<256x36xbf16, #tpu.memory_space<vmem>>, vector<256x4xbf16>
    tpu.vector_store %arg5[%c0_12, %c4], %6 {strides = array<i32>} : memref<256x36xbf16, #tpu.memory_space<vmem>>, vector<256x4xbf16>,
    %c0_13 = arith.constant 0 : index
    %c0_14 = arith.constant 0 : index
    %c0_15 = arith.constant 0 : index
    %c0_16 = arith.constant 0 : index
    %c2 = arith.constant 2 : index
    %c0_17 = arith.constant 0 : index
    %8 = vector.load %arg1[%c0_13, %c0_14, %c0_15, %c0_16, %c2, %c0_17] : memref<1x1x1x18x18x4xbf16, #tpu.memory_space<vmem>>, vector<1x1x1x16x16x4xbf16>
    %9 = vector.shape_cast %8 : vector<1x1x1x16x16x4xbf16> to vector<1x16x16x4xbf16>
    %10 = vector.shape_cast %9 : vector<1x16x16x4xbf16> to vector<256x4xbf16>
    %c0_18 = arith.constant 0 : index
    %c8 = arith.constant 8 : index
    %11 = vector.load %arg5[%c0_18, %c8] : memref<256x36xbf16, #tpu.memory_space<vmem>>, vector<256x4xbf16>
    tpu.vector_store %arg5[%c0_18, %c8], %10 {strides = array<i32>} : memref<256x36xbf16, #tpu.memory_space<vmem>>, vector<256x4xbf16>,
    %c0_19 = arith.constant 0 : index
    %c0_20 = arith.constant 0 : index
    %c0_21 = arith.constant 0 : index
    %c1_22 = arith.constant 1 : index
    %c0_23 = arith.constant 0 : index
    %c0_24 = arith.constant 0 : index
    %12 = vector.load %arg1[%c0_19, %c0_20, %c0_21, %c1_22, %c0_23, %c0_24] : memref<1x1x1x18x18x4xbf16, #tpu.memory_space<vmem>>, vector<1x1x1x16x16x4xbf16>
    %13 = vector.shape_cast %12 : vector<1x1x1x16x16x4xbf16> to vector<1x16x16x4xbf16>
    %14 = vector.shape_cast %13 : vector<1x16x16x4xbf16> to vector<256x4xbf16>
    %c0_25 = arith.constant 0 : index
    %c12 = arith.constant 12 : index
    %15 = vector.load %arg5[%c0_25, %c12] : memref<256x36xbf16, #tpu.memory_space<vmem>>, vector<256x4xbf16>
    tpu.vector_store %arg5[%c0_25, %c12], %14 {strides = array<i32>} : memref<256x36xbf16, #tpu.memory_space<vmem>>, vector<256x4xbf16>,
    %c0_26 = arith.constant 0 : index
    %c0_27 = arith.constant 0 : index
    %c0_28 = arith.constant 0 : index
    %c1_29 = arith.constant 1 : index
    %c1_30 = arith.constant 1 : index
    %c0_31 = arith.constant 0 : index
    %16 = vector.load %arg1[%c0_26, %c0_27, %c0_28, %c1_29, %c1_30, %c0_31] : memref<1x1x1x18x18x4xbf16, #tpu.memory_space<vmem>>, vector<1x1x1x16x16x4xbf16>
    %17 = vector.shape_cast %16 : vector<1x1x1x16x16x4xbf16> to vector<1x16x16x4xbf16>
    %18 = vector.shape_cast %17 : vector<1x16x16x4xbf16> to vector<256x4xbf16>
    %c0_32 = arith.constant 0 : index
    %c16 = arith.constant 16 : index
    %19 = vector.load %arg5[%c0_32, %c16] : memref<256x36xbf16, #tpu.memory_space<vmem>>, vector<256x4xbf16>
    tpu.vector_store %arg5[%c0_32, %c16], %18 {strides = array<i32>} : memref<256x36xbf16, #tpu.memory_space<vmem>>, vector<256x4xbf16>,
    %c0_33 = arith.constant 0 : index
    %c0_34 = arith.constant 0 : index
    %c0_35 = arith.constant 0 : index
    %c1_36 = arith.constant 1 : index
    %c2_37 = arith.constant 2 : index
    %c0_38 = arith.constant 0 : index
    %20 = vector.load %arg1[%c0_33, %c0_34, %c0_35, %c1_36, %c2_37, %c0_38] : memref<1x1x1x18x18x4xbf16, #tpu.memory_space<vmem>>, vector<1x1x1x16x16x4xbf16>
    %21 = vector.shape_cast %20 : vector<1x1x1x16x16x4xbf16> to vector<1x16x16x4xbf16>
    %22 = vector.shape_cast %21 : vector<1x16x16x4xbf16> to vector<256x4xbf16>
    %c0_39 = arith.constant 0 : index
    %c20 = arith.constant 20 : index
    %23 = vector.load %arg5[%c0_39, %c20] : memref<256x36xbf16, #tpu.memory_space<vmem>>, vector<256x4xbf16>
    tpu.vector_store %arg5[%c0_39, %c20], %22 {strides = array<i32>} : memref<256x36xbf16, #tpu.memory_space<vmem>>, vector<256x4xbf16>,
    %c0_40 = arith.constant 0 : index
    %c0_41 = arith.constant 0 : index
    %c0_42 = arith.constant 0 : index
    %c2_43 = arith.constant 2 : index
    %c0_44 = arith.constant 0 : index
    %c0_45 = arith.constant 0 : index
    %24 = vector.load %arg1[%c0_40, %c0_41, %c0_42, %c2_43, %c0_44, %c0_45] : memref<1x1x1x18x18x4xbf16, #tpu.memory_space<vmem>>, vector<1x1x1x16x16x4xbf16>
    %25 = vector.shape_cast %24 : vector<1x1x1x16x16x4xbf16> to vector<1x16x16x4xbf16>
    %26 = vector.shape_cast %25 : vector<1x16x16x4xbf16> to vector<256x4xbf16>
    %c0_46 = arith.constant 0 : index
    %c24 = arith.constant 24 : index
    %27 = vector.load %arg5[%c0_46, %c24] : memref<256x36xbf16, #tpu.memory_space<vmem>>, vector<256x4xbf16>
    tpu.vector_store %arg5[%c0_46, %c24], %26 {strides = array<i32>} : memref<256x36xbf16, #tpu.memory_space<vmem>>, vector<256x4xbf16>,
    %c0_47 = arith.constant 0 : index
    %c0_48 = arith.constant 0 : index
    %c0_49 = arith.constant 0 : index
    %c2_50 = arith.constant 2 : index
    %c1_51 = arith.constant 1 : index
    %c0_52 = arith.constant 0 : index
    %28 = vector.load %arg1[%c0_47, %c0_48, %c0_49, %c2_50, %c1_51, %c0_52] : memref<1x1x1x18x18x4xbf16, #tpu.memory_space<vmem>>, vector<1x1x1x16x16x4xbf16>
    %29 = vector.shape_cast %28 : vector<1x1x1x16x16x4xbf16> to vector<1x16x16x4xbf16>
    %30 = vector.shape_cast %29 : vector<1x16x16x4xbf16> to vector<256x4xbf16>
    %c0_53 = arith.constant 0 : index
    %c28 = arith.constant 28 : index
    %31 = vector.load %arg5[%c0_53, %c28] : memref<256x36xbf16, #tpu.memory_space<vmem>>, vector<256x4xbf16>
    tpu.vector_store %arg5[%c0_53, %c28], %30 {strides = array<i32>} : memref<256x36xbf16, #tpu.memory_space<vmem>>, vector<256x4xbf16>,
    %c0_54 = arith.constant 0 : index
    %c0_55 = arith.constant 0 : index
    %c0_56 = arith.constant 0 : index
    %c2_57 = arith.constant 2 : index
    %c2_58 = arith.constant 2 : index
    %c0_59 = arith.constant 0 : index
    %32 = vector.load %arg1[%c0_54, %c0_55, %c0_56, %c2_57, %c2_58, %c0_59] : memref<1x1x1x18x18x4xbf16, #tpu.memory_space<vmem>>, vector<1x1x1x16x16x4xbf16>
    %33 = vector.shape_cast %32 : vector<1x1x1x16x16x4xbf16> to vector<1x16x16x4xbf16>
    %34 = vector.shape_cast %33 : vector<1x16x16x4xbf16> to vector<256x4xbf16>
    %c0_60 = arith.constant 0 : index
    %c32 = arith.constant 32 : index
    %35 = vector.load %arg5[%c0_60, %c32] : memref<256x36xbf16, #tpu.memory_space<vmem>>, vector<256x4xbf16>
    tpu.vector_store %arg5[%c0_60, %c32], %34 {strides = array<i32>} : memref<256x36xbf16, #tpu.memory_space<vmem>>, vector<256x4xbf16>,
    %c0_61 = arith.constant 0 : index
    %c0_62 = arith.constant 0 : index
    %36 = vector.load %arg5[%c0_61, %c0_62] : memref<256x36xbf16, #tpu.memory_space<vmem>>, vector<256x36xbf16>
    %c0_63 = arith.constant 0 : index
    %c0_64 = arith.constant 0 : index
    %37 = vector.load %arg2[%c0_63, %c0_64] : memref<36x128xbf16, #tpu.memory_space<vmem>>, vector<36x128xbf16>
    %cst = arith.constant dense<0.000000e+00> : vector<256x128xf32>
    %38 = tpu.matmul %36, %37, %cst {dimension_numbers = #tpu.dot_dimension_numbers<[1], [0], [0], [1], [0, 0, 1, 1], [], []>} : vector<256x36xbf16>, vector<36x128xbf16>, vector<256x128xf32> -> vector<256x128xf32>
    %c0_65 = arith.constant 0 : index
    %c0_66 = arith.constant 0 : index
    %39 = vector.load %arg3[%c0_65, %c0_66] : memref<1x128xf32, #tpu.memory_space<vmem>>, vector<1x128xf32>
    %40 = vector.broadcast %39 : vector<1x128xf32> to vector<256x128xf32>
    %41 = arith.addf %38, %40 : vector<256x128xf32>
    %cst_67 = arith.constant 0.000000e+00 : f32
    %42 = vector.broadcast %cst_67 : f32 to vector<256x128xf32>
    %43 = arith.maximumf %41, %42 : vector<256x128xf32>
    %cst_68 = arith.constant 0.000000e+00 : bf16
    %44 = vector.broadcast %cst_68 : bf16 to vector<1x18x18x128xbf16>
    %c0_69 = arith.constant 0 : index
    %c0_70 = arith.constant 0 : index
    %c0_71 = arith.constant 0 : index
    %c0_72 = arith.constant 0 : index
    %45 = vector.load %arg4[%c0_69, %c0_70, %c0_71, %c0_72] : memref<1x18x18x128xbf16, #tpu.memory_space<vmem>>, vector<1x18x18x128xbf16>
    tpu.vector_store %arg4[%c0_69, %c0_70, %c0_71, %c0_72], %44 {strides = array<i32>} : memref<1x18x18x128xbf16, #tpu.memory_space<vmem>>, vector<1x18x18x128xbf16>,
    %46 = vector.shape_cast %43 : vector<256x128xf32> to vector<1x16x16x128xf32>
    %47 = arith.truncf %46 : vector<1x16x16x128xf32> to vector<1x16x16x128xbf16>
    %c0_73 = arith.constant 0 : index
    %c1_74 = arith.constant 1 : index
    %c1_75 = arith.constant 1 : index
    %c0_76 = arith.constant 0 : index
    %48 = vector.load %arg4[%c0_73, %c1_74, %c1_75, %c0_76] : memref<1x18x18x128xbf16, #tpu.memory_space<vmem>>, vector<1x16x16x128xbf16>
    tpu.vector_store %arg4[%c0_73, %c1_74, %c1_75, %c0_76], %47 {strides = array<i32>} : memref<1x18x18x128xbf16, #tpu.memory_space<vmem>>, vector<1x16x16x128xbf16>,
    return
  }
  func.func @transform_0(%arg0: i32) -> (i32, i32, i32, i32, i32, i32) {
    %c0_i32 = arith.constant 0 : i32
    %c0_i32_0 = arith.constant 0 : i32
    %c0_i32_1 = arith.constant 0 : i32
    %c0_i32_2 = arith.constant 0 : i32
    %c0_i32_3 = arith.constant 0 : i32
    %c0_i32_4 = arith.constant 0 : i32
    return %arg0, %c0_i32, %c0_i32_0, %c0_i32_1, %c0_i32_2, %c0_i32_3 : i32, i32, i32, i32, i32, i32
  }
  func.func @transform_1(%arg0: i32) -> (i32, i32) {
    %c0_i32 = arith.constant 0 : i32
    %c0_i32_0 = arith.constant 0 : i32
    %c0_i32_1 = arith.constant 0 : i32
    return %c0_i32, %c0_i32_0 : i32, i32
  }
  func.func @transform_2(%arg0: i32) -> (i32, i32) {
    %c0_i32 = arith.constant 0 : i32
    %c0_i32_0 = arith.constant 0 : i32
    %c0_i32_1 = arith.constant 0 : i32
    return %c0_i32, %c0_i32_0 : i32, i32
  }
  func.func @transform_3(%arg0: i32) -> (i32, i32, i32, i32) {
    %c0_i32 = arith.constant 0 : i32
    %c0_i32_0 = arith.constant 0 : i32
    %c0_i32_1 = arith.constant 0 : i32
    %c0_i32_2 = arith.constant 0 : i32
    return %arg0, %c0_i32, %c0_i32_0, %c0_i32_1 : i32, i32, i32, i32
  }
}

module attributes {stable_mosaic.version = 11 : i64} {
  func.func @kernel(%arg0: i32, %arg1: memref<1x18x18x128xbf16, #tpu.memory_space<vmem>>, %arg2: memref<1152x128xbf16, #tpu.memory_space<vmem>>, %arg3: memref<1x128xf32, #tpu.memory_space<vmem>>, %arg4: memref<1x1x1x18x18x4xbf16, #tpu.memory_space<vmem>>, %arg5: memref<4x128xbf16, #tpu.memory_space<vmem>>, %arg6: memref<1x128xf32, #tpu.memory_space<vmem>>, %arg7: memref<256x128xf32, #tpu.memory_space<vmem>>) attributes {dimension_semantics = [#tpu.dimension_semantics<parallel>], iteration_bounds = array<i64: 2>, scalar_prefetch = 0 : i64, scratch_operands = 0 : i64, tpu.core_type = #tpu.core_type<tc>, window_params = [{transform_indices = @transform_0, window_bounds = array<i64: 1, 18, 18, 128>}, {pipeline_mode = #tpu.pipeline_mode<synchronous>, transform_indices = @transform_1, window_bounds = array<i64: 1152, 128>}, {pipeline_mode = #tpu.pipeline_mode<synchronous>, transform_indices = @transform_2, window_bounds = array<i64: 1, 128>}, {transform_indices = @transform_3, window_bounds = array<i64: 1, 1, 1, 18, 18, 4>}, {pipeline_mode = #tpu.pipeline_mode<synchronous>, transform_indices = @transform_4, window_bounds = array<i64: 4, 128>}, {pipeline_mode = #tpu.pipeline_mode<synchronous>, transform_indices = @transform_5, window_bounds = array<i64: 1, 128>}, {transform_indices = @transform_6, window_bounds = array<i64: 256, 128>}]} {
    %c0 = arith.constant 0 : index
    %c0_0 = arith.constant 0 : index
    %c0_1 = arith.constant 0 : index
    %c0_2 = arith.constant 0 : index
    %0 = vector.load %arg1[%c0, %c0_0, %c0_1, %c0_2] : memref<1x18x18x128xbf16, #tpu.memory_space<vmem>>, vector<1x16x16x128xbf16>
    %1 = vector.shape_cast %0 : vector<1x16x16x128xbf16> to vector<256x128xbf16>
    %c0_3 = arith.constant 0 : index
    %c0_4 = arith.constant 0 : index
    %2 = vector.load %arg2[%c0_3, %c0_4] : memref<1152x128xbf16, #tpu.memory_space<vmem>>, vector<128x128xbf16>
    %cst = arith.constant dense<0.000000e+00> : vector<256x128xf32>
    %3 = tpu.matmul %1, %2, %cst {dimension_numbers = #tpu.dot_dimension_numbers<[1], [0], [0], [1], [0, 0, 1, 1], [], []>} : vector<256x128xbf16>, vector<128x128xbf16>, vector<256x128xf32> -> vector<256x128xf32>
    %c0_5 = arith.constant 0 : index
    %c0_6 = arith.constant 0 : index
    %c1 = arith.constant 1 : index
    %c0_7 = arith.constant 0 : index
    %4 = vector.load %arg1[%c0_5, %c0_6, %c1, %c0_7] : memref<1x18x18x128xbf16, #tpu.memory_space<vmem>>, vector<1x16x16x128xbf16>
    %5 = vector.shape_cast %4 : vector<1x16x16x128xbf16> to vector<256x128xbf16>
    %c128 = arith.constant 128 : index
    %c0_8 = arith.constant 0 : index
    %6 = vector.load %arg2[%c128, %c0_8] : memref<1152x128xbf16, #tpu.memory_space<vmem>>, vector<128x128xbf16>
    %cst_9 = arith.constant dense<0.000000e+00> : vector<256x128xf32>
    %7 = tpu.matmul %5, %6, %cst_9 {dimension_numbers = #tpu.dot_dimension_numbers<[1], [0], [0], [1], [0, 0, 1, 1], [], []>} : vector<256x128xbf16>, vector<128x128xbf16>, vector<256x128xf32> -> vector<256x128xf32>
    %8 = arith.addf %3, %7 : vector<256x128xf32>
    %c0_10 = arith.constant 0 : index
    %c0_11 = arith.constant 0 : index
    %c2 = arith.constant 2 : index
    %c0_12 = arith.constant 0 : index
    %9 = vector.load %arg1[%c0_10, %c0_11, %c2, %c0_12] : memref<1x18x18x128xbf16, #tpu.memory_space<vmem>>, vector<1x16x16x128xbf16>
    %10 = vector.shape_cast %9 : vector<1x16x16x128xbf16> to vector<256x128xbf16>
    %c256 = arith.constant 256 : index
    %c0_13 = arith.constant 0 : index
    %11 = vector.load %arg2[%c256, %c0_13] : memref<1152x128xbf16, #tpu.memory_space<vmem>>, vector<128x128xbf16>
    %cst_14 = arith.constant dense<0.000000e+00> : vector<256x128xf32>
    %12 = tpu.matmul %10, %11, %cst_14 {dimension_numbers = #tpu.dot_dimension_numbers<[1], [0], [0], [1], [0, 0, 1, 1], [], []>} : vector<256x128xbf16>, vector<128x128xbf16>, vector<256x128xf32> -> vector<256x128xf32>
    %13 = arith.addf %8, %12 : vector<256x128xf32>
    %c0_15 = arith.constant 0 : index
    %c1_16 = arith.constant 1 : index
    %c0_17 = arith.constant 0 : index
    %c0_18 = arith.constant 0 : index
    %14 = vector.load %arg1[%c0_15, %c1_16, %c0_17, %c0_18] : memref<1x18x18x128xbf16, #tpu.memory_space<vmem>>, vector<1x16x16x128xbf16>
    %15 = vector.shape_cast %14 : vector<1x16x16x128xbf16> to vector<256x128xbf16>
    %c384 = arith.constant 384 : index
    %c0_19 = arith.constant 0 : index
    %16 = vector.load %arg2[%c384, %c0_19] : memref<1152x128xbf16, #tpu.memory_space<vmem>>, vector<128x128xbf16>
    %cst_20 = arith.constant dense<0.000000e+00> : vector<256x128xf32>
    %17 = tpu.matmul %15, %16, %cst_20 {dimension_numbers = #tpu.dot_dimension_numbers<[1], [0], [0], [1], [0, 0, 1, 1], [], []>} : vector<256x128xbf16>, vector<128x128xbf16>, vector<256x128xf32> -> vector<256x128xf32>
    %18 = arith.addf %13, %17 : vector<256x128xf32>
    %c0_21 = arith.constant 0 : index
    %c1_22 = arith.constant 1 : index
    %c1_23 = arith.constant 1 : index
    %c0_24 = arith.constant 0 : index
    %19 = vector.load %arg1[%c0_21, %c1_22, %c1_23, %c0_24] : memref<1x18x18x128xbf16, #tpu.memory_space<vmem>>, vector<1x16x16x128xbf16>
    %20 = vector.shape_cast %19 : vector<1x16x16x128xbf16> to vector<256x128xbf16>
    %c512 = arith.constant 512 : index
    %c0_25 = arith.constant 0 : index
    %21 = vector.load %arg2[%c512, %c0_25] : memref<1152x128xbf16, #tpu.memory_space<vmem>>, vector<128x128xbf16>
    %cst_26 = arith.constant dense<0.000000e+00> : vector<256x128xf32>
    %22 = tpu.matmul %20, %21, %cst_26 {dimension_numbers = #tpu.dot_dimension_numbers<[1], [0], [0], [1], [0, 0, 1, 1], [], []>} : vector<256x128xbf16>, vector<128x128xbf16>, vector<256x128xf32> -> vector<256x128xf32>
    %23 = arith.addf %18, %22 : vector<256x128xf32>
    %c0_27 = arith.constant 0 : index
    %c1_28 = arith.constant 1 : index
    %c2_29 = arith.constant 2 : index
    %c0_30 = arith.constant 0 : index
    %24 = vector.load %arg1[%c0_27, %c1_28, %c2_29, %c0_30] : memref<1x18x18x128xbf16, #tpu.memory_space<vmem>>, vector<1x16x16x128xbf16>
    %25 = vector.shape_cast %24 : vector<1x16x16x128xbf16> to vector<256x128xbf16>
    %c640 = arith.constant 640 : index
    %c0_31 = arith.constant 0 : index
    %26 = vector.load %arg2[%c640, %c0_31] : memref<1152x128xbf16, #tpu.memory_space<vmem>>, vector<128x128xbf16>
    %cst_32 = arith.constant dense<0.000000e+00> : vector<256x128xf32>
    %27 = tpu.matmul %25, %26, %cst_32 {dimension_numbers = #tpu.dot_dimension_numbers<[1], [0], [0], [1], [0, 0, 1, 1], [], []>} : vector<256x128xbf16>, vector<128x128xbf16>, vector<256x128xf32> -> vector<256x128xf32>
    %28 = arith.addf %23, %27 : vector<256x128xf32>
    %c0_33 = arith.constant 0 : index
    %c2_34 = arith.constant 2 : index
    %c0_35 = arith.constant 0 : index
    %c0_36 = arith.constant 0 : index
    %29 = vector.load %arg1[%c0_33, %c2_34, %c0_35, %c0_36] : memref<1x18x18x128xbf16, #tpu.memory_space<vmem>>, vector<1x16x16x128xbf16>
    %30 = vector.shape_cast %29 : vector<1x16x16x128xbf16> to vector<256x128xbf16>
    %c768 = arith.constant 768 : index
    %c0_37 = arith.constant 0 : index
    %31 = vector.load %arg2[%c768, %c0_37] : memref<1152x128xbf16, #tpu.memory_space<vmem>>, vector<128x128xbf16>
    %cst_38 = arith.constant dense<0.000000e+00> : vector<256x128xf32>
    %32 = tpu.matmul %30, %31, %cst_38 {dimension_numbers = #tpu.dot_dimension_numbers<[1], [0], [0], [1], [0, 0, 1, 1], [], []>} : vector<256x128xbf16>, vector<128x128xbf16>, vector<256x128xf32> -> vector<256x128xf32>
    %33 = arith.addf %28, %32 : vector<256x128xf32>
    %c0_39 = arith.constant 0 : index
    %c2_40 = arith.constant 2 : index
    %c1_41 = arith.constant 1 : index
    %c0_42 = arith.constant 0 : index
    %34 = vector.load %arg1[%c0_39, %c2_40, %c1_41, %c0_42] : memref<1x18x18x128xbf16, #tpu.memory_space<vmem>>, vector<1x16x16x128xbf16>
    %35 = vector.shape_cast %34 : vector<1x16x16x128xbf16> to vector<256x128xbf16>
    %c896 = arith.constant 896 : index
    %c0_43 = arith.constant 0 : index
    %36 = vector.load %arg2[%c896, %c0_43] : memref<1152x128xbf16, #tpu.memory_space<vmem>>, vector<128x128xbf16>
    %cst_44 = arith.constant dense<0.000000e+00> : vector<256x128xf32>
    %37 = tpu.matmul %35, %36, %cst_44 {dimension_numbers = #tpu.dot_dimension_numbers<[1], [0], [0], [1], [0, 0, 1, 1], [], []>} : vector<256x128xbf16>, vector<128x128xbf16>, vector<256x128xf32> -> vector<256x128xf32>
    %38 = arith.addf %33, %37 : vector<256x128xf32>
    %c0_45 = arith.constant 0 : index
    %c2_46 = arith.constant 2 : index
    %c2_47 = arith.constant 2 : index
    %c0_48 = arith.constant 0 : index
    %39 = vector.load %arg1[%c0_45, %c2_46, %c2_47, %c0_48] : memref<1x18x18x128xbf16, #tpu.memory_space<vmem>>, vector<1x16x16x128xbf16>
    %40 = vector.shape_cast %39 : vector<1x16x16x128xbf16> to vector<256x128xbf16>
    %c1024 = arith.constant 1024 : index
    %c0_49 = arith.constant 0 : index
    %41 = vector.load %arg2[%c1024, %c0_49] : memref<1152x128xbf16, #tpu.memory_space<vmem>>, vector<128x128xbf16>
    %cst_50 = arith.constant dense<0.000000e+00> : vector<256x128xf32>
    %42 = tpu.matmul %40, %41, %cst_50 {dimension_numbers = #tpu.dot_dimension_numbers<[1], [0], [0], [1], [0, 0, 1, 1], [], []>} : vector<256x128xbf16>, vector<128x128xbf16>, vector<256x128xf32> -> vector<256x128xf32>
    %43 = arith.addf %38, %42 : vector<256x128xf32>
    %c0_51 = arith.constant 0 : index
    %c0_52 = arith.constant 0 : index
    %44 = vector.load %arg3[%c0_51, %c0_52] : memref<1x128xf32, #tpu.memory_space<vmem>>, vector<1x128xf32>
    %45 = vector.broadcast %44 : vector<1x128xf32> to vector<256x128xf32>
    %46 = arith.addf %43, %45 : vector<256x128xf32>
    %c0_53 = arith.constant 0 : index
    %c0_54 = arith.constant 0 : index
    %c0_55 = arith.constant 0 : index
    %c1_56 = arith.constant 1 : index
    %c1_57 = arith.constant 1 : index
    %c0_58 = arith.constant 0 : index
    %47 = vector.load %arg4[%c0_53, %c0_54, %c0_55, %c1_56, %c1_57, %c0_58] : memref<1x1x1x18x18x4xbf16, #tpu.memory_space<vmem>>, vector<1x1x1x16x16x4xbf16>
    %48 = vector.shape_cast %47 : vector<1x1x1x16x16x4xbf16> to vector<1x16x16x4xbf16>
    %49 = vector.shape_cast %48 : vector<1x16x16x4xbf16> to vector<256x4xbf16>
    %c0_59 = arith.constant 0 : index
    %c0_60 = arith.constant 0 : index
    %50 = vector.load %arg5[%c0_59, %c0_60] : memref<4x128xbf16, #tpu.memory_space<vmem>>, vector<4x128xbf16>
    %cst_61 = arith.constant dense<0.000000e+00> : vector<256x128xf32>
    %51 = tpu.matmul %49, %50, %cst_61 {dimension_numbers = #tpu.dot_dimension_numbers<[1], [0], [0], [1], [0, 0, 1, 1], [], []>} : vector<256x4xbf16>, vector<4x128xbf16>, vector<256x128xf32> -> vector<256x128xf32>
    %52 = arith.addf %46, %51 : vector<256x128xf32>
    %c0_62 = arith.constant 0 : index
    %c0_63 = arith.constant 0 : index
    %53 = vector.load %arg6[%c0_62, %c0_63] : memref<1x128xf32, #tpu.memory_space<vmem>>, vector<1x128xf32>
    %54 = vector.broadcast %53 : vector<1x128xf32> to vector<256x128xf32>
    %55 = arith.addf %52, %54 : vector<256x128xf32>
    %cst_64 = arith.constant 0.000000e+00 : f32
    %56 = vector.broadcast %cst_64 : f32 to vector<256x128xf32>
    %57 = arith.maximumf %55, %56 : vector<256x128xf32>
    %c0_65 = arith.constant 0 : index
    %c0_66 = arith.constant 0 : index
    %58 = vector.load %arg7[%c0_65, %c0_66] : memref<256x128xf32, #tpu.memory_space<vmem>>, vector<256x128xf32>
    tpu.vector_store %arg7[%c0_65, %c0_66], %57 {strides = array<i32>} : memref<256x128xf32, #tpu.memory_space<vmem>>, vector<256x128xf32>,
    return
  }
  func.func @transform_0(%arg0: i32) -> (i32, i32, i32, i32) {
    %c0_i32 = arith.constant 0 : i32
    %c0_i32_0 = arith.constant 0 : i32
    %c0_i32_1 = arith.constant 0 : i32
    %c0_i32_2 = arith.constant 0 : i32
    return %arg0, %c0_i32, %c0_i32_0, %c0_i32_1 : i32, i32, i32, i32
  }
  func.func @transform_1(%arg0: i32) -> (i32, i32) {
    %c0_i32 = arith.constant 0 : i32
    %c0_i32_0 = arith.constant 0 : i32
    %c0_i32_1 = arith.constant 0 : i32
    return %c0_i32, %c0_i32_0 : i32, i32
  }
  func.func @transform_2(%arg0: i32) -> (i32, i32) {
    %c0_i32 = arith.constant 0 : i32
    %c0_i32_0 = arith.constant 0 : i32
    %c0_i32_1 = arith.constant 0 : i32
    return %c0_i32, %c0_i32_0 : i32, i32
  }
  func.func @transform_3(%arg0: i32) -> (i32, i32, i32, i32, i32, i32) {
    %c0_i32 = arith.constant 0 : i32
    %c0_i32_0 = arith.constant 0 : i32
    %c0_i32_1 = arith.constant 0 : i32
    %c0_i32_2 = arith.constant 0 : i32
    %c0_i32_3 = arith.constant 0 : i32
    %c0_i32_4 = arith.constant 0 : i32
    return %arg0, %c0_i32, %c0_i32_0, %c0_i32_1, %c0_i32_2, %c0_i32_3 : i32, i32, i32, i32, i32, i32
  }
  func.func @transform_4(%arg0: i32) -> (i32, i32) {
    %c0_i32 = arith.constant 0 : i32
    %c0_i32_0 = arith.constant 0 : i32
    %c0_i32_1 = arith.constant 0 : i32
    return %c0_i32, %c0_i32_0 : i32, i32
  }
  func.func @transform_5(%arg0: i32) -> (i32, i32) {
    %c0_i32 = arith.constant 0 : i32
    %c0_i32_0 = arith.constant 0 : i32
    %c0_i32_1 = arith.constant 0 : i32
    return %c0_i32, %c0_i32_0 : i32, i32
  }
  func.func @transform_6(%arg0: i32) -> (i32, i32) {
    %c0_i32 = arith.constant 0 : i32
    %c0_i32_0 = arith.constant 0 : i32
    return %arg0, %c0_i32 : i32, i32
  }
}

</mosaic_0001>

<llo_original>
// kernel: basic_block_forward.2
$region0: #{basic_block_forward.2}
  #allocation0 [shape = 'u32[]', space=smem, size = 0x4, offset = 0x4, fixed_abs, tag = 'smem constant byte address 0x4 - core index']
  #allocation1 [shape = 'u32[144,128]{1,0:T(1,128)}', space=vmem, size = 0x12000, scoped, tag = 'internal scratch']
  #allocation2 [shape = 'bf16[256,36]{1,0:T(16,128)(2,1)}', space=vmem, size = 0x10000, scoped, tag = 'scratch operand']
  %s0 = inlined_call_operand.vmem [shape: bf16[2,1,1,18,18,4], index: 0, kind: input, shape index: {}]
  %s1 = inlined_call_operand.vmem [shape: bf16[36,128], index: 1, kind: input, shape index: {}]
  %s2 = inlined_call_operand.vmem [shape: f32[1,128], index: 2, kind: input, shape index: {}]
  %s3 = inlined_call_operand.vmem [shape: bf16[2,18,18,128], index: 3, kind: output, shape index: {}]
  %s4 = sld [smem:[#allocation0]]
  $region45: #{basic_block_forward.2} parent=0
    _
  %s6 = ssub.s32 1, %s4
  %s7 = scalar_select 0, %s6, %s4
  loop: start=0, step=1, limit=4
  $region2: #{basic_block_forward.2} parent=0 // loop_pre_header
    _
  $region3: #{basic_block_forward.2} parent=0 // loop_header
    %s9 = sphi 0, %s13
    %p10 = scmp.ge.s32.totalorder %s9, 4
    %s19 = sphi 0, %s21
    %s22 = sphi 0, %s19
    %s23 = sphi 0, %s22
    %s39 = sphi 0, %s23
    %s43 = sphi 0, %s43
    %s45 = sphi 0, %s43
    %s46 = sphi 0, %s45
    %s60 = sphi 0, %s46
    %s64 = sphi 0, %s64
    %s66 = sphi 0, %s64
    %s67 = sphi 0, %s66
    %s81 = sphi 0, %s67
    %s87 = sphi 0, %s89
    %s90 = sphi 0, %s87
    %s91 = sphi 0, %s90
    %s107 = sphi 0, %s91
  $region4: #{basic_block_forward.2} parent=0 // loop_header_branch
    %12 = sbr.rel (%p10) target = $region8
  $region5: #{basic_block_forward.2} parent=0 // loop_body
    %s14 = ssub.s32 %s9, 1
    %s15 = ssub.s32 %s9, 2
    %s16 = sadd.s32 %s9, 1
    %s17 = ssub.s32 %s9, %s16
    %p18 = scmp.eq.s32.totalorder %s17, 0
    %s20 = sadd.s32 %s19, 1
    %s21 = scalar_select %p18, %s19, %s20
    %p24 = pneg %p18
    %p25 = scmp.eq.s32.totalorder %s9, 1
    %p26 = por %p24, %p25
    %p27 = scmp.ne.s32.totalorder %s19, %s22
    %p28 = scmp.eq.s32.totalorder %s9, 0
    %p29 = por %p27, %p28
    %p30 = scmp.ne.s32.totalorder %s19, %s22
    %p31 = scmp.eq.s32.totalorder %s14, 1
    %p32 = por %p30, %p31
    %p33 = scmp.ne.s32.totalorder %s22, %s23
    %p34 = scmp.eq.s32.totalorder %s14, 0
    %p35 = por %p33, %p34
    %p36 = scmp.ne.s32.totalorder %s22, %s23
    %p37 = scmp.eq.s32.totalorder %s15, 1
    %p38 = por %p36, %p37
    %p40 = scmp.ne.s32.totalorder %s23, %s39
    %p41 = scmp.eq.s32.totalorder %s15, 0
    %p42 = por %p40, %p41
    %s44 = sadd.s32 %s43, 1
    %p47 = scmp.eq.s32.totalorder %s9, 1
    %p48 = scmp.ne.s32.totalorder %s43, %s45
    %p49 = scmp.eq.s32.totalorder %s9, 0
    %p50 = por %p48, %p49
    %p51 = scmp.ne.s32.totalorder %s43, %s45
    %p52 = scmp.eq.s32.totalorder %s14, 1
    %p53 = por %p51, %p52
    %p54 = scmp.ne.s32.totalorder %s45, %s46
    %p55 = scmp.eq.s32.totalorder %s14, 0
    %p56 = por %p54, %p55
    %p57 = scmp.ne.s32.totalorder %s45, %s46
    %p58 = scmp.eq.s32.totalorder %s15, 1
    %p59 = por %p57, %p58
    %p61 = scmp.ne.s32.totalorder %s46, %s60
    %p62 = scmp.eq.s32.totalorder %s15, 0
    %p63 = por %p61, %p62
    %s65 = sadd.s32 %s64, 1
    %p68 = scmp.eq.s32.totalorder %s9, 1
    %p69 = scmp.ne.s32.totalorder %s64, %s66
    %p70 = scmp.eq.s32.totalorder %s9, 0
    %p71 = por %p69, %p70
    %p72 = scmp.ne.s32.totalorder %s64, %s66
    %p73 = scmp.eq.s32.totalorder %s14, 1
    %p74 = por %p72, %p73
    %p75 = scmp.ne.s32.totalorder %s66, %s67
    %p76 = scmp.eq.s32.totalorder %s14, 0
    %p77 = por %p75, %p76
    %p78 = scmp.ne.s32.totalorder %s66, %s67
    %p79 = scmp.eq.s32.totalorder %s15, 1
    %p80 = por %p78, %p79
    %p82 = scmp.ne.s32.totalorder %s67, %s81
    %p83 = scmp.eq.s32.totalorder %s15, 0
    %p84 = por %p82, %p83
    %s85 = ssub.s32 %s9, %s16
    %p86 = scmp.eq.s32.totalorder %s85, 0
    %s88 = sadd.s32 %s87, 1
    %s89 = scalar_select %p86, %s87, %s88
    %p92 = pneg %p86
    %p93 = scmp.eq.s32.totalorder %s9, 1
    %p94 = por %p92, %p93
    %p95 = scmp.ne.s32.totalorder %s87, %s90
    %p96 = scmp.eq.s32.totalorder %s9, 0
    %p97 = por %p95, %p96
    %p98 = scmp.ne.s32.totalorder %s87, %s90
    %p99 = scmp.eq.s32.totalorder %s14, 1
    %p100 = por %p98, %p99
    %p101 = scmp.ne.s32.totalorder %s90, %s91
    %p102 = scmp.eq.s32.totalorder %s14, 0
    %p103 = por %p101, %p102
    %p104 = scmp.ne.s32.totalorder %s90, %s91
    %p105 = scmp.eq.s32.totalorder %s15, 1
    %p106 = por %p104, %p105
    %p108 = scmp.ne.s32.totalorder %s91, %s107
    %p109 = scmp.eq.s32.totalorder %s15, 0
    %p110 = por %p108, %p109
    %p111 = scmp.le.s32.totalorder 1, %s9
    %p112 = scmp.lt.s32.totalorder %s9, 3
    %p113 = pnand %p111, %p112
    %p114 = pneg %p113
    // Predicated region
    $region9: #{basic_block_forward.2} parent=5 // pred_check
      _
    $region10: #{basic_block_forward.2} parent=5 // pred_check_branch
      %116 = sbr.rel (%p113) target = $region12
    $region11: #{basic_block_forward.2} parent=5 // pred_region
      %s117 = ssub.s32 %s9, 1
      // Predicated region
      $region13: #{basic_block_forward.2} parent=11 // pred_check
        %p118 = pneg %p56
      $region14: #{basic_block_forward.2} parent=11 // pred_check_branch
        %120 = sbr.rel (%p118) target = $region16
      $region15: #{basic_block_forward.2} parent=11 // pred_region
        _
      $region16: #{basic_block_forward.2} parent=11 // pred_fallthru
        _
      // Predicated region
      $region17: #{basic_block_forward.2} parent=11 // pred_check
        %p121 = pneg %p77
      $region18: #{basic_block_forward.2} parent=11 // pred_check_branch
        %123 = sbr.rel (%p121) target = $region20
      $region19: #{basic_block_forward.2} parent=11 // pred_region
        _
      $region20: #{basic_block_forward.2} parent=11 // pred_fallthru
        _
    $region12: #{basic_block_forward.2} parent=5 // pred_fallthru
      _
    %p124 = scmp.lt.s32.totalorder %s9, 2
    // Predicated region
    $region21: #{basic_block_forward.2} parent=5 // pred_check
      %p125 = pneg %p124
    $region22: #{basic_block_forward.2} parent=5 // pred_check_branch
      %127 = sbr.rel (%p125) target = $region24
    $region23: #{basic_block_forward.2} parent=5 // pred_region
      // Predicated region
      $region25: #{basic_block_forward.2} parent=23 // pred_check
        %p128 = pneg %p29
      $region26: #{basic_block_forward.2} parent=23 // pred_check_branch
        %130 = sbr.rel (%p128) target = $region28
      $region27: #{basic_block_forward.2} parent=23 // pred_region
        %p131 = scmp.lt.s32.totalorder %s9, 1
        %s132 = scalar_select %p131, %s9, 1
        %s133 = smul.addr %s132, 54
        %s134 = smul.addr %s133, 4
        %s135 = scalar_lea.vmem %s0, %s134
      $region28: #{basic_block_forward.2} parent=23 // pred_fallthru
        _
    $region24: #{basic_block_forward.2} parent=5 // pred_fallthru
      _
    %p136 = scmp.le.s32.totalorder 1, %s9
    %p137 = scmp.lt.s32.totalorder %s9, 3
    %p138 = pnand %p136, %p137
    %p139 = pneg %p138
    // Predicated region
    $region29: #{basic_block_forward.2} parent=5 // pred_check
      _
    $region30: #{basic_block_forward.2} parent=5 // pred_check_branch
      %141 = sbr.rel (%p138) target = $region32
    $region31: #{basic_block_forward.2} parent=5 // pred_region
      %s142 = ssub.s32 %s9, 1
      %p143 = scmp.lt.s32.totalorder %s14, 1
      %s144 = scalar_select %p143, %s14, 1
      %s145 = smul.addr %s144, 54
      %s146 = smul.addr %s145, 4
      %s147 = scalar_lea.vmem %s0, %s146
      %p148 = pneg %p35
      %p149 = pneg %p32
      %p150 = pneg %p56
      %p151 = pneg %p53
      %p152 = pneg %p77
      %p153 = pneg %p74
      %p154 = pneg %p103
      %p155 = pneg %p100
      %p156 = scmp.lt.s32.totalorder %s14, 1
      %s157 = scalar_select %p156, %s14, 1
      %s158 = smul.addr %s157, 54
      %s159 = smul.addr %s158, 4
      %s160 = scalar_lea.vmem %s3, %s159
      %p161 = scmp.lt.s32.totalorder %s14, 1
      %s162 = scalar_select %p161, %s14, 1
      %s163 = smul.addr %s162, 54
      %s164 = smul.addr %s163, 4
      %s165 = scalar_lea.vmem %s0, %s164
      %p166 = scmp.lt.s32.totalorder %s14, 1
      %s167 = scalar_select %p166, %s14, 1
      %s168 = smul.addr %s167, 54
      %s169 = smul.addr %s168, 4
      %s170 = scalar_lea.vmem %s3, %s169
      %v172 = vld [vmem:[%s165] sm:$0xf]
      %v173 = vld [vmem:[%s165 + $0x4] sm:$0xf]
      %v174 = vld [vmem:[%s165 + $0xc] sm:$0xf]
      %v175 = vld [vmem:[%s165 + $0x10] sm:$0xf]
      %v176 = vld [vmem:[%s165 + $0x18] sm:$0xf]
      %v177 = vld [vmem:[%s165 + $0x1c] sm:$0xf]
      %v178 = vld [vmem:[%s165 + $0x24] sm:$0xf]
      %v179 = vld [vmem:[%s165 + $0x28] sm:$0xf]
      %v180 = vld [vmem:[%s165 + $0x30] sm:$0xf]
      %v181 = vld [vmem:[%s165 + $0x34] sm:$0xf]
      %v182 = vld [vmem:[%s165 + $0x3c] sm:$0xf]
      %v183 = vld [vmem:[%s165 + $0x40] sm:$0xf]
      %v184 = vld [vmem:[%s165 + $0x48] sm:$0xf]
      %v185 = vld [vmem:[%s165 + $0x4c] sm:$0xf]
      %v186 = vld [vmem:[%s165 + $0x54] sm:$0xf]
      %v187 = vld [vmem:[%s165 + $0x58] sm:$0xf]
      %v188 = vld [vmem:[%s165 + $0x60] sm:$0xf]
      %v189 = vld [vmem:[%s165 + $0x64] sm:$0xf]
      %v190 = vld [vmem:[%s165 + $0x6c] sm:$0xf]
      %v191 = vld [vmem:[%s165 + $0x70] sm:$0xf]
      %v192 = vld [vmem:[%s165 + $0x78] sm:$0xf]
      %v193 = vld [vmem:[%s165 + $0x7c] sm:$0xf]
      %v194 = vld [vmem:[%s165 + $0x84] sm:$0xf]
      %v195 = vld [vmem:[%s165 + $0x88] sm:$0xf]
      %v196 = vld [vmem:[%s165 + $0x90] sm:$0xf]
      %v197 = vld [vmem:[%s165 + $0x94] sm:$0xf]
      %v198 = vld [vmem:[%s165 + $0x9c] sm:$0xf]
      %v199 = vld [vmem:[%s165 + $0xa0] sm:$0xf]
      %v200 = vld [vmem:[%s165 + $0xa8] sm:$0xf]
      %v201 = vld [vmem:[%s165 + $0xac] sm:$0xf]
      %v202 = vld [vmem:[%s165 + $0xb4] sm:$0xf]
      %v203 = vld [vmem:[%s165 + $0xb8] sm:$0xf]
      %v236 = vunpack.c.l.b16 %v172
      %v237 = vunpack.c.l.b16 %v173
      %v238 = vunpack.c.l.b16 %v174
      %v239 = vunpack.c.l.b16 %v175
      %v240 = vunpack.c.l.b16 %v176
      %v241 = vunpack.c.l.b16 %v177
      %v242 = vunpack.c.l.b16 %v178
      %v243 = vunpack.c.l.b16 %v179
      %v244 = vunpack.c.l.b16 %v180
      %v245 = vunpack.c.l.b16 %v181
      %v246 = vunpack.c.l.b16 %v182
      %v247 = vunpack.c.l.b16 %v183
      %v248 = vunpack.c.l.b16 %v184
      %v249 = vunpack.c.l.b16 %v185
      %v250 = vunpack.c.l.b16 %v186
      %v251 = vunpack.c.l.b16 %v187
      %v252 = vunpack.c.l.b16 %v188
      %v253 = vunpack.c.l.b16 %v189
      %v254 = vunpack.c.l.b16 %v190
      %v255 = vunpack.c.l.b16 %v191
      %v256 = vunpack.c.l.b16 %v192
      %v257 = vunpack.c.l.b16 %v193
      %v258 = vunpack.c.l.b16 %v194
      %v259 = vunpack.c.l.b16 %v195
      %v260 = vunpack.c.l.b16 %v196
      %v261 = vunpack.c.l.b16 %v197
      %v262 = vunpack.c.l.b16 %v198
      %v263 = vunpack.c.l.b16 %v199
      %v264 = vunpack.c.l.b16 %v200
      %v265 = vunpack.c.l.b16 %v201
      %v266 = vunpack.c.l.b16 %v202
      %v267 = vunpack.c.l.b16 %v203
      %v268 = vpack.c.b16 %v237, %v236
      %v269 = vpack.c.b16 %v239, %v238
      %v270 = vpack.c.b16 %v241, %v240
      %v271 = vpack.c.b16 %v243, %v242
      %v272 = vpack.c.b16 %v245, %v244
      %v273 = vpack.c.b16 %v247, %v246
      %v274 = vpack.c.b16 %v249, %v248
      %v275 = vpack.c.b16 %v251, %v250
      %v276 = vpack.c.b16 %v253, %v252
      %v277 = vpack.c.b16 %v255, %v254
      %v278 = vpack.c.b16 %v257, %v256
      %v279 = vpack.c.b16 %v259, %v258
      %v280 = vpack.c.b16 %v261, %v260
      %v281 = vpack.c.b16 %v263, %v262
      %v282 = vpack.c.b16 %v265, %v264
      %v283 = vpack.c.b16 %v267, %v266
      %vm300 = vcmask 31744
      %301 = vst.msk [vmem:[#allocation2] sm:$0xff] %vm300, %v268
      %302 = vst.msk [vmem:[#allocation2 + $0x8] sm:$0xff] %vm300, %v269
      %303 = vst.msk [vmem:[#allocation2 + $0x10] sm:$0xff] %vm300, %v270
      %304 = vst.msk [vmem:[#allocation2 + $0x18] sm:$0xff] %vm300, %v271
      %305 = vst.msk [vmem:[#allocation2 + $0x20] sm:$0xff] %vm300, %v272
      %306 = vst.msk [vmem:[#allocation2 + $0x28] sm:$0xff] %vm300, %v273
      %307 = vst.msk [vmem:[#allocation2 + $0x30] sm:$0xff] %vm300, %v274
      %308 = vst.msk [vmem:[#allocation2 + $0x38] sm:$0xff] %vm300, %v275
      %309 = vst.msk [vmem:[#allocation2 + $0x40] sm:$0xff] %vm300, %v276
      %310 = vst.msk [vmem:[#allocation2 + $0x48] sm:$0xff] %vm300, %v277
      %311 = vst.msk [vmem:[#allocation2 + $0x50] sm:$0xff] %vm300, %v278
      %312 = vst.msk [vmem:[#allocation2 + $0x58] sm:$0xff] %vm300, %v279
      %313 = vst.msk [vmem:[#allocation2 + $0x60] sm:$0xff] %vm300, %v280
      %314 = vst.msk [vmem:[#allocation2 + $0x68] sm:$0xff] %vm300, %v281
      %315 = vst.msk [vmem:[#allocation2 + $0x70] sm:$0xff] %vm300, %v282
      %316 = vst.msk [vmem:[#allocation2 + $0x78] sm:$0xff] %vm300, %v283
      %v317 = vld [vmem:[%s165] sm:$0xf]
      %v318 = vld [vmem:[%s165 + $0x4] sm:$0xf]
      %v319 = vld [vmem:[%s165 + $0x8] sm:$0x1]
      %v320 = vld [vmem:[%s165 + $0xc] sm:$0xf]
      %v321 = vld [vmem:[%s165 + $0x10] sm:$0xf]
      %v322 = vld [vmem:[%s165 + $0x14] sm:$0x1]
      %v323 = vld [vmem:[%s165 + $0x18] sm:$0xf]
      %v324 = vld [vmem:[%s165 + $0x1c] sm:$0xf]
      %v325 = vld [vmem:[%s165 + $0x20] sm:$0x1]
      %v326 = vld [vmem:[%s165 + $0x24] sm:$0xf]
      %v327 = vld [vmem:[%s165 + $0x28] sm:$0xf]
      %v328 = vld [vmem:[%s165 + $0x2c] sm:$0x1]
      %v329 = vld [vmem:[%s165 + $0x30] sm:$0xf]
      %v330 = vld [vmem:[%s165 + $0x34] sm:$0xf]
      %v331 = vld [vmem:[%s165 + $0x38] sm:$0x1]
      %v332 = vld [vmem:[%s165 + $0x3c] sm:$0xf]
      %v333 = vld [vmem:[%s165 + $0x40] sm:$0xf]
      %v334 = vld [vmem:[%s165 + $0x44] sm:$0x1]
      %v335 = vld [vmem:[%s165 + $0x48] sm:$0xf]
      %v336 = vld [vmem:[%s165 + $0x4c] sm:$0xf]
      %v337 = vld [vmem:[%s165 + $0x50] sm:$0x1]
      %v338 = vld [vmem:[%s165 + $0x54] sm:$0xf]
      %v339 = vld [vmem:[%s165 + $0x58] sm:$0xf]
      %v340 = vld [vmem:[%s165 + $0x5c] sm:$0x1]
      %v341 = vld [vmem:[%s165 + $0x60] sm:$0xf]
      %v342 = vld [vmem:[%s165 + $0x64] sm:$0xf]
      %v343 = vld [vmem:[%s165 + $0x68] sm:$0x1]
      %v344 = vld [vmem:[%s165 + $0x6c] sm:$0xf]
      %v345 = vld [vmem:[%s165 + $0x70] sm:$0xf]
      %v346 = vld [vmem:[%s165 + $0x74] sm:$0x1]
      %v347 = vld [vmem:[%s165 + $0x78] sm:$0xf]
      %v348 = vld [vmem:[%s165 + $0x7c] sm:$0xf]
      %v349 = vld [vmem:[%s165 + $0x80] sm:$0x1]
      %v350 = vld [vmem:[%s165 + $0x84] sm:$0xf]
      %v351 = vld [vmem:[%s165 + $0x88] sm:$0xf]
      %v352 = vld [vmem:[%s165 + $0x8c] sm:$0x1]
      %v353 = vld [vmem:[%s165 + $0x90] sm:$0xf]
      %v354 = vld [vmem:[%s165 + $0x94] sm:$0xf]
      %v355 = vld [vmem:[%s165 + $0x98] sm:$0x1]
      %v356 = vld [vmem:[%s165 + $0x9c] sm:$0xf]
      %v357 = vld [vmem:[%s165 + $0xa0] sm:$0xf]
      %v358 = vld [vmem:[%s165 + $0xa4] sm:$0x1]
      %v359 = vld [vmem:[%s165 + $0xa8] sm:$0xf]
      %v360 = vld [vmem:[%s165 + $0xac] sm:$0xf]
      %v361 = vld [vmem:[%s165 + $0xb0] sm:$0x1]
      %v362 = vld [vmem:[%s165 + $0xb4] sm:$0xf]
      %v363 = vld [vmem:[%s165 + $0xb8] sm:$0xf]
      %v364 = vld [vmem:[%s165 + $0xbc] sm:$0x1]
      %vm365 = vsmask.f32 3328
      %vm366 = vsmask.f32 7440
      %vm367 = vmor %vm365, %vm366
      %v369 = vshrl.u32 %v317, 16
      %v371 = vrot.slane %v369, 4
      %v372 = vshll.u32 %v317, 16
      %v374 = vrot.slane %v372, 5
      %v375 = vor.u32 %v371, %v374
      %v376 = vrot.slane %v375, 4
      %v378 = vshll.u32 %v318, 16
      %v380 = vrot.slane %v378, 5
      %v381 = vsel %vm367, %v376, %v380
      %v382 = vshrl.u32 %v318, 16
      %v384 = vrot.slane %v382, 4
      %v385 = vor.u32 %v384, %v380
      %v386 = vrot.slane %v385, 4
      %v388 = vshll.u32 %v319, 16
      %v390 = vrot.slane %v388, 5
      %v391 = vsel %vm367, %v386, %v390
      %v393 = vshrl.u32 %v320, 16
      %v395 = vrot.slane %v393, 4
      %v396 = vshll.u32 %v320, 16
      %v398 = vrot.slane %v396, 5
      %v399 = vor.u32 %v395, %v398
      %v400 = vrot.slane %v399, 4
      %v402 = vshll.u32 %v321, 16
      %v404 = vrot.slane %v402, 5
      %v405 = vsel %vm367, %v400, %v404
      %v406 = vshrl.u32 %v321, 16
      %v408 = vrot.slane %v406, 4
      %v409 = vor.u32 %v408, %v404
      %v410 = vrot.slane %v409, 4
      %v412 = vshll.u32 %v322, 16
      %v414 = vrot.slane %v412, 5
      %v415 = vsel %vm367, %v410, %v414
      %v417 = vshrl.u32 %v323, 16
      %v419 = vrot.slane %v417, 4
      %v420 = vshll.u32 %v323, 16
      %v422 = vrot.slane %v420, 5
      %v423 = vor.u32 %v419, %v422
      %v424 = vrot.slane %v423, 4
      %v426 = vshll.u32 %v324, 16
      %v428 = vrot.slane %v426, 5
      %v429 = vsel %vm367, %v424, %v428
      %v430 = vshrl.u32 %v324, 16
      %v432 = vrot.slane %v430, 4
      %v433 = vor.u32 %v432, %v428
      %v434 = vrot.slane %v433, 4
      %v436 = vshll.u32 %v325, 16
      %v438 = vrot.slane %v436, 5
      %v439 = vsel %vm367, %v434, %v438
      %v441 = vshrl.u32 %v326, 16
      %v443 = vrot.slane %v441, 4
      %v444 = vshll.u32 %v326, 16
      %v446 = vrot.slane %v444, 5
      %v447 = vor.u32 %v443, %v446
      %v448 = vrot.slane %v447, 4
      %v450 = vshll.u32 %v327, 16
      %v452 = vrot.slane %v450, 5
      %v453 = vsel %vm367, %v448, %v452
      %v454 = vshrl.u32 %v327, 16
      %v456 = vrot.slane %v454, 4
      %v457 = vor.u32 %v456, %v452
      %v458 = vrot.slane %v457, 4
      %v460 = vshll.u32 %v328, 16
      %v462 = vrot.slane %v460, 5
      %v463 = vsel %vm367, %v458, %v462
      %v465 = vshrl.u32 %v329, 16
      %v467 = vrot.slane %v465, 4
      %v468 = vshll.u32 %v329, 16
      %v470 = vrot.slane %v468, 5
      %v471 = vor.u32 %v467, %v470
      %v472 = vrot.slane %v471, 4
      %v474 = vshll.u32 %v330, 16
      %v476 = vrot.slane %v474, 5
      %v477 = vsel %vm367, %v472, %v476
      %v478 = vshrl.u32 %v330, 16
      %v480 = vrot.slane %v478, 4
      %v481 = vor.u32 %v480, %v476
      %v482 = vrot.slane %v481, 4
      %v484 = vshll.u32 %v331, 16
      %v486 = vrot.slane %v484, 5
      %v487 = vsel %vm367, %v482, %v486
      %v489 = vshrl.u32 %v332, 16
      %v491 = vrot.slane %v489, 4
      %v492 = vshll.u32 %v332, 16
      %v494 = vrot.slane %v492, 5
      %v495 = vor.u32 %v491, %v494
      %v496 = vrot.slane %v495, 4
      %v498 = vshll.u32 %v333, 16
      %v500 = vrot.slane %v498, 5
      %v501 = vsel %vm367, %v496, %v500
      %v502 = vshrl.u32 %v333, 16
      %v504 = vrot.slane %v502, 4
      %v505 = vor.u32 %v504, %v500
      %v506 = vrot.slane %v505, 4
      %v508 = vshll.u32 %v334, 16
      %v510 = vrot.slane %v508, 5
      %v511 = vsel %vm367, %v506, %v510
      %v513 = vshrl.u32 %v335, 16
      %v515 = vrot.slane %v513, 4
      %v516 = vshll.u32 %v335, 16
      %v518 = vrot.slane %v516, 5
      %v519 = vor.u32 %v515, %v518
      %v520 = vrot.slane %v519, 4
      %v522 = vshll.u32 %v336, 16
      %v524 = vrot.slane %v522, 5
      %v525 = vsel %vm367, %v520, %v524
      %v526 = vshrl.u32 %v336, 16
      %v528 = vrot.slane %v526, 4
      %v529 = vor.u32 %v528, %v524
      %v530 = vrot.slane %v529, 4
      %v532 = vshll.u32 %v337, 16
      %v534 = vrot.slane %v532, 5
      %v535 = vsel %vm367, %v530, %v534
      %v537 = vshrl.u32 %v338, 16
      %v539 = vrot.slane %v537, 4
      %v540 = vshll.u32 %v338, 16
      %v542 = vrot.slane %v540, 5
      %v543 = vor.u32 %v539, %v542
      %v544 = vrot.slane %v543, 4
      %v546 = vshll.u32 %v339, 16
      %v548 = vrot.slane %v546, 5
      %v549 = vsel %vm367, %v544, %v548
      %v550 = vshrl.u32 %v339, 16
      %v552 = vrot.slane %v550, 4
      %v553 = vor.u32 %v552, %v548
      %v554 = vrot.slane %v553, 4
      %v556 = vshll.u32 %v340, 16
      %v558 = vrot.slane %v556, 5
      %v559 = vsel %vm367, %v554, %v558
      %v561 = vshrl.u32 %v341, 16
      %v563 = vrot.slane %v561, 4
      %v564 = vshll.u32 %v341, 16
      %v566 = vrot.slane %v564, 5
      %v567 = vor.u32 %v563, %v566
      %v568 = vrot.slane %v567, 4
      %v570 = vshll.u32 %v342, 16
      %v572 = vrot.slane %v570, 5
      %v573 = vsel %vm367, %v568, %v572
      %v574 = vshrl.u32 %v342, 16
      %v576 = vrot.slane %v574, 4
      %v577 = vor.u32 %v576, %v572
      %v578 = vrot.slane %v577, 4
      %v580 = vshll.u32 %v343, 16
      %v582 = vrot.slane %v580, 5
      %v583 = vsel %vm367, %v578, %v582
      %v585 = vshrl.u32 %v344, 16
      %v587 = vrot.slane %v585, 4
      %v588 = vshll.u32 %v344, 16
      %v590 = vrot.slane %v588, 5
      %v591 = vor.u32 %v587, %v590
      %v592 = vrot.slane %v591, 4
      %v594 = vshll.u32 %v345, 16
      %v596 = vrot.slane %v594, 5
      %v597 = vsel %vm367, %v592, %v596
      %v598 = vshrl.u32 %v345, 16
      %v600 = vrot.slane %v598, 4
      %v601 = vor.u32 %v600, %v596
      %v602 = vrot.slane %v601, 4
      %v604 = vshll.u32 %v346, 16
      %v606 = vrot.slane %v604, 5
      %v607 = vsel %vm367, %v602, %v606
      %v609 = vshrl.u32 %v347, 16
      %v611 = vrot.slane %v609, 4
      %v612 = vshll.u32 %v347, 16
      %v614 = vrot.slane %v612, 5
      %v615 = vor.u32 %v611, %v614
      %v616 = vrot.slane %v615, 4
      %v618 = vshll.u32 %v348, 16
      %v620 = vrot.slane %v618, 5
      %v621 = vsel %vm367, %v616, %v620
      %v622 = vshrl.u32 %v348, 16
      %v624 = vrot.slane %v622, 4
      %v625 = vor.u32 %v624, %v620
      %v626 = vrot.slane %v625, 4
      %v628 = vshll.u32 %v349, 16
      %v630 = vrot.slane %v628, 5
      %v631 = vsel %vm367, %v626, %v630
      %v633 = vshrl.u32 %v350, 16
      %v635 = vrot.slane %v633, 4
      %v636 = vshll.u32 %v350, 16
      %v638 = vrot.slane %v636, 5
      %v639 = vor.u32 %v635, %v638
      %v640 = vrot.slane %v639, 4
      %v642 = vshll.u32 %v351, 16
      %v644 = vrot.slane %v642, 5
      %v645 = vsel %vm367, %v640, %v644
      %v646 = vshrl.u32 %v351, 16
      %v648 = vrot.slane %v646, 4
      %v649 = vor.u32 %v648, %v644
      %v650 = vrot.slane %v649, 4
      %v652 = vshll.u32 %v352, 16
      %v654 = vrot.slane %v652, 5
      %v655 = vsel %vm367, %v650, %v654
      %v657 = vshrl.u32 %v353, 16
      %v659 = vrot.slane %v657, 4
      %v660 = vshll.u32 %v353, 16
      %v662 = vrot.slane %v660, 5
      %v663 = vor.u32 %v659, %v662
      %v664 = vrot.slane %v663, 4
      %v666 = vshll.u32 %v354, 16
      %v668 = vrot.slane %v666, 5
      %v669 = vsel %vm367, %v664, %v668
      %v670 = vshrl.u32 %v354, 16
      %v672 = vrot.slane %v670, 4
      %v673 = vor.u32 %v672, %v668
      %v674 = vrot.slane %v673, 4
      %v676 = vshll.u32 %v355, 16
      %v678 = vrot.slane %v676, 5
      %v679 = vsel %vm367, %v674, %v678
      %v681 = vshrl.u32 %v356, 16
      %v683 = vrot.slane %v681, 4
      %v684 = vshll.u32 %v356, 16
      %v686 = vrot.slane %v684, 5
      %v687 = vor.u32 %v683, %v686
      %v688 = vrot.slane %v687, 4
      %v690 = vshll.u32 %v357, 16
      %v692 = vrot.slane %v690, 5
      %v693 = vsel %vm367, %v688, %v692
      %v694 = vshrl.u32 %v357, 16
      %v696 = vrot.slane %v694, 4
      %v697 = vor.u32 %v696, %v692
      %v698 = vrot.slane %v697, 4
      %v700 = vshll.u32 %v358, 16
      %v702 = vrot.slane %v700, 5
      %v703 = vsel %vm367, %v698, %v702
      %v705 = vshrl.u32 %v359, 16
      %v707 = vrot.slane %v705, 4
      %v708 = vshll.u32 %v359, 16
      %v710 = vrot.slane %v708, 5
      %v711 = vor.u32 %v707, %v710
      %v712 = vrot.slane %v711, 4
      %v714 = vshll.u32 %v360, 16
      %v716 = vrot.slane %v714, 5
      %v717 = vsel %vm367, %v712, %v716
      %v718 = vshrl.u32 %v360, 16
      %v720 = vrot.slane %v718, 4
      %v721 = vor.u32 %v720, %v716
      %v722 = vrot.slane %v721, 4
      %v724 = vshll.u32 %v361, 16
      %v726 = vrot.slane %v724, 5
      %v727 = vsel %vm367, %v722, %v726
      %v729 = vshrl.u32 %v362, 16
      %v731 = vrot.slane %v729, 4
      %v732 = vshll.u32 %v362, 16
      %v734 = vrot.slane %v732, 5
      %v735 = vor.u32 %v731, %v734
      %v736 = vrot.slane %v735, 4
      %v738 = vshll.u32 %v363, 16
      %v740 = vrot.slane %v738, 5
      %v741 = vsel %vm367, %v736, %v740
      %v742 = vshrl.u32 %v363, 16
      %v744 = vrot.slane %v742, 4
      %v745 = vor.u32 %v744, %v740
      %v746 = vrot.slane %v745, 4
      %v748 = vshll.u32 %v364, 16
      %v750 = vrot.slane %v748, 5
      %v751 = vsel %vm367, %v746, %v750
      %v752 = vunpack.c.l.b16 %v381
      %v753 = vunpack.c.l.b16 %v391
      %v754 = vunpack.c.l.b16 %v405
      %v755 = vunpack.c.l.b16 %v415
      %v756 = vunpack.c.l.b16 %v429
      %v757 = vunpack.c.l.b16 %v439
      %v758 = vunpack.c.l.b16 %v453
      %v759 = vunpack.c.l.b16 %v463
      %v760 = vunpack.c.l.b16 %v477
      %v761 = vunpack.c.l.b16 %v487
      %v762 = vunpack.c.l.b16 %v501
      %v763 = vunpack.c.l.b16 %v511
      %v764 = vunpack.c.l.b16 %v525
      %v765 = vunpack.c.l.b16 %v535
      %v766 = vunpack.c.l.b16 %v549
      %v767 = vunpack.c.l.b16 %v559
      %v768 = vunpack.c.l.b16 %v573
      %v769 = vunpack.c.l.b16 %v583
      %v770 = vunpack.c.l.b16 %v597
      %v771 = vunpack.c.l.b16 %v607
      %v772 = vunpack.c.l.b16 %v621
      %v773 = vunpack.c.l.b16 %v631
      %v774 = vunpack.c.l.b16 %v645
      %v775 = vunpack.c.l.b16 %v655
      %v776 = vunpack.c.l.b16 %v669
      %v777 = vunpack.c.l.b16 %v679
      %v778 = vunpack.c.l.b16 %v693
      %v779 = vunpack.c.l.b16 %v703
      %v780 = vunpack.c.l.b16 %v717
      %v781 = vunpack.c.l.b16 %v727
      %v782 = vunpack.c.l.b16 %v741
      %v783 = vunpack.c.l.b16 %v751
      %v784 = vpack.c.b16 %v753, %v752
      %v785 = vpack.c.b16 %v755, %v754
      %v786 = vpack.c.b16 %v757, %v756
      %v787 = vpack.c.b16 %v759, %v758
      %v788 = vpack.c.b16 %v761, %v760
      %v789 = vpack.c.b16 %v763, %v762
      %v790 = vpack.c.b16 %v765, %v764
      %v791 = vpack.c.b16 %v767, %v766
      %v792 = vpack.c.b16 %v769, %v768
      %v793 = vpack.c.b16 %v771, %v770
      %v794 = vpack.c.b16 %v773, %v772
      %v795 = vpack.c.b16 %v775, %v774
      %v796 = vpack.c.b16 %v777, %v776
      %v797 = vpack.c.b16 %v779, %v778
      %v798 = vpack.c.b16 %v781, %v780
      %v799 = vpack.c.b16 %v783, %v782
      %800 = vrot.lane.b32.xlu0 %v784, 4
      %v801 = vpop.permute.xlu0 %800
      %802 = vrot.lane.b32.xlu0 %v785, 4
      %v803 = vpop.permute.xlu0 %802
      %804 = vrot.lane.b32.xlu0 %v786, 4
      %v805 = vpop.permute.xlu0 %804
      %806 = vrot.lane.b32.xlu0 %v787, 4
      %v807 = vpop.permute.xlu0 %806
      %808 = vrot.lane.b32.xlu0 %v788, 4
      %v809 = vpop.permute.xlu0 %808
      %810 = vrot.lane.b32.xlu0 %v789, 4
      %v811 = vpop.permute.xlu0 %810
      %812 = vrot.lane.b32.xlu0 %v790, 4
      %v813 = vpop.permute.xlu0 %812
      %814 = vrot.lane.b32.xlu0 %v791, 4
      %v815 = vpop.permute.xlu0 %814
      %816 = vrot.lane.b32.xlu0 %v792, 4
      %v817 = vpop.permute.xlu0 %816
      %818 = vrot.lane.b32.xlu0 %v793, 4
      %v819 = vpop.permute.xlu0 %818
      %820 = vrot.lane.b32.xlu0 %v794, 4
      %v821 = vpop.permute.xlu0 %820
      %822 = vrot.lane.b32.xlu0 %v795, 4
      %v823 = vpop.permute.xlu0 %822
      %824 = vrot.lane.b32.xlu0 %v796, 4
      %v825 = vpop.permute.xlu0 %824
      %826 = vrot.lane.b32.xlu0 %v797, 4
      %v827 = vpop.permute.xlu0 %826
      %828 = vrot.lane.b32.xlu0 %v798, 4
      %v829 = vpop.permute.xlu0 %828
      %830 = vrot.lane.b32.xlu0 %v799, 4
      %v831 = vpop.permute.xlu0 %830
      %vm848 = vcmask 64544
      %849 = vst.msk [vmem:[#allocation2] sm:$0xff] %vm848, %v801
      %850 = vst.msk [vmem:[#allocation2 + $0x8] sm:$0xff] %vm848, %v803
      %851 = vst.msk [vmem:[#allocation2 + $0x10] sm:$0xff] %vm848, %v805
      %852 = vst.msk [vmem:[#allocation2 + $0x18] sm:$0xff] %vm848, %v807
      %853 = vst.msk [vmem:[#allocation2 + $0x20] sm:$0xff] %vm848, %v809
      %854 = vst.msk [vmem:[#allocation2 + $0x28] sm:$0xff] %vm848, %v811
      %855 = vst.msk [vmem:[#allocation2 + $0x30] sm:$0xff] %vm848, %v813
      %856 = vst.msk [vmem:[#allocation2 + $0x38] sm:$0xff] %vm848, %v815
      %857 = vst.msk [vmem:[#allocation2 + $0x40] sm:$0xff] %vm848, %v817
      %858 = vst.msk [vmem:[#allocation2 + $0x48] sm:$0xff] %vm848, %v819
      %859 = vst.msk [vmem:[#allocation2 + $0x50] sm:$0xff] %vm848, %v821
      %860 = vst.msk [vmem:[#allocation2 + $0x58] sm:$0xff] %vm848, %v823
      %861 = vst.msk [vmem:[#allocation2 + $0x60] sm:$0xff] %vm848, %v825
      %862 = vst.msk [vmem:[#allocation2 + $0x68] sm:$0xff] %vm848, %v827
      %863 = vst.msk [vmem:[#allocation2 + $0x70] sm:$0xff] %vm848, %v829
      %864 = vst.msk [vmem:[#allocation2 + $0x78] sm:$0xff] %vm848, %v831
      %v865 = vld [vmem:[%s165] sm:$0xe]
      %v866 = vld [vmem:[%s165 + $0x4] sm:$0xf]
      %v867 = vld [vmem:[%s165 + $0x8] sm:$0x1]
      %v868 = vld [vmem:[%s165 + $0xc] sm:$0xe]
      %v869 = vld [vmem:[%s165 + $0x10] sm:$0xf]
      %v870 = vld [vmem:[%s165 + $0x14] sm:$0x1]
      %v871 = vld [vmem:[%s165 + $0x18] sm:$0xe]
      %v872 = vld [vmem:[%s165 + $0x1c] sm:$0xf]
      %v873 = vld [vmem:[%s165 + $0x20] sm:$0x1]
      %v874 = vld [vmem:[%s165 + $0x24] sm:$0xe]
      %v875 = vld [vmem:[%s165 + $0x28] sm:$0xf]
      %v876 = vld [vmem:[%s165 + $0x2c] sm:$0x1]
      %v877 = vld [vmem:[%s165 + $0x30] sm:$0xe]
      %v878 = vld [vmem:[%s165 + $0x34] sm:$0xf]
      %v879 = vld [vmem:[%s165 + $0x38] sm:$0x1]
      %v880 = vld [vmem:[%s165 + $0x3c] sm:$0xe]
      %v881 = vld [vmem:[%s165 + $0x40] sm:$0xf]
      %v882 = vld [vmem:[%s165 + $0x44] sm:$0x1]
      %v883 = vld [vmem:[%s165 + $0x48] sm:$0xe]
      %v884 = vld [vmem:[%s165 + $0x4c] sm:$0xf]
      %v885 = vld [vmem:[%s165 + $0x50] sm:$0x1]
      %v886 = vld [vmem:[%s165 + $0x54] sm:$0xe]
      %v887 = vld [vmem:[%s165 + $0x58] sm:$0xf]
      %v888 = vld [vmem:[%s165 + $0x5c] sm:$0x1]
      %v889 = vld [vmem:[%s165 + $0x60] sm:$0xe]
      %v890 = vld [vmem:[%s165 + $0x64] sm:$0xf]
      %v891 = vld [vmem:[%s165 + $0x68] sm:$0x1]
      %v892 = vld [vmem:[%s165 + $0x6c] sm:$0xe]
      %v893 = vld [vmem:[%s165 + $0x70] sm:$0xf]
      %v894 = vld [vmem:[%s165 + $0x74] sm:$0x1]
      %v895 = vld [vmem:[%s165 + $0x78] sm:$0xe]
      %v896 = vld [vmem:[%s165 + $0x7c] sm:$0xf]
      %v897 = vld [vmem:[%s165 + $0x80] sm:$0x1]
      %v898 = vld [vmem:[%s165 + $0x84] sm:$0xe]
      %v899 = vld [vmem:[%s165 + $0x88] sm:$0xf]
      %v900 = vld [vmem:[%s165 + $0x8c] sm:$0x1]
      %v901 = vld [vmem:[%s165 + $0x90] sm:$0xe]
      %v902 = vld [vmem:[%s165 + $0x94] sm:$0xf]
      %v903 = vld [vmem:[%s165 + $0x98] sm:$0x1]
      %v904 = vld [vmem:[%s165 + $0x9c] sm:$0xe]
      %v905 = vld [vmem:[%s165 + $0xa0] sm:$0xf]
      %v906 = vld [vmem:[%s165 + $0xa4] sm:$0x1]
      %v907 = vld [vmem:[%s165 + $0xa8] sm:$0xe]
      %v908 = vld [vmem:[%s165 + $0xac] sm:$0xf]
      %v909 = vld [vmem:[%s165 + $0xb0] sm:$0x1]
      %v910 = vld [vmem:[%s165 + $0xb4] sm:$0xe]
      %v911 = vld [vmem:[%s165 + $0xb8] sm:$0xf]
      %v912 = vld [vmem:[%s165 + $0xbc] sm:$0x1]
      %vm961 = vcmask 1042432
      %vm962 = vcmask 1046532
      %vm963 = vmor %vm961, %vm962
      %v964 = vrot.slane %v865, 5
      %v965 = vrot.slane %v964, 4
      %v966 = vrot.slane %v866, 5
      %v967 = vsel %vm963, %v965, %v966
      %v968 = vrot.slane %v966, 4
      %v969 = vrot.slane %v867, 5
      %v970 = vsel %vm963, %v968, %v969
      %v971 = vrot.slane %v868, 5
      %v972 = vrot.slane %v971, 4
      %v973 = vrot.slane %v869, 5
      %v974 = vsel %vm963, %v972, %v973
      %v975 = vrot.slane %v973, 4
      %v976 = vrot.slane %v870, 5
      %v977 = vsel %vm963, %v975, %v976
      %v978 = vrot.slane %v871, 5
      %v979 = vrot.slane %v978, 4
      %v980 = vrot.slane %v872, 5
      %v981 = vsel %vm963, %v979, %v980
      %v982 = vrot.slane %v980, 4
      %v983 = vrot.slane %v873, 5
      %v984 = vsel %vm963, %v982, %v983
      %v985 = vrot.slane %v874, 5
      %v986 = vrot.slane %v985, 4
      %v987 = vrot.slane %v875, 5
      %v988 = vsel %vm963, %v986, %v987
      %v989 = vrot.slane %v987, 4
      %v990 = vrot.slane %v876, 5
      %v991 = vsel %vm963, %v989, %v990
      %v992 = vrot.slane %v877, 5
      %v993 = vrot.slane %v992, 4
      %v994 = vrot.slane %v878, 5
      %v995 = vsel %vm963, %v993, %v994
      %v996 = vrot.slane %v994, 4
      %v997 = vrot.slane %v879, 5
      %v998 = vsel %vm963, %v996, %v997
      %v999 = vrot.slane %v880, 5
      %v1000 = vrot.slane %v999, 4
      %v1001 = vrot.slane %v881, 5
      %v1002 = vsel %vm963, %v1000, %v1001
      %v1003 = vrot.slane %v1001, 4
      %v1004 = vrot.slane %v882, 5
      %v1005 = vsel %vm963, %v1003, %v1004
      %v1006 = vrot.slane %v883, 5
      %v1007 = vrot.slane %v1006, 4
      %v1008 = vrot.slane %v884, 5
      %v1009 = vsel %vm963, %v1007, %v1008
      %v1010 = vrot.slane %v1008, 4
      %v1011 = vrot.slane %v885, 5
      %v1012 = vsel %vm963, %v1010, %v1011
      %v1013 = vrot.slane %v886, 5
      %v1014 = vrot.slane %v1013, 4
      %v1015 = vrot.slane %v887, 5
      %v1016 = vsel %vm963, %v1014, %v1015
      %v1017 = vrot.slane %v1015, 4
      %v1018 = vrot.slane %v888, 5
      %v1019 = vsel %vm963, %v1017, %v1018
      %v1020 = vrot.slane %v889, 5
      %v1021 = vrot.slane %v1020, 4
      %v1022 = vrot.slane %v890, 5
      %v1023 = vsel %vm963, %v1021, %v1022
      %v1024 = vrot.slane %v1022, 4
      %v1025 = vrot.slane %v891, 5
      %v1026 = vsel %vm963, %v1024, %v1025
      %v1027 = vrot.slane %v892, 5
      %v1028 = vrot.slane %v1027, 4
      %v1029 = vrot.slane %v893, 5
      %v1030 = vsel %vm963, %v1028, %v1029
      %v1031 = vrot.slane %v1029, 4
      %v1032 = vrot.slane %v894, 5
      %v1033 = vsel %vm963, %v1031, %v1032
      %v1034 = vrot.slane %v895, 5
      %v1035 = vrot.slane %v1034, 4
      %v1036 = vrot.slane %v896, 5
      %v1037 = vsel %vm963, %v1035, %v1036
      %v1038 = vrot.slane %v1036, 4
      %v1039 = vrot.slane %v897, 5
      %v1040 = vsel %vm963, %v1038, %v1039
      %v1041 = vrot.slane %v898, 5
      %v1042 = vrot.slane %v1041, 4
      %v1043 = vrot.slane %v899, 5
      %v1044 = vsel %vm963, %v1042, %v1043
      %v1045 = vrot.slane %v1043, 4
      %v1046 = vrot.slane %v900, 5
      %v1047 = vsel %vm963, %v1045, %v1046
      %v1048 = vrot.slane %v901, 5
      %v1049 = vrot.slane %v1048, 4
      %v1050 = vrot.slane %v902, 5
      %v1051 = vsel %vm963, %v1049, %v1050
      %v1052 = vrot.slane %v1050, 4
      %v1053 = vrot.slane %v903, 5
      %v1054 = vsel %vm963, %v1052, %v1053
      %v1055 = vrot.slane %v904, 5
      %v1056 = vrot.slane %v1055, 4
      %v1057 = vrot.slane %v905, 5
      %v1058 = vsel %vm963, %v1056, %v1057
      %v1059 = vrot.slane %v1057, 4
      %v1060 = vrot.slane %v906, 5
      %v1061 = vsel %vm963, %v1059, %v1060
      %v1062 = vrot.slane %v907, 5
      %v1063 = vrot.slane %v1062, 4
      %v1064 = vrot.slane %v908, 5
      %v1065 = vsel %vm963, %v1063, %v1064
      %v1066 = vrot.slane %v1064, 4
      %v1067 = vrot.slane %v909, 5
      %v1068 = vsel %vm963, %v1066, %v1067
      %v1069 = vrot.slane %v910, 5
      %v1070 = vrot.slane %v1069, 4
      %v1071 = vrot.slane %v911, 5
      %v1072 = vsel %vm963, %v1070, %v1071
      %v1073 = vrot.slane %v1071, 4
      %v1074 = vrot.slane %v912, 5
      %v1075 = vsel %vm963, %v1073, %v1074
      %v1076 = vunpack.c.l.b16 %v967
      %v1077 = vunpack.c.l.b16 %v970
      %v1078 = vunpack.c.l.b16 %v974
      %v1079 = vunpack.c.l.b16 %v977
      %v1080 = vunpack.c.l.b16 %v981
      %v1081 = vunpack.c.l.b16 %v984
      %v1082 = vunpack.c.l.b16 %v988
      %v1083 = vunpack.c.l.b16 %v991
      %v1084 = vunpack.c.l.b16 %v995
      %v1085 = vunpack.c.l.b16 %v998
      %v1086 = vunpack.c.l.b16 %v1002
      %v1087 = vunpack.c.l.b16 %v1005
      %v1088 = vunpack.c.l.b16 %v1009
      %v1089 = vunpack.c.l.b16 %v1012
      %v1090 = vunpack.c.l.b16 %v1016
      %v1091 = vunpack.c.l.b16 %v1019
      %v1092 = vunpack.c.l.b16 %v1023
      %v1093 = vunpack.c.l.b16 %v1026
      %v1094 = vunpack.c.l.b16 %v1030
      %v1095 = vunpack.c.l.b16 %v1033
      %v1096 = vunpack.c.l.b16 %v1037
      %v1097 = vunpack.c.l.b16 %v1040
      %v1098 = vunpack.c.l.b16 %v1044
      %v1099 = vunpack.c.l.b16 %v1047
      %v1100 = vunpack.c.l.b16 %v1051
      %v1101 = vunpack.c.l.b16 %v1054
      %v1102 = vunpack.c.l.b16 %v1058
      %v1103 = vunpack.c.l.b16 %v1061
      %v1104 = vunpack.c.l.b16 %v1065
      %v1105 = vunpack.c.l.b16 %v1068
      %v1106 = vunpack.c.l.b16 %v1072
      %v1107 = vunpack.c.l.b16 %v1075
      %v1108 = vpack.c.b16 %v1077, %v1076
      %v1109 = vpack.c.b16 %v1079, %v1078
      %v1110 = vpack.c.b16 %v1081, %v1080
      %v1111 = vpack.c.b16 %v1083, %v1082
      %v1112 = vpack.c.b16 %v1085, %v1084
      %v1113 = vpack.c.b16 %v1087, %v1086
      %v1114 = vpack.c.b16 %v1089, %v1088
      %v1115 = vpack.c.b16 %v1091, %v1090
      %v1116 = vpack.c.b16 %v1093, %v1092
      %v1117 = vpack.c.b16 %v1095, %v1094
      %v1118 = vpack.c.b16 %v1097, %v1096
      %v1119 = vpack.c.b16 %v1099, %v1098
      %v1120 = vpack.c.b16 %v1101, %v1100
      %v1121 = vpack.c.b16 %v1103, %v1102
      %v1122 = vpack.c.b16 %v1105, %v1104
      %v1123 = vpack.c.b16 %v1107, %v1106
      %1124 = vrot.lane.b32.xlu0 %v1108, 8
      %v1125 = vpop.permute.xlu0 %1124
      %1126 = vrot.lane.b32.xlu0 %v1109, 8
      %v1127 = vpop.permute.xlu0 %1126
      %1128 = vrot.lane.b32.xlu0 %v1110, 8
      %v1129 = vpop.permute.xlu0 %1128
      %1130 = vrot.lane.b32.xlu0 %v1111, 8
      %v1131 = vpop.permute.xlu0 %1130
      %1132 = vrot.lane.b32.xlu0 %v1112, 8
      %v1133 = vpop.permute.xlu0 %1132
      %1134 = vrot.lane.b32.xlu0 %v1113, 8
      %v1135 = vpop.permute.xlu0 %1134
      %1136 = vrot.lane.b32.xlu0 %v1114, 8
      %v1137 = vpop.permute.xlu0 %1136
      %1138 = vrot.lane.b32.xlu0 %v1115, 8
      %v1139 = vpop.permute.xlu0 %1138
      %1140 = vrot.lane.b32.xlu0 %v1116, 8
      %v1141 = vpop.permute.xlu0 %1140
      %1142 = vrot.lane.b32.xlu0 %v1117, 8
      %v1143 = vpop.permute.xlu0 %1142
      %1144 = vrot.lane.b32.xlu0 %v1118, 8
      %v1145 = vpop.permute.xlu0 %1144
      %1146 = vrot.lane.b32.xlu0 %v1119, 8
      %v1147 = vpop.permute.xlu0 %1146
      %1148 = vrot.lane.b32.xlu0 %v1120, 8
      %v1149 = vpop.permute.xlu0 %1148
      %1150 = vrot.lane.b32.xlu0 %v1121, 8
      %v1151 = vpop.permute.xlu0 %1150
      %1152 = vrot.lane.b32.xlu0 %v1122, 8
      %v1153 = vpop.permute.xlu0 %1152
      %1154 = vrot.lane.b32.xlu0 %v1123, 8
      %v1155 = vpop.permute.xlu0 %1154
      %vm1172 = vcmask 97344
      %1173 = vst.msk [vmem:[#allocation2] sm:$0xff] %vm1172, %v1125
      %1174 = vst.msk [vmem:[#allocation2 + $0x8] sm:$0xff] %vm1172, %v1127
      %1175 = vst.msk [vmem:[#allocation2 + $0x10] sm:$0xff] %vm1172, %v1129
      %1176 = vst.msk [vmem:[#allocation2 + $0x18] sm:$0xff] %vm1172, %v1131
      %1177 = vst.msk [vmem:[#allocation2 + $0x20] sm:$0xff] %vm1172, %v1133
      %1178 = vst.msk [vmem:[#allocation2 + $0x28] sm:$0xff] %vm1172, %v1135
      %1179 = vst.msk [vmem:[#allocation2 + $0x30] sm:$0xff] %vm1172, %v1137
      %1180 = vst.msk [vmem:[#allocation2 + $0x38] sm:$0xff] %vm1172, %v1139
      %1181 = vst.msk [vmem:[#allocation2 + $0x40] sm:$0xff] %vm1172, %v1141
      %1182 = vst.msk [vmem:[#allocation2 + $0x48] sm:$0xff] %vm1172, %v1143
      %1183 = vst.msk [vmem:[#allocation2 + $0x50] sm:$0xff] %vm1172, %v1145
      %1184 = vst.msk [vmem:[#allocation2 + $0x58] sm:$0xff] %vm1172, %v1147
      %1185 = vst.msk [vmem:[#allocation2 + $0x60] sm:$0xff] %vm1172, %v1149
      %1186 = vst.msk [vmem:[#allocation2 + $0x68] sm:$0xff] %vm1172, %v1151
      %1187 = vst.msk [vmem:[#allocation2 + $0x70] sm:$0xff] %vm1172, %v1153
      %1188 = vst.msk [vmem:[#allocation2 + $0x78] sm:$0xff] %vm1172, %v1155
      %s1189 = scalar_lea.vmem %s165, 12
      %v1190 = vld [vmem:[%s1189] sm:$0xf]
      %v1191 = vld [vmem:[%s1189 + $0x4] sm:$0xf]
      %v1192 = vld [vmem:[%s1189 + $0xc] sm:$0xf]
      %v1193 = vld [vmem:[%s1189 + $0x10] sm:$0xf]
      %v1194 = vld [vmem:[%s1189 + $0x18] sm:$0xf]
      %v1195 = vld [vmem:[%s1189 + $0x1c] sm:$0xf]
      %v1196 = vld [vmem:[%s1189 + $0x24] sm:$0xf]
      %v1197 = vld [vmem:[%s1189 + $0x28] sm:$0xf]
      %v1198 = vld [vmem:[%s1189 + $0x30] sm:$0xf]
      %v1199 = vld [vmem:[%s1189 + $0x34] sm:$0xf]
      %v1200 = vld [vmem:[%s1189 + $0x3c] sm:$0xf]
      %v1201 = vld [vmem:[%s1189 + $0x40] sm:$0xf]
      %v1202 = vld [vmem:[%s1189 + $0x48] sm:$0xf]
      %v1203 = vld [vmem:[%s1189 + $0x4c] sm:$0xf]
      %v1204 = vld [vmem:[%s1189 + $0x54] sm:$0xf]
      %v1205 = vld [vmem:[%s1189 + $0x58] sm:$0xf]
      %v1206 = vld [vmem:[%s1189 + $0x60] sm:$0xf]
      %v1207 = vld [vmem:[%s1189 + $0x64] sm:$0xf]
      %v1208 = vld [vmem:[%s1189 + $0x6c] sm:$0xf]
      %v1209 = vld [vmem:[%s1189 + $0x70] sm:$0xf]
      %v1210 = vld [vmem:[%s1189 + $0x78] sm:$0xf]
      %v1211 = vld [vmem:[%s1189 + $0x7c] sm:$0xf]
      %v1212 = vld [vmem:[%s1189 + $0x84] sm:$0xf]
      %v1213 = vld [vmem:[%s1189 + $0x88] sm:$0xf]
      %v1214 = vld [vmem:[%s1189 + $0x90] sm:$0xf]
      %v1215 = vld [vmem:[%s1189 + $0x94] sm:$0xf]
      %v1216 = vld [vmem:[%s1189 + $0x9c] sm:$0xf]
      %v1217 = vld [vmem:[%s1189 + $0xa0] sm:$0xf]
      %v1218 = vld [vmem:[%s1189 + $0xa8] sm:$0xf]
      %v1219 = vld [vmem:[%s1189 + $0xac] sm:$0xf]
      %v1220 = vld [vmem:[%s1189 + $0xb4] sm:$0xf]
      %v1221 = vld [vmem:[%s1189 + $0xb8] sm:$0xf]
      %v1254 = vunpack.c.l.b16 %v1190
      %v1255 = vunpack.c.l.b16 %v1191
      %v1256 = vunpack.c.l.b16 %v1192
      %v1257 = vunpack.c.l.b16 %v1193
      %v1258 = vunpack.c.l.b16 %v1194
      %v1259 = vunpack.c.l.b16 %v1195
      %v1260 = vunpack.c.l.b16 %v1196
      %v1261 = vunpack.c.l.b16 %v1197
      %v1262 = vunpack.c.l.b16 %v1198
      %v1263 = vunpack.c.l.b16 %v1199
      %v1264 = vunpack.c.l.b16 %v1200
      %v1265 = vunpack.c.l.b16 %v1201
      %v1266 = vunpack.c.l.b16 %v1202
      %v1267 = vunpack.c.l.b16 %v1203
      %v1268 = vunpack.c.l.b16 %v1204
      %v1269 = vunpack.c.l.b16 %v1205
      %v1270 = vunpack.c.l.b16 %v1206
      %v1271 = vunpack.c.l.b16 %v1207
      %v1272 = vunpack.c.l.b16 %v1208
      %v1273 = vunpack.c.l.b16 %v1209
      %v1274 = vunpack.c.l.b16 %v1210
      %v1275 = vunpack.c.l.b16 %v1211
      %v1276 = vunpack.c.l.b16 %v1212
      %v1277 = vunpack.c.l.b16 %v1213
      %v1278 = vunpack.c.l.b16 %v1214
      %v1279 = vunpack.c.l.b16 %v1215
      %v1280 = vunpack.c.l.b16 %v1216
      %v1281 = vunpack.c.l.b16 %v1217
      %v1282 = vunpack.c.l.b16 %v1218
      %v1283 = vunpack.c.l.b16 %v1219
      %v1284 = vunpack.c.l.b16 %v1220
      %v1285 = vunpack.c.l.b16 %v1221
      %v1286 = vpack.c.b16 %v1255, %v1254
      %v1287 = vpack.c.b16 %v1257, %v1256
      %v1288 = vpack.c.b16 %v1259, %v1258
      %v1289 = vpack.c.b16 %v1261, %v1260
      %v1290 = vpack.c.b16 %v1263, %v1262
      %v1291 = vpack.c.b16 %v1265, %v1264
      %v1292 = vpack.c.b16 %v1267, %v1266
      %v1293 = vpack.c.b16 %v1269, %v1268
      %v1294 = vpack.c.b16 %v1271, %v1270
      %v1295 = vpack.c.b16 %v1273, %v1272
      %v1296 = vpack.c.b16 %v1275, %v1274
      %v1297 = vpack.c.b16 %v1277, %v1276
      %v1298 = vpack.c.b16 %v1279, %v1278
      %v1299 = vpack.c.b16 %v1281, %v1280
      %v1300 = vpack.c.b16 %v1283, %v1282
      %v1301 = vpack.c.b16 %v1285, %v1284
      %1302 = vrot.lane.b32.xlu0 %v1286, 12
      %v1303 = vpop.permute.xlu0 %1302
      %1304 = vrot.lane.b32.xlu0 %v1287, 12
      %v1305 = vpop.permute.xlu0 %1304
      %1306 = vrot.lane.b32.xlu0 %v1288, 12
      %v1307 = vpop.permute.xlu0 %1306
      %1308 = vrot.lane.b32.xlu0 %v1289, 12
      %v1309 = vpop.permute.xlu0 %1308
      %1310 = vrot.lane.b32.xlu0 %v1290, 12
      %v1311 = vpop.permute.xlu0 %1310
      %1312 = vrot.lane.b32.xlu0 %v1291, 12
      %v1313 = vpop.permute.xlu0 %1312
      %1314 = vrot.lane.b32.xlu0 %v1292, 12
      %v1315 = vpop.permute.xlu0 %1314
      %1316 = vrot.lane.b32.xlu0 %v1293, 12
      %v1317 = vpop.permute.xlu0 %1316
      %1318 = vrot.lane.b32.xlu0 %v1294, 12
      %v1319 = vpop.permute.xlu0 %1318
      %1320 = vrot.lane.b32.xlu0 %v1295, 12
      %v1321 = vpop.permute.xlu0 %1320
      %1322 = vrot.lane.b32.xlu0 %v1296, 12
      %v1323 = vpop.permute.xlu0 %1322
      %1324 = vrot.lane.b32.xlu0 %v1297, 12
      %v1325 = vpop.permute.xlu0 %1324
      %1326 = vrot.lane.b32.xlu0 %v1298, 12
      %v1327 = vpop.permute.xlu0 %1326
      %1328 = vrot.lane.b32.xlu0 %v1299, 12
      %v1329 = vpop.permute.xlu0 %1328
      %1330 = vrot.lane.b32.xlu0 %v1300, 12
      %v1331 = vpop.permute.xlu0 %1330
      %1332 = vrot.lane.b32.xlu0 %v1301, 12
      %v1333 = vpop.permute.xlu0 %1332
      %vm1350 = vcmask 130144
      %1351 = vst.msk [vmem:[#allocation2] sm:$0xff] %vm1350, %v1303
      %1352 = vst.msk [vmem:[#allocation2 + $0x8] sm:$0xff] %vm1350, %v1305
      %1353 = vst.msk [vmem:[#allocation2 + $0x10] sm:$0xff] %vm1350, %v1307
      %1354 = vst.msk [vmem:[#allocation2 + $0x18] sm:$0xff] %vm1350, %v1309
      %1355 = vst.msk [vmem:[#allocation2 + $0x20] sm:$0xff] %vm1350, %v1311
      %1356 = vst.msk [vmem:[#allocation2 + $0x28] sm:$0xff] %vm1350, %v1313
      %1357 = vst.msk [vmem:[#allocation2 + $0x30] sm:$0xff] %vm1350, %v1315
      %1358 = vst.msk [vmem:[#allocation2 + $0x38] sm:$0xff] %vm1350, %v1317
      %1359 = vst.msk [vmem:[#allocation2 + $0x40] sm:$0xff] %vm1350, %v1319
      %1360 = vst.msk [vmem:[#allocation2 + $0x48] sm:$0xff] %vm1350, %v1321
      %1361 = vst.msk [vmem:[#allocation2 + $0x50] sm:$0xff] %vm1350, %v1323
      %1362 = vst.msk [vmem:[#allocation2 + $0x58] sm:$0xff] %vm1350, %v1325
      %1363 = vst.msk [vmem:[#allocation2 + $0x60] sm:$0xff] %vm1350, %v1327
      %1364 = vst.msk [vmem:[#allocation2 + $0x68] sm:$0xff] %vm1350, %v1329
      %1365 = vst.msk [vmem:[#allocation2 + $0x70] sm:$0xff] %vm1350, %v1331
      %1366 = vst.msk [vmem:[#allocation2 + $0x78] sm:$0xff] %vm1350, %v1333
      %v1367 = vld [vmem:[%s1189] sm:$0xf]
      %v1368 = vld [vmem:[%s1189 + $0x4] sm:$0xf]
      %v1369 = vld [vmem:[%s1189 + $0x8] sm:$0x1]
      %v1370 = vld [vmem:[%s1189 + $0xc] sm:$0xf]
      %v1371 = vld [vmem:[%s1189 + $0x10] sm:$0xf]
      %v1372 = vld [vmem:[%s1189 + $0x14] sm:$0x1]
      %v1373 = vld [vmem:[%s1189 + $0x18] sm:$0xf]
      %v1374 = vld [vmem:[%s1189 + $0x1c] sm:$0xf]
      %v1375 = vld [vmem:[%s1189 + $0x20] sm:$0x1]
      %v1376 = vld [vmem:[%s1189 + $0x24] sm:$0xf]
      %v1377 = vld [vmem:[%s1189 + $0x28] sm:$0xf]
      %v1378 = vld [vmem:[%s1189 + $0x2c] sm:$0x1]
      %v1379 = vld [vmem:[%s1189 + $0x30] sm:$0xf]
      %v1380 = vld [vmem:[%s1189 + $0x34] sm:$0xf]
      %v1381 = vld [vmem:[%s1189 + $0x38] sm:$0x1]
      %v1382 = vld [vmem:[%s1189 + $0x3c] sm:$0xf]
      %v1383 = vld [vmem:[%s1189 + $0x40] sm:$0xf]
      %v1384 = vld [vmem:[%s1189 + $0x44] sm:$0x1]
      %v1385 = vld [vmem:[%s1189 + $0x48] sm:$0xf]
      %v1386 = vld [vmem:[%s1189 + $0x4c] sm:$0xf]
      %v1387 = vld [vmem:[%s1189 + $0x50] sm:$0x1]
      %v1388 = vld [vmem:[%s1189 + $0x54] sm:$0xf]
      %v1389 = vld [vmem:[%s1189 + $0x58] sm:$0xf]
      %v1390 = vld [vmem:[%s1189 + $0x5c] sm:$0x1]
      %v1391 = vld [vmem:[%s1189 + $0x60] sm:$0xf]
      %v1392 = vld [vmem:[%s1189 + $0x64] sm:$0xf]
      %v1393 = vld [vmem:[%s1189 + $0x68] sm:$0x1]
      %v1394 = vld [vmem:[%s1189 + $0x6c] sm:$0xf]
      %v1395 = vld [vmem:[%s1189 + $0x70] sm:$0xf]
      %v1396 = vld [vmem:[%s1189 + $0x74] sm:$0x1]
      %v1397 = vld [vmem:[%s1189 + $0x78] sm:$0xf]
      %v1398 = vld [vmem:[%s1189 + $0x7c] sm:$0xf]
      %v1399 = vld [vmem:[%s1189 + $0x80] sm:$0x1]
      %v1400 = vld [vmem:[%s1189 + $0x84] sm:$0xf]
      %v1401 = vld [vmem:[%s1189 + $0x88] sm:$0xf]
      %v1402 = vld [vmem:[%s1189 + $0x8c] sm:$0x1]
      %v1403 = vld [vmem:[%s1189 + $0x90] sm:$0xf]
      %v1404 = vld [vmem:[%s1189 + $0x94] sm:$0xf]
      %v1405 = vld [vmem:[%s1189 + $0x98] sm:$0x1]
      %v1406 = vld [vmem:[%s1189 + $0x9c] sm:$0xf]
      %v1407 = vld [vmem:[%s1189 + $0xa0] sm:$0xf]
      %v1408 = vld [vmem:[%s1189 + $0xa4] sm:$0x1]
      %v1409 = vld [vmem:[%s1189 + $0xa8] sm:$0xf]
      %v1410 = vld [vmem:[%s1189 + $0xac] sm:$0xf]
      %v1411 = vld [vmem:[%s1189 + $0xb0] sm:$0x1]
      %v1412 = vld [vmem:[%s1189 + $0xb4] sm:$0xf]
      %v1413 = vld [vmem:[%s1189 + $0xb8] sm:$0xf]
      %v1414 = vld [vmem:[%s1189 + $0xbc] sm:$0x1]
      %v1416 = vshrl.u32 %v1367, 16
      %v1418 = vrot.slane %v1416, 4
      %v1419 = vshll.u32 %v1367, 16
      %v1421 = vrot.slane %v1419, 5
      %v1422 = vor.u32 %v1418, %v1421
      %v1423 = vrot.slane %v1422, 4
      %v1425 = vshll.u32 %v1368, 16
      %v1427 = vrot.slane %v1425, 5
      %v1428 = vsel %vm367, %v1423, %v1427
      %v1429 = vshrl.u32 %v1368, 16
      %v1431 = vrot.slane %v1429, 4
      %v1432 = vor.u32 %v1431, %v1427
      %v1433 = vrot.slane %v1432, 4
      %v1435 = vshll.u32 %v1369, 16
      %v1437 = vrot.slane %v1435, 5
      %v1438 = vsel %vm367, %v1433, %v1437
      %v1440 = vshrl.u32 %v1370, 16
      %v1442 = vrot.slane %v1440, 4
      %v1443 = vshll.u32 %v1370, 16
      %v1445 = vrot.slane %v1443, 5
      %v1446 = vor.u32 %v1442, %v1445
      %v1447 = vrot.slane %v1446, 4
      %v1449 = vshll.u32 %v1371, 16
      %v1451 = vrot.slane %v1449, 5
      %v1452 = vsel %vm367, %v1447, %v1451
      %v1453 = vshrl.u32 %v1371, 16
      %v1455 = vrot.slane %v1453, 4
      %v1456 = vor.u32 %v1455, %v1451
      %v1457 = vrot.slane %v1456, 4
      %v1459 = vshll.u32 %v1372, 16
      %v1461 = vrot.slane %v1459, 5
      %v1462 = vsel %vm367, %v1457, %v1461
      %v1464 = vshrl.u32 %v1373, 16
      %v1466 = vrot.slane %v1464, 4
      %v1467 = vshll.u32 %v1373, 16
      %v1469 = vrot.slane %v1467, 5
      %v1470 = vor.u32 %v1466, %v1469
      %v1471 = vrot.slane %v1470, 4
      %v1473 = vshll.u32 %v1374, 16
      %v1475 = vrot.slane %v1473, 5
      %v1476 = vsel %vm367, %v1471, %v1475
      %v1477 = vshrl.u32 %v1374, 16
      %v1479 = vrot.slane %v1477, 4
      %v1480 = vor.u32 %v1479, %v1475
      %v1481 = vrot.slane %v1480, 4
      %v1483 = vshll.u32 %v1375, 16
      %v1485 = vrot.slane %v1483, 5
      %v1486 = vsel %vm367, %v1481, %v1485
      %v1488 = vshrl.u32 %v1376, 16
      %v1490 = vrot.slane %v1488, 4
      %v1491 = vshll.u32 %v1376, 16
      %v1493 = vrot.slane %v1491, 5
      %v1494 = vor.u32 %v1490, %v1493
      %v1495 = vrot.slane %v1494, 4
      %v1497 = vshll.u32 %v1377, 16
      %v1499 = vrot.slane %v1497, 5
      %v1500 = vsel %vm367, %v1495, %v1499
      %v1501 = vshrl.u32 %v1377, 16
      %v1503 = vrot.slane %v1501, 4
      %v1504 = vor.u32 %v1503, %v1499
      %v1505 = vrot.slane %v1504, 4
      %v1507 = vshll.u32 %v1378, 16
      %v1509 = vrot.slane %v1507, 5
      %v1510 = vsel %vm367, %v1505, %v1509
      %v1512 = vshrl.u32 %v1379, 16
      %v1514 = vrot.slane %v1512, 4
      %v1515 = vshll.u32 %v1379, 16
      %v1517 = vrot.slane %v1515, 5
      %v1518 = vor.u32 %v1514, %v1517
      %v1519 = vrot.slane %v1518, 4
      %v1521 = vshll.u32 %v1380, 16
      %v1523 = vrot.slane %v1521, 5
      %v1524 = vsel %vm367, %v1519, %v1523
      %v1525 = vshrl.u32 %v1380, 16
      %v1527 = vrot.slane %v1525, 4
      %v1528 = vor.u32 %v1527, %v1523
      %v1529 = vrot.slane %v1528, 4
      %v1531 = vshll.u32 %v1381, 16
      %v1533 = vrot.slane %v1531, 5
      %v1534 = vsel %vm367, %v1529, %v1533
      %v1536 = vshrl.u32 %v1382, 16
      %v1538 = vrot.slane %v1536, 4
      %v1539 = vshll.u32 %v1382, 16
      %v1541 = vrot.slane %v1539, 5
      %v1542 = vor.u32 %v1538, %v1541
      %v1543 = vrot.slane %v1542, 4
      %v1545 = vshll.u32 %v1383, 16
      %v1547 = vrot.slane %v1545, 5
      %v1548 = vsel %vm367, %v1543, %v1547
      %v1549 = vshrl.u32 %v1383, 16
      %v1551 = vrot.slane %v1549, 4
      %v1552 = vor.u32 %v1551, %v1547
      %v1553 = vrot.slane %v1552, 4
      %v1555 = vshll.u32 %v1384, 16
      %v1557 = vrot.slane %v1555, 5
      %v1558 = vsel %vm367, %v1553, %v1557
      %v1560 = vshrl.u32 %v1385, 16
      %v1562 = vrot.slane %v1560, 4
      %v1563 = vshll.u32 %v1385, 16
      %v1565 = vrot.slane %v1563, 5
      %v1566 = vor.u32 %v1562, %v1565
      %v1567 = vrot.slane %v1566, 4
      %v1569 = vshll.u32 %v1386, 16
      %v1571 = vrot.slane %v1569, 5
      %v1572 = vsel %vm367, %v1567, %v1571
      %v1573 = vshrl.u32 %v1386, 16
      %v1575 = vrot.slane %v1573, 4
      %v1576 = vor.u32 %v1575, %v1571
      %v1577 = vrot.slane %v1576, 4
      %v1579 = vshll.u32 %v1387, 16
      %v1581 = vrot.slane %v1579, 5
      %v1582 = vsel %vm367, %v1577, %v1581
      %v1584 = vshrl.u32 %v1388, 16
      %v1586 = vrot.slane %v1584, 4
      %v1587 = vshll.u32 %v1388, 16
      %v1589 = vrot.slane %v1587, 5
      %v1590 = vor.u32 %v1586, %v1589
      %v1591 = vrot.slane %v1590, 4
      %v1593 = vshll.u32 %v1389, 16
      %v1595 = vrot.slane %v1593, 5
      %v1596 = vsel %vm367, %v1591, %v1595
      %v1597 = vshrl.u32 %v1389, 16
      %v1599 = vrot.slane %v1597, 4
      %v1600 = vor.u32 %v1599, %v1595
      %v1601 = vrot.slane %v1600, 4
      %v1603 = vshll.u32 %v1390, 16
      %v1605 = vrot.slane %v1603, 5
      %v1606 = vsel %vm367, %v1601, %v1605
      %v1608 = vshrl.u32 %v1391, 16
      %v1610 = vrot.slane %v1608, 4
      %v1611 = vshll.u32 %v1391, 16
      %v1613 = vrot.slane %v1611, 5
      %v1614 = vor.u32 %v1610, %v1613
      %v1615 = vrot.slane %v1614, 4
      %v1617 = vshll.u32 %v1392, 16
      %v1619 = vrot.slane %v1617, 5
      %v1620 = vsel %vm367, %v1615, %v1619
      %v1621 = vshrl.u32 %v1392, 16
      %v1623 = vrot.slane %v1621, 4
      %v1624 = vor.u32 %v1623, %v1619
      %v1625 = vrot.slane %v1624, 4
      %v1627 = vshll.u32 %v1393, 16
      %v1629 = vrot.slane %v1627, 5
      %v1630 = vsel %vm367, %v1625, %v1629
      %v1632 = vshrl.u32 %v1394, 16
      %v1634 = vrot.slane %v1632, 4
      %v1635 = vshll.u32 %v1394, 16
      %v1637 = vrot.slane %v1635, 5
      %v1638 = vor.u32 %v1634, %v1637
      %v1639 = vrot.slane %v1638, 4
      %v1641 = vshll.u32 %v1395, 16
      %v1643 = vrot.slane %v1641, 5
      %v1644 = vsel %vm367, %v1639, %v1643
      %v1645 = vshrl.u32 %v1395, 16
      %v1647 = vrot.slane %v1645, 4
      %v1648 = vor.u32 %v1647, %v1643
      %v1649 = vrot.slane %v1648, 4
      %v1651 = vshll.u32 %v1396, 16
      %v1653 = vrot.slane %v1651, 5
      %v1654 = vsel %vm367, %v1649, %v1653
      %v1656 = vshrl.u32 %v1397, 16
      %v1658 = vrot.slane %v1656, 4
      %v1659 = vshll.u32 %v1397, 16
      %v1661 = vrot.slane %v1659, 5
      %v1662 = vor.u32 %v1658, %v1661
      %v1663 = vrot.slane %v1662, 4
      %v1665 = vshll.u32 %v1398, 16
      %v1667 = vrot.slane %v1665, 5
      %v1668 = vsel %vm367, %v1663, %v1667
      %v1669 = vshrl.u32 %v1398, 16
      %v1671 = vrot.slane %v1669, 4
      %v1672 = vor.u32 %v1671, %v1667
      %v1673 = vrot.slane %v1672, 4
      %v1675 = vshll.u32 %v1399, 16
      %v1677 = vrot.slane %v1675, 5
      %v1678 = vsel %vm367, %v1673, %v1677
      %v1680 = vshrl.u32 %v1400, 16
      %v1682 = vrot.slane %v1680, 4
      %v1683 = vshll.u32 %v1400, 16
      %v1685 = vrot.slane %v1683, 5
      %v1686 = vor.u32 %v1682, %v1685
      %v1687 = vrot.slane %v1686, 4
      %v1689 = vshll.u32 %v1401, 16
      %v1691 = vrot.slane %v1689, 5
      %v1692 = vsel %vm367, %v1687, %v1691
      %v1693 = vshrl.u32 %v1401, 16
      %v1695 = vrot.slane %v1693, 4
      %v1696 = vor.u32 %v1695, %v1691
      %v1697 = vrot.slane %v1696, 4
      %v1699 = vshll.u32 %v1402, 16
      %v1701 = vrot.slane %v1699, 5
      %v1702 = vsel %vm367, %v1697, %v1701
      %v1704 = vshrl.u32 %v1403, 16
      %v1706 = vrot.slane %v1704, 4
      %v1707 = vshll.u32 %v1403, 16
      %v1709 = vrot.slane %v1707, 5
      %v1710 = vor.u32 %v1706, %v1709
      %v1711 = vrot.slane %v1710, 4
      %v1713 = vshll.u32 %v1404, 16
      %v1715 = vrot.slane %v1713, 5
      %v1716 = vsel %vm367, %v1711, %v1715
      %v1717 = vshrl.u32 %v1404, 16
      %v1719 = vrot.slane %v1717, 4
      %v1720 = vor.u32 %v1719, %v1715
      %v1721 = vrot.slane %v1720, 4
      %v1723 = vshll.u32 %v1405, 16
      %v1725 = vrot.slane %v1723, 5
      %v1726 = vsel %vm367, %v1721, %v1725
      %v1728 = vshrl.u32 %v1406, 16
      %v1730 = vrot.slane %v1728, 4
      %v1731 = vshll.u32 %v1406, 16
      %v1733 = vrot.slane %v1731, 5
      %v1734 = vor.u32 %v1730, %v1733
      %v1735 = vrot.slane %v1734, 4
      %v1737 = vshll.u32 %v1407, 16
      %v1739 = vrot.slane %v1737, 5
      %v1740 = vsel %vm367, %v1735, %v1739
      %v1741 = vshrl.u32 %v1407, 16
      %v1743 = vrot.slane %v1741, 4
      %v1744 = vor.u32 %v1743, %v1739
      %v1745 = vrot.slane %v1744, 4
      %v1747 = vshll.u32 %v1408, 16
      %v1749 = vrot.slane %v1747, 5
      %v1750 = vsel %vm367, %v1745, %v1749
      %v1752 = vshrl.u32 %v1409, 16
      %v1754 = vrot.slane %v1752, 4
      %v1755 = vshll.u32 %v1409, 16
      %v1757 = vrot.slane %v1755, 5
      %v1758 = vor.u32 %v1754, %v1757
      %v1759 = vrot.slane %v1758, 4
      %v1761 = vshll.u32 %v1410, 16
      %v1763 = vrot.slane %v1761, 5
      %v1764 = vsel %vm367, %v1759, %v1763
      %v1765 = vshrl.u32 %v1410, 16
      %v1767 = vrot.slane %v1765, 4
      %v1768 = vor.u32 %v1767, %v1763
      %v1769 = vrot.slane %v1768, 4
      %v1771 = vshll.u32 %v1411, 16
      %v1773 = vrot.slane %v1771, 5
      %v1774 = vsel %vm367, %v1769, %v1773
      %v1776 = vshrl.u32 %v1412, 16
      %v1778 = vrot.slane %v1776, 4
      %v1779 = vshll.u32 %v1412, 16
      %v1781 = vrot.slane %v1779, 5
      %v1782 = vor.u32 %v1778, %v1781
      %v1783 = vrot.slane %v1782, 4
      %v1785 = vshll.u32 %v1413, 16
      %v1787 = vrot.slane %v1785, 5
      %v1788 = vsel %vm367, %v1783, %v1787
      %v1789 = vshrl.u32 %v1413, 16
      %v1791 = vrot.slane %v1789, 4
      %v1792 = vor.u32 %v1791, %v1787
      %v1793 = vrot.slane %v1792, 4
      %v1795 = vshll.u32 %v1414, 16
      %v1797 = vrot.slane %v1795, 5
      %v1798 = vsel %vm367, %v1793, %v1797
      %v1799 = vunpack.c.l.b16 %v1428
      %v1800 = vunpack.c.l.b16 %v1438
      %v1801 = vunpack.c.l.b16 %v1452
      %v1802 = vunpack.c.l.b16 %v1462
      %v1803 = vunpack.c.l.b16 %v1476
      %v1804 = vunpack.c.l.b16 %v1486
      %v1805 = vunpack.c.l.b16 %v1500
      %v1806 = vunpack.c.l.b16 %v1510
      %v1807 = vunpack.c.l.b16 %v1524
      %v1808 = vunpack.c.l.b16 %v1534
      %v1809 = vunpack.c.l.b16 %v1548
      %v1810 = vunpack.c.l.b16 %v1558
      %v1811 = vunpack.c.l.b16 %v1572
      %v1812 = vunpack.c.l.b16 %v1582
      %v1813 = vunpack.c.l.b16 %v1596
      %v1814 = vunpack.c.l.b16 %v1606
      %v1815 = vunpack.c.l.b16 %v1620
      %v1816 = vunpack.c.l.b16 %v1630
      %v1817 = vunpack.c.l.b16 %v1644
      %v1818 = vunpack.c.l.b16 %v1654
      %v1819 = vunpack.c.l.b16 %v1668
      %v1820 = vunpack.c.l.b16 %v1678
      %v1821 = vunpack.c.l.b16 %v1692
      %v1822 = vunpack.c.l.b16 %v1702
      %v1823 = vunpack.c.l.b16 %v1716
      %v1824 = vunpack.c.l.b16 %v1726
      %v1825 = vunpack.c.l.b16 %v1740
      %v1826 = vunpack.c.l.b16 %v1750
      %v1827 = vunpack.c.l.b16 %v1764
      %v1828 = vunpack.c.l.b16 %v1774
      %v1829 = vunpack.c.l.b16 %v1788
      %v1830 = vunpack.c.l.b16 %v1798
      %v1831 = vpack.c.b16 %v1800, %v1799
      %v1832 = vpack.c.b16 %v1802, %v1801
      %v1833 = vpack.c.b16 %v1804, %v1803
      %v1834 = vpack.c.b16 %v1806, %v1805
      %v1835 = vpack.c.b16 %v1808, %v1807
      %v1836 = vpack.c.b16 %v1810, %v1809
      %v1837 = vpack.c.b16 %v1812, %v1811
      %v1838 = vpack.c.b16 %v1814, %v1813
      %v1839 = vpack.c.b16 %v1816, %v1815
      %v1840 = vpack.c.b16 %v1818, %v1817
      %v1841 = vpack.c.b16 %v1820, %v1819
      %v1842 = vpack.c.b16 %v1822, %v1821
      %v1843 = vpack.c.b16 %v1824, %v1823
      %v1844 = vpack.c.b16 %v1826, %v1825
      %v1845 = vpack.c.b16 %v1828, %v1827
      %v1846 = vpack.c.b16 %v1830, %v1829
      %1847 = vrot.lane.b32.xlu0 %v1831, 16
      %v1848 = vpop.permute.xlu0 %1847
      %1849 = vrot.lane.b32.xlu0 %v1832, 16
      %v1850 = vpop.permute.xlu0 %1849
      %1851 = vrot.lane.b32.xlu0 %v1833, 16
      %v1852 = vpop.permute.xlu0 %1851
      %1853 = vrot.lane.b32.xlu0 %v1834, 16
      %v1854 = vpop.permute.xlu0 %1853
      %1855 = vrot.lane.b32.xlu0 %v1835, 16
      %v1856 = vpop.permute.xlu0 %1855
      %1857 = vrot.lane.b32.xlu0 %v1836, 16
      %v1858 = vpop.permute.xlu0 %1857
      %1859 = vrot.lane.b32.xlu0 %v1837, 16
      %v1860 = vpop.permute.xlu0 %1859
      %1861 = vrot.lane.b32.xlu0 %v1838, 16
      %v1862 = vpop.permute.xlu0 %1861
      %1863 = vrot.lane.b32.xlu0 %v1839, 16
      %v1864 = vpop.permute.xlu0 %1863
      %1865 = vrot.lane.b32.xlu0 %v1840, 16
      %v1866 = vpop.permute.xlu0 %1865
      %1867 = vrot.lane.b32.xlu0 %v1841, 16
      %v1868 = vpop.permute.xlu0 %1867
      %1869 = vrot.lane.b32.xlu0 %v1842, 16
      %v1870 = vpop.permute.xlu0 %1869
      %1871 = vrot.lane.b32.xlu0 %v1843, 16
      %v1872 = vpop.permute.xlu0 %1871
      %1873 = vrot.lane.b32.xlu0 %v1844, 16
      %v1874 = vpop.permute.xlu0 %1873
      %1875 = vrot.lane.b32.xlu0 %v1845, 16
      %v1876 = vpop.permute.xlu0 %1875
      %1877 = vrot.lane.b32.xlu0 %v1846, 16
      %v1878 = vpop.permute.xlu0 %1877
      %vm1895 = vcmask 162944
      %1896 = vst.msk [vmem:[#allocation2] sm:$0xff] %vm1895, %v1848
      %1897 = vst.msk [vmem:[#allocation2 + $0x8] sm:$0xff] %vm1895, %v1850
      %1898 = vst.msk [vmem:[#allocation2 + $0x10] sm:$0xff] %vm1895, %v1852
      %1899 = vst.msk [vmem:[#allocation2 + $0x18] sm:$0xff] %vm1895, %v1854
      %1900 = vst.msk [vmem:[#allocation2 + $0x20] sm:$0xff] %vm1895, %v1856
      %1901 = vst.msk [vmem:[#allocation2 + $0x28] sm:$0xff] %vm1895, %v1858
      %1902 = vst.msk [vmem:[#allocation2 + $0x30] sm:$0xff] %vm1895, %v1860
      %1903 = vst.msk [vmem:[#allocation2 + $0x38] sm:$0xff] %vm1895, %v1862
      %1904 = vst.msk [vmem:[#allocation2 + $0x40] sm:$0xff] %vm1895, %v1864
      %1905 = vst.msk [vmem:[#allocation2 + $0x48] sm:$0xff] %vm1895, %v1866
      %1906 = vst.msk [vmem:[#allocation2 + $0x50] sm:$0xff] %vm1895, %v1868
      %1907 = vst.msk [vmem:[#allocation2 + $0x58] sm:$0xff] %vm1895, %v1870
      %1908 = vst.msk [vmem:[#allocation2 + $0x60] sm:$0xff] %vm1895, %v1872
      %1909 = vst.msk [vmem:[#allocation2 + $0x68] sm:$0xff] %vm1895, %v1874
      %1910 = vst.msk [vmem:[#allocation2 + $0x70] sm:$0xff] %vm1895, %v1876
      %1911 = vst.msk [vmem:[#allocation2 + $0x78] sm:$0xff] %vm1895, %v1878
      %v1912 = vld [vmem:[%s1189] sm:$0xe]
      %v1913 = vld [vmem:[%s1189 + $0x4] sm:$0xf]
      %v1914 = vld [vmem:[%s1189 + $0x8] sm:$0x1]
      %v1915 = vld [vmem:[%s1189 + $0xc] sm:$0xe]
      %v1916 = vld [vmem:[%s1189 + $0x10] sm:$0xf]
      %v1917 = vld [vmem:[%s1189 + $0x14] sm:$0x1]
      %v1918 = vld [vmem:[%s1189 + $0x18] sm:$0xe]
      %v1919 = vld [vmem:[%s1189 + $0x1c] sm:$0xf]
      %v1920 = vld [vmem:[%s1189 + $0x20] sm:$0x1]
      %v1921 = vld [vmem:[%s1189 + $0x24] sm:$0xe]
      %v1922 = vld [vmem:[%s1189 + $0x28] sm:$0xf]
      %v1923 = vld [vmem:[%s1189 + $0x2c] sm:$0x1]
      %v1924 = vld [vmem:[%s1189 + $0x30] sm:$0xe]
      %v1925 = vld [vmem:[%s1189 + $0x34] sm:$0xf]
      %v1926 = vld [vmem:[%s1189 + $0x38] sm:$0x1]
      %v1927 = vld [vmem:[%s1189 + $0x3c] sm:$0xe]
      %v1928 = vld [vmem:[%s1189 + $0x40] sm:$0xf]
      %v1929 = vld [vmem:[%s1189 + $0x44] sm:$0x1]
      %v1930 = vld [vmem:[%s1189 + $0x48] sm:$0xe]
      %v1931 = vld [vmem:[%s1189 + $0x4c] sm:$0xf]
      %v1932 = vld [vmem:[%s1189 + $0x50] sm:$0x1]
      %v1933 = vld [vmem:[%s1189 + $0x54] sm:$0xe]
      %v1934 = vld [vmem:[%s1189 + $0x58] sm:$0xf]
      %v1935 = vld [vmem:[%s1189 + $0x5c] sm:$0x1]
      %v1936 = vld [vmem:[%s1189 + $0x60] sm:$0xe]
      %v1937 = vld [vmem:[%s1189 + $0x64] sm:$0xf]
      %v1938 = vld [vmem:[%s1189 + $0x68] sm:$0x1]
      %v1939 = vld [vmem:[%s1189 + $0x6c] sm:$0xe]
      %v1940 = vld [vmem:[%s1189 + $0x70] sm:$0xf]
      %v1941 = vld [vmem:[%s1189 + $0x74] sm:$0x1]
      %v1942 = vld [vmem:[%s1189 + $0x78] sm:$0xe]
      %v1943 = vld [vmem:[%s1189 + $0x7c] sm:$0xf]
      %v1944 = vld [vmem:[%s1189 + $0x80] sm:$0x1]
      %v1945 = vld [vmem:[%s1189 + $0x84] sm:$0xe]
      %v1946 = vld [vmem:[%s1189 + $0x88] sm:$0xf]
      %v1947 = vld [vmem:[%s1189 + $0x8c] sm:$0x1]
      %v1948 = vld [vmem:[%s1189 + $0x90] sm:$0xe]
      %v1949 = vld [vmem:[%s1189 + $0x94] sm:$0xf]
      %v1950 = vld [vmem:[%s1189 + $0x98] sm:$0x1]
      %v1951 = vld [vmem:[%s1189 + $0x9c] sm:$0xe]
      %v1952 = vld [vmem:[%s1189 + $0xa0] sm:$0xf]
      %v1953 = vld [vmem:[%s1189 + $0xa4] sm:$0x1]
      %v1954 = vld [vmem:[%s1189 + $0xa8] sm:$0xe]
      %v1955 = vld [vmem:[%s1189 + $0xac] sm:$0xf]
      %v1956 = vld [vmem:[%s1189 + $0xb0] sm:$0x1]
      %v1957 = vld [vmem:[%s1189 + $0xb4] sm:$0xe]
      %v1958 = vld [vmem:[%s1189 + $0xb8] sm:$0xf]
      %v1959 = vld [vmem:[%s1189 + $0xbc] sm:$0x1]
      %v2008 = vrot.slane %v1912, 5
      %v2009 = vrot.slane %v2008, 4
      %v2010 = vrot.slane %v1913, 5
      %v2011 = vsel %vm963, %v2009, %v2010
      %v2012 = vrot.slane %v2010, 4
      %v2013 = vrot.slane %v1914, 5
      %v2014 = vsel %vm963, %v2012, %v2013
      %v2015 = vrot.slane %v1915, 5
      %v2016 = vrot.slane %v2015, 4
      %v2017 = vrot.slane %v1916, 5
      %v2018 = vsel %vm963, %v2016, %v2017
      %v2019 = vrot.slane %v2017, 4
      %v2020 = vrot.slane %v1917, 5
      %v2021 = vsel %vm963, %v2019, %v2020
      %v2022 = vrot.slane %v1918, 5
      %v2023 = vrot.slane %v2022, 4
      %v2024 = vrot.slane %v1919, 5
      %v2025 = vsel %vm963, %v2023, %v2024
      %v2026 = vrot.slane %v2024, 4
      %v2027 = vrot.slane %v1920, 5
      %v2028 = vsel %vm963, %v2026, %v2027
      %v2029 = vrot.slane %v1921, 5
      %v2030 = vrot.slane %v2029, 4
      %v2031 = vrot.slane %v1922, 5
      %v2032 = vsel %vm963, %v2030, %v2031
      %v2033 = vrot.slane %v2031, 4
      %v2034 = vrot.slane %v1923, 5
      %v2035 = vsel %vm963, %v2033, %v2034
      %v2036 = vrot.slane %v1924, 5
      %v2037 = vrot.slane %v2036, 4
      %v2038 = vrot.slane %v1925, 5
      %v2039 = vsel %vm963, %v2037, %v2038
      %v2040 = vrot.slane %v2038, 4
      %v2041 = vrot.slane %v1926, 5
      %v2042 = vsel %vm963, %v2040, %v2041
      %v2043 = vrot.slane %v1927, 5
      %v2044 = vrot.slane %v2043, 4
      %v2045 = vrot.slane %v1928, 5
      %v2046 = vsel %vm963, %v2044, %v2045
      %v2047 = vrot.slane %v2045, 4
      %v2048 = vrot.slane %v1929, 5
      %v2049 = vsel %vm963, %v2047, %v2048
      %v2050 = vrot.slane %v1930, 5
      %v2051 = vrot.slane %v2050, 4
      %v2052 = vrot.slane %v1931, 5
      %v2053 = vsel %vm963, %v2051, %v2052
      %v2054 = vrot.slane %v2052, 4
      %v2055 = vrot.slane %v1932, 5
      %v2056 = vsel %vm963, %v2054, %v2055
      %v2057 = vrot.slane %v1933, 5
      %v2058 = vrot.slane %v2057, 4
      %v2059 = vrot.slane %v1934, 5
      %v2060 = vsel %vm963, %v2058, %v2059
      %v2061 = vrot.slane %v2059, 4
      %v2062 = vrot.slane %v1935, 5
      %v2063 = vsel %vm963, %v2061, %v2062
      %v2064 = vrot.slane %v1936, 5
      %v2065 = vrot.slane %v2064, 4
      %v2066 = vrot.slane %v1937, 5
      %v2067 = vsel %vm963, %v2065, %v2066
      %v2068 = vrot.slane %v2066, 4
      %v2069 = vrot.slane %v1938, 5
      %v2070 = vsel %vm963, %v2068, %v2069
      %v2071 = vrot.slane %v1939, 5
      %v2072 = vrot.slane %v2071, 4
      %v2073 = vrot.slane %v1940, 5
      %v2074 = vsel %vm963, %v2072, %v2073
      %v2075 = vrot.slane %v2073, 4
      %v2076 = vrot.slane %v1941, 5
      %v2077 = vsel %vm963, %v2075, %v2076
      %v2078 = vrot.slane %v1942, 5
      %v2079 = vrot.slane %v2078, 4
      %v2080 = vrot.slane %v1943, 5
      %v2081 = vsel %vm963, %v2079, %v2080
      %v2082 = vrot.slane %v2080, 4
      %v2083 = vrot.slane %v1944, 5
      %v2084 = vsel %vm963, %v2082, %v2083
      %v2085 = vrot.slane %v1945, 5
      %v2086 = vrot.slane %v2085, 4
      %v2087 = vrot.slane %v1946, 5
      %v2088 = vsel %vm963, %v2086, %v2087
      %v2089 = vrot.slane %v2087, 4
      %v2090 = vrot.slane %v1947, 5
      %v2091 = vsel %vm963, %v2089, %v2090
      %v2092 = vrot.slane %v1948, 5
      %v2093 = vrot.slane %v2092, 4
      %v2094 = vrot.slane %v1949, 5
      %v2095 = vsel %vm963, %v2093, %v2094
      %v2096 = vrot.slane %v2094, 4
      %v2097 = vrot.slane %v1950, 5
      %v2098 = vsel %vm963, %v2096, %v2097
      %v2099 = vrot.slane %v1951, 5
      %v2100 = vrot.slane %v2099, 4
      %v2101 = vrot.slane %v1952, 5
      %v2102 = vsel %vm963, %v2100, %v2101
      %v2103 = vrot.slane %v2101, 4
      %v2104 = vrot.slane %v1953, 5
      %v2105 = vsel %vm963, %v2103, %v2104
      %v2106 = vrot.slane %v1954, 5
      %v2107 = vrot.slane %v2106, 4
      %v2108 = vrot.slane %v1955, 5
      %v2109 = vsel %vm963, %v2107, %v2108
      %v2110 = vrot.slane %v2108, 4
      %v2111 = vrot.slane %v1956, 5
      %v2112 = vsel %vm963, %v2110, %v2111
      %v2113 = vrot.slane %v1957, 5
      %v2114 = vrot.slane %v2113, 4
      %v2115 = vrot.slane %v1958, 5
      %v2116 = vsel %vm963, %v2114, %v2115
      %v2117 = vrot.slane %v2115, 4
      %v2118 = vrot.slane %v1959, 5
      %v2119 = vsel %vm963, %v2117, %v2118
      %v2120 = vunpack.c.l.b16 %v2011
      %v2121 = vunpack.c.l.b16 %v2014
      %v2122 = vunpack.c.l.b16 %v2018
      %v2123 = vunpack.c.l.b16 %v2021
      %v2124 = vunpack.c.l.b16 %v2025
      %v2125 = vunpack.c.l.b16 %v2028
      %v2126 = vunpack.c.l.b16 %v2032
      %v2127 = vunpack.c.l.b16 %v2035
      %v2128 = vunpack.c.l.b16 %v2039
      %v2129 = vunpack.c.l.b16 %v2042
      %v2130 = vunpack.c.l.b16 %v2046
      %v2131 = vunpack.c.l.b16 %v2049
      %v2132 = vunpack.c.l.b16 %v2053
      %v2133 = vunpack.c.l.b16 %v2056
      %v2134 = vunpack.c.l.b16 %v2060
      %v2135 = vunpack.c.l.b16 %v2063
      %v2136 = vunpack.c.l.b16 %v2067
      %v2137 = vunpack.c.l.b16 %v2070
      %v2138 = vunpack.c.l.b16 %v2074
      %v2139 = vunpack.c.l.b16 %v2077
      %v2140 = vunpack.c.l.b16 %v2081
      %v2141 = vunpack.c.l.b16 %v2084
      %v2142 = vunpack.c.l.b16 %v2088
      %v2143 = vunpack.c.l.b16 %v2091
      %v2144 = vunpack.c.l.b16 %v2095
      %v2145 = vunpack.c.l.b16 %v2098
      %v2146 = vunpack.c.l.b16 %v2102
      %v2147 = vunpack.c.l.b16 %v2105
      %v2148 = vunpack.c.l.b16 %v2109
      %v2149 = vunpack.c.l.b16 %v2112
      %v2150 = vunpack.c.l.b16 %v2116
      %v2151 = vunpack.c.l.b16 %v2119
      %v2152 = vpack.c.b16 %v2121, %v2120
      %v2153 = vpack.c.b16 %v2123, %v2122
      %v2154 = vpack.c.b16 %v2125, %v2124
      %v2155 = vpack.c.b16 %v2127, %v2126
      %v2156 = vpack.c.b16 %v2129, %v2128
      %v2157 = vpack.c.b16 %v2131, %v2130
      %v2158 = vpack.c.b16 %v2133, %v2132
      %v2159 = vpack.c.b16 %v2135, %v2134
      %v2160 = vpack.c.b16 %v2137, %v2136
      %v2161 = vpack.c.b16 %v2139, %v2138
      %v2162 = vpack.c.b16 %v2141, %v2140
      %v2163 = vpack.c.b16 %v2143, %v2142
      %v2164 = vpack.c.b16 %v2145, %v2144
      %v2165 = vpack.c.b16 %v2147, %v2146
      %v2166 = vpack.c.b16 %v2149, %v2148
      %v2167 = vpack.c.b16 %v2151, %v2150
      %2168 = vrot.lane.b32.xlu0 %v2152, 20
      %v2169 = vpop.permute.xlu0 %2168
      %2170 = vrot.lane.b32.xlu0 %v2153, 20
      %v2171 = vpop.permute.xlu0 %2170
      %2172 = vrot.lane.b32.xlu0 %v2154, 20
      %v2173 = vpop.permute.xlu0 %2172
      %2174 = vrot.lane.b32.xlu0 %v2155, 20
      %v2175 = vpop.permute.xlu0 %2174
      %2176 = vrot.lane.b32.xlu0 %v2156, 20
      %v2177 = vpop.permute.xlu0 %2176
      %2178 = vrot.lane.b32.xlu0 %v2157, 20
      %v2179 = vpop.permute.xlu0 %2178
      %2180 = vrot.lane.b32.xlu0 %v2158, 20
      %v2181 = vpop.permute.xlu0 %2180
      %2182 = vrot.lane.b32.xlu0 %v2159, 20
      %v2183 = vpop.permute.xlu0 %2182
      %2184 = vrot.lane.b32.xlu0 %v2160, 20
      %v2185 = vpop.permute.xlu0 %2184
      %2186 = vrot.lane.b32.xlu0 %v2161, 20
      %v2187 = vpop.permute.xlu0 %2186
      %2188 = vrot.lane.b32.xlu0 %v2162, 20
      %v2189 = vpop.permute.xlu0 %2188
      %2190 = vrot.lane.b32.xlu0 %v2163, 20
      %v2191 = vpop.permute.xlu0 %2190
      %2192 = vrot.lane.b32.xlu0 %v2164, 20
      %v2193 = vpop.permute.xlu0 %2192
      %2194 = vrot.lane.b32.xlu0 %v2165, 20
      %v2195 = vpop.permute.xlu0 %2194
      %2196 = vrot.lane.b32.xlu0 %v2166, 20
      %v2197 = vpop.permute.xlu0 %2196
      %2198 = vrot.lane.b32.xlu0 %v2167, 20
      %v2199 = vpop.permute.xlu0 %2198
      %vm2216 = vcmask 195744
      %2217 = vst.msk [vmem:[#allocation2] sm:$0xff] %vm2216, %v2169
      %2218 = vst.msk [vmem:[#allocation2 + $0x8] sm:$0xff] %vm2216, %v2171
      %2219 = vst.msk [vmem:[#allocation2 + $0x10] sm:$0xff] %vm2216, %v2173
      %2220 = vst.msk [vmem:[#allocation2 + $0x18] sm:$0xff] %vm2216, %v2175
      %2221 = vst.msk [vmem:[#allocation2 + $0x20] sm:$0xff] %vm2216, %v2177
      %2222 = vst.msk [vmem:[#allocation2 + $0x28] sm:$0xff] %vm2216, %v2179
      %2223 = vst.msk [vmem:[#allocation2 + $0x30] sm:$0xff] %vm2216, %v2181
      %2224 = vst.msk [vmem:[#allocation2 + $0x38] sm:$0xff] %vm2216, %v2183
      %2225 = vst.msk [vmem:[#allocation2 + $0x40] sm:$0xff] %vm2216, %v2185
      %2226 = vst.msk [vmem:[#allocation2 + $0x48] sm:$0xff] %vm2216, %v2187
      %2227 = vst.msk [vmem:[#allocation2 + $0x50] sm:$0xff] %vm2216, %v2189
      %2228 = vst.msk [vmem:[#allocation2 + $0x58] sm:$0xff] %vm2216, %v2191
      %2229 = vst.msk [vmem:[#allocation2 + $0x60] sm:$0xff] %vm2216, %v2193
      %2230 = vst.msk [vmem:[#allocation2 + $0x68] sm:$0xff] %vm2216, %v2195
      %2231 = vst.msk [vmem:[#allocation2 + $0x70] sm:$0xff] %vm2216, %v2197
      %2232 = vst.msk [vmem:[#allocation2 + $0x78] sm:$0xff] %vm2216, %v2199
      %s2233 = scalar_lea.vmem %s165, 24
      %v2234 = vld [vmem:[%s2233] sm:$0xf]
      %v2235 = vld [vmem:[%s2233 + $0x4] sm:$0xf]
      %v2236 = vld [vmem:[%s2233 + $0xc] sm:$0xf]
      %v2237 = vld [vmem:[%s2233 + $0x10] sm:$0xf]
      %v2238 = vld [vmem:[%s2233 + $0x18] sm:$0xf]
      %v2239 = vld [vmem:[%s2233 + $0x1c] sm:$0xf]
      %v2240 = vld [vmem:[%s2233 + $0x24] sm:$0xf]
      %v2241 = vld [vmem:[%s2233 + $0x28] sm:$0xf]
      %v2242 = vld [vmem:[%s2233 + $0x30] sm:$0xf]
      %v2243 = vld [vmem:[%s2233 + $0x34] sm:$0xf]
      %v2244 = vld [vmem:[%s2233 + $0x3c] sm:$0xf]
      %v2245 = vld [vmem:[%s2233 + $0x40] sm:$0xf]
      %v2246 = vld [vmem:[%s2233 + $0x48] sm:$0xf]
      %v2247 = vld [vmem:[%s2233 + $0x4c] sm:$0xf]
      %v2248 = vld [vmem:[%s2233 + $0x54] sm:$0xf]
      %v2249 = vld [vmem:[%s2233 + $0x58] sm:$0xf]
      %v2250 = vld [vmem:[%s2233 + $0x60] sm:$0xf]
      %v2251 = vld [vmem:[%s2233 + $0x64] sm:$0xf]
      %v2252 = vld [vmem:[%s2233 + $0x6c] sm:$0xf]
      %v2253 = vld [vmem:[%s2233 + $0x70] sm:$0xf]
      %v2254 = vld [vmem:[%s2233 + $0x78] sm:$0xf]
      %v2255 = vld [vmem:[%s2233 + $0x7c] sm:$0xf]
      %v2256 = vld [vmem:[%s2233 + $0x84] sm:$0xf]
      %v2257 = vld [vmem:[%s2233 + $0x88] sm:$0xf]
      %v2258 = vld [vmem:[%s2233 + $0x90] sm:$0xf]
      %v2259 = vld [vmem:[%s2233 + $0x94] sm:$0xf]
      %v2260 = vld [vmem:[%s2233 + $0x9c] sm:$0xf]
      %v2261 = vld [vmem:[%s2233 + $0xa0] sm:$0xf]
      %v2262 = vld [vmem:[%s2233 + $0xa8] sm:$0xf]
      %v2263 = vld [vmem:[%s2233 + $0xac] sm:$0xf]
      %v2264 = vld [vmem:[%s2233 + $0xb4] sm:$0xf]
      %v2265 = vld [vmem:[%s2233 + $0xb8] sm:$0xf]
      %v2298 = vunpack.c.l.b16 %v2234
      %v2299 = vunpack.c.l.b16 %v2235
      %v2300 = vunpack.c.l.b16 %v2236
      %v2301 = vunpack.c.l.b16 %v2237
      %v2302 = vunpack.c.l.b16 %v2238
      %v2303 = vunpack.c.l.b16 %v2239
      %v2304 = vunpack.c.l.b16 %v2240
      %v2305 = vunpack.c.l.b16 %v2241
      %v2306 = vunpack.c.l.b16 %v2242
      %v2307 = vunpack.c.l.b16 %v2243
      %v2308 = vunpack.c.l.b16 %v2244
      %v2309 = vunpack.c.l.b16 %v2245
      %v2310 = vunpack.c.l.b16 %v2246
      %v2311 = vunpack.c.l.b16 %v2247
      %v2312 = vunpack.c.l.b16 %v2248
      %v2313 = vunpack.c.l.b16 %v2249
      %v2314 = vunpack.c.l.b16 %v2250
      %v2315 = vunpack.c.l.b16 %v2251
      %v2316 = vunpack.c.l.b16 %v2252
      %v2317 = vunpack.c.l.b16 %v2253
      %v2318 = vunpack.c.l.b16 %v2254
      %v2319 = vunpack.c.l.b16 %v2255
      %v2320 = vunpack.c.l.b16 %v2256
      %v2321 = vunpack.c.l.b16 %v2257
      %v2322 = vunpack.c.l.b16 %v2258
      %v2323 = vunpack.c.l.b16 %v2259
      %v2324 = vunpack.c.l.b16 %v2260
      %v2325 = vunpack.c.l.b16 %v2261
      %v2326 = vunpack.c.l.b16 %v2262
      %v2327 = vunpack.c.l.b16 %v2263
      %v2328 = vunpack.c.l.b16 %v2264
      %v2329 = vunpack.c.l.b16 %v2265
      %v2330 = vpack.c.b16 %v2299, %v2298
      %v2331 = vpack.c.b16 %v2301, %v2300
      %v2332 = vpack.c.b16 %v2303, %v2302
      %v2333 = vpack.c.b16 %v2305, %v2304
      %v2334 = vpack.c.b16 %v2307, %v2306
      %v2335 = vpack.c.b16 %v2309, %v2308
      %v2336 = vpack.c.b16 %v2311, %v2310
      %v2337 = vpack.c.b16 %v2313, %v2312
      %v2338 = vpack.c.b16 %v2315, %v2314
      %v2339 = vpack.c.b16 %v2317, %v2316
      %v2340 = vpack.c.b16 %v2319, %v2318
      %v2341 = vpack.c.b16 %v2321, %v2320
      %v2342 = vpack.c.b16 %v2323, %v2322
      %v2343 = vpack.c.b16 %v2325, %v2324
      %v2344 = vpack.c.b16 %v2327, %v2326
      %v2345 = vpack.c.b16 %v2329, %v2328
      %2346 = vrot.lane.b32.xlu0 %v2330, 24
      %v2347 = vpop.permute.xlu0 %2346
      %2348 = vrot.lane.b32.xlu0 %v2331, 24
      %v2349 = vpop.permute.xlu0 %2348
      %2350 = vrot.lane.b32.xlu0 %v2332, 24
      %v2351 = vpop.permute.xlu0 %2350
      %2352 = vrot.lane.b32.xlu0 %v2333, 24
      %v2353 = vpop.permute.xlu0 %2352
      %2354 = vrot.lane.b32.xlu0 %v2334, 24
      %v2355 = vpop.permute.xlu0 %2354
      %2356 = vrot.lane.b32.xlu0 %v2335, 24
      %v2357 = vpop.permute.xlu0 %2356
      %2358 = vrot.lane.b32.xlu0 %v2336, 24
      %v2359 = vpop.permute.xlu0 %2358
      %2360 = vrot.lane.b32.xlu0 %v2337, 24
      %v2361 = vpop.permute.xlu0 %2360
      %2362 = vrot.lane.b32.xlu0 %v2338, 24
      %v2363 = vpop.permute.xlu0 %2362
      %2364 = vrot.lane.b32.xlu0 %v2339, 24
      %v2365 = vpop.permute.xlu0 %2364
      %2366 = vrot.lane.b32.xlu0 %v2340, 24
      %v2367 = vpop.permute.xlu0 %2366
      %2368 = vrot.lane.b32.xlu0 %v2341, 24
      %v2369 = vpop.permute.xlu0 %2368
      %2370 = vrot.lane.b32.xlu0 %v2342, 24
      %v2371 = vpop.permute.xlu0 %2370
      %2372 = vrot.lane.b32.xlu0 %v2343, 24
      %v2373 = vpop.permute.xlu0 %2372
      %2374 = vrot.lane.b32.xlu0 %v2344, 24
      %v2375 = vpop.permute.xlu0 %2374
      %2376 = vrot.lane.b32.xlu0 %v2345, 24
      %v2377 = vpop.permute.xlu0 %2376
      %vm2394 = vcmask 228544
      %2395 = vst.msk [vmem:[#allocation2] sm:$0xff] %vm2394, %v2347
      %2396 = vst.msk [vmem:[#allocation2 + $0x8] sm:$0xff] %vm2394, %v2349
      %2397 = vst.msk [vmem:[#allocation2 + $0x10] sm:$0xff] %vm2394, %v2351
      %2398 = vst.msk [vmem:[#allocation2 + $0x18] sm:$0xff] %vm2394, %v2353
      %2399 = vst.msk [vmem:[#allocation2 + $0x20] sm:$0xff] %vm2394, %v2355
      %2400 = vst.msk [vmem:[#allocation2 + $0x28] sm:$0xff] %vm2394, %v2357
      %2401 = vst.msk [vmem:[#allocation2 + $0x30] sm:$0xff] %vm2394, %v2359
      %2402 = vst.msk [vmem:[#allocation2 + $0x38] sm:$0xff] %vm2394, %v2361
      %2403 = vst.msk [vmem:[#allocation2 + $0x40] sm:$0xff] %vm2394, %v2363
      %2404 = vst.msk [vmem:[#allocation2 + $0x48] sm:$0xff] %vm2394, %v2365
      %2405 = vst.msk [vmem:[#allocation2 + $0x50] sm:$0xff] %vm2394, %v2367
      %2406 = vst.msk [vmem:[#allocation2 + $0x58] sm:$0xff] %vm2394, %v2369
      %2407 = vst.msk [vmem:[#allocation2 + $0x60] sm:$0xff] %vm2394, %v2371
      %2408 = vst.msk [vmem:[#allocation2 + $0x68] sm:$0xff] %vm2394, %v2373
      %2409 = vst.msk [vmem:[#allocation2 + $0x70] sm:$0xff] %vm2394, %v2375
      %2410 = vst.msk [vmem:[#allocation2 + $0x78] sm:$0xff] %vm2394, %v2377
      %v2411 = vld [vmem:[%s2233] sm:$0xf]
      %v2412 = vld [vmem:[%s2233 + $0x4] sm:$0xf]
      %v2413 = vld [vmem:[%s2233 + $0x8] sm:$0x1]
      %v2414 = vld [vmem:[%s2233 + $0xc] sm:$0xf]
      %v2415 = vld [vmem:[%s2233 + $0x10] sm:$0xf]
      %v2416 = vld [vmem:[%s2233 + $0x14] sm:$0x1]
      %v2417 = vld [vmem:[%s2233 + $0x18] sm:$0xf]
      %v2418 = vld [vmem:[%s2233 + $0x1c] sm:$0xf]
      %v2419 = vld [vmem:[%s2233 + $0x20] sm:$0x1]
      %v2420 = vld [vmem:[%s2233 + $0x24] sm:$0xf]
      %v2421 = vld [vmem:[%s2233 + $0x28] sm:$0xf]
      %v2422 = vld [vmem:[%s2233 + $0x2c] sm:$0x1]
      %v2423 = vld [vmem:[%s2233 + $0x30] sm:$0xf]
      %v2424 = vld [vmem:[%s2233 + $0x34] sm:$0xf]
      %v2425 = vld [vmem:[%s2233 + $0x38] sm:$0x1]
      %v2426 = vld [vmem:[%s2233 + $0x3c] sm:$0xf]
      %v2427 = vld [vmem:[%s2233 + $0x40] sm:$0xf]
      %v2428 = vld [vmem:[%s2233 + $0x44] sm:$0x1]
      %v2429 = vld [vmem:[%s2233 + $0x48] sm:$0xf]
      %v2430 = vld [vmem:[%s2233 + $0x4c] sm:$0xf]
      %v2431 = vld [vmem:[%s2233 + $0x50] sm:$0x1]
      %v2432 = vld [vmem:[%s2233 + $0x54] sm:$0xf]
      %v2433 = vld [vmem:[%s2233 + $0x58] sm:$0xf]
      %v2434 = vld [vmem:[%s2233 + $0x5c] sm:$0x1]
      %v2435 = vld [vmem:[%s2233 + $0x60] sm:$0xf]
      %v2436 = vld [vmem:[%s2233 + $0x64] sm:$0xf]
      %v2437 = vld [vmem:[%s2233 + $0x68] sm:$0x1]
      %v2438 = vld [vmem:[%s2233 + $0x6c] sm:$0xf]
      %v2439 = vld [vmem:[%s2233 + $0x70] sm:$0xf]
      %v2440 = vld [vmem:[%s2233 + $0x74] sm:$0x1]
      %v2441 = vld [vmem:[%s2233 + $0x78] sm:$0xf]
      %v2442 = vld [vmem:[%s2233 + $0x7c] sm:$0xf]
      %v2443 = vld [vmem:[%s2233 + $0x80] sm:$0x1]
      %v2444 = vld [vmem:[%s2233 + $0x84] sm:$0xf]
      %v2445 = vld [vmem:[%s2233 + $0x88] sm:$0xf]
      %v2446 = vld [vmem:[%s2233 + $0x8c] sm:$0x1]
      %v2447 = vld [vmem:[%s2233 + $0x90] sm:$0xf]
      %v2448 = vld [vmem:[%s2233 + $0x94] sm:$0xf]
      %v2449 = vld [vmem:[%s2233 + $0x98] sm:$0x1]
      %v2450 = vld [vmem:[%s2233 + $0x9c] sm:$0xf]
      %v2451 = vld [vmem:[%s2233 + $0xa0] sm:$0xf]
      %v2452 = vld [vmem:[%s2233 + $0xa4] sm:$0x1]
      %v2453 = vld [vmem:[%s2233 + $0xa8] sm:$0xf]
      %v2454 = vld [vmem:[%s2233 + $0xac] sm:$0xf]
      %v2455 = vld [vmem:[%s2233 + $0xb0] sm:$0x1]
      %v2456 = vld [vmem:[%s2233 + $0xb4] sm:$0xf]
      %v2457 = vld [vmem:[%s2233 + $0xb8] sm:$0xf]
      %v2458 = vld [vmem:[%s2233 + $0xbc] sm:$0x1]
      %v2460 = vshrl.u32 %v2411, 16
      %v2462 = vrot.slane %v2460, 4
      %v2463 = vshll.u32 %v2411, 16
      %v2465 = vrot.slane %v2463, 5
      %v2466 = vor.u32 %v2462, %v2465
      %v2467 = vrot.slane %v2466, 4
      %v2469 = vshll.u32 %v2412, 16
      %v2471 = vrot.slane %v2469, 5
      %v2472 = vsel %vm367, %v2467, %v2471
      %v2473 = vshrl.u32 %v2412, 16
      %v2475 = vrot.slane %v2473, 4
      %v2476 = vor.u32 %v2475, %v2471
      %v2477 = vrot.slane %v2476, 4
      %v2479 = vshll.u32 %v2413, 16
      %v2481 = vrot.slane %v2479, 5
      %v2482 = vsel %vm367, %v2477, %v2481
      %v2484 = vshrl.u32 %v2414, 16
      %v2486 = vrot.slane %v2484, 4
      %v2487 = vshll.u32 %v2414, 16
      %v2489 = vrot.slane %v2487, 5
      %v2490 = vor.u32 %v2486, %v2489
      %v2491 = vrot.slane %v2490, 4
      %v2493 = vshll.u32 %v2415, 16
      %v2495 = vrot.slane %v2493, 5
      %v2496 = vsel %vm367, %v2491, %v2495
      %v2497 = vshrl.u32 %v2415, 16
      %v2499 = vrot.slane %v2497, 4
      %v2500 = vor.u32 %v2499, %v2495
      %v2501 = vrot.slane %v2500, 4
      %v2503 = vshll.u32 %v2416, 16
      %v2505 = vrot.slane %v2503, 5
      %v2506 = vsel %vm367, %v2501, %v2505
      %v2508 = vshrl.u32 %v2417, 16
      %v2510 = vrot.slane %v2508, 4
      %v2511 = vshll.u32 %v2417, 16
      %v2513 = vrot.slane %v2511, 5
      %v2514 = vor.u32 %v2510, %v2513
      %v2515 = vrot.slane %v2514, 4
      %v2517 = vshll.u32 %v2418, 16
      %v2519 = vrot.slane %v2517, 5
      %v2520 = vsel %vm367, %v2515, %v2519
      %v2521 = vshrl.u32 %v2418, 16
      %v2523 = vrot.slane %v2521, 4
      %v2524 = vor.u32 %v2523, %v2519
      %v2525 = vrot.slane %v2524, 4
      %v2527 = vshll.u32 %v2419, 16
      %v2529 = vrot.slane %v2527, 5
      %v2530 = vsel %vm367, %v2525, %v2529
      %v2532 = vshrl.u32 %v2420, 16
      %v2534 = vrot.slane %v2532, 4
      %v2535 = vshll.u32 %v2420, 16
      %v2537 = vrot.slane %v2535, 5
      %v2538 = vor.u32 %v2534, %v2537
      %v2539 = vrot.slane %v2538, 4
      %v2541 = vshll.u32 %v2421, 16
      %v2543 = vrot.slane %v2541, 5
      %v2544 = vsel %vm367, %v2539, %v2543
      %v2545 = vshrl.u32 %v2421, 16
      %v2547 = vrot.slane %v2545, 4
      %v2548 = vor.u32 %v2547, %v2543
      %v2549 = vrot.slane %v2548, 4
      %v2551 = vshll.u32 %v2422, 16
      %v2553 = vrot.slane %v2551, 5
      %v2554 = vsel %vm367, %v2549, %v2553
      %v2556 = vshrl.u32 %v2423, 16
      %v2558 = vrot.slane %v2556, 4
      %v2559 = vshll.u32 %v2423, 16
      %v2561 = vrot.slane %v2559, 5
      %v2562 = vor.u32 %v2558, %v2561
      %v2563 = vrot.slane %v2562, 4
      %v2565 = vshll.u32 %v2424, 16
      %v2567 = vrot.slane %v2565, 5
      %v2568 = vsel %vm367, %v2563, %v2567
      %v2569 = vshrl.u32 %v2424, 16
      %v2571 = vrot.slane %v2569, 4
      %v2572 = vor.u32 %v2571, %v2567
      %v2573 = vrot.slane %v2572, 4
      %v2575 = vshll.u32 %v2425, 16
      %v2577 = vrot.slane %v2575, 5
      %v2578 = vsel %vm367, %v2573, %v2577
      %v2580 = vshrl.u32 %v2426, 16
      %v2582 = vrot.slane %v2580, 4
      %v2583 = vshll.u32 %v2426, 16
      %v2585 = vrot.slane %v2583, 5
      %v2586 = vor.u32 %v2582, %v2585
      %v2587 = vrot.slane %v2586, 4
      %v2589 = vshll.u32 %v2427, 16
      %v2591 = vrot.slane %v2589, 5
      %v2592 = vsel %vm367, %v2587, %v2591
      %v2593 = vshrl.u32 %v2427, 16
      %v2595 = vrot.slane %v2593, 4
      %v2596 = vor.u32 %v2595, %v2591
      %v2597 = vrot.slane %v2596, 4
      %v2599 = vshll.u32 %v2428, 16
      %v2601 = vrot.slane %v2599, 5
      %v2602 = vsel %vm367, %v2597, %v2601
      %v2604 = vshrl.u32 %v2429, 16
      %v2606 = vrot.slane %v2604, 4
      %v2607 = vshll.u32 %v2429, 16
      %v2609 = vrot.slane %v2607, 5
      %v2610 = vor.u32 %v2606, %v2609
      %v2611 = vrot.slane %v2610, 4
      %v2613 = vshll.u32 %v2430, 16
      %v2615 = vrot.slane %v2613, 5
      %v2616 = vsel %vm367, %v2611, %v2615
      %v2617 = vshrl.u32 %v2430, 16
      %v2619 = vrot.slane %v2617, 4
      %v2620 = vor.u32 %v2619, %v2615
      %v2621 = vrot.slane %v2620, 4
      %v2623 = vshll.u32 %v2431, 16
      %v2625 = vrot.slane %v2623, 5
      %v2626 = vsel %vm367, %v2621, %v2625
      %v2628 = vshrl.u32 %v2432, 16
      %v2630 = vrot.slane %v2628, 4
      %v2631 = vshll.u32 %v2432, 16
      %v2633 = vrot.slane %v2631, 5
      %v2634 = vor.u32 %v2630, %v2633
      %v2635 = vrot.slane %v2634, 4
      %v2637 = vshll.u32 %v2433, 16
      %v2639 = vrot.slane %v2637, 5
      %v2640 = vsel %vm367, %v2635, %v2639
      %v2641 = vshrl.u32 %v2433, 16
      %v2643 = vrot.slane %v2641, 4
      %v2644 = vor.u32 %v2643, %v2639
      %v2645 = vrot.slane %v2644, 4
      %v2647 = vshll.u32 %v2434, 16
      %v2649 = vrot.slane %v2647, 5
      %v2650 = vsel %vm367, %v2645, %v2649
      %v2652 = vshrl.u32 %v2435, 16
      %v2654 = vrot.slane %v2652, 4
      %v2655 = vshll.u32 %v2435, 16
      %v2657 = vrot.slane %v2655, 5
      %v2658 = vor.u32 %v2654, %v2657
      %v2659 = vrot.slane %v2658, 4
      %v2661 = vshll.u32 %v2436, 16
      %v2663 = vrot.slane %v2661, 5
      %v2664 = vsel %vm367, %v2659, %v2663
      %v2665 = vshrl.u32 %v2436, 16
      %v2667 = vrot.slane %v2665, 4
      %v2668 = vor.u32 %v2667, %v2663
      %v2669 = vrot.slane %v2668, 4
      %v2671 = vshll.u32 %v2437, 16
      %v2673 = vrot.slane %v2671, 5
      %v2674 = vsel %vm367, %v2669, %v2673
      %v2676 = vshrl.u32 %v2438, 16
      %v2678 = vrot.slane %v2676, 4
      %v2679 = vshll.u32 %v2438, 16
      %v2681 = vrot.slane %v2679, 5
      %v2682 = vor.u32 %v2678, %v2681
      %v2683 = vrot.slane %v2682, 4
      %v2685 = vshll.u32 %v2439, 16
      %v2687 = vrot.slane %v2685, 5
      %v2688 = vsel %vm367, %v2683, %v2687
      %v2689 = vshrl.u32 %v2439, 16
      %v2691 = vrot.slane %v2689, 4
      %v2692 = vor.u32 %v2691, %v2687
      %v2693 = vrot.slane %v2692, 4
      %v2695 = vshll.u32 %v2440, 16
      %v2697 = vrot.slane %v2695, 5
      %v2698 = vsel %vm367, %v2693, %v2697
      %v2700 = vshrl.u32 %v2441, 16
      %v2702 = vrot.slane %v2700, 4
      %v2703 = vshll.u32 %v2441, 16
      %v2705 = vrot.slane %v2703, 5
      %v2706 = vor.u32 %v2702, %v2705
      %v2707 = vrot.slane %v2706, 4
      %v2709 = vshll.u32 %v2442, 16
      %v2711 = vrot.slane %v2709, 5
      %v2712 = vsel %vm367, %v2707, %v2711
      %v2713 = vshrl.u32 %v2442, 16
      %v2715 = vrot.slane %v2713, 4
      %v2716 = vor.u32 %v2715, %v2711
      %v2717 = vrot.slane %v2716, 4
      %v2719 = vshll.u32 %v2443, 16
      %v2721 = vrot.slane %v2719, 5
      %v2722 = vsel %vm367, %v2717, %v2721
      %v2724 = vshrl.u32 %v2444, 16
      %v2726 = vrot.slane %v2724, 4
      %v2727 = vshll.u32 %v2444, 16
      %v2729 = vrot.slane %v2727, 5
      %v2730 = vor.u32 %v2726, %v2729
      %v2731 = vrot.slane %v2730, 4
      %v2733 = vshll.u32 %v2445, 16
      %v2735 = vrot.slane %v2733, 5
      %v2736 = vsel %vm367, %v2731, %v2735
      %v2737 = vshrl.u32 %v2445, 16
      %v2739 = vrot.slane %v2737, 4
      %v2740 = vor.u32 %v2739, %v2735
      %v2741 = vrot.slane %v2740, 4
      %v2743 = vshll.u32 %v2446, 16
      %v2745 = vrot.slane %v2743, 5
      %v2746 = vsel %vm367, %v2741, %v2745
      %v2748 = vshrl.u32 %v2447, 16
      %v2750 = vrot.slane %v2748, 4
      %v2751 = vshll.u32 %v2447, 16
      %v2753 = vrot.slane %v2751, 5
      %v2754 = vor.u32 %v2750, %v2753
      %v2755 = vrot.slane %v2754, 4
      %v2757 = vshll.u32 %v2448, 16
      %v2759 = vrot.slane %v2757, 5
      %v2760 = vsel %vm367, %v2755, %v2759
      %v2761 = vshrl.u32 %v2448, 16
      %v2763 = vrot.slane %v2761, 4
      %v2764 = vor.u32 %v2763, %v2759
      %v2765 = vrot.slane %v2764, 4
      %v2767 = vshll.u32 %v2449, 16
      %v2769 = vrot.slane %v2767, 5
      %v2770 = vsel %vm367, %v2765, %v2769
      %v2772 = vshrl.u32 %v2450, 16
      %v2774 = vrot.slane %v2772, 4
      %v2775 = vshll.u32 %v2450, 16
      %v2777 = vrot.slane %v2775, 5
      %v2778 = vor.u32 %v2774, %v2777
      %v2779 = vrot.slane %v2778, 4
      %v2781 = vshll.u32 %v2451, 16
      %v2783 = vrot.slane %v2781, 5
      %v2784 = vsel %vm367, %v2779, %v2783
      %v2785 = vshrl.u32 %v2451, 16
      %v2787 = vrot.slane %v2785, 4
      %v2788 = vor.u32 %v2787, %v2783
      %v2789 = vrot.slane %v2788, 4
      %v2791 = vshll.u32 %v2452, 16
      %v2793 = vrot.slane %v2791, 5
      %v2794 = vsel %vm367, %v2789, %v2793
      %v2796 = vshrl.u32 %v2453, 16
      %v2798 = vrot.slane %v2796, 4
      %v2799 = vshll.u32 %v2453, 16
      %v2801 = vrot.slane %v2799, 5
      %v2802 = vor.u32 %v2798, %v2801
      %v2803 = vrot.slane %v2802, 4
      %v2805 = vshll.u32 %v2454, 16
      %v2807 = vrot.slane %v2805, 5
      %v2808 = vsel %vm367, %v2803, %v2807
      %v2809 = vshrl.u32 %v2454, 16
      %v2811 = vrot.slane %v2809, 4
      %v2812 = vor.u32 %v2811, %v2807
      %v2813 = vrot.slane %v2812, 4
      %v2815 = vshll.u32 %v2455, 16
      %v2817 = vrot.slane %v2815, 5
      %v2818 = vsel %vm367, %v2813, %v2817
      %v2820 = vshrl.u32 %v2456, 16
      %v2822 = vrot.slane %v2820, 4
      %v2823 = vshll.u32 %v2456, 16
      %v2825 = vrot.slane %v2823, 5
      %v2826 = vor.u32 %v2822, %v2825
      %v2827 = vrot.slane %v2826, 4
      %v2829 = vshll.u32 %v2457, 16
      %v2831 = vrot.slane %v2829, 5
      %v2832 = vsel %vm367, %v2827, %v2831
      %v2833 = vshrl.u32 %v2457, 16
      %v2835 = vrot.slane %v2833, 4
      %v2836 = vor.u32 %v2835, %v2831
      %v2837 = vrot.slane %v2836, 4
      %v2839 = vshll.u32 %v2458, 16
      %v2841 = vrot.slane %v2839, 5
      %v2842 = vsel %vm367, %v2837, %v2841
      %v2843 = vunpack.c.l.b16 %v2472
      %v2844 = vunpack.c.l.b16 %v2482
      %v2845 = vunpack.c.l.b16 %v2496
      %v2846 = vunpack.c.l.b16 %v2506
      %v2847 = vunpack.c.l.b16 %v2520
      %v2848 = vunpack.c.l.b16 %v2530
      %v2849 = vunpack.c.l.b16 %v2544
      %v2850 = vunpack.c.l.b16 %v2554
      %v2851 = vunpack.c.l.b16 %v2568
      %v2852 = vunpack.c.l.b16 %v2578
      %v2853 = vunpack.c.l.b16 %v2592
      %v2854 = vunpack.c.l.b16 %v2602
      %v2855 = vunpack.c.l.b16 %v2616
      %v2856 = vunpack.c.l.b16 %v2626
      %v2857 = vunpack.c.l.b16 %v2640
      %v2858 = vunpack.c.l.b16 %v2650
      %v2859 = vunpack.c.l.b16 %v2664
      %v2860 = vunpack.c.l.b16 %v2674
      %v2861 = vunpack.c.l.b16 %v2688
      %v2862 = vunpack.c.l.b16 %v2698
      %v2863 = vunpack.c.l.b16 %v2712
      %v2864 = vunpack.c.l.b16 %v2722
      %v2865 = vunpack.c.l.b16 %v2736
      %v2866 = vunpack.c.l.b16 %v2746
      %v2867 = vunpack.c.l.b16 %v2760
      %v2868 = vunpack.c.l.b16 %v2770
      %v2869 = vunpack.c.l.b16 %v2784
      %v2870 = vunpack.c.l.b16 %v2794
      %v2871 = vunpack.c.l.b16 %v2808
      %v2872 = vunpack.c.l.b16 %v2818
      %v2873 = vunpack.c.l.b16 %v2832
      %v2874 = vunpack.c.l.b16 %v2842
      %v2875 = vpack.c.b16 %v2844, %v2843
      %v2876 = vpack.c.b16 %v2846, %v2845
      %v2877 = vpack.c.b16 %v2848, %v2847
      %v2878 = vpack.c.b16 %v2850, %v2849
      %v2879 = vpack.c.b16 %v2852, %v2851
      %v2880 = vpack.c.b16 %v2854, %v2853
      %v2881 = vpack.c.b16 %v2856, %v2855
      %v2882 = vpack.c.b16 %v2858, %v2857
      %v2883 = vpack.c.b16 %v2860, %v2859
      %v2884 = vpack.c.b16 %v2862, %v2861
      %v2885 = vpack.c.b16 %v2864, %v2863
      %v2886 = vpack.c.b16 %v2866, %v2865
      %v2887 = vpack.c.b16 %v2868, %v2867
      %v2888 = vpack.c.b16 %v2870, %v2869
      %v2889 = vpack.c.b16 %v2872, %v2871
      %v2890 = vpack.c.b16 %v2874, %v2873
      %2891 = vrot.lane.b32.xlu0 %v2875, 28
      %v2892 = vpop.permute.xlu0 %2891
      %2893 = vrot.lane.b32.xlu0 %v2876, 28
      %v2894 = vpop.permute.xlu0 %2893
      %2895 = vrot.lane.b32.xlu0 %v2877, 28
      %v2896 = vpop.permute.xlu0 %2895
      %2897 = vrot.lane.b32.xlu0 %v2878, 28
      %v2898 = vpop.permute.xlu0 %2897
      %2899 = vrot.lane.b32.xlu0 %v2879, 28
      %v2900 = vpop.permute.xlu0 %2899
      %2901 = vrot.lane.b32.xlu0 %v2880, 28
      %v2902 = vpop.permute.xlu0 %2901
      %2903 = vrot.lane.b32.xlu0 %v2881, 28
      %v2904 = vpop.permute.xlu0 %2903
      %2905 = vrot.lane.b32.xlu0 %v2882, 28
      %v2906 = vpop.permute.xlu0 %2905
      %2907 = vrot.lane.b32.xlu0 %v2883, 28
      %v2908 = vpop.permute.xlu0 %2907
      %2909 = vrot.lane.b32.xlu0 %v2884, 28
      %v2910 = vpop.permute.xlu0 %2909
      %2911 = vrot.lane.b32.xlu0 %v2885, 28
      %v2912 = vpop.permute.xlu0 %2911
      %2913 = vrot.lane.b32.xlu0 %v2886, 28
      %v2914 = vpop.permute.xlu0 %2913
      %2915 = vrot.lane.b32.xlu0 %v2887, 28
      %v2916 = vpop.permute.xlu0 %2915
      %2917 = vrot.lane.b32.xlu0 %v2888, 28
      %v2918 = vpop.permute.xlu0 %2917
      %2919 = vrot.lane.b32.xlu0 %v2889, 28
      %v2920 = vpop.permute.xlu0 %2919
      %2921 = vrot.lane.b32.xlu0 %v2890, 28
      %v2922 = vpop.permute.xlu0 %2921
      %vm2939 = vcmask 261344
      %2940 = vst.msk [vmem:[#allocation2] sm:$0xff] %vm2939, %v2892
      %2941 = vst.msk [vmem:[#allocation2 + $0x8] sm:$0xff] %vm2939, %v2894
      %2942 = vst.msk [vmem:[#allocation2 + $0x10] sm:$0xff] %vm2939, %v2896
      %2943 = vst.msk [vmem:[#allocation2 + $0x18] sm:$0xff] %vm2939, %v2898
      %2944 = vst.msk [vmem:[#allocation2 + $0x20] sm:$0xff] %vm2939, %v2900
      %2945 = vst.msk [vmem:[#allocation2 + $0x28] sm:$0xff] %vm2939, %v2902
      %2946 = vst.msk [vmem:[#allocation2 + $0x30] sm:$0xff] %vm2939, %v2904
      %2947 = vst.msk [vmem:[#allocation2 + $0x38] sm:$0xff] %vm2939, %v2906
      %2948 = vst.msk [vmem:[#allocation2 + $0x40] sm:$0xff] %vm2939, %v2908
      %2949 = vst.msk [vmem:[#allocation2 + $0x48] sm:$0xff] %vm2939, %v2910
      %2950 = vst.msk [vmem:[#allocation2 + $0x50] sm:$0xff] %vm2939, %v2912
      %2951 = vst.msk [vmem:[#allocation2 + $0x58] sm:$0xff] %vm2939, %v2914
      %2952 = vst.msk [vmem:[#allocation2 + $0x60] sm:$0xff] %vm2939, %v2916
      %2953 = vst.msk [vmem:[#allocation2 + $0x68] sm:$0xff] %vm2939, %v2918
      %2954 = vst.msk [vmem:[#allocation2 + $0x70] sm:$0xff] %vm2939, %v2920
      %2955 = vst.msk [vmem:[#allocation2 + $0x78] sm:$0xff] %vm2939, %v2922
      %v2956 = vld [vmem:[%s2233] sm:$0xe]
      %v2957 = vld [vmem:[%s2233 + $0x4] sm:$0xf]
      %v2958 = vld [vmem:[%s2233 + $0x8] sm:$0x1]
      %v2959 = vld [vmem:[%s2233 + $0xc] sm:$0xe]
      %v2960 = vld [vmem:[%s2233 + $0x10] sm:$0xf]
      %v2961 = vld [vmem:[%s2233 + $0x14] sm:$0x1]
      %v2962 = vld [vmem:[%s2233 + $0x18] sm:$0xe]
      %v2963 = vld [vmem:[%s2233 + $0x1c] sm:$0xf]
      %v2964 = vld [vmem:[%s2233 + $0x20] sm:$0x1]
      %v2965 = vld [vmem:[%s2233 + $0x24] sm:$0xe]
      %v2966 = vld [vmem:[%s2233 + $0x28] sm:$0xf]
      %v2967 = vld [vmem:[%s2233 + $0x2c] sm:$0x1]
      %v2968 = vld [vmem:[%s2233 + $0x30] sm:$0xe]
      %v2969 = vld [vmem:[%s2233 + $0x34] sm:$0xf]
      %v2970 = vld [vmem:[%s2233 + $0x38] sm:$0x1]
      %v2971 = vld [vmem:[%s2233 + $0x3c] sm:$0xe]
      %v2972 = vld [vmem:[%s2233 + $0x40] sm:$0xf]
      %v2973 = vld [vmem:[%s2233 + $0x44] sm:$0x1]
      %v2974 = vld [vmem:[%s2233 + $0x48] sm:$0xe]
      %v2975 = vld [vmem:[%s2233 + $0x4c] sm:$0xf]
      %v2976 = vld [vmem:[%s2233 + $0x50] sm:$0x1]
      %v2977 = vld [vmem:[%s2233 + $0x54] sm:$0xe]
      %v2978 = vld [vmem:[%s2233 + $0x58] sm:$0xf]
      %v2979 = vld [vmem:[%s2233 + $0x5c] sm:$0x1]
      %v2980 = vld [vmem:[%s2233 + $0x60] sm:$0xe]
      %v2981 = vld [vmem:[%s2233 + $0x64] sm:$0xf]
      %v2982 = vld [vmem:[%s2233 + $0x68] sm:$0x1]
      %v2983 = vld [vmem:[%s2233 + $0x6c] sm:$0xe]
      %v2984 = vld [vmem:[%s2233 + $0x70] sm:$0xf]
      %v2985 = vld [vmem:[%s2233 + $0x74] sm:$0x1]
      %v2986 = vld [vmem:[%s2233 + $0x78] sm:$0xe]
      %v2987 = vld [vmem:[%s2233 + $0x7c] sm:$0xf]
      %v2988 = vld [vmem:[%s2233 + $0x80] sm:$0x1]
      %v2989 = vld [vmem:[%s2233 + $0x84] sm:$0xe]
      %v2990 = vld [vmem:[%s2233 + $0x88] sm:$0xf]
      %v2991 = vld [vmem:[%s2233 + $0x8c] sm:$0x1]
      %v2992 = vld [vmem:[%s2233 + $0x90] sm:$0xe]
      %v2993 = vld [vmem:[%s2233 + $0x94] sm:$0xf]
      %v2994 = vld [vmem:[%s2233 + $0x98] sm:$0x1]
      %v2995 = vld [vmem:[%s2233 + $0x9c] sm:$0xe]
      %v2996 = vld [vmem:[%s2233 + $0xa0] sm:$0xf]
      %v2997 = vld [vmem:[%s2233 + $0xa4] sm:$0x1]
      %v2998 = vld [vmem:[%s2233 + $0xa8] sm:$0xe]
      %v2999 = vld [vmem:[%s2233 + $0xac] sm:$0xf]
      %v3000 = vld [vmem:[%s2233 + $0xb0] sm:$0x1]
      %v3001 = vld [vmem:[%s2233 + $0xb4] sm:$0xe]
      %v3002 = vld [vmem:[%s2233 + $0xb8] sm:$0xf]
      %v3003 = vld [vmem:[%s2233 + $0xbc] sm:$0x1]
      %v3052 = vrot.slane %v2956, 5
      %v3053 = vrot.slane %v3052, 4
      %v3054 = vrot.slane %v2957, 5
      %v3055 = vsel %vm963, %v3053, %v3054
      %v3056 = vrot.slane %v3054, 4
      %v3057 = vrot.slane %v2958, 5
      %v3058 = vsel %vm963, %v3056, %v3057
      %v3059 = vrot.slane %v2959, 5
      %v3060 = vrot.slane %v3059, 4
      %v3061 = vrot.slane %v2960, 5
      %v3062 = vsel %vm963, %v3060, %v3061
      %v3063 = vrot.slane %v3061, 4
      %v3064 = vrot.slane %v2961, 5
      %v3065 = vsel %vm963, %v3063, %v3064
      %v3066 = vrot.slane %v2962, 5
      %v3067 = vrot.slane %v3066, 4
      %v3068 = vrot.slane %v2963, 5
      %v3069 = vsel %vm963, %v3067, %v3068
      %v3070 = vrot.slane %v3068, 4
      %v3071 = vrot.slane %v2964, 5
      %v3072 = vsel %vm963, %v3070, %v3071
      %v3073 = vrot.slane %v2965, 5
      %v3074 = vrot.slane %v3073, 4
      %v3075 = vrot.slane %v2966, 5
      %v3076 = vsel %vm963, %v3074, %v3075
      %v3077 = vrot.slane %v3075, 4
      %v3078 = vrot.slane %v2967, 5
      %v3079 = vsel %vm963, %v3077, %v3078
      %v3080 = vrot.slane %v2968, 5
      %v3081 = vrot.slane %v3080, 4
      %v3082 = vrot.slane %v2969, 5
      %v3083 = vsel %vm963, %v3081, %v3082
      %v3084 = vrot.slane %v3082, 4
      %v3085 = vrot.slane %v2970, 5
      %v3086 = vsel %vm963, %v3084, %v3085
      %v3087 = vrot.slane %v2971, 5
      %v3088 = vrot.slane %v3087, 4
      %v3089 = vrot.slane %v2972, 5
      %v3090 = vsel %vm963, %v3088, %v3089
      %v3091 = vrot.slane %v3089, 4
      %v3092 = vrot.slane %v2973, 5
      %v3093 = vsel %vm963, %v3091, %v3092
      %v3094 = vrot.slane %v2974, 5
      %v3095 = vrot.slane %v3094, 4
      %v3096 = vrot.slane %v2975, 5
      %v3097 = vsel %vm963, %v3095, %v3096
      %v3098 = vrot.slane %v3096, 4
      %v3099 = vrot.slane %v2976, 5
      %v3100 = vsel %vm963, %v3098, %v3099
      %v3101 = vrot.slane %v2977, 5
      %v3102 = vrot.slane %v3101, 4
      %v3103 = vrot.slane %v2978, 5
      %v3104 = vsel %vm963, %v3102, %v3103
      %v3105 = vrot.slane %v3103, 4
      %v3106 = vrot.slane %v2979, 5
      %v3107 = vsel %vm963, %v3105, %v3106
      %v3108 = vrot.slane %v2980, 5
      %v3109 = vrot.slane %v3108, 4
      %v3110 = vrot.slane %v2981, 5
      %v3111 = vsel %vm963, %v3109, %v3110
      %v3112 = vrot.slane %v3110, 4
      %v3113 = vrot.slane %v2982, 5
      %v3114 = vsel %vm963, %v3112, %v3113
      %v3115 = vrot.slane %v2983, 5
      %v3116 = vrot.slane %v3115, 4
      %v3117 = vrot.slane %v2984, 5
      %v3118 = vsel %vm963, %v3116, %v3117
      %v3119 = vrot.slane %v3117, 4
      %v3120 = vrot.slane %v2985, 5
      %v3121 = vsel %vm963, %v3119, %v3120
      %v3122 = vrot.slane %v2986, 5
      %v3123 = vrot.slane %v3122, 4
      %v3124 = vrot.slane %v2987, 5
      %v3125 = vsel %vm963, %v3123, %v3124
      %v3126 = vrot.slane %v3124, 4
      %v3127 = vrot.slane %v2988, 5
      %v3128 = vsel %vm963, %v3126, %v3127
      %v3129 = vrot.slane %v2989, 5
      %v3130 = vrot.slane %v3129, 4
      %v3131 = vrot.slane %v2990, 5
      %v3132 = vsel %vm963, %v3130, %v3131
      %v3133 = vrot.slane %v3131, 4
      %v3134 = vrot.slane %v2991, 5
      %v3135 = vsel %vm963, %v3133, %v3134
      %v3136 = vrot.slane %v2992, 5
      %v3137 = vrot.slane %v3136, 4
      %v3138 = vrot.slane %v2993, 5
      %v3139 = vsel %vm963, %v3137, %v3138
      %v3140 = vrot.slane %v3138, 4
      %v3141 = vrot.slane %v2994, 5
      %v3142 = vsel %vm963, %v3140, %v3141
      %v3143 = vrot.slane %v2995, 5
      %v3144 = vrot.slane %v3143, 4
      %v3145 = vrot.slane %v2996, 5
      %v3146 = vsel %vm963, %v3144, %v3145
      %v3147 = vrot.slane %v3145, 4
      %v3148 = vrot.slane %v2997, 5
      %v3149 = vsel %vm963, %v3147, %v3148
      %v3150 = vrot.slane %v2998, 5
      %v3151 = vrot.slane %v3150, 4
      %v3152 = vrot.slane %v2999, 5
      %v3153 = vsel %vm963, %v3151, %v3152
      %v3154 = vrot.slane %v3152, 4
      %v3155 = vrot.slane %v3000, 5
      %v3156 = vsel %vm963, %v3154, %v3155
      %v3157 = vrot.slane %v3001, 5
      %v3158 = vrot.slane %v3157, 4
      %v3159 = vrot.slane %v3002, 5
      %v3160 = vsel %vm963, %v3158, %v3159
      %v3161 = vrot.slane %v3159, 4
      %v3162 = vrot.slane %v3003, 5
      %v3163 = vsel %vm963, %v3161, %v3162
      %v3164 = vunpack.c.l.b16 %v3055
      %v3165 = vunpack.c.l.b16 %v3058
      %v3166 = vunpack.c.l.b16 %v3062
      %v3167 = vunpack.c.l.b16 %v3065
      %v3168 = vunpack.c.l.b16 %v3069
      %v3169 = vunpack.c.l.b16 %v3072
      %v3170 = vunpack.c.l.b16 %v3076
      %v3171 = vunpack.c.l.b16 %v3079
      %v3172 = vunpack.c.l.b16 %v3083
      %v3173 = vunpack.c.l.b16 %v3086
      %v3174 = vunpack.c.l.b16 %v3090
      %v3175 = vunpack.c.l.b16 %v3093
      %v3176 = vunpack.c.l.b16 %v3097
      %v3177 = vunpack.c.l.b16 %v3100
      %v3178 = vunpack.c.l.b16 %v3104
      %v3179 = vunpack.c.l.b16 %v3107
      %v3180 = vunpack.c.l.b16 %v3111
      %v3181 = vunpack.c.l.b16 %v3114
      %v3182 = vunpack.c.l.b16 %v3118
      %v3183 = vunpack.c.l.b16 %v3121
      %v3184 = vunpack.c.l.b16 %v3125
      %v3185 = vunpack.c.l.b16 %v3128
      %v3186 = vunpack.c.l.b16 %v3132
      %v3187 = vunpack.c.l.b16 %v3135
      %v3188 = vunpack.c.l.b16 %v3139
      %v3189 = vunpack.c.l.b16 %v3142
      %v3190 = vunpack.c.l.b16 %v3146
      %v3191 = vunpack.c.l.b16 %v3149
      %v3192 = vunpack.c.l.b16 %v3153
      %v3193 = vunpack.c.l.b16 %v3156
      %v3194 = vunpack.c.l.b16 %v3160
      %v3195 = vunpack.c.l.b16 %v3163
      %v3196 = vpack.c.b16 %v3165, %v3164
      %v3197 = vpack.c.b16 %v3167, %v3166
      %v3198 = vpack.c.b16 %v3169, %v3168
      %v3199 = vpack.c.b16 %v3171, %v3170
      %v3200 = vpack.c.b16 %v3173, %v3172
      %v3201 = vpack.c.b16 %v3175, %v3174
      %v3202 = vpack.c.b16 %v3177, %v3176
      %v3203 = vpack.c.b16 %v3179, %v3178
      %v3204 = vpack.c.b16 %v3181, %v3180
      %v3205 = vpack.c.b16 %v3183, %v3182
      %v3206 = vpack.c.b16 %v3185, %v3184
      %v3207 = vpack.c.b16 %v3187, %v3186
      %v3208 = vpack.c.b16 %v3189, %v3188
      %v3209 = vpack.c.b16 %v3191, %v3190
      %v3210 = vpack.c.b16 %v3193, %v3192
      %v3211 = vpack.c.b16 %v3195, %v3194
      %3212 = vrot.lane.b32.xlu0 %v3196, 32
      %v3213 = vpop.permute.xlu0 %3212
      %3214 = vrot.lane.b32.xlu0 %v3197, 32
      %v3215 = vpop.permute.xlu0 %3214
      %3216 = vrot.lane.b32.xlu0 %v3198, 32
      %v3217 = vpop.permute.xlu0 %3216
      %3218 = vrot.lane.b32.xlu0 %v3199, 32
      %v3219 = vpop.permute.xlu0 %3218
      %3220 = vrot.lane.b32.xlu0 %v3200, 32
      %v3221 = vpop.permute.xlu0 %3220
      %3222 = vrot.lane.b32.xlu0 %v3201, 32
      %v3223 = vpop.permute.xlu0 %3222
      %3224 = vrot.lane.b32.xlu0 %v3202, 32
      %v3225 = vpop.permute.xlu0 %3224
      %3226 = vrot.lane.b32.xlu0 %v3203, 32
      %v3227 = vpop.permute.xlu0 %3226
      %3228 = vrot.lane.b32.xlu0 %v3204, 32
      %v3229 = vpop.permute.xlu0 %3228
      %3230 = vrot.lane.b32.xlu0 %v3205, 32
      %v3231 = vpop.permute.xlu0 %3230
      %3232 = vrot.lane.b32.xlu0 %v3206, 32
      %v3233 = vpop.permute.xlu0 %3232
      %3234 = vrot.lane.b32.xlu0 %v3207, 32
      %v3235 = vpop.permute.xlu0 %3234
      %3236 = vrot.lane.b32.xlu0 %v3208, 32
      %v3237 = vpop.permute.xlu0 %3236
      %3238 = vrot.lane.b32.xlu0 %v3209, 32
      %v3239 = vpop.permute.xlu0 %3238
      %3240 = vrot.lane.b32.xlu0 %v3210, 32
      %v3241 = vpop.permute.xlu0 %3240
      %3242 = vrot.lane.b32.xlu0 %v3211, 32
      %v3243 = vpop.permute.xlu0 %3242
      %vm3260 = vcmask 294144
      %3261 = vst.msk [vmem:[#allocation2] sm:$0xff] %vm3260, %v3213
      %3262 = vst.msk [vmem:[#allocation2 + $0x8] sm:$0xff] %vm3260, %v3215
      %3263 = vst.msk [vmem:[#allocation2 + $0x10] sm:$0xff] %vm3260, %v3217
      %3264 = vst.msk [vmem:[#allocation2 + $0x18] sm:$0xff] %vm3260, %v3219
      %3265 = vst.msk [vmem:[#allocation2 + $0x20] sm:$0xff] %vm3260, %v3221
      %3266 = vst.msk [vmem:[#allocation2 + $0x28] sm:$0xff] %vm3260, %v3223
      %3267 = vst.msk [vmem:[#allocation2 + $0x30] sm:$0xff] %vm3260, %v3225
      %3268 = vst.msk [vmem:[#allocation2 + $0x38] sm:$0xff] %vm3260, %v3227
      %3269 = vst.msk [vmem:[#allocation2 + $0x40] sm:$0xff] %vm3260, %v3229
      %3270 = vst.msk [vmem:[#allocation2 + $0x48] sm:$0xff] %vm3260, %v3231
      %3271 = vst.msk [vmem:[#allocation2 + $0x50] sm:$0xff] %vm3260, %v3233
      %3272 = vst.msk [vmem:[#allocation2 + $0x58] sm:$0xff] %vm3260, %v3235
      %3273 = vst.msk [vmem:[#allocation2 + $0x60] sm:$0xff] %vm3260, %v3237
      %3274 = vst.msk [vmem:[#allocation2 + $0x68] sm:$0xff] %vm3260, %v3239
      %3275 = vst.msk [vmem:[#allocation2 + $0x70] sm:$0xff] %vm3260, %v3241
      %3276 = vst.msk [vmem:[#allocation2 + $0x78] sm:$0xff] %vm3260, %v3243
      %v3277 = vld [vmem:[#allocation2] sm:$0xff]
      %v3278 = vld [vmem:[#allocation2 + $0x8] sm:$0xff]
      %v3279 = vld [vmem:[#allocation2 + $0x10] sm:$0xff]
      %v3280 = vld [vmem:[#allocation2 + $0x18] sm:$0xff]
      %v3281 = vld [vmem:[#allocation2 + $0x20] sm:$0xff]
      %v3282 = vld [vmem:[#allocation2 + $0x28] sm:$0xff]
      %v3283 = vld [vmem:[#allocation2 + $0x30] sm:$0xff]
      %v3284 = vld [vmem:[#allocation2 + $0x38] sm:$0xff]
      %v3285 = vld [vmem:[#allocation2 + $0x40] sm:$0xff]
      %v3286 = vld [vmem:[#allocation2 + $0x48] sm:$0xff]
      %v3287 = vld [vmem:[#allocation2 + $0x50] sm:$0xff]
      %v3288 = vld [vmem:[#allocation2 + $0x58] sm:$0xff]
      %v3289 = vld [vmem:[#allocation2 + $0x60] sm:$0xff]
      %v3290 = vld [vmem:[#allocation2 + $0x68] sm:$0xff]
      %v3291 = vld [vmem:[#allocation2 + $0x70] sm:$0xff]
      %v3292 = vld [vmem:[#allocation2 + $0x78] sm:$0xff]
      %v3293 = vld [vmem:[%s1] sm:$0xf]
      %v3294 = vld [vmem:[%s1 + $0x4] sm:$0xf]
      %v3295 = vld [vmem:[%s1 + $0x8] sm:$0xf]
      %v3296 = vld [vmem:[%s1 + $0xc] sm:$0xf]
      %v3297 = vld [vmem:[%s1 + $0x10] sm:$0x3]
      %v3298 = vld [vmem:[%s2] sm:$0x1]
      %v3300 = vlaneseq
      %v3301 = vshrl.u32 %v3300, 7
      %v3302 = vsub.s32 0, %v3301
      %v3303 = vrot.slane %v3298, %v3302
      %v3310 = vunpack.c.l.b16 %v3293
      %v3311 = vunpack.c.l.b16 %v3294
      %v3312 = vunpack.c.l.b16 %v3295
      %v3313 = vunpack.c.l.b16 %v3296
      %v3314 = vunpack.c.l.b16 %v3297
      %v3315 = vpack.c.b16 %v3311, %v3310
      %v3316 = vpack.c.b16 %v3313, %v3312
      %v3317 = vpack.c.b16 %v3314, %v3314
      %vm3320 = vcmask 293888
      %v3322 = vsel %vm3320, %v3277, 0
      %v3325 = vsel %vm3320, %v3278, 0
      %v3328 = vsel %vm3320, %v3279, 0
      %v3331 = vsel %vm3320, %v3280, 0
      %v3334 = vsel %vm3320, %v3281, 0
      %v3337 = vsel %vm3320, %v3282, 0
      %v3340 = vsel %vm3320, %v3283, 0
      %v3343 = vsel %vm3320, %v3284, 0
      %v3346 = vsel %vm3320, %v3285, 0
      %v3349 = vsel %vm3320, %v3286, 0
      %v3352 = vsel %vm3320, %v3287, 0
      %v3355 = vsel %vm3320, %v3288, 0
      %v3358 = vsel %vm3320, %v3289, 0
      %v3361 = vsel %vm3320, %v3290, 0
      %v3364 = vsel %vm3320, %v3291, 0
      %v3367 = vsel %vm3320, %v3292, 0
      %vm3369 = vcmask 1041408
      %v3371 = vsel %vm3369, %v3317, 0
      %3373 = vmatprep.subr.bf16.mxu0 0
      %3374 = vmatpush1.bf16.msra.mxu0 %v3315
      %3375 = vmatprep.subr.bf16.mxu0 0
      %3376 = vmatpush1.bf16.msra.mxu0 %v3316
      %3377 = vmatprep.subr.bf16.mxu0 0
      %3378 = vmatpush1.bf16.msra.mxu0 %v3371
      %3379 = vmatprep.subr.bf16.mxu0 0
      %3380 = vmatpush1.bf16.msra.mxu0 0
      %3381 = vmatprep.subr.bf16.mxu0 0
      %3382 = vmatpush1.bf16.msra.mxu0 0
      %3383 = vmatprep.subr.bf16.mxu0 0
      %3384 = vmatpush1.bf16.msra.mxu0 0
      %3385 = vmatprep.subr.bf16.mxu0 0
      %3386 = vmatpush1.bf16.msra.mxu0 0
      %3387 = vmatprep.subr.bf16.mxu0 0
      %3388 = vmatpush1.bf16.msra.mxu0 0
      %3389 = vmatprep.subr.bf16.mxu0 0
      %3390 = vmatpush1.bf16.msra.mxu0 0
      %3391 = vmatprep.subr.bf16.mxu0 0
      %3392 = vmatpush1.bf16.msra.mxu0 0
      %3393 = vmatprep.subr.bf16.mxu0 0
      %3394 = vmatpush1.bf16.msra.mxu0 0
      %3395 = vmatprep.subr.bf16.mxu0 0
      %3396 = vmatpush1.bf16.msra.mxu0 0
      %3397 = vmatprep.subr.bf16.mxu0 0
      %3398 = vmatpush1.bf16.msra.mxu0 0
      %3399 = vmatprep.subr.bf16.mxu0 0
      %3400 = vmatpush1.bf16.msra.mxu0 0
      %3401 = vmatprep.subr.bf16.mxu0 0
      %3402 = vmatpush1.bf16.msra.mxu0 0
      %3403 = vmatprep.subr.bf16.mxu0 0
      %3404 = vmatpush1.bf16.msra.mxu0 0
      %3405 = vmatprep.mubr.bf16.mxu0 0
      %3406 = vmatmul.mubr.bf16.gmra.mrb[0].mxu0 %v3322
      %v3407 = vpop.f32.mrb[0].mxu0
      %v3408 = vadd.f32 %v3303, %v3407
      %v3409 = vpop.f32.mrb[0].mxu0
      %v3410 = vpop.f32.mrb[0].mxu0
      %v3411 = vadd.f32 %v3303, %v3410
      %v3412 = vpop.f32.mrb[0].mxu0
      %3413 = vmatprep.mubr.bf16.mxu0 0
      %3414 = vmatmul.mubr.bf16.gmra.mrb[0].mxu0 %v3325
      %v3415 = vpop.f32.mrb[0].mxu0
      %v3416 = vadd.f32 %v3303, %v3415
      %v3417 = vpop.f32.mrb[0].mxu0
      %v3418 = vpop.f32.mrb[0].mxu0
      %v3419 = vadd.f32 %v3303, %v3418
      %v3420 = vpop.f32.mrb[0].mxu0
      %3421 = vmatprep.mubr.bf16.mxu0 0
      %3422 = vmatmul.mubr.bf16.gmra.mrb[0].mxu0 %v3328
      %v3423 = vpop.f32.mrb[0].mxu0
      %v3424 = vadd.f32 %v3303, %v3423
      %v3425 = vpop.f32.mrb[0].mxu0
      %v3426 = vpop.f32.mrb[0].mxu0
      %v3427 = vadd.f32 %v3303, %v3426
      %v3428 = vpop.f32.mrb[0].mxu0
      %3429 = vmatprep.mubr.bf16.mxu0 0
      %3430 = vmatmul.mubr.bf16.gmra.mrb[0].mxu0 %v3331
      %v3431 = vpop.f32.mrb[0].mxu0
      %v3432 = vadd.f32 %v3303, %v3431
      %v3433 = vpop.f32.mrb[0].mxu0
      %v3434 = vpop.f32.mrb[0].mxu0
      %v3435 = vadd.f32 %v3303, %v3434
      %v3436 = vpop.f32.mrb[0].mxu0
      %3437 = vmatprep.mubr.bf16.mxu0 0
      %3438 = vmatmul.mubr.bf16.gmra.mrb[0].mxu0 %v3334
      %v3439 = vpop.f32.mrb[0].mxu0
      %v3440 = vadd.f32 %v3303, %v3439
      %v3441 = vpop.f32.mrb[0].mxu0
      %v3442 = vpop.f32.mrb[0].mxu0
      %v3443 = vadd.f32 %v3303, %v3442
      %v3444 = vpop.f32.mrb[0].mxu0
      %3445 = vmatprep.mubr.bf16.mxu0 0
      %3446 = vmatmul.mubr.bf16.gmra.mrb[0].mxu0 %v3337
      %v3447 = vpop.f32.mrb[0].mxu0
      %v3448 = vadd.f32 %v3303, %v3447
      %v3449 = vpop.f32.mrb[0].mxu0
      %v3450 = vpop.f32.mrb[0].mxu0
      %v3451 = vadd.f32 %v3303, %v3450
      %v3452 = vpop.f32.mrb[0].mxu0
      %3453 = vmatprep.mubr.bf16.mxu0 0
      %3454 = vmatmul.mubr.bf16.gmra.mrb[0].mxu0 %v3340
      %v3455 = vpop.f32.mrb[0].mxu0
      %v3456 = vadd.f32 %v3303, %v3455
      %v3457 = vpop.f32.mrb[0].mxu0
      %v3458 = vpop.f32.mrb[0].mxu0
      %v3459 = vadd.f32 %v3303, %v3458
      %v3460 = vpop.f32.mrb[0].mxu0
      %3461 = vmatprep.mubr.bf16.mxu0 0
      %3462 = vmatmul.mubr.bf16.gmra.mrb[0].mxu0 %v3343
      %v3463 = vpop.f32.mrb[0].mxu0
      %v3464 = vadd.f32 %v3303, %v3463
      %v3465 = vpop.f32.mrb[0].mxu0
      %v3466 = vpop.f32.mrb[0].mxu0
      %v3467 = vadd.f32 %v3303, %v3466
      %v3468 = vpop.f32.mrb[0].mxu0
      %3469 = vmatprep.mubr.bf16.mxu0 0
      %3470 = vmatmul.mubr.bf16.gmra.mrb[0].mxu0 %v3346
      %v3471 = vpop.f32.mrb[0].mxu0
      %v3472 = vadd.f32 %v3303, %v3471
      %v3473 = vpop.f32.mrb[0].mxu0
      %v3474 = vpop.f32.mrb[0].mxu0
      %v3475 = vadd.f32 %v3303, %v3474
      %v3476 = vpop.f32.mrb[0].mxu0
      %3477 = vmatprep.mubr.bf16.mxu0 0
      %3478 = vmatmul.mubr.bf16.gmra.mrb[0].mxu0 %v3349
      %v3479 = vpop.f32.mrb[0].mxu0
      %v3480 = vadd.f32 %v3303, %v3479
      %v3481 = vpop.f32.mrb[0].mxu0
      %v3482 = vpop.f32.mrb[0].mxu0
      %v3483 = vadd.f32 %v3303, %v3482
      %v3484 = vpop.f32.mrb[0].mxu0
      %3485 = vmatprep.mubr.bf16.mxu0 0
      %3486 = vmatmul.mubr.bf16.gmra.mrb[0].mxu0 %v3352
      %v3487 = vpop.f32.mrb[0].mxu0
      %v3488 = vadd.f32 %v3303, %v3487
      %v3489 = vpop.f32.mrb[0].mxu0
      %v3490 = vpop.f32.mrb[0].mxu0
      %v3491 = vadd.f32 %v3303, %v3490
      %v3492 = vpop.f32.mrb[0].mxu0
      %3493 = vmatprep.mubr.bf16.mxu0 0
      %3494 = vmatmul.mubr.bf16.gmra.mrb[0].mxu0 %v3355
      %v3495 = vpop.f32.mrb[0].mxu0
      %v3496 = vadd.f32 %v3303, %v3495
      %v3497 = vpop.f32.mrb[0].mxu0
      %v3498 = vpop.f32.mrb[0].mxu0
      %v3499 = vadd.f32 %v3303, %v3498
      %v3500 = vpop.f32.mrb[0].mxu0
      %3501 = vmatprep.mubr.bf16.mxu0 0
      %3502 = vmatmul.mubr.bf16.gmra.mrb[0].mxu0 %v3358
      %v3503 = vpop.f32.mrb[0].mxu0
      %v3504 = vadd.f32 %v3303, %v3503
      %v3505 = vpop.f32.mrb[0].mxu0
      %v3506 = vpop.f32.mrb[0].mxu0
      %v3507 = vadd.f32 %v3303, %v3506
      %v3508 = vpop.f32.mrb[0].mxu0
      %3509 = vmatprep.mubr.bf16.mxu0 0
      %3510 = vmatmul.mubr.bf16.gmra.mrb[0].mxu0 %v3361
      %v3511 = vpop.f32.mrb[0].mxu0
      %v3512 = vadd.f32 %v3303, %v3511
      %v3513 = vpop.f32.mrb[0].mxu0
      %v3514 = vpop.f32.mrb[0].mxu0
      %v3515 = vadd.f32 %v3303, %v3514
      %v3516 = vpop.f32.mrb[0].mxu0
      %3517 = vmatprep.mubr.bf16.mxu0 0
      %3518 = vmatmul.mubr.bf16.gmra.mrb[0].mxu0 %v3364
      %v3519 = vpop.f32.mrb[0].mxu0
      %v3520 = vadd.f32 %v3303, %v3519
      %v3521 = vpop.f32.mrb[0].mxu0
      %v3522 = vpop.f32.mrb[0].mxu0
      %v3523 = vadd.f32 %v3303, %v3522
      %v3524 = vpop.f32.mrb[0].mxu0
      %3525 = vmatprep.mubr.bf16.mxu0 0
      %3526 = vmatmul.mubr.bf16.gmra.mrb[0].mxu0 %v3367
      %v3527 = vpop.f32.mrb[0].mxu0
      %v3528 = vadd.f32 %v3303, %v3527
      %v3529 = vpop.f32.mrb[0].mxu0
      %v3530 = vpop.f32.mrb[0].mxu0
      %v3531 = vadd.f32 %v3303, %v3530
      %v3532 = vpop.f32.mrb[0].mxu0
      %3533 = vdwg.mxu0
      %v3534 = vmax.f32 %v3408, 0.0
      %v3535 = vmax.f32 %v3411, 0.0
      %v3536 = vmax.f32 %v3416, 0.0
      %v3537 = vmax.f32 %v3419, 0.0
      %v3538 = vmax.f32 %v3424, 0.0
      %v3539 = vmax.f32 %v3427, 0.0
      %v3540 = vmax.f32 %v3432, 0.0
      %v3541 = vmax.f32 %v3435, 0.0
      %v3542 = vmax.f32 %v3440, 0.0
      %v3543 = vmax.f32 %v3443, 0.0
      %v3544 = vmax.f32 %v3448, 0.0
      %v3545 = vmax.f32 %v3451, 0.0
      %v3546 = vmax.f32 %v3456, 0.0
      %v3547 = vmax.f32 %v3459, 0.0
      %v3548 = vmax.f32 %v3464, 0.0
      %v3549 = vmax.f32 %v3467, 0.0
      %v3550 = vmax.f32 %v3472, 0.0
      %v3551 = vmax.f32 %v3475, 0.0
      %v3552 = vmax.f32 %v3480, 0.0
      %v3553 = vmax.f32 %v3483, 0.0
      %v3554 = vmax.f32 %v3488, 0.0
      %v3555 = vmax.f32 %v3491, 0.0
      %v3556 = vmax.f32 %v3496, 0.0
      %v3557 = vmax.f32 %v3499, 0.0
      %v3558 = vmax.f32 %v3504, 0.0
      %v3559 = vmax.f32 %v3507, 0.0
      %v3560 = vmax.f32 %v3512, 0.0
      %v3561 = vmax.f32 %v3515, 0.0
      %v3562 = vmax.f32 %v3520, 0.0
      %v3563 = vmax.f32 %v3523, 0.0
      %v3564 = vmax.f32 %v3528, 0.0
      %v3565 = vmax.f32 %v3531, 0.0
      %3566 = vst [vmem:[%s170] sm:$0xf] 0
      %3567 = vst [vmem:[%s170 + $0x4] sm:$0xf] 0
      %3568 = vst [vmem:[%s170 + $0x8] sm:$0x1] 0
      %3569 = vst [vmem:[%s170 + $0xc] sm:$0xf] 0
      %3570 = vst [vmem:[%s170 + $0x10] sm:$0xf] 0
      %3571 = vst [vmem:[%s170 + $0x14] sm:$0x1] 0
      %3572 = vst [vmem:[%s170 + $0x18] sm:$0xf] 0
      %3573 = vst [vmem:[%s170 + $0x1c] sm:$0xf] 0
      %3574 = vst [vmem:[%s170 + $0x20] sm:$0x1] 0
      %3575 = vst [vmem:[%s170 + $0x24] sm:$0xf] 0
      %3576 = vst [vmem:[%s170 + $0x28] sm:$0xf] 0
      %3577 = vst [vmem:[%s170 + $0x2c] sm:$0x1] 0
      %3578 = vst [vmem:[%s170 + $0x30] sm:$0xf] 0
      %3579 = vst [vmem:[%s170 + $0x34] sm:$0xf] 0
      %3580 = vst [vmem:[%s170 + $0x38] sm:$0x1] 0
      %3581 = vst [vmem:[%s170 + $0x3c] sm:$0xf] 0
      %3582 = vst [vmem:[%s170 + $0x40] sm:$0xf] 0
      %3583 = vst [vmem:[%s170 + $0x44] sm:$0x1] 0
      %3584 = vst [vmem:[%s170 + $0x48] sm:$0xf] 0
      %3585 = vst [vmem:[%s170 + $0x4c] sm:$0xf] 0
      %3586 = vst [vmem:[%s170 + $0x50] sm:$0x1] 0
      %3587 = vst [vmem:[%s170 + $0x54] sm:$0xf] 0
      %3588 = vst [vmem:[%s170 + $0x58] sm:$0xf] 0
      %3589 = vst [vmem:[%s170 + $0x5c] sm:$0x1] 0
      %3590 = vst [vmem:[%s170 + $0x60] sm:$0xf] 0
      %3591 = vst [vmem:[%s170 + $0x64] sm:$0xf] 0
      %3592 = vst [vmem:[%s170 + $0x68] sm:$0x1] 0
      %3593 = vst [vmem:[%s170 + $0x6c] sm:$0xf] 0
      %3594 = vst [vmem:[%s170 + $0x70] sm:$0xf] 0
      %3595 = vst [vmem:[%s170 + $0x74] sm:$0x1] 0
      %3596 = vst [vmem:[%s170 + $0x78] sm:$0xf] 0
      %3597 = vst [vmem:[%s170 + $0x7c] sm:$0xf] 0
      %3598 = vst [vmem:[%s170 + $0x80] sm:$0x1] 0
      %3599 = vst [vmem:[%s170 + $0x84] sm:$0xf] 0
      %3600 = vst [vmem:[%s170 + $0x88] sm:$0xf] 0
      %3601 = vst [vmem:[%s170 + $0x8c] sm:$0x1] 0
      %3602 = vst [vmem:[%s170 + $0x90] sm:$0xf] 0
      %3603 = vst [vmem:[%s170 + $0x94] sm:$0xf] 0
      %3604 = vst [vmem:[%s170 + $0x98] sm:$0x1] 0
      %3605 = vst [vmem:[%s170 + $0x9c] sm:$0xf] 0
      %3606 = vst [vmem:[%s170 + $0xa0] sm:$0xf] 0
      %3607 = vst [vmem:[%s170 + $0xa4] sm:$0x1] 0
      %3608 = vst [vmem:[%s170 + $0xa8] sm:$0xf] 0
      %3609 = vst [vmem:[%s170 + $0xac] sm:$0xf] 0
      %3610 = vst [vmem:[%s170 + $0xb0] sm:$0x1] 0
      %3611 = vst [vmem:[%s170 + $0xb4] sm:$0xf] 0
      %3612 = vst [vmem:[%s170 + $0xb8] sm:$0xf] 0
      %3613 = vst [vmem:[%s170 + $0xbc] sm:$0x1] 0
      %3614 = vst [vmem:[%s170 + $0xc0] sm:$0xf] 0
      %3615 = vst [vmem:[%s170 + $0xc4] sm:$0xf] 0
      %3616 = vst [vmem:[%s170 + $0xc8] sm:$0x1] 0
      %3617 = vst [vmem:[%s170 + $0xcc] sm:$0xf] 0
      %3618 = vst [vmem:[%s170 + $0xd0] sm:$0xf] 0
      %3619 = vst [vmem:[%s170 + $0xd4] sm:$0x1] 0
      %v3620 = vpack.c.bf16 %v3535, %v3534
      %v3621 = vpack.c.bf16 %v3537, %v3536
      %v3622 = vpack.c.bf16 %v3539, %v3538
      %v3623 = vpack.c.bf16 %v3541, %v3540
      %v3624 = vpack.c.bf16 %v3543, %v3542
      %v3625 = vpack.c.bf16 %v3545, %v3544
      %v3626 = vpack.c.bf16 %v3547, %v3546
      %v3627 = vpack.c.bf16 %v3549, %v3548
      %v3628 = vpack.c.bf16 %v3551, %v3550
      %v3629 = vpack.c.bf16 %v3553, %v3552
      %v3630 = vpack.c.bf16 %v3555, %v3554
      %v3631 = vpack.c.bf16 %v3557, %v3556
      %v3632 = vpack.c.bf16 %v3559, %v3558
      %v3633 = vpack.c.bf16 %v3561, %v3560
      %v3634 = vpack.c.bf16 %v3563, %v3562
      %v3635 = vpack.c.bf16 %v3565, %v3564
      %v3652 = vunpack.c.l.b16 %v3620
      %v3653 = vunpack.c.h.b16 %v3620
      %v3654 = vunpack.c.l.b16 %v3621
      %v3655 = vunpack.c.h.b16 %v3621
      %v3656 = vunpack.c.l.b16 %v3622
      %v3657 = vunpack.c.h.b16 %v3622
      %v3658 = vunpack.c.l.b16 %v3623
      %v3659 = vunpack.c.h.b16 %v3623
      %v3660 = vunpack.c.l.b16 %v3624
      %v3661 = vunpack.c.h.b16 %v3624
      %v3662 = vunpack.c.l.b16 %v3625
      %v3663 = vunpack.c.h.b16 %v3625
      %v3664 = vunpack.c.l.b16 %v3626
      %v3665 = vunpack.c.h.b16 %v3626
      %v3666 = vunpack.c.l.b16 %v3627
      %v3667 = vunpack.c.h.b16 %v3627
      %v3668 = vunpack.c.l.b16 %v3628
      %v3669 = vunpack.c.h.b16 %v3628
      %v3670 = vunpack.c.l.b16 %v3629
      %v3671 = vunpack.c.h.b16 %v3629
      %v3672 = vunpack.c.l.b16 %v3630
      %v3673 = vunpack.c.h.b16 %v3630
      %v3674 = vunpack.c.l.b16 %v3631
      %v3675 = vunpack.c.h.b16 %v3631
      %v3676 = vunpack.c.l.b16 %v3632
      %v3677 = vunpack.c.h.b16 %v3632
      %v3678 = vunpack.c.l.b16 %v3633
      %v3679 = vunpack.c.h.b16 %v3633
      %v3680 = vunpack.c.l.b16 %v3634
      %v3681 = vunpack.c.h.b16 %v3634
      %v3682 = vunpack.c.l.b16 %v3635
      %v3683 = vunpack.c.h.b16 %v3635
      %v3684 = vpack.c.b16 %v3652, %v3652
      %v3685 = vpack.c.b16 %v3653, %v3653
      %v3686 = vpack.c.b16 %v3654, %v3654
      %v3687 = vpack.c.b16 %v3655, %v3655
      %v3688 = vpack.c.b16 %v3656, %v3656
      %v3689 = vpack.c.b16 %v3657, %v3657
      %v3690 = vpack.c.b16 %v3658, %v3658
      %v3691 = vpack.c.b16 %v3659, %v3659
      %v3692 = vpack.c.b16 %v3660, %v3660
      %v3693 = vpack.c.b16 %v3661, %v3661
      %v3694 = vpack.c.b16 %v3662, %v3662
      %v3695 = vpack.c.b16 %v3663, %v3663
      %v3696 = vpack.c.b16 %v3664, %v3664
      %v3697 = vpack.c.b16 %v3665, %v3665
      %v3698 = vpack.c.b16 %v3666, %v3666
      %v3699 = vpack.c.b16 %v3667, %v3667
      %v3700 = vpack.c.b16 %v3668, %v3668
      %v3701 = vpack.c.b16 %v3669, %v3669
      %v3702 = vpack.c.b16 %v3670, %v3670
      %v3703 = vpack.c.b16 %v3671, %v3671
      %v3704 = vpack.c.b16 %v3672, %v3672
      %v3705 = vpack.c.b16 %v3673, %v3673
      %v3706 = vpack.c.b16 %v3674, %v3674
      %v3707 = vpack.c.b16 %v3675, %v3675
      %v3708 = vpack.c.b16 %v3676, %v3676
      %v3709 = vpack.c.b16 %v3677, %v3677
      %v3710 = vpack.c.b16 %v3678, %v3678
      %v3711 = vpack.c.b16 %v3679, %v3679
      %v3712 = vpack.c.b16 %v3680, %v3680
      %v3713 = vpack.c.b16 %v3681, %v3681
      %v3714 = vpack.c.b16 %v3682, %v3682
      %v3715 = vpack.c.b16 %v3683, %v3683
      %vm3716 = vsmask.f32 256
      %vm3717 = vsmask.f32 4368
      %vm3718 = vmor %vm3716, %vm3717
      %v3720 = vshrl.u32 %v3684, 16
      %v3722 = vrot.slane %v3720, 7
      %v3723 = vshll.u32 %v3684, 16
      %v3725 = vor.u32 %v3722, %v3723
      %v3726 = vrot.slane %v3722, 4
      %v3728 = vshrl.u32 %v3685, 16
      %v3730 = vrot.slane %v3728, 7
      %v3731 = vshll.u32 %v3685, 16
      %v3733 = vor.u32 %v3730, %v3731
      %v3734 = vsel %vm3718, %v3726, %v3733
      %v3735 = vrot.slane %v3730, 4
      %v3737 = vshrl.u32 %v3686, 16
      %v3739 = vrot.slane %v3737, 7
      %v3740 = vshll.u32 %v3686, 16
      %v3742 = vor.u32 %v3739, %v3740
      %v3743 = vrot.slane %v3739, 4
      %v3745 = vshrl.u32 %v3687, 16
      %v3747 = vrot.slane %v3745, 7
      %v3748 = vshll.u32 %v3687, 16
      %v3750 = vor.u32 %v3747, %v3748
      %v3751 = vsel %vm3718, %v3743, %v3750
      %v3752 = vrot.slane %v3747, 4
      %v3754 = vshrl.u32 %v3688, 16
      %v3756 = vrot.slane %v3754, 7
      %v3757 = vshll.u32 %v3688, 16
      %v3759 = vor.u32 %v3756, %v3757
      %v3760 = vrot.slane %v3756, 4
      %v3762 = vshrl.u32 %v3689, 16
      %v3764 = vrot.slane %v3762, 7
      %v3765 = vshll.u32 %v3689, 16
      %v3767 = vor.u32 %v3764, %v3765
      %v3768 = vsel %vm3718, %v3760, %v3767
      %v3769 = vrot.slane %v3764, 4
      %v3771 = vshrl.u32 %v3690, 16
      %v3773 = vrot.slane %v3771, 7
      %v3774 = vshll.u32 %v3690, 16
      %v3776 = vor.u32 %v3773, %v3774
      %v3777 = vrot.slane %v3773, 4
      %v3779 = vshrl.u32 %v3691, 16
      %v3781 = vrot.slane %v3779, 7
      %v3782 = vshll.u32 %v3691, 16
      %v3784 = vor.u32 %v3781, %v3782
      %v3785 = vsel %vm3718, %v3777, %v3784
      %v3786 = vrot.slane %v3781, 4
      %v3788 = vshrl.u32 %v3692, 16
      %v3790 = vrot.slane %v3788, 7
      %v3791 = vshll.u32 %v3692, 16
      %v3793 = vor.u32 %v3790, %v3791
      %v3794 = vrot.slane %v3790, 4
      %v3796 = vshrl.u32 %v3693, 16
      %v3798 = vrot.slane %v3796, 7
      %v3799 = vshll.u32 %v3693, 16
      %v3801 = vor.u32 %v3798, %v3799
      %v3802 = vsel %vm3718, %v3794, %v3801
      %v3803 = vrot.slane %v3798, 4
      %v3805 = vshrl.u32 %v3694, 16
      %v3807 = vrot.slane %v3805, 7
      %v3808 = vshll.u32 %v3694, 16
      %v3810 = vor.u32 %v3807, %v3808
      %v3811 = vrot.slane %v3807, 4
      %v3813 = vshrl.u32 %v3695, 16
      %v3815 = vrot.slane %v3813, 7
      %v3816 = vshll.u32 %v3695, 16
      %v3818 = vor.u32 %v3815, %v3816
      %v3819 = vsel %vm3718, %v3811, %v3818
      %v3820 = vrot.slane %v3815, 4
      %v3822 = vshrl.u32 %v3696, 16
      %v3824 = vrot.slane %v3822, 7
      %v3825 = vshll.u32 %v3696, 16
      %v3827 = vor.u32 %v3824, %v3825
      %v3828 = vrot.slane %v3824, 4
      %v3830 = vshrl.u32 %v3697, 16
      %v3832 = vrot.slane %v3830, 7
      %v3833 = vshll.u32 %v3697, 16
      %v3835 = vor.u32 %v3832, %v3833
      %v3836 = vsel %vm3718, %v3828, %v3835
      %v3837 = vrot.slane %v3832, 4
      %v3839 = vshrl.u32 %v3698, 16
      %v3841 = vrot.slane %v3839, 7
      %v3842 = vshll.u32 %v3698, 16
      %v3844 = vor.u32 %v3841, %v3842
      %v3845 = vrot.slane %v3841, 4
      %v3847 = vshrl.u32 %v3699, 16
      %v3849 = vrot.slane %v3847, 7
      %v3850 = vshll.u32 %v3699, 16
      %v3852 = vor.u32 %v3849, %v3850
      %v3853 = vsel %vm3718, %v3845, %v3852
      %v3854 = vrot.slane %v3849, 4
      %v3856 = vshrl.u32 %v3700, 16
      %v3858 = vrot.slane %v3856, 7
      %v3859 = vshll.u32 %v3700, 16
      %v3861 = vor.u32 %v3858, %v3859
      %v3862 = vrot.slane %v3858, 4
      %v3864 = vshrl.u32 %v3701, 16
      %v3866 = vrot.slane %v3864, 7
      %v3867 = vshll.u32 %v3701, 16
      %v3869 = vor.u32 %v3866, %v3867
      %v3870 = vsel %vm3718, %v3862, %v3869
      %v3871 = vrot.slane %v3866, 4
      %v3873 = vshrl.u32 %v3702, 16
      %v3875 = vrot.slane %v3873, 7
      %v3876 = vshll.u32 %v3702, 16
      %v3878 = vor.u32 %v3875, %v3876
      %v3879 = vrot.slane %v3875, 4
      %v3881 = vshrl.u32 %v3703, 16
      %v3883 = vrot.slane %v3881, 7
      %v3884 = vshll.u32 %v3703, 16
      %v3886 = vor.u32 %v3883, %v3884
      %v3887 = vsel %vm3718, %v3879, %v3886
      %v3888 = vrot.slane %v3883, 4
      %v3890 = vshrl.u32 %v3704, 16
      %v3892 = vrot.slane %v3890, 7
      %v3893 = vshll.u32 %v3704, 16
      %v3895 = vor.u32 %v3892, %v3893
      %v3896 = vrot.slane %v3892, 4
      %v3898 = vshrl.u32 %v3705, 16
      %v3900 = vrot.slane %v3898, 7
      %v3901 = vshll.u32 %v3705, 16
      %v3903 = vor.u32 %v3900, %v3901
      %v3904 = vsel %vm3718, %v3896, %v3903
      %v3905 = vrot.slane %v3900, 4
      %v3907 = vshrl.u32 %v3706, 16
      %v3909 = vrot.slane %v3907, 7
      %v3910 = vshll.u32 %v3706, 16
      %v3912 = vor.u32 %v3909, %v3910
      %v3913 = vrot.slane %v3909, 4
      %v3915 = vshrl.u32 %v3707, 16
      %v3917 = vrot.slane %v3915, 7
      %v3918 = vshll.u32 %v3707, 16
      %v3920 = vor.u32 %v3917, %v3918
      %v3921 = vsel %vm3718, %v3913, %v3920
      %v3922 = vrot.slane %v3917, 4
      %v3924 = vshrl.u32 %v3708, 16
      %v3926 = vrot.slane %v3924, 7
      %v3927 = vshll.u32 %v3708, 16
      %v3929 = vor.u32 %v3926, %v3927
      %v3930 = vrot.slane %v3926, 4
      %v3932 = vshrl.u32 %v3709, 16
      %v3934 = vrot.slane %v3932, 7
      %v3935 = vshll.u32 %v3709, 16
      %v3937 = vor.u32 %v3934, %v3935
      %v3938 = vsel %vm3718, %v3930, %v3937
      %v3939 = vrot.slane %v3934, 4
      %v3941 = vshrl.u32 %v3710, 16
      %v3943 = vrot.slane %v3941, 7
      %v3944 = vshll.u32 %v3710, 16
      %v3946 = vor.u32 %v3943, %v3944
      %v3947 = vrot.slane %v3943, 4
      %v3949 = vshrl.u32 %v3711, 16
      %v3951 = vrot.slane %v3949, 7
      %v3952 = vshll.u32 %v3711, 16
      %v3954 = vor.u32 %v3951, %v3952
      %v3955 = vsel %vm3718, %v3947, %v3954
      %v3956 = vrot.slane %v3951, 4
      %v3958 = vshrl.u32 %v3712, 16
      %v3960 = vrot.slane %v3958, 7
      %v3961 = vshll.u32 %v3712, 16
      %v3963 = vor.u32 %v3960, %v3961
      %v3964 = vrot.slane %v3960, 4
      %v3966 = vshrl.u32 %v3713, 16
      %v3968 = vrot.slane %v3966, 7
      %v3969 = vshll.u32 %v3713, 16
      %v3971 = vor.u32 %v3968, %v3969
      %v3972 = vsel %vm3718, %v3964, %v3971
      %v3973 = vrot.slane %v3968, 4
      %v3975 = vshrl.u32 %v3714, 16
      %v3977 = vrot.slane %v3975, 7
      %v3978 = vshll.u32 %v3714, 16
      %v3980 = vor.u32 %v3977, %v3978
      %v3981 = vrot.slane %v3977, 4
      %v3983 = vshrl.u32 %v3715, 16
      %v3985 = vrot.slane %v3983, 7
      %v3986 = vshll.u32 %v3715, 16
      %v3988 = vor.u32 %v3985, %v3986
      %v3989 = vsel %vm3718, %v3981, %v3988
      %v3990 = vrot.slane %v3985, 4
      %s4039 = scalar_lea.vmem %s170, 12
      %vm4040 = vcmask 1043456
      %vm4041 = vsmask.f32 7938
      %vm4042 = vmand %vm4040, %vm4041
      %v4043 = vld [vmem:[%s4039] sm:$0xf]
      %v4044 = vsel %vm4042, %v3725, %v4043
      %4045 = vst [vmem:[%s4039] sm:$0xf] %v4044
      %4046 = vst [vmem:[%s4039 + $0x4] sm:$0xf] %v3734
      %vm4047 = vcmask 1040384
      %vm4048 = vmand %vm4047, %vm3716
      %v4049 = vld [vmem:[%s4039 + $0x8] sm:$0x1]
      %v4050 = vsel %vm4048, %v3735, %v4049
      %4051 = vst [vmem:[%s4039 + $0x8] sm:$0x1] %v4050
      %v4052 = vld [vmem:[%s4039 + $0xc] sm:$0xf]
      %v4053 = vsel %vm4042, %v3742, %v4052
      %4054 = vst [vmem:[%s4039 + $0xc] sm:$0xf] %v4053
      %4055 = vst [vmem:[%s4039 + $0x10] sm:$0xf] %v3751
      %v4056 = vld [vmem:[%s4039 + $0x14] sm:$0x1]
      %v4057 = vsel %vm4048, %v3752, %v4056
      %4058 = vst [vmem:[%s4039 + $0x14] sm:$0x1] %v4057
      %v4059 = vld [vmem:[%s4039 + $0x18] sm:$0xf]
      %v4060 = vsel %vm4042, %v3759, %v4059
      %4061 = vst [vmem:[%s4039 + $0x18] sm:$0xf] %v4060
      %4062 = vst [vmem:[%s4039 + $0x1c] sm:$0xf] %v3768
      %v4063 = vld [vmem:[%s4039 + $0x20] sm:$0x1]
      %v4064 = vsel %vm4048, %v3769, %v4063
      %4065 = vst [vmem:[%s4039 + $0x20] sm:$0x1] %v4064
      %v4066 = vld [vmem:[%s4039 + $0x24] sm:$0xf]
      %v4067 = vsel %vm4042, %v3776, %v4066
      %4068 = vst [vmem:[%s4039 + $0x24] sm:$0xf] %v4067
      %4069 = vst [vmem:[%s4039 + $0x28] sm:$0xf] %v3785
      %v4070 = vld [vmem:[%s4039 + $0x2c] sm:$0x1]
      %v4071 = vsel %vm4048, %v3786, %v4070
      %4072 = vst [vmem:[%s4039 + $0x2c] sm:$0x1] %v4071
      %v4073 = vld [vmem:[%s4039 + $0x30] sm:$0xf]
      %v4074 = vsel %vm4042, %v3793, %v4073
      %4075 = vst [vmem:[%s4039 + $0x30] sm:$0xf] %v4074
      %4076 = vst [vmem:[%s4039 + $0x34] sm:$0xf] %v3802
      %v4077 = vld [vmem:[%s4039 + $0x38] sm:$0x1]
      %v4078 = vsel %vm4048, %v3803, %v4077
      %4079 = vst [vmem:[%s4039 + $0x38] sm:$0x1] %v4078
      %v4080 = vld [vmem:[%s4039 + $0x3c] sm:$0xf]
      %v4081 = vsel %vm4042, %v3810, %v4080
      %4082 = vst [vmem:[%s4039 + $0x3c] sm:$0xf] %v4081
      %4083 = vst [vmem:[%s4039 + $0x40] sm:$0xf] %v3819
      %v4084 = vld [vmem:[%s4039 + $0x44] sm:$0x1]
      %v4085 = vsel %vm4048, %v3820, %v4084
      %4086 = vst [vmem:[%s4039 + $0x44] sm:$0x1] %v4085
      %v4087 = vld [vmem:[%s4039 + $0x48] sm:$0xf]
      %v4088 = vsel %vm4042, %v3827, %v4087
      %4089 = vst [vmem:[%s4039 + $0x48] sm:$0xf] %v4088
      %4090 = vst [vmem:[%s4039 + $0x4c] sm:$0xf] %v3836
      %v4091 = vld [vmem:[%s4039 + $0x50] sm:$0x1]
      %v4092 = vsel %vm4048, %v3837, %v4091
      %4093 = vst [vmem:[%s4039 + $0x50] sm:$0x1] %v4092
      %v4094 = vld [vmem:[%s4039 + $0x54] sm:$0xf]
      %v4095 = vsel %vm4042, %v3844, %v4094
      %4096 = vst [vmem:[%s4039 + $0x54] sm:$0xf] %v4095
      %4097 = vst [vmem:[%s4039 + $0x58] sm:$0xf] %v3853
      %v4098 = vld [vmem:[%s4039 + $0x5c] sm:$0x1]
      %v4099 = vsel %vm4048, %v3854, %v4098
      %4100 = vst [vmem:[%s4039 + $0x5c] sm:$0x1] %v4099
      %v4101 = vld [vmem:[%s4039 + $0x60] sm:$0xf]
      %v4102 = vsel %vm4042, %v3861, %v4101
      %4103 = vst [vmem:[%s4039 + $0x60] sm:$0xf] %v4102
      %4104 = vst [vmem:[%s4039 + $0x64] sm:$0xf] %v3870
      %v4105 = vld [vmem:[%s4039 + $0x68] sm:$0x1]
      %v4106 = vsel %vm4048, %v3871, %v4105
      %4107 = vst [vmem:[%s4039 + $0x68] sm:$0x1] %v4106
      %v4108 = vld [vmem:[%s4039 + $0x6c] sm:$0xf]
      %v4109 = vsel %vm4042, %v3878, %v4108
      %4110 = vst [vmem:[%s4039 + $0x6c] sm:$0xf] %v4109
      %4111 = vst [vmem:[%s4039 + $0x70] sm:$0xf] %v3887
      %v4112 = vld [vmem:[%s4039 + $0x74] sm:$0x1]
      %v4113 = vsel %vm4048, %v3888, %v4112
      %4114 = vst [vmem:[%s4039 + $0x74] sm:$0x1] %v4113
      %v4115 = vld [vmem:[%s4039 + $0x78] sm:$0xf]
      %v4116 = vsel %vm4042, %v3895, %v4115
      %4117 = vst [vmem:[%s4039 + $0x78] sm:$0xf] %v4116
      %4118 = vst [vmem:[%s4039 + $0x7c] sm:$0xf] %v3904
      %v4119 = vld [vmem:[%s4039 + $0x80] sm:$0x1]
      %v4120 = vsel %vm4048, %v3905, %v4119
      %4121 = vst [vmem:[%s4039 + $0x80] sm:$0x1] %v4120
      %v4122 = vld [vmem:[%s4039 + $0x84] sm:$0xf]
      %v4123 = vsel %vm4042, %v3912, %v4122
      %4124 = vst [vmem:[%s4039 + $0x84] sm:$0xf] %v4123
      %4125 = vst [vmem:[%s4039 + $0x88] sm:$0xf] %v3921
      %v4126 = vld [vmem:[%s4039 + $0x8c] sm:$0x1]
      %v4127 = vsel %vm4048, %v3922, %v4126
      %4128 = vst [vmem:[%s4039 + $0x8c] sm:$0x1] %v4127
      %v4129 = vld [vmem:[%s4039 + $0x90] sm:$0xf]
      %v4130 = vsel %vm4042, %v3929, %v4129
      %4131 = vst [vmem:[%s4039 + $0x90] sm:$0xf] %v4130
      %4132 = vst [vmem:[%s4039 + $0x94] sm:$0xf] %v3938
      %v4133 = vld [vmem:[%s4039 + $0x98] sm:$0x1]
      %v4134 = vsel %vm4048, %v3939, %v4133
      %4135 = vst [vmem:[%s4039 + $0x98] sm:$0x1] %v4134
      %v4136 = vld [vmem:[%s4039 + $0x9c] sm:$0xf]
      %v4137 = vsel %vm4042, %v3946, %v4136
      %4138 = vst [vmem:[%s4039 + $0x9c] sm:$0xf] %v4137
      %4139 = vst [vmem:[%s4039 + $0xa0] sm:$0xf] %v3955
      %v4140 = vld [vmem:[%s4039 + $0xa4] sm:$0x1]
      %v4141 = vsel %vm4048, %v3956, %v4140
      %4142 = vst [vmem:[%s4039 + $0xa4] sm:$0x1] %v4141
      %v4143 = vld [vmem:[%s4039 + $0xa8] sm:$0xf]
      %v4144 = vsel %vm4042, %v3963, %v4143
      %4145 = vst [vmem:[%s4039 + $0xa8] sm:$0xf] %v4144
      %4146 = vst [vmem:[%s4039 + $0xac] sm:$0xf] %v3972
      %v4147 = vld [vmem:[%s4039 + $0xb0] sm:$0x1]
      %v4148 = vsel %vm4048, %v3973, %v4147
      %4149 = vst [vmem:[%s4039 + $0xb0] sm:$0x1] %v4148
      %v4150 = vld [vmem:[%s4039 + $0xb4] sm:$0xf]
      %v4151 = vsel %vm4042, %v3980, %v4150
      %4152 = vst [vmem:[%s4039 + $0xb4] sm:$0xf] %v4151
      %4153 = vst [vmem:[%s4039 + $0xb8] sm:$0xf] %v3989
      %v4154 = vld [vmem:[%s4039 + $0xbc] sm:$0x1]
      %v4155 = vsel %vm4048, %v3990, %v4154
      %4156 = vst [vmem:[%s4039 + $0xbc] sm:$0x1] %v4155
      %p4157 = scmp.lt.s32.totalorder %s14, 1
      %s4158 = scalar_select %p4157, %s14, 1
      %s4159 = smul.addr %s4158, 54
      %s4160 = smul.addr %s4159, 4
      %s4161 = scalar_lea.vmem %s3, %s4160
      // Predicated region
      $region33: #{basic_block_forward.2} parent=31 // pred_check
        %p4162 = pneg %p100
      $region34: #{basic_block_forward.2} parent=31 // pred_check_branch
        %4164 = sbr.rel (%p4162) target = $region36
      $region35: #{basic_block_forward.2} parent=31 // pred_region
        _
      $region36: #{basic_block_forward.2} parent=31 // pred_fallthru
        _
    $region32: #{basic_block_forward.2} parent=5 // pred_fallthru
      _
    %p4165 = scmp.le.s32.totalorder 2, %s9
    // Predicated region
    $region37: #{basic_block_forward.2} parent=5 // pred_check
      %p4166 = pneg %p4165
    $region38: #{basic_block_forward.2} parent=5 // pred_check_branch
      %4168 = sbr.rel (%p4166) target = $region40
    $region39: #{basic_block_forward.2} parent=5 // pred_region
      %s4169 = ssub.s32 %s9, 2
      // Predicated region
      $region41: #{basic_block_forward.2} parent=39 // pred_check
        %p4170 = pneg %p106
      $region42: #{basic_block_forward.2} parent=39 // pred_check_branch
        %4172 = sbr.rel (%p4170) target = $region44
      $region43: #{basic_block_forward.2} parent=39 // pred_region
        %p4173 = scmp.lt.s32.totalorder %s15, 1
        %s4174 = scalar_select %p4173, %s15, 1
        %s4175 = smul.addr %s4174, 54
        %s4176 = smul.addr %s4175, 4
        %s4177 = scalar_lea.vmem %s3, %s4176
      $region44: #{basic_block_forward.2} parent=39 // pred_fallthru
        _
    $region40: #{basic_block_forward.2} parent=5 // pred_fallthru
      _
  $region6: #{basic_block_forward.2} parent=0 // loop_footer
    %s13 = sadd.s32 1, %s9
  $region7: #{basic_block_forward.2} parent=0 // loop_footer_branch
    %8 = sbr.rel target = $region3
  $region8: #{basic_block_forward.2} parent=0 // loop_exit
    _

// kernel: basic_block_forward.3
$region0: #{basic_block_forward.3}
  #allocation0 [shape = 'u32[]', space=smem, size = 0x4, offset = 0x4, fixed_abs, tag = 'smem constant byte address 0x4 - core index']
  #allocation1 [shape = 'u32[144,128]{1,0:T(1,128)}', space=vmem, size = 0x12000, scoped, tag = 'internal scratch']
  %s0 = inlined_call_operand.vmem [shape: bf16[2,18,18,128], index: 0, kind: input, shape index: {}]
  %s1 = inlined_call_operand.vmem [shape: bf16[1152,128], index: 1, kind: input, shape index: {}]
  %s2 = inlined_call_operand.vmem [shape: f32[1,128], index: 2, kind: input, shape index: {}]
  %s3 = inlined_call_operand.vmem [shape: bf16[2,1,1,18,18,4], index: 3, kind: input, shape index: {}]
  %s4 = inlined_call_operand.vmem [shape: bf16[4,128], index: 4, kind: input, shape index: {}]
  %s5 = inlined_call_operand.vmem [shape: f32[1,128], index: 5, kind: input, shape index: {}]
  %s6 = inlined_call_operand.vmem [shape: f32[512,128], index: 6, kind: output, shape index: {}]
  %s7 = sld [smem:[#allocation0]]
  $region57: #{basic_block_forward.3} parent=0
    _
  %s9 = ssub.s32 1, %s7
  %s10 = scalar_select 0, %s9, %s7
  loop: start=0, step=1, limit=4
  $region2: #{basic_block_forward.3} parent=0 // loop_pre_header
    _
  $region3: #{basic_block_forward.3} parent=0 // loop_header
    %s12 = sphi 0, %s16
    %p13 = scmp.ge.s32.totalorder %s12, 4
    %s22 = sphi 0, %s24
    %s25 = sphi 0, %s22
    %s26 = sphi 0, %s25
    %s42 = sphi 0, %s26
    %s46 = sphi 0, %s46
    %s48 = sphi 0, %s46
    %s49 = sphi 0, %s48
    %s63 = sphi 0, %s49
    %s67 = sphi 0, %s67
    %s69 = sphi 0, %s67
    %s70 = sphi 0, %s69
    %s84 = sphi 0, %s70
    %s90 = sphi 0, %s92
    %s93 = sphi 0, %s90
    %s94 = sphi 0, %s93
    %s110 = sphi 0, %s94
    %s114 = sphi 0, %s114
    %s116 = sphi 0, %s114
    %s117 = sphi 0, %s116
    %s131 = sphi 0, %s117
    %s135 = sphi 0, %s135
    %s137 = sphi 0, %s135
    %s138 = sphi 0, %s137
    %s152 = sphi 0, %s138
    %s158 = sphi 0, %s160
    %s161 = sphi 0, %s158
    %s162 = sphi 0, %s161
    %s178 = sphi 0, %s162
  $region4: #{basic_block_forward.3} parent=0 // loop_header_branch
    %15 = sbr.rel (%p13) target = $region8
  $region5: #{basic_block_forward.3} parent=0 // loop_body
    %s17 = ssub.s32 %s12, 1
    %s18 = ssub.s32 %s12, 2
    %s19 = sadd.s32 %s12, 1
    %s20 = ssub.s32 %s12, %s19
    %p21 = scmp.eq.s32.totalorder %s20, 0
    %s23 = sadd.s32 %s22, 1
    %s24 = scalar_select %p21, %s22, %s23
    %p27 = pneg %p21
    %p28 = scmp.eq.s32.totalorder %s12, 1
    %p29 = por %p27, %p28
    %p30 = scmp.ne.s32.totalorder %s22, %s25
    %p31 = scmp.eq.s32.totalorder %s12, 0
    %p32 = por %p30, %p31
    %p33 = scmp.ne.s32.totalorder %s22, %s25
    %p34 = scmp.eq.s32.totalorder %s17, 1
    %p35 = por %p33, %p34
    %p36 = scmp.ne.s32.totalorder %s25, %s26
    %p37 = scmp.eq.s32.totalorder %s17, 0
    %p38 = por %p36, %p37
    %p39 = scmp.ne.s32.totalorder %s25, %s26
    %p40 = scmp.eq.s32.totalorder %s18, 1
    %p41 = por %p39, %p40
    %p43 = scmp.ne.s32.totalorder %s26, %s42
    %p44 = scmp.eq.s32.totalorder %s18, 0
    %p45 = por %p43, %p44
    %s47 = sadd.s32 %s46, 1
    %p50 = scmp.eq.s32.totalorder %s12, 1
    %p51 = scmp.ne.s32.totalorder %s46, %s48
    %p52 = scmp.eq.s32.totalorder %s12, 0
    %p53 = por %p51, %p52
    %p54 = scmp.ne.s32.totalorder %s46, %s48
    %p55 = scmp.eq.s32.totalorder %s17, 1
    %p56 = por %p54, %p55
    %p57 = scmp.ne.s32.totalorder %s48, %s49
    %p58 = scmp.eq.s32.totalorder %s17, 0
    %p59 = por %p57, %p58
    %p60 = scmp.ne.s32.totalorder %s48, %s49
    %p61 = scmp.eq.s32.totalorder %s18, 1
    %p62 = por %p60, %p61
    %p64 = scmp.ne.s32.totalorder %s49, %s63
    %p65 = scmp.eq.s32.totalorder %s18, 0
    %p66 = por %p64, %p65
    %s68 = sadd.s32 %s67, 1
    %p71 = scmp.eq.s32.totalorder %s12, 1
    %p72 = scmp.ne.s32.totalorder %s67, %s69
    %p73 = scmp.eq.s32.totalorder %s12, 0
    %p74 = por %p72, %p73
    %p75 = scmp.ne.s32.totalorder %s67, %s69
    %p76 = scmp.eq.s32.totalorder %s17, 1
    %p77 = por %p75, %p76
    %p78 = scmp.ne.s32.totalorder %s69, %s70
    %p79 = scmp.eq.s32.totalorder %s17, 0
    %p80 = por %p78, %p79
    %p81 = scmp.ne.s32.totalorder %s69, %s70
    %p82 = scmp.eq.s32.totalorder %s18, 1
    %p83 = por %p81, %p82
    %p85 = scmp.ne.s32.totalorder %s70, %s84
    %p86 = scmp.eq.s32.totalorder %s18, 0
    %p87 = por %p85, %p86
    %s88 = ssub.s32 %s12, %s19
    %p89 = scmp.eq.s32.totalorder %s88, 0
    %s91 = sadd.s32 %s90, 1
    %s92 = scalar_select %p89, %s90, %s91
    %p95 = pneg %p89
    %p96 = scmp.eq.s32.totalorder %s12, 1
    %p97 = por %p95, %p96
    %p98 = scmp.ne.s32.totalorder %s90, %s93
    %p99 = scmp.eq.s32.totalorder %s12, 0
    %p100 = por %p98, %p99
    %p101 = scmp.ne.s32.totalorder %s90, %s93
    %p102 = scmp.eq.s32.totalorder %s17, 1
    %p103 = por %p101, %p102
    %p104 = scmp.ne.s32.totalorder %s93, %s94
    %p105 = scmp.eq.s32.totalorder %s17, 0
    %p106 = por %p104, %p105
    %p107 = scmp.ne.s32.totalorder %s93, %s94
    %p108 = scmp.eq.s32.totalorder %s18, 1
    %p109 = por %p107, %p108
    %p111 = scmp.ne.s32.totalorder %s94, %s110
    %p112 = scmp.eq.s32.totalorder %s18, 0
    %p113 = por %p111, %p112
    %s115 = sadd.s32 %s114, 1
    %p118 = scmp.eq.s32.totalorder %s12, 1
    %p119 = scmp.ne.s32.totalorder %s114, %s116
    %p120 = scmp.eq.s32.totalorder %s12, 0
    %p121 = por %p119, %p120
    %p122 = scmp.ne.s32.totalorder %s114, %s116
    %p123 = scmp.eq.s32.totalorder %s17, 1
    %p124 = por %p122, %p123
    %p125 = scmp.ne.s32.totalorder %s116, %s117
    %p126 = scmp.eq.s32.totalorder %s17, 0
    %p127 = por %p125, %p126
    %p128 = scmp.ne.s32.totalorder %s116, %s117
    %p129 = scmp.eq.s32.totalorder %s18, 1
    %p130 = por %p128, %p129
    %p132 = scmp.ne.s32.totalorder %s117, %s131
    %p133 = scmp.eq.s32.totalorder %s18, 0
    %p134 = por %p132, %p133
    %s136 = sadd.s32 %s135, 1
    %p139 = scmp.eq.s32.totalorder %s12, 1
    %p140 = scmp.ne.s32.totalorder %s135, %s137
    %p141 = scmp.eq.s32.totalorder %s12, 0
    %p142 = por %p140, %p141
    %p143 = scmp.ne.s32.totalorder %s135, %s137
    %p144 = scmp.eq.s32.totalorder %s17, 1
    %p145 = por %p143, %p144
    %p146 = scmp.ne.s32.totalorder %s137, %s138
    %p147 = scmp.eq.s32.totalorder %s17, 0
    %p148 = por %p146, %p147
    %p149 = scmp.ne.s32.totalorder %s137, %s138
    %p150 = scmp.eq.s32.totalorder %s18, 1
    %p151 = por %p149, %p150
    %p153 = scmp.ne.s32.totalorder %s138, %s152
    %p154 = scmp.eq.s32.totalorder %s18, 0
    %p155 = por %p153, %p154
    %s156 = ssub.s32 %s12, %s19
    %p157 = scmp.eq.s32.totalorder %s156, 0
    %s159 = sadd.s32 %s158, 1
    %s160 = scalar_select %p157, %s158, %s159
    %p163 = pneg %p157
    %p164 = scmp.eq.s32.totalorder %s12, 1
    %p165 = por %p163, %p164
    %p166 = scmp.ne.s32.totalorder %s158, %s161
    %p167 = scmp.eq.s32.totalorder %s12, 0
    %p168 = por %p166, %p167
    %p169 = scmp.ne.s32.totalorder %s158, %s161
    %p170 = scmp.eq.s32.totalorder %s17, 1
    %p171 = por %p169, %p170
    %p172 = scmp.ne.s32.totalorder %s161, %s162
    %p173 = scmp.eq.s32.totalorder %s17, 0
    %p174 = por %p172, %p173
    %p175 = scmp.ne.s32.totalorder %s161, %s162
    %p176 = scmp.eq.s32.totalorder %s18, 1
    %p177 = por %p175, %p176
    %p179 = scmp.ne.s32.totalorder %s162, %s178
    %p180 = scmp.eq.s32.totalorder %s18, 0
    %p181 = por %p179, %p180
    %p182 = scmp.le.s32.totalorder 1, %s12
    %p183 = scmp.lt.s32.totalorder %s12, 3
    %p184 = pnand %p182, %p183
    %p185 = pneg %p184
    // Predicated region
    $region9: #{basic_block_forward.3} parent=5 // pred_check
      _
    $region10: #{basic_block_forward.3} parent=5 // pred_check_branch
      %187 = sbr.rel (%p184) target = $region12
    $region11: #{basic_block_forward.3} parent=5 // pred_region
      %s188 = ssub.s32 %s12, 1
      // Predicated region
      $region13: #{basic_block_forward.3} parent=11 // pred_check
        %p189 = pneg %p59
      $region14: #{basic_block_forward.3} parent=11 // pred_check_branch
        %191 = sbr.rel (%p189) target = $region16
      $region15: #{basic_block_forward.3} parent=11 // pred_region
        _
      $region16: #{basic_block_forward.3} parent=11 // pred_fallthru
        _
      // Predicated region
      $region17: #{basic_block_forward.3} parent=11 // pred_check
        %p192 = pneg %p80
      $region18: #{basic_block_forward.3} parent=11 // pred_check_branch
        %194 = sbr.rel (%p192) target = $region20
      $region19: #{basic_block_forward.3} parent=11 // pred_region
        _
      $region20: #{basic_block_forward.3} parent=11 // pred_fallthru
        _
      // Predicated region
      $region21: #{basic_block_forward.3} parent=11 // pred_check
        %p195 = pneg %p127
      $region22: #{basic_block_forward.3} parent=11 // pred_check_branch
        %197 = sbr.rel (%p195) target = $region24
      $region23: #{basic_block_forward.3} parent=11 // pred_region
        _
      $region24: #{basic_block_forward.3} parent=11 // pred_fallthru
        _
      // Predicated region
      $region25: #{basic_block_forward.3} parent=11 // pred_check
        %p198 = pneg %p148
      $region26: #{basic_block_forward.3} parent=11 // pred_check_branch
        %200 = sbr.rel (%p198) target = $region28
      $region27: #{basic_block_forward.3} parent=11 // pred_region
        _
      $region28: #{basic_block_forward.3} parent=11 // pred_fallthru
        _
    $region12: #{basic_block_forward.3} parent=5 // pred_fallthru
      _
    %p201 = scmp.lt.s32.totalorder %s12, 2
    // Predicated region
    $region29: #{basic_block_forward.3} parent=5 // pred_check
      %p202 = pneg %p201
    $region30: #{basic_block_forward.3} parent=5 // pred_check_branch
      %204 = sbr.rel (%p202) target = $region32
    $region31: #{basic_block_forward.3} parent=5 // pred_region
      // Predicated region
      $region33: #{basic_block_forward.3} parent=31 // pred_check
        %p205 = pneg %p32
      $region34: #{basic_block_forward.3} parent=31 // pred_check_branch
        %207 = sbr.rel (%p205) target = $region36
      $region35: #{basic_block_forward.3} parent=31 // pred_region
        %p208 = scmp.lt.s32.totalorder %s12, 1
        %s209 = scalar_select %p208, %s12, 1
        %s210 = smul.addr %s209, 54
        %s211 = smul.addr %s210, 4
        %s212 = scalar_lea.vmem %s0, %s211
      $region36: #{basic_block_forward.3} parent=31 // pred_fallthru
        _
      // Predicated region
      $region37: #{basic_block_forward.3} parent=31 // pred_check
        %p213 = pneg %p100
      $region38: #{basic_block_forward.3} parent=31 // pred_check_branch
        %215 = sbr.rel (%p213) target = $region40
      $region39: #{basic_block_forward.3} parent=31 // pred_region
        %p216 = scmp.lt.s32.totalorder %s12, 1
        %s217 = scalar_select %p216, %s12, 1
        %s218 = smul.addr %s217, 54
        %s219 = smul.addr %s218, 4
        %s220 = scalar_lea.vmem %s3, %s219
      $region40: #{basic_block_forward.3} parent=31 // pred_fallthru
        _
    $region32: #{basic_block_forward.3} parent=5 // pred_fallthru
      _
    %p221 = scmp.le.s32.totalorder 1, %s12
    %p222 = scmp.lt.s32.totalorder %s12, 3
    %p223 = pnand %p221, %p222
    %p224 = pneg %p223
    // Predicated region
    $region41: #{basic_block_forward.3} parent=5 // pred_check
      _
    $region42: #{basic_block_forward.3} parent=5 // pred_check_branch
      %226 = sbr.rel (%p223) target = $region44
    $region43: #{basic_block_forward.3} parent=5 // pred_region
      %s227 = ssub.s32 %s12, 1
      %p228 = scmp.lt.s32.totalorder %s17, 1
      %s229 = scalar_select %p228, %s17, 1
      %s230 = smul.addr %s229, 54
      %s231 = smul.addr %s230, 4
      %s232 = scalar_lea.vmem %s0, %s231
      %p233 = pneg %p38
      %p234 = pneg %p35
      %p235 = pneg %p59
      %p236 = pneg %p56
      %p237 = pneg %p80
      %p238 = pneg %p77
      %p239 = scmp.lt.s32.totalorder %s17, 1
      %s240 = scalar_select %p239, %s17, 1
      %s241 = smul.addr %s240, 54
      %s242 = smul.addr %s241, 4
      %s243 = scalar_lea.vmem %s3, %s242
      %p244 = pneg %p106
      %p245 = pneg %p103
      %p246 = pneg %p127
      %p247 = pneg %p124
      %p248 = pneg %p148
      %p249 = pneg %p145
      %p250 = pneg %p174
      %p251 = pneg %p171
      %s252 = smul.u32 32, %s17
      %p253 = scmp.lt.s32.totalorder %s252, 63
      %s254 = scalar_select %p253, %s252, 63
      %s255 = smul.addr %s254, 8
      %s256 = scalar_lea.vmem %s6, %s255
      %p257 = scmp.lt.s32.totalorder %s17, 1
      %s258 = scalar_select %p257, %s17, 1
      %s259 = smul.addr %s258, 54
      %s260 = smul.addr %s259, 4
      %s261 = scalar_lea.vmem %s0, %s260
      %p262 = scmp.lt.s32.totalorder %s17, 1
      %s263 = scalar_select %p262, %s17, 1
      %s264 = smul.addr %s263, 54
      %s265 = smul.addr %s264, 4
      %s266 = scalar_lea.vmem %s3, %s265
      %s267 = smul.u32 32, %s17
      %p268 = scmp.lt.s32.totalorder %s267, 63
      %s269 = scalar_select %p268, %s267, 63
      %s270 = smul.addr %s269, 8
      %s271 = scalar_lea.vmem %s6, %s270
      %s272 = smul.u32 32, %s17
      %v274 = vld [vmem:[%s261] sm:$0xf]
      %v275 = vld [vmem:[%s261 + $0x4] sm:$0xf]
      %v276 = vld [vmem:[%s261 + $0xc] sm:$0xf]
      %v277 = vld [vmem:[%s261 + $0x10] sm:$0xf]
      %v278 = vld [vmem:[%s261 + $0x18] sm:$0xf]
      %v279 = vld [vmem:[%s261 + $0x1c] sm:$0xf]
      %v280 = vld [vmem:[%s261 + $0x24] sm:$0xf]
      %v281 = vld [vmem:[%s261 + $0x28] sm:$0xf]
      %v282 = vld [vmem:[%s261 + $0x30] sm:$0xf]
      %v283 = vld [vmem:[%s261 + $0x34] sm:$0xf]
      %v284 = vld [vmem:[%s261 + $0x3c] sm:$0xf]
      %v285 = vld [vmem:[%s261 + $0x40] sm:$0xf]
      %v286 = vld [vmem:[%s261 + $0x48] sm:$0xf]
      %v287 = vld [vmem:[%s261 + $0x4c] sm:$0xf]
      %v288 = vld [vmem:[%s261 + $0x54] sm:$0xf]
      %v289 = vld [vmem:[%s261 + $0x58] sm:$0xf]
      %v290 = vld [vmem:[%s261 + $0x60] sm:$0xf]
      %v291 = vld [vmem:[%s261 + $0x64] sm:$0xf]
      %v292 = vld [vmem:[%s261 + $0x6c] sm:$0xf]
      %v293 = vld [vmem:[%s261 + $0x70] sm:$0xf]
      %v294 = vld [vmem:[%s261 + $0x78] sm:$0xf]
      %v295 = vld [vmem:[%s261 + $0x7c] sm:$0xf]
      %v296 = vld [vmem:[%s261 + $0x84] sm:$0xf]
      %v297 = vld [vmem:[%s261 + $0x88] sm:$0xf]
      %v298 = vld [vmem:[%s261 + $0x90] sm:$0xf]
      %v299 = vld [vmem:[%s261 + $0x94] sm:$0xf]
      %v300 = vld [vmem:[%s261 + $0x9c] sm:$0xf]
      %v301 = vld [vmem:[%s261 + $0xa0] sm:$0xf]
      %v302 = vld [vmem:[%s261 + $0xa8] sm:$0xf]
      %v303 = vld [vmem:[%s261 + $0xac] sm:$0xf]
      %v304 = vld [vmem:[%s261 + $0xb4] sm:$0xf]
      %v305 = vld [vmem:[%s261 + $0xb8] sm:$0xf]
      %v306 = vld [vmem:[%s1] sm:$0xf]
      %v307 = vld [vmem:[%s1 + $0x4] sm:$0xf]
      %v308 = vld [vmem:[%s1 + $0x8] sm:$0xf]
      %v309 = vld [vmem:[%s1 + $0xc] sm:$0xf]
      %v310 = vld [vmem:[%s1 + $0x10] sm:$0xf]
      %v311 = vld [vmem:[%s1 + $0x14] sm:$0xf]
      %v312 = vld [vmem:[%s1 + $0x18] sm:$0xf]
      %v313 = vld [vmem:[%s1 + $0x1c] sm:$0xf]
      %v314 = vld [vmem:[%s1 + $0x20] sm:$0xf]
      %v315 = vld [vmem:[%s1 + $0x24] sm:$0xf]
      %v316 = vld [vmem:[%s1 + $0x28] sm:$0xf]
      %v317 = vld [vmem:[%s1 + $0x2c] sm:$0xf]
      %v318 = vld [vmem:[%s1 + $0x30] sm:$0xf]
      %v319 = vld [vmem:[%s1 + $0x34] sm:$0xf]
      %v320 = vld [vmem:[%s1 + $0x38] sm:$0xf]
      %v321 = vld [vmem:[%s1 + $0x3c] sm:$0xf]
      %v322 = vld [vmem:[%s261 + $0x8] sm:$0x1]
      %v323 = vld [vmem:[%s261 + $0x14] sm:$0x1]
      %v324 = vld [vmem:[%s261 + $0x20] sm:$0x1]
      %v325 = vld [vmem:[%s261 + $0x2c] sm:$0x1]
      %v326 = vld [vmem:[%s261 + $0x38] sm:$0x1]
      %v327 = vld [vmem:[%s261 + $0x44] sm:$0x1]
      %v328 = vld [vmem:[%s261 + $0x50] sm:$0x1]
      %v329 = vld [vmem:[%s261 + $0x5c] sm:$0x1]
      %v330 = vld [vmem:[%s261 + $0x68] sm:$0x1]
      %v331 = vld [vmem:[%s261 + $0x74] sm:$0x1]
      %v332 = vld [vmem:[%s261 + $0x80] sm:$0x1]
      %v333 = vld [vmem:[%s261 + $0x8c] sm:$0x1]
      %v334 = vld [vmem:[%s261 + $0x98] sm:$0x1]
      %v335 = vld [vmem:[%s261 + $0xa4] sm:$0x1]
      %v336 = vld [vmem:[%s261 + $0xb0] sm:$0x1]
      %v337 = vld [vmem:[%s261 + $0xbc] sm:$0x1]
      %vm338 = vsmask.f32 3328
      %vm339 = vsmask.f32 7440
      %vm340 = vmor %vm338, %vm339
      %v342 = vshrl.u32 %v274, 16
      %v344 = vrot.slane %v342, 4
      %v345 = vshll.u32 %v274, 16
      %v347 = vrot.slane %v345, 5
      %v348 = vor.u32 %v344, %v347
      %v349 = vrot.slane %v348, 4
      %v351 = vshll.u32 %v275, 16
      %v353 = vrot.slane %v351, 5
      %v354 = vsel %vm340, %v349, %v353
      %v355 = vshrl.u32 %v275, 16
      %v357 = vrot.slane %v355, 4
      %v358 = vor.u32 %v357, %v353
      %v359 = vrot.slane %v358, 4
      %v361 = vshll.u32 %v322, 16
      %v363 = vrot.slane %v361, 5
      %v364 = vsel %vm340, %v359, %v363
      %v366 = vshrl.u32 %v276, 16
      %v368 = vrot.slane %v366, 4
      %v369 = vshll.u32 %v276, 16
      %v371 = vrot.slane %v369, 5
      %v372 = vor.u32 %v368, %v371
      %v373 = vrot.slane %v372, 4
      %v375 = vshll.u32 %v277, 16
      %v377 = vrot.slane %v375, 5
      %v378 = vsel %vm340, %v373, %v377
      %v379 = vshrl.u32 %v277, 16
      %v381 = vrot.slane %v379, 4
      %v382 = vor.u32 %v381, %v377
      %v383 = vrot.slane %v382, 4
      %v385 = vshll.u32 %v323, 16
      %v387 = vrot.slane %v385, 5
      %v388 = vsel %vm340, %v383, %v387
      %v390 = vshrl.u32 %v278, 16
      %v392 = vrot.slane %v390, 4
      %v393 = vshll.u32 %v278, 16
      %v395 = vrot.slane %v393, 5
      %v396 = vor.u32 %v392, %v395
      %v397 = vrot.slane %v396, 4
      %v399 = vshll.u32 %v279, 16
      %v401 = vrot.slane %v399, 5
      %v402 = vsel %vm340, %v397, %v401
      %v403 = vshrl.u32 %v279, 16
      %v405 = vrot.slane %v403, 4
      %v406 = vor.u32 %v405, %v401
      %v407 = vrot.slane %v406, 4
      %v409 = vshll.u32 %v324, 16
      %v411 = vrot.slane %v409, 5
      %v412 = vsel %vm340, %v407, %v411
      %v414 = vshrl.u32 %v280, 16
      %v416 = vrot.slane %v414, 4
      %v417 = vshll.u32 %v280, 16
      %v419 = vrot.slane %v417, 5
      %v420 = vor.u32 %v416, %v419
      %v421 = vrot.slane %v420, 4
      %v423 = vshll.u32 %v281, 16
      %v425 = vrot.slane %v423, 5
      %v426 = vsel %vm340, %v421, %v425
      %v427 = vshrl.u32 %v281, 16
      %v429 = vrot.slane %v427, 4
      %v430 = vor.u32 %v429, %v425
      %v431 = vrot.slane %v430, 4
      %v433 = vshll.u32 %v325, 16
      %v435 = vrot.slane %v433, 5
      %v436 = vsel %vm340, %v431, %v435
      %v438 = vshrl.u32 %v282, 16
      %v440 = vrot.slane %v438, 4
      %v441 = vshll.u32 %v282, 16
      %v443 = vrot.slane %v441, 5
      %v444 = vor.u32 %v440, %v443
      %v445 = vrot.slane %v444, 4
      %v447 = vshll.u32 %v283, 16
      %v449 = vrot.slane %v447, 5
      %v450 = vsel %vm340, %v445, %v449
      %v451 = vshrl.u32 %v283, 16
      %v453 = vrot.slane %v451, 4
      %v454 = vor.u32 %v453, %v449
      %v455 = vrot.slane %v454, 4
      %v457 = vshll.u32 %v326, 16
      %v459 = vrot.slane %v457, 5
      %v460 = vsel %vm340, %v455, %v459
      %v462 = vshrl.u32 %v284, 16
      %v464 = vrot.slane %v462, 4
      %v465 = vshll.u32 %v284, 16
      %v467 = vrot.slane %v465, 5
      %v468 = vor.u32 %v464, %v467
      %v469 = vrot.slane %v468, 4
      %v471 = vshll.u32 %v285, 16
      %v473 = vrot.slane %v471, 5
      %v474 = vsel %vm340, %v469, %v473
      %v475 = vshrl.u32 %v285, 16
      %v477 = vrot.slane %v475, 4
      %v478 = vor.u32 %v477, %v473
      %v479 = vrot.slane %v478, 4
      %v481 = vshll.u32 %v327, 16
      %v483 = vrot.slane %v481, 5
      %v484 = vsel %vm340, %v479, %v483
      %v486 = vshrl.u32 %v286, 16
      %v488 = vrot.slane %v486, 4
      %v489 = vshll.u32 %v286, 16
      %v491 = vrot.slane %v489, 5
      %v492 = vor.u32 %v488, %v491
      %v493 = vrot.slane %v492, 4
      %v495 = vshll.u32 %v287, 16
      %v497 = vrot.slane %v495, 5
      %v498 = vsel %vm340, %v493, %v497
      %v499 = vshrl.u32 %v287, 16
      %v501 = vrot.slane %v499, 4
      %v502 = vor.u32 %v501, %v497
      %v503 = vrot.slane %v502, 4
      %v505 = vshll.u32 %v328, 16
      %v507 = vrot.slane %v505, 5
      %v508 = vsel %vm340, %v503, %v507
      %v510 = vshrl.u32 %v288, 16
      %v512 = vrot.slane %v510, 4
      %v513 = vshll.u32 %v288, 16
      %v515 = vrot.slane %v513, 5
      %v516 = vor.u32 %v512, %v515
      %v517 = vrot.slane %v516, 4
      %v519 = vshll.u32 %v289, 16
      %v521 = vrot.slane %v519, 5
      %v522 = vsel %vm340, %v517, %v521
      %v523 = vshrl.u32 %v289, 16
      %v525 = vrot.slane %v523, 4
      %v526 = vor.u32 %v525, %v521
      %v527 = vrot.slane %v526, 4
      %v529 = vshll.u32 %v329, 16
      %v531 = vrot.slane %v529, 5
      %v532 = vsel %vm340, %v527, %v531
      %v534 = vshrl.u32 %v290, 16
      %v536 = vrot.slane %v534, 4
      %v537 = vshll.u32 %v290, 16
      %v539 = vrot.slane %v537, 5
      %v540 = vor.u32 %v536, %v539
      %v541 = vrot.slane %v540, 4
      %v543 = vshll.u32 %v291, 16
      %v545 = vrot.slane %v543, 5
      %v546 = vsel %vm340, %v541, %v545
      %v547 = vshrl.u32 %v291, 16
      %v549 = vrot.slane %v547, 4
      %v550 = vor.u32 %v549, %v545
      %v551 = vrot.slane %v550, 4
      %v553 = vshll.u32 %v330, 16
      %v555 = vrot.slane %v553, 5
      %v556 = vsel %vm340, %v551, %v555
      %v558 = vshrl.u32 %v292, 16
      %v560 = vrot.slane %v558, 4
      %v561 = vshll.u32 %v292, 16
      %v563 = vrot.slane %v561, 5
      %v564 = vor.u32 %v560, %v563
      %v565 = vrot.slane %v564, 4
      %v567 = vshll.u32 %v293, 16
      %v569 = vrot.slane %v567, 5
      %v570 = vsel %vm340, %v565, %v569
      %v571 = vshrl.u32 %v293, 16
      %v573 = vrot.slane %v571, 4
      %v574 = vor.u32 %v573, %v569
      %v575 = vrot.slane %v574, 4
      %v577 = vshll.u32 %v331, 16
      %v579 = vrot.slane %v577, 5
      %v580 = vsel %vm340, %v575, %v579
      %v582 = vshrl.u32 %v294, 16
      %v584 = vrot.slane %v582, 4
      %v585 = vshll.u32 %v294, 16
      %v587 = vrot.slane %v585, 5
      %v588 = vor.u32 %v584, %v587
      %v589 = vrot.slane %v588, 4
      %v591 = vshll.u32 %v295, 16
      %v593 = vrot.slane %v591, 5
      %v594 = vsel %vm340, %v589, %v593
      %v595 = vshrl.u32 %v295, 16
      %v597 = vrot.slane %v595, 4
      %v598 = vor.u32 %v597, %v593
      %v599 = vrot.slane %v598, 4
      %v601 = vshll.u32 %v332, 16
      %v603 = vrot.slane %v601, 5
      %v604 = vsel %vm340, %v599, %v603
      %v606 = vshrl.u32 %v296, 16
      %v608 = vrot.slane %v606, 4
      %v609 = vshll.u32 %v296, 16
      %v611 = vrot.slane %v609, 5
      %v612 = vor.u32 %v608, %v611
      %v613 = vrot.slane %v612, 4
      %v615 = vshll.u32 %v297, 16
      %v617 = vrot.slane %v615, 5
      %v618 = vsel %vm340, %v613, %v617
      %v619 = vshrl.u32 %v297, 16
      %v621 = vrot.slane %v619, 4
      %v622 = vor.u32 %v621, %v617
      %v623 = vrot.slane %v622, 4
      %v625 = vshll.u32 %v333, 16
      %v627 = vrot.slane %v625, 5
      %v628 = vsel %vm340, %v623, %v627
      %v630 = vshrl.u32 %v298, 16
      %v632 = vrot.slane %v630, 4
      %v633 = vshll.u32 %v298, 16
      %v635 = vrot.slane %v633, 5
      %v636 = vor.u32 %v632, %v635
      %v637 = vrot.slane %v636, 4
      %v639 = vshll.u32 %v299, 16
      %v641 = vrot.slane %v639, 5
      %v642 = vsel %vm340, %v637, %v641
      %v643 = vshrl.u32 %v299, 16
      %v645 = vrot.slane %v643, 4
      %v646 = vor.u32 %v645, %v641
      %v647 = vrot.slane %v646, 4
      %v649 = vshll.u32 %v334, 16
      %v651 = vrot.slane %v649, 5
      %v652 = vsel %vm340, %v647, %v651
      %v654 = vshrl.u32 %v300, 16
      %v656 = vrot.slane %v654, 4
      %v657 = vshll.u32 %v300, 16
      %v659 = vrot.slane %v657, 5
      %v660 = vor.u32 %v656, %v659
      %v661 = vrot.slane %v660, 4
      %v663 = vshll.u32 %v301, 16
      %v665 = vrot.slane %v663, 5
      %v666 = vsel %vm340, %v661, %v665
      %v667 = vshrl.u32 %v301, 16
      %v669 = vrot.slane %v667, 4
      %v670 = vor.u32 %v669, %v665
      %v671 = vrot.slane %v670, 4
      %v673 = vshll.u32 %v335, 16
      %v675 = vrot.slane %v673, 5
      %v676 = vsel %vm340, %v671, %v675
      %v678 = vshrl.u32 %v302, 16
      %v680 = vrot.slane %v678, 4
      %v681 = vshll.u32 %v302, 16
      %v683 = vrot.slane %v681, 5
      %v684 = vor.u32 %v680, %v683
      %v685 = vrot.slane %v684, 4
      %v687 = vshll.u32 %v303, 16
      %v689 = vrot.slane %v687, 5
      %v690 = vsel %vm340, %v685, %v689
      %v691 = vshrl.u32 %v303, 16
      %v693 = vrot.slane %v691, 4
      %v694 = vor.u32 %v693, %v689
      %v695 = vrot.slane %v694, 4
      %v697 = vshll.u32 %v336, 16
      %v699 = vrot.slane %v697, 5
      %v700 = vsel %vm340, %v695, %v699
      %v702 = vshrl.u32 %v304, 16
      %v704 = vrot.slane %v702, 4
      %v705 = vshll.u32 %v304, 16
      %v707 = vrot.slane %v705, 5
      %v708 = vor.u32 %v704, %v707
      %v709 = vrot.slane %v708, 4
      %v711 = vshll.u32 %v305, 16
      %v713 = vrot.slane %v711, 5
      %v714 = vsel %vm340, %v709, %v713
      %v715 = vshrl.u32 %v305, 16
      %v717 = vrot.slane %v715, 4
      %v718 = vor.u32 %v717, %v713
      %v719 = vrot.slane %v718, 4
      %v721 = vshll.u32 %v337, 16
      %v723 = vrot.slane %v721, 5
      %v724 = vsel %vm340, %v719, %v723
      %v725 = vld [vmem:[%s1 + $0x40] sm:$0xf]
      %v726 = vld [vmem:[%s1 + $0x44] sm:$0xf]
      %v727 = vld [vmem:[%s1 + $0x48] sm:$0xf]
      %v728 = vld [vmem:[%s1 + $0x4c] sm:$0xf]
      %v729 = vld [vmem:[%s1 + $0x50] sm:$0xf]
      %v730 = vld [vmem:[%s1 + $0x54] sm:$0xf]
      %v731 = vld [vmem:[%s1 + $0x58] sm:$0xf]
      %v732 = vld [vmem:[%s1 + $0x5c] sm:$0xf]
      %v733 = vld [vmem:[%s1 + $0x60] sm:$0xf]
      %v734 = vld [vmem:[%s1 + $0x64] sm:$0xf]
      %v735 = vld [vmem:[%s1 + $0x68] sm:$0xf]
      %v736 = vld [vmem:[%s1 + $0x6c] sm:$0xf]
      %v737 = vld [vmem:[%s1 + $0x70] sm:$0xf]
      %v738 = vld [vmem:[%s1 + $0x74] sm:$0xf]
      %v739 = vld [vmem:[%s1 + $0x78] sm:$0xf]
      %v740 = vld [vmem:[%s1 + $0x7c] sm:$0xf]
      %v741 = vunpack.c.l.b16 %v354
      %v742 = vunpack.c.l.b16 %v364
      %v743 = vunpack.c.l.b16 %v378
      %v744 = vunpack.c.l.b16 %v388
      %v745 = vunpack.c.l.b16 %v402
      %v746 = vunpack.c.l.b16 %v412
      %v747 = vunpack.c.l.b16 %v426
      %v748 = vunpack.c.l.b16 %v436
      %v749 = vunpack.c.l.b16 %v450
      %v750 = vunpack.c.l.b16 %v460
      %v751 = vunpack.c.l.b16 %v474
      %v752 = vunpack.c.l.b16 %v484
      %v753 = vunpack.c.l.b16 %v498
      %v754 = vunpack.c.l.b16 %v508
      %v755 = vunpack.c.l.b16 %v522
      %v756 = vunpack.c.l.b16 %v532
      %v757 = vunpack.c.l.b16 %v546
      %v758 = vunpack.c.l.b16 %v556
      %v759 = vunpack.c.l.b16 %v570
      %v760 = vunpack.c.l.b16 %v580
      %v761 = vunpack.c.l.b16 %v594
      %v762 = vunpack.c.l.b16 %v604
      %v763 = vunpack.c.l.b16 %v618
      %v764 = vunpack.c.l.b16 %v628
      %v765 = vunpack.c.l.b16 %v642
      %v766 = vunpack.c.l.b16 %v652
      %v767 = vunpack.c.l.b16 %v666
      %v768 = vunpack.c.l.b16 %v676
      %v769 = vunpack.c.l.b16 %v690
      %v770 = vunpack.c.l.b16 %v700
      %v771 = vunpack.c.l.b16 %v714
      %v772 = vunpack.c.l.b16 %v724
      %v773 = vpack.c.b16 %v742, %v741
      %v774 = vpack.c.b16 %v744, %v743
      %v775 = vpack.c.b16 %v746, %v745
      %v776 = vpack.c.b16 %v748, %v747
      %v777 = vpack.c.b16 %v750, %v749
      %v778 = vpack.c.b16 %v752, %v751
      %v779 = vpack.c.b16 %v754, %v753
      %v780 = vpack.c.b16 %v756, %v755
      %v781 = vpack.c.b16 %v758, %v757
      %v782 = vpack.c.b16 %v760, %v759
      %v783 = vpack.c.b16 %v762, %v761
      %v784 = vpack.c.b16 %v764, %v763
      %v785 = vpack.c.b16 %v766, %v765
      %v786 = vpack.c.b16 %v768, %v767
      %v787 = vpack.c.b16 %v770, %v769
      %v788 = vpack.c.b16 %v772, %v771
      %v821 = vunpack.c.l.b16 %v725
      %v822 = vunpack.c.l.b16 %v726
      %v823 = vunpack.c.l.b16 %v727
      %v824 = vunpack.c.l.b16 %v728
      %v825 = vunpack.c.l.b16 %v729
      %v826 = vunpack.c.l.b16 %v730
      %v827 = vunpack.c.l.b16 %v731
      %v828 = vunpack.c.l.b16 %v732
      %v829 = vunpack.c.l.b16 %v733
      %v830 = vunpack.c.l.b16 %v734
      %v831 = vunpack.c.l.b16 %v735
      %v832 = vunpack.c.l.b16 %v736
      %v833 = vunpack.c.l.b16 %v737
      %v834 = vunpack.c.l.b16 %v738
      %v835 = vunpack.c.l.b16 %v739
      %v836 = vunpack.c.l.b16 %v740
      %v837 = vpack.c.b16 %v822, %v821
      %v838 = vpack.c.b16 %v824, %v823
      %v839 = vpack.c.b16 %v826, %v825
      %v840 = vpack.c.b16 %v828, %v827
      %v841 = vpack.c.b16 %v830, %v829
      %v842 = vpack.c.b16 %v832, %v831
      %v843 = vpack.c.b16 %v834, %v833
      %v844 = vpack.c.b16 %v836, %v835
      %853 = vmatprep.subr.bf16.mxu0 0
      %854 = vmatpush1.bf16.msra.mxu0 %v837
      %855 = vmatprep.subr.bf16.mxu0 0
      %856 = vmatpush1.bf16.msra.mxu0 %v838
      %857 = vmatprep.subr.bf16.mxu0 0
      %858 = vmatpush1.bf16.msra.mxu0 %v839
      %859 = vmatprep.subr.bf16.mxu0 0
      %860 = vmatpush1.bf16.msra.mxu0 %v840
      %861 = vmatprep.subr.bf16.mxu0 0
      %862 = vmatpush1.bf16.msra.mxu0 %v841
      %863 = vmatprep.subr.bf16.mxu0 0
      %864 = vmatpush1.bf16.msra.mxu0 %v842
      %865 = vmatprep.subr.bf16.mxu0 0
      %866 = vmatpush1.bf16.msra.mxu0 %v843
      %867 = vmatprep.subr.bf16.mxu0 0
      %868 = vmatpush1.bf16.msra.mxu0 %v844
      %869 = vmatprep.subr.bf16.mxu0 0
      %870 = vmatpush1.bf16.msra.mxu0 0
      %871 = vmatprep.subr.bf16.mxu0 0
      %872 = vmatpush1.bf16.msra.mxu0 0
      %873 = vmatprep.subr.bf16.mxu0 0
      %874 = vmatpush1.bf16.msra.mxu0 0
      %875 = vmatprep.subr.bf16.mxu0 0
      %876 = vmatpush1.bf16.msra.mxu0 0
      %877 = vmatprep.subr.bf16.mxu0 0
      %878 = vmatpush1.bf16.msra.mxu0 0
      %879 = vmatprep.subr.bf16.mxu0 0
      %880 = vmatpush1.bf16.msra.mxu0 0
      %881 = vmatprep.subr.bf16.mxu0 0
      %882 = vmatpush1.bf16.msra.mxu0 0
      %883 = vmatprep.subr.bf16.mxu0 0
      %884 = vmatpush1.bf16.msra.mxu0 0
      %885 = vmatprep.mubr.bf16.mxu0 0
      %886 = vmatmul.mubr.bf16.gmra.mrb[0].mxu0 %v773
      %v887 = vpop.f32.mrb[0].mxu0
      %v888 = vadd.f32 0.0, %v887
      %v889 = vpop.f32.mrb[0].mxu0
      %v890 = vpop.f32.mrb[0].mxu0
      %v891 = vadd.f32 0.0, %v890
      %v892 = vpop.f32.mrb[0].mxu0
      %893 = vmatprep.mubr.bf16.mxu0 0
      %894 = vmatmul.mubr.bf16.gmra.mrb[0].mxu0 %v774
      %v895 = vpop.f32.mrb[0].mxu0
      %v896 = vadd.f32 0.0, %v895
      %v897 = vpop.f32.mrb[0].mxu0
      %v898 = vpop.f32.mrb[0].mxu0
      %v899 = vadd.f32 0.0, %v898
      %v900 = vpop.f32.mrb[0].mxu0
      %901 = vmatprep.mubr.bf16.mxu0 0
      %902 = vmatmul.mubr.bf16.gmra.mrb[0].mxu0 %v775
      %v903 = vpop.f32.mrb[0].mxu0
      %v904 = vadd.f32 0.0, %v903
      %v905 = vpop.f32.mrb[0].mxu0
      %v906 = vpop.f32.mrb[0].mxu0
      %v907 = vadd.f32 0.0, %v906
      %v908 = vpop.f32.mrb[0].mxu0
      %909 = vmatprep.mubr.bf16.mxu0 0
      %910 = vmatmul.mubr.bf16.gmra.mrb[0].mxu0 %v776
      %v911 = vpop.f32.mrb[0].mxu0
      %v912 = vadd.f32 0.0, %v911
      %v913 = vpop.f32.mrb[0].mxu0
      %v914 = vpop.f32.mrb[0].mxu0
      %v915 = vadd.f32 0.0, %v914
      %v916 = vpop.f32.mrb[0].mxu0
      %917 = vmatprep.mubr.bf16.mxu0 0
      %918 = vmatmul.mubr.bf16.gmra.mrb[0].mxu0 %v777
      %v919 = vpop.f32.mrb[0].mxu0
      %v920 = vadd.f32 0.0, %v919
      %v921 = vpop.f32.mrb[0].mxu0
      %v922 = vpop.f32.mrb[0].mxu0
      %v923 = vadd.f32 0.0, %v922
      %v924 = vpop.f32.mrb[0].mxu0
      %925 = vmatprep.mubr.bf16.mxu0 0
      %926 = vmatmul.mubr.bf16.gmra.mrb[0].mxu0 %v778
      %v927 = vpop.f32.mrb[0].mxu0
      %v928 = vadd.f32 0.0, %v927
      %v929 = vpop.f32.mrb[0].mxu0
      %v930 = vpop.f32.mrb[0].mxu0
      %v931 = vadd.f32 0.0, %v930
      %v932 = vpop.f32.mrb[0].mxu0
      %933 = vmatprep.mubr.bf16.mxu0 0
      %934 = vmatmul.mubr.bf16.gmra.mrb[0].mxu0 %v779
      %v935 = vpop.f32.mrb[0].mxu0
      %v936 = vadd.f32 0.0, %v935
      %v937 = vpop.f32.mrb[0].mxu0
      %v938 = vpop.f32.mrb[0].mxu0
      %v939 = vadd.f32 0.0, %v938
      %v940 = vpop.f32.mrb[0].mxu0
      %941 = vmatprep.mubr.bf16.mxu0 0
      %942 = vmatmul.mubr.bf16.gmra.mrb[0].mxu0 %v780
      %v943 = vpop.f32.mrb[0].mxu0
      %v944 = vadd.f32 0.0, %v943
      %v945 = vpop.f32.mrb[0].mxu0
      %v946 = vpop.f32.mrb[0].mxu0
      %v947 = vadd.f32 0.0, %v946
      %v948 = vpop.f32.mrb[0].mxu0
      %949 = vmatprep.mubr.bf16.mxu0 0
      %950 = vmatmul.mubr.bf16.gmra.mrb[0].mxu0 %v781
      %v951 = vpop.f32.mrb[0].mxu0
      %v952 = vadd.f32 0.0, %v951
      %v953 = vpop.f32.mrb[0].mxu0
      %v954 = vpop.f32.mrb[0].mxu0
      %v955 = vadd.f32 0.0, %v954
      %v956 = vpop.f32.mrb[0].mxu0
      %957 = vmatprep.mubr.bf16.mxu0 0
      %958 = vmatmul.mubr.bf16.gmra.mrb[0].mxu0 %v782
      %v959 = vpop.f32.mrb[0].mxu0
      %v960 = vadd.f32 0.0, %v959
      %v961 = vpop.f32.mrb[0].mxu0
      %v962 = vpop.f32.mrb[0].mxu0
      %v963 = vadd.f32 0.0, %v962
      %v964 = vpop.f32.mrb[0].mxu0
      %965 = vmatprep.mubr.bf16.mxu0 0
      %966 = vmatmul.mubr.bf16.gmra.mrb[0].mxu0 %v783
      %v967 = vpop.f32.mrb[0].mxu0
      %v968 = vadd.f32 0.0, %v967
      %v969 = vpop.f32.mrb[0].mxu0
      %v970 = vpop.f32.mrb[0].mxu0
      %v971 = vadd.f32 0.0, %v970
      %v972 = vpop.f32.mrb[0].mxu0
      %973 = vmatprep.mubr.bf16.mxu0 0
      %974 = vmatmul.mubr.bf16.gmra.mrb[0].mxu0 %v784
      %v975 = vpop.f32.mrb[0].mxu0
      %v976 = vadd.f32 0.0, %v975
      %v977 = vpop.f32.mrb[0].mxu0
      %v978 = vpop.f32.mrb[0].mxu0
      %v979 = vadd.f32 0.0, %v978
      %v980 = vpop.f32.mrb[0].mxu0
      %981 = vmatprep.mubr.bf16.mxu0 0
      %982 = vmatmul.mubr.bf16.gmra.mrb[0].mxu0 %v785
      %v983 = vpop.f32.mrb[0].mxu0
      %v984 = vadd.f32 0.0, %v983
      %v985 = vpop.f32.mrb[0].mxu0
      %v986 = vpop.f32.mrb[0].mxu0
      %v987 = vadd.f32 0.0, %v986
      %v988 = vpop.f32.mrb[0].mxu0
      %989 = vmatprep.mubr.bf16.mxu0 0
      %990 = vmatmul.mubr.bf16.gmra.mrb[0].mxu0 %v786
      %v991 = vpop.f32.mrb[0].mxu0
      %v992 = vadd.f32 0.0, %v991
      %v993 = vpop.f32.mrb[0].mxu0
      %v994 = vpop.f32.mrb[0].mxu0
      %v995 = vadd.f32 0.0, %v994
      %v996 = vpop.f32.mrb[0].mxu0
      %997 = vmatprep.mubr.bf16.mxu0 0
      %998 = vmatmul.mubr.bf16.gmra.mrb[0].mxu0 %v787
      %v999 = vpop.f32.mrb[0].mxu0
      %v1000 = vadd.f32 0.0, %v999
      %v1001 = vpop.f32.mrb[0].mxu0
      %v1002 = vpop.f32.mrb[0].mxu0
      %v1003 = vadd.f32 0.0, %v1002
      %v1004 = vpop.f32.mrb[0].mxu0
      %1005 = vmatprep.mubr.bf16.mxu0 0
      %1006 = vmatmul.mubr.bf16.gmra.mrb[0].mxu0 %v788
      %v1007 = vpop.f32.mrb[0].mxu0
      %v1008 = vadd.f32 0.0, %v1007
      %v1009 = vpop.f32.mrb[0].mxu0
      %v1010 = vpop.f32.mrb[0].mxu0
      %v1011 = vadd.f32 0.0, %v1010
      %v1012 = vpop.f32.mrb[0].mxu0
      %1013 = vdwg.mxu0
      %v1046 = vunpack.c.l.b16 %v274
      %v1047 = vunpack.c.l.b16 %v275
      %v1048 = vunpack.c.l.b16 %v276
      %v1049 = vunpack.c.l.b16 %v277
      %v1050 = vunpack.c.l.b16 %v278
      %v1051 = vunpack.c.l.b16 %v279
      %v1052 = vunpack.c.l.b16 %v280
      %v1053 = vunpack.c.l.b16 %v281
      %v1054 = vunpack.c.l.b16 %v282
      %v1055 = vunpack.c.l.b16 %v283
      %v1056 = vunpack.c.l.b16 %v284
      %v1057 = vunpack.c.l.b16 %v285
      %v1058 = vunpack.c.l.b16 %v286
      %v1059 = vunpack.c.l.b16 %v287
      %v1060 = vunpack.c.l.b16 %v288
      %v1061 = vunpack.c.l.b16 %v289
      %v1062 = vunpack.c.l.b16 %v290
      %v1063 = vunpack.c.l.b16 %v291
      %v1064 = vunpack.c.l.b16 %v292
      %v1065 = vunpack.c.l.b16 %v293
      %v1066 = vunpack.c.l.b16 %v294
      %v1067 = vunpack.c.l.b16 %v295
      %v1068 = vunpack.c.l.b16 %v296
      %v1069 = vunpack.c.l.b16 %v297
      %v1070 = vunpack.c.l.b16 %v298
      %v1071 = vunpack.c.l.b16 %v299
      %v1072 = vunpack.c.l.b16 %v300
      %v1073 = vunpack.c.l.b16 %v301
      %v1074 = vunpack.c.l.b16 %v302
      %v1075 = vunpack.c.l.b16 %v303
      %v1076 = vunpack.c.l.b16 %v304
      %v1077 = vunpack.c.l.b16 %v305
      %v1078 = vpack.c.b16 %v1047, %v1046
      %v1079 = vpack.c.b16 %v1049, %v1048
      %v1080 = vpack.c.b16 %v1051, %v1050
      %v1081 = vpack.c.b16 %v1053, %v1052
      %v1082 = vpack.c.b16 %v1055, %v1054
      %v1083 = vpack.c.b16 %v1057, %v1056
      %v1084 = vpack.c.b16 %v1059, %v1058
      %v1085 = vpack.c.b16 %v1061, %v1060
      %v1086 = vpack.c.b16 %v1063, %v1062
      %v1087 = vpack.c.b16 %v1065, %v1064
      %v1088 = vpack.c.b16 %v1067, %v1066
      %v1089 = vpack.c.b16 %v1069, %v1068
      %v1090 = vpack.c.b16 %v1071, %v1070
      %v1091 = vpack.c.b16 %v1073, %v1072
      %v1092 = vpack.c.b16 %v1075, %v1074
      %v1093 = vpack.c.b16 %v1077, %v1076
      %v1126 = vunpack.c.l.b16 %v306
      %v1127 = vunpack.c.l.b16 %v307
      %v1128 = vunpack.c.l.b16 %v308
      %v1129 = vunpack.c.l.b16 %v309
      %v1130 = vunpack.c.l.b16 %v310
      %v1131 = vunpack.c.l.b16 %v311
      %v1132 = vunpack.c.l.b16 %v312
      %v1133 = vunpack.c.l.b16 %v313
      %v1134 = vunpack.c.l.b16 %v314
      %v1135 = vunpack.c.l.b16 %v315
      %v1136 = vunpack.c.l.b16 %v316
      %v1137 = vunpack.c.l.b16 %v317
      %v1138 = vunpack.c.l.b16 %v318
      %v1139 = vunpack.c.l.b16 %v319
      %v1140 = vunpack.c.l.b16 %v320
      %v1141 = vunpack.c.l.b16 %v321
      %v1142 = vpack.c.b16 %v1127, %v1126
      %v1143 = vpack.c.b16 %v1129, %v1128
      %v1144 = vpack.c.b16 %v1131, %v1130
      %v1145 = vpack.c.b16 %v1133, %v1132
      %v1146 = vpack.c.b16 %v1135, %v1134
      %v1147 = vpack.c.b16 %v1137, %v1136
      %v1148 = vpack.c.b16 %v1139, %v1138
      %v1149 = vpack.c.b16 %v1141, %v1140
      %1158 = vmatprep.subr.bf16.mxu0 0
      %1159 = vmatpush1.bf16.msra.mxu0 %v1142
      %1160 = vmatprep.subr.bf16.mxu0 0
      %1161 = vmatpush1.bf16.msra.mxu0 %v1143
      %1162 = vmatprep.subr.bf16.mxu0 0
      %1163 = vmatpush1.bf16.msra.mxu0 %v1144
      %1164 = vmatprep.subr.bf16.mxu0 0
      %1165 = vmatpush1.bf16.msra.mxu0 %v1145
      %1166 = vmatprep.subr.bf16.mxu0 0
      %1167 = vmatpush1.bf16.msra.mxu0 %v1146
      %1168 = vmatprep.subr.bf16.mxu0 0
      %1169 = vmatpush1.bf16.msra.mxu0 %v1147
      %1170 = vmatprep.subr.bf16.mxu0 0
      %1171 = vmatpush1.bf16.msra.mxu0 %v1148
      %1172 = vmatprep.subr.bf16.mxu0 0
      %1173 = vmatpush1.bf16.msra.mxu0 %v1149
      %1174 = vmatprep.subr.bf16.mxu0 0
      %1175 = vmatpush1.bf16.msra.mxu0 0
      %1176 = vmatprep.subr.bf16.mxu0 0
      %1177 = vmatpush1.bf16.msra.mxu0 0
      %1178 = vmatprep.subr.bf16.mxu0 0
      %1179 = vmatpush1.bf16.msra.mxu0 0
      %1180 = vmatprep.subr.bf16.mxu0 0
      %1181 = vmatpush1.bf16.msra.mxu0 0
      %1182 = vmatprep.subr.bf16.mxu0 0
      %1183 = vmatpush1.bf16.msra.mxu0 0
      %1184 = vmatprep.subr.bf16.mxu0 0
      %1185 = vmatpush1.bf16.msra.mxu0 0
      %1186 = vmatprep.subr.bf16.mxu0 0
      %1187 = vmatpush1.bf16.msra.mxu0 0
      %1188 = vmatprep.subr.bf16.mxu0 0
      %1189 = vmatpush1.bf16.msra.mxu0 0
      %1190 = vmatprep.mubr.bf16.mxu0 0
      %1191 = vmatmul.mubr.bf16.gmra.mrb[0].mxu0 %v1078
      %v1192 = vpop.f32.mrb[0].mxu0
      %v1193 = vadd.f32 %v888, %v1192
      %v1194 = vpop.f32.mrb[0].mxu0
      %v1195 = vpop.f32.mrb[0].mxu0
      %v1196 = vadd.f32 %v891, %v1195
      %v1197 = vpop.f32.mrb[0].mxu0
      %1198 = vmatprep.mubr.bf16.mxu0 0
      %1199 = vmatmul.mubr.bf16.gmra.mrb[0].mxu0 %v1079
      %v1200 = vpop.f32.mrb[0].mxu0
      %v1201 = vadd.f32 %v896, %v1200
      %v1202 = vpop.f32.mrb[0].mxu0
      %v1203 = vpop.f32.mrb[0].mxu0
      %v1204 = vadd.f32 %v899, %v1203
      %v1205 = vpop.f32.mrb[0].mxu0
      %1206 = vmatprep.mubr.bf16.mxu0 0
      %1207 = vmatmul.mubr.bf16.gmra.mrb[0].mxu0 %v1080
      %v1208 = vpop.f32.mrb[0].mxu0
      %v1209 = vadd.f32 %v904, %v1208
      %v1210 = vpop.f32.mrb[0].mxu0
      %v1211 = vpop.f32.mrb[0].mxu0
      %v1212 = vadd.f32 %v907, %v1211
      %v1213 = vpop.f32.mrb[0].mxu0
      %1214 = vmatprep.mubr.bf16.mxu0 0
      %1215 = vmatmul.mubr.bf16.gmra.mrb[0].mxu0 %v1081
      %v1216 = vpop.f32.mrb[0].mxu0
      %v1217 = vadd.f32 %v912, %v1216
      %v1218 = vpop.f32.mrb[0].mxu0
      %v1219 = vpop.f32.mrb[0].mxu0
      %v1220 = vadd.f32 %v915, %v1219
      %v1221 = vpop.f32.mrb[0].mxu0
      %1222 = vmatprep.mubr.bf16.mxu0 0
      %1223 = vmatmul.mubr.bf16.gmra.mrb[0].mxu0 %v1082
      %v1224 = vpop.f32.mrb[0].mxu0
      %v1225 = vadd.f32 %v920, %v1224
      %v1226 = vpop.f32.mrb[0].mxu0
      %v1227 = vpop.f32.mrb[0].mxu0
      %v1228 = vadd.f32 %v923, %v1227
      %v1229 = vpop.f32.mrb[0].mxu0
      %1230 = vmatprep.mubr.bf16.mxu0 0
      %1231 = vmatmul.mubr.bf16.gmra.mrb[0].mxu0 %v1083
      %v1232 = vpop.f32.mrb[0].mxu0
      %v1233 = vadd.f32 %v928, %v1232
      %v1234 = vpop.f32.mrb[0].mxu0
      %v1235 = vpop.f32.mrb[0].mxu0
      %v1236 = vadd.f32 %v931, %v1235
      %v1237 = vpop.f32.mrb[0].mxu0
      %1238 = vmatprep.mubr.bf16.mxu0 0
      %1239 = vmatmul.mubr.bf16.gmra.mrb[0].mxu0 %v1084
      %v1240 = vpop.f32.mrb[0].mxu0
      %v1241 = vadd.f32 %v936, %v1240
      %v1242 = vpop.f32.mrb[0].mxu0
      %v1243 = vpop.f32.mrb[0].mxu0
      %v1244 = vadd.f32 %v939, %v1243
      %v1245 = vpop.f32.mrb[0].mxu0
      %1246 = vmatprep.mubr.bf16.mxu0 0
      %1247 = vmatmul.mubr.bf16.gmra.mrb[0].mxu0 %v1085
      %v1248 = vpop.f32.mrb[0].mxu0
      %v1249 = vadd.f32 %v944, %v1248
      %v1250 = vpop.f32.mrb[0].mxu0
      %v1251 = vpop.f32.mrb[0].mxu0
      %v1252 = vadd.f32 %v947, %v1251
      %v1253 = vpop.f32.mrb[0].mxu0
      %1254 = vmatprep.mubr.bf16.mxu0 0
      %1255 = vmatmul.mubr.bf16.gmra.mrb[0].mxu0 %v1086
      %v1256 = vpop.f32.mrb[0].mxu0
      %v1257 = vadd.f32 %v952, %v1256
      %v1258 = vpop.f32.mrb[0].mxu0
      %v1259 = vpop.f32.mrb[0].mxu0
      %v1260 = vadd.f32 %v955, %v1259
      %v1261 = vpop.f32.mrb[0].mxu0
      %1262 = vmatprep.mubr.bf16.mxu0 0
      %1263 = vmatmul.mubr.bf16.gmra.mrb[0].mxu0 %v1087
      %v1264 = vpop.f32.mrb[0].mxu0
      %v1265 = vadd.f32 %v960, %v1264
      %v1266 = vpop.f32.mrb[0].mxu0
      %v1267 = vpop.f32.mrb[0].mxu0
      %v1268 = vadd.f32 %v963, %v1267
      %v1269 = vpop.f32.mrb[0].mxu0
      %1270 = vmatprep.mubr.bf16.mxu0 0
      %1271 = vmatmul.mubr.bf16.gmra.mrb[0].mxu0 %v1088
      %v1272 = vpop.f32.mrb[0].mxu0
      %v1273 = vadd.f32 %v968, %v1272
      %v1274 = vpop.f32.mrb[0].mxu0
      %v1275 = vpop.f32.mrb[0].mxu0
      %v1276 = vadd.f32 %v971, %v1275
      %v1277 = vpop.f32.mrb[0].mxu0
      %1278 = vmatprep.mubr.bf16.mxu0 0
      %1279 = vmatmul.mubr.bf16.gmra.mrb[0].mxu0 %v1089
      %v1280 = vpop.f32.mrb[0].mxu0
      %v1281 = vadd.f32 %v976, %v1280
      %v1282 = vpop.f32.mrb[0].mxu0
      %v1283 = vpop.f32.mrb[0].mxu0
      %v1284 = vadd.f32 %v979, %v1283
      %v1285 = vpop.f32.mrb[0].mxu0
      %1286 = vmatprep.mubr.bf16.mxu0 0
      %1287 = vmatmul.mubr.bf16.gmra.mrb[0].mxu0 %v1090
      %v1288 = vpop.f32.mrb[0].mxu0
      %v1289 = vadd.f32 %v984, %v1288
      %v1290 = vpop.f32.mrb[0].mxu0
      %v1291 = vpop.f32.mrb[0].mxu0
      %v1292 = vadd.f32 %v987, %v1291
      %v1293 = vpop.f32.mrb[0].mxu0
      %1294 = vmatprep.mubr.bf16.mxu0 0
      %1295 = vmatmul.mubr.bf16.gmra.mrb[0].mxu0 %v1091
      %v1296 = vpop.f32.mrb[0].mxu0
      %v1297 = vadd.f32 %v992, %v1296
      %v1298 = vpop.f32.mrb[0].mxu0
      %v1299 = vpop.f32.mrb[0].mxu0
      %v1300 = vadd.f32 %v995, %v1299
      %v1301 = vpop.f32.mrb[0].mxu0
      %1302 = vmatprep.mubr.bf16.mxu0 0
      %1303 = vmatmul.mubr.bf16.gmra.mrb[0].mxu0 %v1092
      %v1304 = vpop.f32.mrb[0].mxu0
      %v1305 = vadd.f32 %v1000, %v1304
      %v1306 = vpop.f32.mrb[0].mxu0
      %v1307 = vpop.f32.mrb[0].mxu0
      %v1308 = vadd.f32 %v1003, %v1307
      %v1309 = vpop.f32.mrb[0].mxu0
      %1310 = vmatprep.mubr.bf16.mxu0 0
      %1311 = vmatmul.mubr.bf16.gmra.mrb[0].mxu0 %v1093
      %v1312 = vpop.f32.mrb[0].mxu0
      %v1313 = vadd.f32 %v1008, %v1312
      %v1314 = vpop.f32.mrb[0].mxu0
      %v1315 = vpop.f32.mrb[0].mxu0
      %v1316 = vadd.f32 %v1011, %v1315
      %v1317 = vpop.f32.mrb[0].mxu0
      %1318 = vdwg.mxu0
      %v1319 = vld [vmem:[%s261] sm:$0xe]
      %v1320 = vld [vmem:[%s261 + $0xc] sm:$0xe]
      %v1321 = vld [vmem:[%s261 + $0x18] sm:$0xe]
      %v1322 = vld [vmem:[%s261 + $0x24] sm:$0xe]
      %v1323 = vld [vmem:[%s261 + $0x30] sm:$0xe]
      %v1324 = vld [vmem:[%s261 + $0x3c] sm:$0xe]
      %v1325 = vld [vmem:[%s261 + $0x48] sm:$0xe]
      %v1326 = vld [vmem:[%s261 + $0x54] sm:$0xe]
      %v1327 = vld [vmem:[%s261 + $0x60] sm:$0xe]
      %v1328 = vld [vmem:[%s261 + $0x6c] sm:$0xe]
      %v1329 = vld [vmem:[%s261 + $0x78] sm:$0xe]
      %v1330 = vld [vmem:[%s261 + $0x84] sm:$0xe]
      %v1331 = vld [vmem:[%s261 + $0x90] sm:$0xe]
      %v1332 = vld [vmem:[%s261 + $0x9c] sm:$0xe]
      %v1333 = vld [vmem:[%s261 + $0xa8] sm:$0xe]
      %v1334 = vld [vmem:[%s261 + $0xb4] sm:$0xe]
      %vm1367 = vcmask 1042432
      %vm1368 = vcmask 1046532
      %vm1369 = vmor %vm1367, %vm1368
      %v1370 = vrot.slane %v1319, 5
      %v1371 = vrot.slane %v1370, 4
      %v1372 = vrot.slane %v275, 5
      %v1373 = vsel %vm1369, %v1371, %v1372
      %v1374 = vrot.slane %v1372, 4
      %v1375 = vrot.slane %v322, 5
      %v1376 = vsel %vm1369, %v1374, %v1375
      %v1377 = vrot.slane %v1320, 5
      %v1378 = vrot.slane %v1377, 4
      %v1379 = vrot.slane %v277, 5
      %v1380 = vsel %vm1369, %v1378, %v1379
      %v1381 = vrot.slane %v1379, 4
      %v1382 = vrot.slane %v323, 5
      %v1383 = vsel %vm1369, %v1381, %v1382
      %v1384 = vrot.slane %v1321, 5
      %v1385 = vrot.slane %v1384, 4
      %v1386 = vrot.slane %v279, 5
      %v1387 = vsel %vm1369, %v1385, %v1386
      %v1388 = vrot.slane %v1386, 4
      %v1389 = vrot.slane %v324, 5
      %v1390 = vsel %vm1369, %v1388, %v1389
      %v1391 = vrot.slane %v1322, 5
      %v1392 = vrot.slane %v1391, 4
      %v1393 = vrot.slane %v281, 5
      %v1394 = vsel %vm1369, %v1392, %v1393
      %v1395 = vrot.slane %v1393, 4
      %v1396 = vrot.slane %v325, 5
      %v1397 = vsel %vm1369, %v1395, %v1396
      %v1398 = vrot.slane %v1323, 5
      %v1399 = vrot.slane %v1398, 4
      %v1400 = vrot.slane %v283, 5
      %v1401 = vsel %vm1369, %v1399, %v1400
      %v1402 = vrot.slane %v1400, 4
      %v1403 = vrot.slane %v326, 5
      %v1404 = vsel %vm1369, %v1402, %v1403
      %v1405 = vrot.slane %v1324, 5
      %v1406 = vrot.slane %v1405, 4
      %v1407 = vrot.slane %v285, 5
      %v1408 = vsel %vm1369, %v1406, %v1407
      %v1409 = vrot.slane %v1407, 4
      %v1410 = vrot.slane %v327, 5
      %v1411 = vsel %vm1369, %v1409, %v1410
      %v1412 = vrot.slane %v1325, 5
      %v1413 = vrot.slane %v1412, 4
      %v1414 = vrot.slane %v287, 5
      %v1415 = vsel %vm1369, %v1413, %v1414
      %v1416 = vrot.slane %v1414, 4
      %v1417 = vrot.slane %v328, 5
      %v1418 = vsel %vm1369, %v1416, %v1417
      %v1419 = vrot.slane %v1326, 5
      %v1420 = vrot.slane %v1419, 4
      %v1421 = vrot.slane %v289, 5
      %v1422 = vsel %vm1369, %v1420, %v1421
      %v1423 = vrot.slane %v1421, 4
      %v1424 = vrot.slane %v329, 5
      %v1425 = vsel %vm1369, %v1423, %v1424
      %v1426 = vrot.slane %v1327, 5
      %v1427 = vrot.slane %v1426, 4
      %v1428 = vrot.slane %v291, 5
      %v1429 = vsel %vm1369, %v1427, %v1428
      %v1430 = vrot.slane %v1428, 4
      %v1431 = vrot.slane %v330, 5
      %v1432 = vsel %vm1369, %v1430, %v1431
      %v1433 = vrot.slane %v1328, 5
      %v1434 = vrot.slane %v1433, 4
      %v1435 = vrot.slane %v293, 5
      %v1436 = vsel %vm1369, %v1434, %v1435
      %v1437 = vrot.slane %v1435, 4
      %v1438 = vrot.slane %v331, 5
      %v1439 = vsel %vm1369, %v1437, %v1438
      %v1440 = vrot.slane %v1329, 5
      %v1441 = vrot.slane %v1440, 4
      %v1442 = vrot.slane %v295, 5
      %v1443 = vsel %vm1369, %v1441, %v1442
      %v1444 = vrot.slane %v1442, 4
      %v1445 = vrot.slane %v332, 5
      %v1446 = vsel %vm1369, %v1444, %v1445
      %v1447 = vrot.slane %v1330, 5
      %v1448 = vrot.slane %v1447, 4
      %v1449 = vrot.slane %v297, 5
      %v1450 = vsel %vm1369, %v1448, %v1449
      %v1451 = vrot.slane %v1449, 4
      %v1452 = vrot.slane %v333, 5
      %v1453 = vsel %vm1369, %v1451, %v1452
      %v1454 = vrot.slane %v1331, 5
      %v1455 = vrot.slane %v1454, 4
      %v1456 = vrot.slane %v299, 5
      %v1457 = vsel %vm1369, %v1455, %v1456
      %v1458 = vrot.slane %v1456, 4
      %v1459 = vrot.slane %v334, 5
      %v1460 = vsel %vm1369, %v1458, %v1459
      %v1461 = vrot.slane %v1332, 5
      %v1462 = vrot.slane %v1461, 4
      %v1463 = vrot.slane %v301, 5
      %v1464 = vsel %vm1369, %v1462, %v1463
      %v1465 = vrot.slane %v1463, 4
      %v1466 = vrot.slane %v335, 5
      %v1467 = vsel %vm1369, %v1465, %v1466
      %v1468 = vrot.slane %v1333, 5
      %v1469 = vrot.slane %v1468, 4
      %v1470 = vrot.slane %v303, 5
      %v1471 = vsel %vm1369, %v1469, %v1470
      %v1472 = vrot.slane %v1470, 4
      %v1473 = vrot.slane %v336, 5
      %v1474 = vsel %vm1369, %v1472, %v1473
      %v1475 = vrot.slane %v1334, 5
      %v1476 = vrot.slane %v1475, 4
      %v1477 = vrot.slane %v305, 5
      %v1478 = vsel %vm1369, %v1476, %v1477
      %v1479 = vrot.slane %v1477, 4
      %v1480 = vrot.slane %v337, 5
      %v1481 = vsel %vm1369, %v1479, %v1480
      %v1482 = vld [vmem:[%s1 + $0x80] sm:$0xf]
      %v1483 = vld [vmem:[%s1 + $0x84] sm:$0xf]
      %v1484 = vld [vmem:[%s1 + $0x88] sm:$0xf]
      %v1485 = vld [vmem:[%s1 + $0x8c] sm:$0xf]
      %v1486 = vld [vmem:[%s1 + $0x90] sm:$0xf]
      %v1487 = vld [vmem:[%s1 + $0x94] sm:$0xf]
      %v1488 = vld [vmem:[%s1 + $0x98] sm:$0xf]
      %v1489 = vld [vmem:[%s1 + $0x9c] sm:$0xf]
      %v1490 = vld [vmem:[%s1 + $0xa0] sm:$0xf]
      %v1491 = vld [vmem:[%s1 + $0xa4] sm:$0xf]
      %v1492 = vld [vmem:[%s1 + $0xa8] sm:$0xf]
      %v1493 = vld [vmem:[%s1 + $0xac] sm:$0xf]
      %v1494 = vld [vmem:[%s1 + $0xb0] sm:$0xf]
      %v1495 = vld [vmem:[%s1 + $0xb4] sm:$0xf]
      %v1496 = vld [vmem:[%s1 + $0xb8] sm:$0xf]
      %v1497 = vld [vmem:[%s1 + $0xbc] sm:$0xf]
      %v1498 = vunpack.c.l.b16 %v1373
      %v1499 = vunpack.c.l.b16 %v1376
      %v1500 = vunpack.c.l.b16 %v1380
      %v1501 = vunpack.c.l.b16 %v1383
      %v1502 = vunpack.c.l.b16 %v1387
      %v1503 = vunpack.c.l.b16 %v1390
      %v1504 = vunpack.c.l.b16 %v1394
      %v1505 = vunpack.c.l.b16 %v1397
      %v1506 = vunpack.c.l.b16 %v1401
      %v1507 = vunpack.c.l.b16 %v1404
      %v1508 = vunpack.c.l.b16 %v1408
      %v1509 = vunpack.c.l.b16 %v1411
      %v1510 = vunpack.c.l.b16 %v1415
      %v1511 = vunpack.c.l.b16 %v1418
      %v1512 = vunpack.c.l.b16 %v1422
      %v1513 = vunpack.c.l.b16 %v1425
      %v1514 = vunpack.c.l.b16 %v1429
      %v1515 = vunpack.c.l.b16 %v1432
      %v1516 = vunpack.c.l.b16 %v1436
      %v1517 = vunpack.c.l.b16 %v1439
      %v1518 = vunpack.c.l.b16 %v1443
      %v1519 = vunpack.c.l.b16 %v1446
      %v1520 = vunpack.c.l.b16 %v1450
      %v1521 = vunpack.c.l.b16 %v1453
      %v1522 = vunpack.c.l.b16 %v1457
      %v1523 = vunpack.c.l.b16 %v1460
      %v1524 = vunpack.c.l.b16 %v1464
      %v1525 = vunpack.c.l.b16 %v1467
      %v1526 = vunpack.c.l.b16 %v1471
      %v1527 = vunpack.c.l.b16 %v1474
      %v1528 = vunpack.c.l.b16 %v1478
      %v1529 = vunpack.c.l.b16 %v1481
      %v1530 = vpack.c.b16 %v1499, %v1498
      %v1531 = vpack.c.b16 %v1501, %v1500
      %v1532 = vpack.c.b16 %v1503, %v1502
      %v1533 = vpack.c.b16 %v1505, %v1504
      %v1534 = vpack.c.b16 %v1507, %v1506
      %v1535 = vpack.c.b16 %v1509, %v1508
      %v1536 = vpack.c.b16 %v1511, %v1510
      %v1537 = vpack.c.b16 %v1513, %v1512
      %v1538 = vpack.c.b16 %v1515, %v1514
      %v1539 = vpack.c.b16 %v1517, %v1516
      %v1540 = vpack.c.b16 %v1519, %v1518
      %v1541 = vpack.c.b16 %v1521, %v1520
      %v1542 = vpack.c.b16 %v1523, %v1522
      %v1543 = vpack.c.b16 %v1525, %v1524
      %v1544 = vpack.c.b16 %v1527, %v1526
      %v1545 = vpack.c.b16 %v1529, %v1528
      %v1578 = vunpack.c.l.b16 %v1482
      %v1579 = vunpack.c.l.b16 %v1483
      %v1580 = vunpack.c.l.b16 %v1484
      %v1581 = vunpack.c.l.b16 %v1485
      %v1582 = vunpack.c.l.b16 %v1486
      %v1583 = vunpack.c.l.b16 %v1487
      %v1584 = vunpack.c.l.b16 %v1488
      %v1585 = vunpack.c.l.b16 %v1489
      %v1586 = vunpack.c.l.b16 %v1490
      %v1587 = vunpack.c.l.b16 %v1491
      %v1588 = vunpack.c.l.b16 %v1492
      %v1589 = vunpack.c.l.b16 %v1493
      %v1590 = vunpack.c.l.b16 %v1494
      %v1591 = vunpack.c.l.b16 %v1495
      %v1592 = vunpack.c.l.b16 %v1496
      %v1593 = vunpack.c.l.b16 %v1497
      %v1594 = vpack.c.b16 %v1579, %v1578
      %v1595 = vpack.c.b16 %v1581, %v1580
      %v1596 = vpack.c.b16 %v1583, %v1582
      %v1597 = vpack.c.b16 %v1585, %v1584
      %v1598 = vpack.c.b16 %v1587, %v1586
      %v1599 = vpack.c.b16 %v1589, %v1588
      %v1600 = vpack.c.b16 %v1591, %v1590
      %v1601 = vpack.c.b16 %v1593, %v1592
      %1610 = vmatprep.subr.bf16.mxu0 0
      %1611 = vmatpush1.bf16.msra.mxu0 %v1594
      %1612 = vmatprep.subr.bf16.mxu0 0
      %1613 = vmatpush1.bf16.msra.mxu0 %v1595
      %1614 = vmatprep.subr.bf16.mxu0 0
      %1615 = vmatpush1.bf16.msra.mxu0 %v1596
      %1616 = vmatprep.subr.bf16.mxu0 0
      %1617 = vmatpush1.bf16.msra.mxu0 %v1597
      %1618 = vmatprep.subr.bf16.mxu0 0
      %1619 = vmatpush1.bf16.msra.mxu0 %v1598
      %1620 = vmatprep.subr.bf16.mxu0 0
      %1621 = vmatpush1.bf16.msra.mxu0 %v1599
      %1622 = vmatprep.subr.bf16.mxu0 0
      %1623 = vmatpush1.bf16.msra.mxu0 %v1600
      %1624 = vmatprep.subr.bf16.mxu0 0
      %1625 = vmatpush1.bf16.msra.mxu0 %v1601
      %1626 = vmatprep.subr.bf16.mxu0 0
      %1627 = vmatpush1.bf16.msra.mxu0 0
      %1628 = vmatprep.subr.bf16.mxu0 0
      %1629 = vmatpush1.bf16.msra.mxu0 0
      %1630 = vmatprep.subr.bf16.mxu0 0
      %1631 = vmatpush1.bf16.msra.mxu0 0
      %1632 = vmatprep.subr.bf16.mxu0 0
      %1633 = vmatpush1.bf16.msra.mxu0 0
      %1634 = vmatprep.subr.bf16.mxu0 0
      %1635 = vmatpush1.bf16.msra.mxu0 0
      %1636 = vmatprep.subr.bf16.mxu0 0
      %1637 = vmatpush1.bf16.msra.mxu0 0
      %1638 = vmatprep.subr.bf16.mxu0 0
      %1639 = vmatpush1.bf16.msra.mxu0 0
      %1640 = vmatprep.subr.bf16.mxu0 0
      %1641 = vmatpush1.bf16.msra.mxu0 0
      %1642 = vmatprep.mubr.bf16.mxu0 0
      %1643 = vmatmul.mubr.bf16.gmra.mrb[0].mxu0 %v1530
      %v1644 = vpop.f32.mrb[0].mxu0
      %v1645 = vadd.f32 0.0, %v1644
      %v1646 = vpop.f32.mrb[0].mxu0
      %v1647 = vpop.f32.mrb[0].mxu0
      %v1648 = vadd.f32 0.0, %v1647
      %v1649 = vpop.f32.mrb[0].mxu0
      %1650 = vmatprep.mubr.bf16.mxu0 0
      %1651 = vmatmul.mubr.bf16.gmra.mrb[0].mxu0 %v1531
      %v1652 = vpop.f32.mrb[0].mxu0
      %v1653 = vadd.f32 0.0, %v1652
      %v1654 = vpop.f32.mrb[0].mxu0
      %v1655 = vpop.f32.mrb[0].mxu0
      %v1656 = vadd.f32 0.0, %v1655
      %v1657 = vpop.f32.mrb[0].mxu0
      %1658 = vmatprep.mubr.bf16.mxu0 0
      %1659 = vmatmul.mubr.bf16.gmra.mrb[0].mxu0 %v1532
      %v1660 = vpop.f32.mrb[0].mxu0
      %v1661 = vadd.f32 0.0, %v1660
      %v1662 = vpop.f32.mrb[0].mxu0
      %v1663 = vpop.f32.mrb[0].mxu0
      %v1664 = vadd.f32 0.0, %v1663
      %v1665 = vpop.f32.mrb[0].mxu0
      %1666 = vmatprep.mubr.bf16.mxu0 0
      %1667 = vmatmul.mubr.bf16.gmra.mrb[0].mxu0 %v1533
      %v1668 = vpop.f32.mrb[0].mxu0
      %v1669 = vadd.f32 0.0, %v1668
      %v1670 = vpop.f32.mrb[0].mxu0
      %v1671 = vpop.f32.mrb[0].mxu0
      %v1672 = vadd.f32 0.0, %v1671
      %v1673 = vpop.f32.mrb[0].mxu0
      %1674 = vmatprep.mubr.bf16.mxu0 0
      %1675 = vmatmul.mubr.bf16.gmra.mrb[0].mxu0 %v1534
      %v1676 = vpop.f32.mrb[0].mxu0
      %v1677 = vadd.f32 0.0, %v1676
      %v1678 = vpop.f32.mrb[0].mxu0
      %v1679 = vpop.f32.mrb[0].mxu0
      %v1680 = vadd.f32 0.0, %v1679
      %v1681 = vpop.f32.mrb[0].mxu0
      %1682 = vmatprep.mubr.bf16.mxu0 0
      %1683 = vmatmul.mubr.bf16.gmra.mrb[0].mxu0 %v1535
      %v1684 = vpop.f32.mrb[0].mxu0
      %v1685 = vadd.f32 0.0, %v1684
      %v1686 = vpop.f32.mrb[0].mxu0
      %v1687 = vpop.f32.mrb[0].mxu0
      %v1688 = vadd.f32 0.0, %v1687
      %v1689 = vpop.f32.mrb[0].mxu0
      %1690 = vmatprep.mubr.bf16.mxu0 0
      %1691 = vmatmul.mubr.bf16.gmra.mrb[0].mxu0 %v1536
      %v1692 = vpop.f32.mrb[0].mxu0
      %v1693 = vadd.f32 0.0, %v1692
      %v1694 = vpop.f32.mrb[0].mxu0
      %v1695 = vpop.f32.mrb[0].mxu0
      %v1696 = vadd.f32 0.0, %v1695
      %v1697 = vpop.f32.mrb[0].mxu0
      %1698 = vmatprep.mubr.bf16.mxu0 0
      %1699 = vmatmul.mubr.bf16.gmra.mrb[0].mxu0 %v1537
      %v1700 = vpop.f32.mrb[0].mxu0
      %v1701 = vadd.f32 0.0, %v1700
      %v1702 = vpop.f32.mrb[0].mxu0
      %v1703 = vpop.f32.mrb[0].mxu0
      %v1704 = vadd.f32 0.0, %v1703
      %v1705 = vpop.f32.mrb[0].mxu0
      %1706 = vmatprep.mubr.bf16.mxu0 0
      %1707 = vmatmul.mubr.bf16.gmra.mrb[0].mxu0 %v1538
      %v1708 = vpop.f32.mrb[0].mxu0
      %v1709 = vadd.f32 0.0, %v1708
      %v1710 = vpop.f32.mrb[0].mxu0
      %v1711 = vpop.f32.mrb[0].mxu0
      %v1712 = vadd.f32 0.0, %v1711
      %v1713 = vpop.f32.mrb[0].mxu0
      %1714 = vmatprep.mubr.bf16.mxu0 0
      %1715 = vmatmul.mubr.bf16.gmra.mrb[0].mxu0 %v1539
      %v1716 = vpop.f32.mrb[0].mxu0
      %v1717 = vadd.f32 0.0, %v1716
      %v1718 = vpop.f32.mrb[0].mxu0
      %v1719 = vpop.f32.mrb[0].mxu0
      %v1720 = vadd.f32 0.0, %v1719
      %v1721 = vpop.f32.mrb[0].mxu0
      %1722 = vmatprep.mubr.bf16.mxu0 0
      %1723 = vmatmul.mubr.bf16.gmra.mrb[0].mxu0 %v1540
      %v1724 = vpop.f32.mrb[0].mxu0
      %v1725 = vadd.f32 0.0, %v1724
      %v1726 = vpop.f32.mrb[0].mxu0
      %v1727 = vpop.f32.mrb[0].mxu0
      %v1728 = vadd.f32 0.0, %v1727
      %v1729 = vpop.f32.mrb[0].mxu0
      %1730 = vmatprep.mubr.bf16.mxu0 0
      %1731 = vmatmul.mubr.bf16.gmra.mrb[0].mxu0 %v1541
      %v1732 = vpop.f32.mrb[0].mxu0
      %v1733 = vadd.f32 0.0, %v1732
      %v1734 = vpop.f32.mrb[0].mxu0
      %v1735 = vpop.f32.mrb[0].mxu0
      %v1736 = vadd.f32 0.0, %v1735
      %v1737 = vpop.f32.mrb[0].mxu0
      %1738 = vmatprep.mubr.bf16.mxu0 0
      %1739 = vmatmul.mubr.bf16.gmra.mrb[0].mxu0 %v1542
      %v1740 = vpop.f32.mrb[0].mxu0
      %v1741 = vadd.f32 0.0, %v1740
      %v1742 = vpop.f32.mrb[0].mxu0
      %v1743 = vpop.f32.mrb[0].mxu0
      %v1744 = vadd.f32 0.0, %v1743
      %v1745 = vpop.f32.mrb[0].mxu0
      %1746 = vmatprep.mubr.bf16.mxu0 0
      %1747 = vmatmul.mubr.bf16.gmra.mrb[0].mxu0 %v1543
      %v1748 = vpop.f32.mrb[0].mxu0
      %v1749 = vadd.f32 0.0, %v1748
      %v1750 = vpop.f32.mrb[0].mxu0
      %v1751 = vpop.f32.mrb[0].mxu0
      %v1752 = vadd.f32 0.0, %v1751
      %v1753 = vpop.f32.mrb[0].mxu0
      %1754 = vmatprep.mubr.bf16.mxu0 0
      %1755 = vmatmul.mubr.bf16.gmra.mrb[0].mxu0 %v1544
      %v1756 = vpop.f32.mrb[0].mxu0
      %v1757 = vadd.f32 0.0, %v1756
      %v1758 = vpop.f32.mrb[0].mxu0
      %v1759 = vpop.f32.mrb[0].mxu0
      %v1760 = vadd.f32 0.0, %v1759
      %v1761 = vpop.f32.mrb[0].mxu0
      %1762 = vmatprep.mubr.bf16.mxu0 0
      %1763 = vmatmul.mubr.bf16.gmra.mrb[0].mxu0 %v1545
      %v1764 = vpop.f32.mrb[0].mxu0
      %v1765 = vadd.f32 0.0, %v1764
      %v1766 = vpop.f32.mrb[0].mxu0
      %v1767 = vpop.f32.mrb[0].mxu0
      %v1768 = vadd.f32 0.0, %v1767
      %v1769 = vpop.f32.mrb[0].mxu0
      %1770 = vdwg.mxu0
      %v1771 = vadd.f32 %v1193, %v1645
      %v1772 = vadd.f32 %v1196, %v1648
      %v1773 = vadd.f32 %v1201, %v1653
      %v1774 = vadd.f32 %v1204, %v1656
      %v1775 = vadd.f32 %v1209, %v1661
      %v1776 = vadd.f32 %v1212, %v1664
      %v1777 = vadd.f32 %v1217, %v1669
      %v1778 = vadd.f32 %v1220, %v1672
      %v1779 = vadd.f32 %v1225, %v1677
      %v1780 = vadd.f32 %v1228, %v1680
      %v1781 = vadd.f32 %v1233, %v1685
      %v1782 = vadd.f32 %v1236, %v1688
      %v1783 = vadd.f32 %v1241, %v1693
      %v1784 = vadd.f32 %v1244, %v1696
      %v1785 = vadd.f32 %v1249, %v1701
      %v1786 = vadd.f32 %v1252, %v1704
      %v1787 = vadd.f32 %v1257, %v1709
      %v1788 = vadd.f32 %v1260, %v1712
      %v1789 = vadd.f32 %v1265, %v1717
      %v1790 = vadd.f32 %v1268, %v1720
      %v1791 = vadd.f32 %v1273, %v1725
      %v1792 = vadd.f32 %v1276, %v1728
      %v1793 = vadd.f32 %v1281, %v1733
      %v1794 = vadd.f32 %v1284, %v1736
      %v1795 = vadd.f32 %v1289, %v1741
      %v1796 = vadd.f32 %v1292, %v1744
      %v1797 = vadd.f32 %v1297, %v1749
      %v1798 = vadd.f32 %v1300, %v1752
      %v1799 = vadd.f32 %v1305, %v1757
      %v1800 = vadd.f32 %v1308, %v1760
      %v1801 = vadd.f32 %v1313, %v1765
      %v1802 = vadd.f32 %v1316, %v1768
      %s1803 = scalar_lea.vmem %s261, 12
      %v1804 = vld [vmem:[%s1803] sm:$0xf]
      %v1805 = vld [vmem:[%s1803 + $0x4] sm:$0xf]
      %v1806 = vld [vmem:[%s1803 + $0xc] sm:$0xf]
      %v1807 = vld [vmem:[%s1803 + $0x10] sm:$0xf]
      %v1808 = vld [vmem:[%s1803 + $0x18] sm:$0xf]
      %v1809 = vld [vmem:[%s1803 + $0x1c] sm:$0xf]
      %v1810 = vld [vmem:[%s1803 + $0x24] sm:$0xf]
      %v1811 = vld [vmem:[%s1803 + $0x28] sm:$0xf]
      %v1812 = vld [vmem:[%s1803 + $0x30] sm:$0xf]
      %v1813 = vld [vmem:[%s1803 + $0x34] sm:$0xf]
      %v1814 = vld [vmem:[%s1803 + $0x3c] sm:$0xf]
      %v1815 = vld [vmem:[%s1803 + $0x40] sm:$0xf]
      %v1816 = vld [vmem:[%s1803 + $0x48] sm:$0xf]
      %v1817 = vld [vmem:[%s1803 + $0x4c] sm:$0xf]
      %v1818 = vld [vmem:[%s1803 + $0x54] sm:$0xf]
      %v1819 = vld [vmem:[%s1803 + $0x58] sm:$0xf]
      %v1820 = vld [vmem:[%s1803 + $0x60] sm:$0xf]
      %v1821 = vld [vmem:[%s1803 + $0x64] sm:$0xf]
      %v1822 = vld [vmem:[%s1803 + $0x6c] sm:$0xf]
      %v1823 = vld [vmem:[%s1803 + $0x70] sm:$0xf]
      %v1824 = vld [vmem:[%s1803 + $0x78] sm:$0xf]
      %v1825 = vld [vmem:[%s1803 + $0x7c] sm:$0xf]
      %v1826 = vld [vmem:[%s1803 + $0x84] sm:$0xf]
      %v1827 = vld [vmem:[%s1803 + $0x88] sm:$0xf]
      %v1828 = vld [vmem:[%s1803 + $0x90] sm:$0xf]
      %v1829 = vld [vmem:[%s1803 + $0x94] sm:$0xf]
      %v1830 = vld [vmem:[%s1803 + $0x9c] sm:$0xf]
      %v1831 = vld [vmem:[%s1803 + $0xa0] sm:$0xf]
      %v1832 = vld [vmem:[%s1803 + $0xa8] sm:$0xf]
      %v1833 = vld [vmem:[%s1803 + $0xac] sm:$0xf]
      %v1834 = vld [vmem:[%s1803 + $0xb4] sm:$0xf]
      %v1835 = vld [vmem:[%s1803 + $0xb8] sm:$0xf]
      %v1836 = vld [vmem:[%s1 + $0xc0] sm:$0xf]
      %v1837 = vld [vmem:[%s1 + $0xc4] sm:$0xf]
      %v1838 = vld [vmem:[%s1 + $0xc8] sm:$0xf]
      %v1839 = vld [vmem:[%s1 + $0xcc] sm:$0xf]
      %v1840 = vld [vmem:[%s1 + $0xd0] sm:$0xf]
      %v1841 = vld [vmem:[%s1 + $0xd4] sm:$0xf]
      %v1842 = vld [vmem:[%s1 + $0xd8] sm:$0xf]
      %v1843 = vld [vmem:[%s1 + $0xdc] sm:$0xf]
      %v1844 = vld [vmem:[%s1 + $0xe0] sm:$0xf]
      %v1845 = vld [vmem:[%s1 + $0xe4] sm:$0xf]
      %v1846 = vld [vmem:[%s1 + $0xe8] sm:$0xf]
      %v1847 = vld [vmem:[%s1 + $0xec] sm:$0xf]
      %v1848 = vld [vmem:[%s1 + $0xf0] sm:$0xf]
      %v1849 = vld [vmem:[%s1 + $0xf4] sm:$0xf]
      %v1850 = vld [vmem:[%s1 + $0xf8] sm:$0xf]
      %v1851 = vld [vmem:[%s1 + $0xfc] sm:$0xf]
      %v1884 = vunpack.c.l.b16 %v1804
      %v1885 = vunpack.c.l.b16 %v1805
      %v1886 = vunpack.c.l.b16 %v1806
      %v1887 = vunpack.c.l.b16 %v1807
      %v1888 = vunpack.c.l.b16 %v1808
      %v1889 = vunpack.c.l.b16 %v1809
      %v1890 = vunpack.c.l.b16 %v1810
      %v1891 = vunpack.c.l.b16 %v1811
      %v1892 = vunpack.c.l.b16 %v1812
      %v1893 = vunpack.c.l.b16 %v1813
      %v1894 = vunpack.c.l.b16 %v1814
      %v1895 = vunpack.c.l.b16 %v1815
      %v1896 = vunpack.c.l.b16 %v1816
      %v1897 = vunpack.c.l.b16 %v1817
      %v1898 = vunpack.c.l.b16 %v1818
      %v1899 = vunpack.c.l.b16 %v1819
      %v1900 = vunpack.c.l.b16 %v1820
      %v1901 = vunpack.c.l.b16 %v1821
      %v1902 = vunpack.c.l.b16 %v1822
      %v1903 = vunpack.c.l.b16 %v1823
      %v1904 = vunpack.c.l.b16 %v1824
      %v1905 = vunpack.c.l.b16 %v1825
      %v1906 = vunpack.c.l.b16 %v1826
      %v1907 = vunpack.c.l.b16 %v1827
      %v1908 = vunpack.c.l.b16 %v1828
      %v1909 = vunpack.c.l.b16 %v1829
      %v1910 = vunpack.c.l.b16 %v1830
      %v1911 = vunpack.c.l.b16 %v1831
      %v1912 = vunpack.c.l.b16 %v1832
      %v1913 = vunpack.c.l.b16 %v1833
      %v1914 = vunpack.c.l.b16 %v1834
      %v1915 = vunpack.c.l.b16 %v1835
      %v1916 = vpack.c.b16 %v1885, %v1884
      %v1917 = vpack.c.b16 %v1887, %v1886
      %v1918 = vpack.c.b16 %v1889, %v1888
      %v1919 = vpack.c.b16 %v1891, %v1890
      %v1920 = vpack.c.b16 %v1893, %v1892
      %v1921 = vpack.c.b16 %v1895, %v1894
      %v1922 = vpack.c.b16 %v1897, %v1896
      %v1923 = vpack.c.b16 %v1899, %v1898
      %v1924 = vpack.c.b16 %v1901, %v1900
      %v1925 = vpack.c.b16 %v1903, %v1902
      %v1926 = vpack.c.b16 %v1905, %v1904
      %v1927 = vpack.c.b16 %v1907, %v1906
      %v1928 = vpack.c.b16 %v1909, %v1908
      %v1929 = vpack.c.b16 %v1911, %v1910
      %v1930 = vpack.c.b16 %v1913, %v1912
      %v1931 = vpack.c.b16 %v1915, %v1914
      %v1964 = vunpack.c.l.b16 %v1836
      %v1965 = vunpack.c.l.b16 %v1837
      %v1966 = vunpack.c.l.b16 %v1838
      %v1967 = vunpack.c.l.b16 %v1839
      %v1968 = vunpack.c.l.b16 %v1840
      %v1969 = vunpack.c.l.b16 %v1841
      %v1970 = vunpack.c.l.b16 %v1842
      %v1971 = vunpack.c.l.b16 %v1843
      %v1972 = vunpack.c.l.b16 %v1844
      %v1973 = vunpack.c.l.b16 %v1845
      %v1974 = vunpack.c.l.b16 %v1846
      %v1975 = vunpack.c.l.b16 %v1847
      %v1976 = vunpack.c.l.b16 %v1848
      %v1977 = vunpack.c.l.b16 %v1849
      %v1978 = vunpack.c.l.b16 %v1850
      %v1979 = vunpack.c.l.b16 %v1851
      %v1980 = vpack.c.b16 %v1965, %v1964
      %v1981 = vpack.c.b16 %v1967, %v1966
      %v1982 = vpack.c.b16 %v1969, %v1968
      %v1983 = vpack.c.b16 %v1971, %v1970
      %v1984 = vpack.c.b16 %v1973, %v1972
      %v1985 = vpack.c.b16 %v1975, %v1974
      %v1986 = vpack.c.b16 %v1977, %v1976
      %v1987 = vpack.c.b16 %v1979, %v1978
      %1996 = vmatprep.subr.bf16.mxu0 0
      %1997 = vmatpush1.bf16.msra.mxu0 %v1980
      %1998 = vmatprep.subr.bf16.mxu0 0
      %1999 = vmatpush1.bf16.msra.mxu0 %v1981
      %2000 = vmatprep.subr.bf16.mxu0 0
      %2001 = vmatpush1.bf16.msra.mxu0 %v1982
      %2002 = vmatprep.subr.bf16.mxu0 0
      %2003 = vmatpush1.bf16.msra.mxu0 %v1983
      %2004 = vmatprep.subr.bf16.mxu0 0
      %2005 = vmatpush1.bf16.msra.mxu0 %v1984
      %2006 = vmatprep.subr.bf16.mxu0 0
      %2007 = vmatpush1.bf16.msra.mxu0 %v1985
      %2008 = vmatprep.subr.bf16.mxu0 0
      %2009 = vmatpush1.bf16.msra.mxu0 %v1986
      %2010 = vmatprep.subr.bf16.mxu0 0
      %2011 = vmatpush1.bf16.msra.mxu0 %v1987
      %2012 = vmatprep.subr.bf16.mxu0 0
      %2013 = vmatpush1.bf16.msra.mxu0 0
      %2014 = vmatprep.subr.bf16.mxu0 0
      %2015 = vmatpush1.bf16.msra.mxu0 0
      %2016 = vmatprep.subr.bf16.mxu0 0
      %2017 = vmatpush1.bf16.msra.mxu0 0
      %2018 = vmatprep.subr.bf16.mxu0 0
      %2019 = vmatpush1.bf16.msra.mxu0 0
      %2020 = vmatprep.subr.bf16.mxu0 0
      %2021 = vmatpush1.bf16.msra.mxu0 0
      %2022 = vmatprep.subr.bf16.mxu0 0
      %2023 = vmatpush1.bf16.msra.mxu0 0
      %2024 = vmatprep.subr.bf16.mxu0 0
      %2025 = vmatpush1.bf16.msra.mxu0 0
      %2026 = vmatprep.subr.bf16.mxu0 0
      %2027 = vmatpush1.bf16.msra.mxu0 0
      %2028 = vmatprep.mubr.bf16.mxu0 0
      %2029 = vmatmul.mubr.bf16.gmra.mrb[0].mxu0 %v1916
      %v2030 = vpop.f32.mrb[0].mxu0
      %v2031 = vadd.f32 0.0, %v2030
      %v2032 = vpop.f32.mrb[0].mxu0
      %v2033 = vpop.f32.mrb[0].mxu0
      %v2034 = vadd.f32 0.0, %v2033
      %v2035 = vpop.f32.mrb[0].mxu0
      %2036 = vmatprep.mubr.bf16.mxu0 0
      %2037 = vmatmul.mubr.bf16.gmra.mrb[0].mxu0 %v1917
      %v2038 = vpop.f32.mrb[0].mxu0
      %v2039 = vadd.f32 0.0, %v2038
      %v2040 = vpop.f32.mrb[0].mxu0
      %v2041 = vpop.f32.mrb[0].mxu0
      %v2042 = vadd.f32 0.0, %v2041
      %v2043 = vpop.f32.mrb[0].mxu0
      %2044 = vmatprep.mubr.bf16.mxu0 0
      %2045 = vmatmul.mubr.bf16.gmra.mrb[0].mxu0 %v1918
      %v2046 = vpop.f32.mrb[0].mxu0
      %v2047 = vadd.f32 0.0, %v2046
      %v2048 = vpop.f32.mrb[0].mxu0
      %v2049 = vpop.f32.mrb[0].mxu0
      %v2050 = vadd.f32 0.0, %v2049
      %v2051 = vpop.f32.mrb[0].mxu0
      %2052 = vmatprep.mubr.bf16.mxu0 0
      %2053 = vmatmul.mubr.bf16.gmra.mrb[0].mxu0 %v1919
      %v2054 = vpop.f32.mrb[0].mxu0
      %v2055 = vadd.f32 0.0, %v2054
      %v2056 = vpop.f32.mrb[0].mxu0
      %v2057 = vpop.f32.mrb[0].mxu0
      %v2058 = vadd.f32 0.0, %v2057
      %v2059 = vpop.f32.mrb[0].mxu0
      %2060 = vmatprep.mubr.bf16.mxu0 0
      %2061 = vmatmul.mubr.bf16.gmra.mrb[0].mxu0 %v1920
      %v2062 = vpop.f32.mrb[0].mxu0
      %v2063 = vadd.f32 0.0, %v2062
      %v2064 = vpop.f32.mrb[0].mxu0
      %v2065 = vpop.f32.mrb[0].mxu0
      %v2066 = vadd.f32 0.0, %v2065
      %v2067 = vpop.f32.mrb[0].mxu0
      %2068 = vmatprep.mubr.bf16.mxu0 0
      %2069 = vmatmul.mubr.bf16.gmra.mrb[0].mxu0 %v1921
      %v2070 = vpop.f32.mrb[0].mxu0
      %v2071 = vadd.f32 0.0, %v2070
      %v2072 = vpop.f32.mrb[0].mxu0
      %v2073 = vpop.f32.mrb[0].mxu0
      %v2074 = vadd.f32 0.0, %v2073
      %v2075 = vpop.f32.mrb[0].mxu0
      %2076 = vmatprep.mubr.bf16.mxu0 0
      %2077 = vmatmul.mubr.bf16.gmra.mrb[0].mxu0 %v1922
      %v2078 = vpop.f32.mrb[0].mxu0
      %v2079 = vadd.f32 0.0, %v2078
      %v2080 = vpop.f32.mrb[0].mxu0
      %v2081 = vpop.f32.mrb[0].mxu0
      %v2082 = vadd.f32 0.0, %v2081
      %v2083 = vpop.f32.mrb[0].mxu0
      %2084 = vmatprep.mubr.bf16.mxu0 0
      %2085 = vmatmul.mubr.bf16.gmra.mrb[0].mxu0 %v1923
      %v2086 = vpop.f32.mrb[0].mxu0
      %v2087 = vadd.f32 0.0, %v2086
      %v2088 = vpop.f32.mrb[0].mxu0
      %v2089 = vpop.f32.mrb[0].mxu0
      %v2090 = vadd.f32 0.0, %v2089
      %v2091 = vpop.f32.mrb[0].mxu0
      %2092 = vmatprep.mubr.bf16.mxu0 0
      %2093 = vmatmul.mubr.bf16.gmra.mrb[0].mxu0 %v1924
      %v2094 = vpop.f32.mrb[0].mxu0
      %v2095 = vadd.f32 0.0, %v2094
      %v2096 = vpop.f32.mrb[0].mxu0
      %v2097 = vpop.f32.mrb[0].mxu0
      %v2098 = vadd.f32 0.0, %v2097
      %v2099 = vpop.f32.mrb[0].mxu0
      %2100 = vmatprep.mubr.bf16.mxu0 0
      %2101 = vmatmul.mubr.bf16.gmra.mrb[0].mxu0 %v1925
      %v2102 = vpop.f32.mrb[0].mxu0
      %v2103 = vadd.f32 0.0, %v2102
      %v2104 = vpop.f32.mrb[0].mxu0
      %v2105 = vpop.f32.mrb[0].mxu0
      %v2106 = vadd.f32 0.0, %v2105
      %v2107 = vpop.f32.mrb[0].mxu0
      %2108 = vmatprep.mubr.bf16.mxu0 0
      %2109 = vmatmul.mubr.bf16.gmra.mrb[0].mxu0 %v1926
      %v2110 = vpop.f32.mrb[0].mxu0
      %v2111 = vadd.f32 0.0, %v2110
      %v2112 = vpop.f32.mrb[0].mxu0
      %v2113 = vpop.f32.mrb[0].mxu0
      %v2114 = vadd.f32 0.0, %v2113
      %v2115 = vpop.f32.mrb[0].mxu0
      %2116 = vmatprep.mubr.bf16.mxu0 0
      %2117 = vmatmul.mubr.bf16.gmra.mrb[0].mxu0 %v1927
      %v2118 = vpop.f32.mrb[0].mxu0
      %v2119 = vadd.f32 0.0, %v2118
      %v2120 = vpop.f32.mrb[0].mxu0
      %v2121 = vpop.f32.mrb[0].mxu0
      %v2122 = vadd.f32 0.0, %v2121
      %v2123 = vpop.f32.mrb[0].mxu0
      %2124 = vmatprep.mubr.bf16.mxu0 0
      %2125 = vmatmul.mubr.bf16.gmra.mrb[0].mxu0 %v1928
      %v2126 = vpop.f32.mrb[0].mxu0
      %v2127 = vadd.f32 0.0, %v2126
      %v2128 = vpop.f32.mrb[0].mxu0
      %v2129 = vpop.f32.mrb[0].mxu0
      %v2130 = vadd.f32 0.0, %v2129
      %v2131 = vpop.f32.mrb[0].mxu0
      %2132 = vmatprep.mubr.bf16.mxu0 0
      %2133 = vmatmul.mubr.bf16.gmra.mrb[0].mxu0 %v1929
      %v2134 = vpop.f32.mrb[0].mxu0
      %v2135 = vadd.f32 0.0, %v2134
      %v2136 = vpop.f32.mrb[0].mxu0
      %v2137 = vpop.f32.mrb[0].mxu0
      %v2138 = vadd.f32 0.0, %v2137
      %v2139 = vpop.f32.mrb[0].mxu0
      %2140 = vmatprep.mubr.bf16.mxu0 0
      %2141 = vmatmul.mubr.bf16.gmra.mrb[0].mxu0 %v1930
      %v2142 = vpop.f32.mrb[0].mxu0
      %v2143 = vadd.f32 0.0, %v2142
      %v2144 = vpop.f32.mrb[0].mxu0
      %v2145 = vpop.f32.mrb[0].mxu0
      %v2146 = vadd.f32 0.0, %v2145
      %v2147 = vpop.f32.mrb[0].mxu0
      %2148 = vmatprep.mubr.bf16.mxu0 0
      %2149 = vmatmul.mubr.bf16.gmra.mrb[0].mxu0 %v1931
      %v2150 = vpop.f32.mrb[0].mxu0
      %v2151 = vadd.f32 0.0, %v2150
      %v2152 = vpop.f32.mrb[0].mxu0
      %v2153 = vpop.f32.mrb[0].mxu0
      %v2154 = vadd.f32 0.0, %v2153
      %v2155 = vpop.f32.mrb[0].mxu0
      %2156 = vdwg.mxu0
      %v2157 = vadd.f32 %v1771, %v2031
      %v2158 = vadd.f32 %v1772, %v2034
      %v2159 = vadd.f32 %v1773, %v2039
      %v2160 = vadd.f32 %v1774, %v2042
      %v2161 = vadd.f32 %v1775, %v2047
      %v2162 = vadd.f32 %v1776, %v2050
      %v2163 = vadd.f32 %v1777, %v2055
      %v2164 = vadd.f32 %v1778, %v2058
      %v2165 = vadd.f32 %v1779, %v2063
      %v2166 = vadd.f32 %v1780, %v2066
      %v2167 = vadd.f32 %v1781, %v2071
      %v2168 = vadd.f32 %v1782, %v2074
      %v2169 = vadd.f32 %v1783, %v2079
      %v2170 = vadd.f32 %v1784, %v2082
      %v2171 = vadd.f32 %v1785, %v2087
      %v2172 = vadd.f32 %v1786, %v2090
      %v2173 = vadd.f32 %v1787, %v2095
      %v2174 = vadd.f32 %v1788, %v2098
      %v2175 = vadd.f32 %v1789, %v2103
      %v2176 = vadd.f32 %v1790, %v2106
      %v2177 = vadd.f32 %v1791, %v2111
      %v2178 = vadd.f32 %v1792, %v2114
      %v2179 = vadd.f32 %v1793, %v2119
      %v2180 = vadd.f32 %v1794, %v2122
      %v2181 = vadd.f32 %v1795, %v2127
      %v2182 = vadd.f32 %v1796, %v2130
      %v2183 = vadd.f32 %v1797, %v2135
      %v2184 = vadd.f32 %v1798, %v2138
      %v2185 = vadd.f32 %v1799, %v2143
      %v2186 = vadd.f32 %v1800, %v2146
      %v2187 = vadd.f32 %v1801, %v2151
      %v2188 = vadd.f32 %v1802, %v2154
      %v2189 = vld [vmem:[%s1803] sm:$0xf]
      %v2190 = vld [vmem:[%s1803 + $0x4] sm:$0xf]
      %v2191 = vld [vmem:[%s1803 + $0x8] sm:$0x1]
      %v2192 = vld [vmem:[%s1803 + $0xc] sm:$0xf]
      %v2193 = vld [vmem:[%s1803 + $0x10] sm:$0xf]
      %v2194 = vld [vmem:[%s1803 + $0x14] sm:$0x1]
      %v2195 = vld [vmem:[%s1803 + $0x18] sm:$0xf]
      %v2196 = vld [vmem:[%s1803 + $0x1c] sm:$0xf]
      %v2197 = vld [vmem:[%s1803 + $0x20] sm:$0x1]
      %v2198 = vld [vmem:[%s1803 + $0x24] sm:$0xf]
      %v2199 = vld [vmem:[%s1803 + $0x28] sm:$0xf]
      %v2200 = vld [vmem:[%s1803 + $0x2c] sm:$0x1]
      %v2201 = vld [vmem:[%s1803 + $0x30] sm:$0xf]
      %v2202 = vld [vmem:[%s1803 + $0x34] sm:$0xf]
      %v2203 = vld [vmem:[%s1803 + $0x38] sm:$0x1]
      %v2204 = vld [vmem:[%s1803 + $0x3c] sm:$0xf]
      %v2205 = vld [vmem:[%s1803 + $0x40] sm:$0xf]
      %v2206 = vld [vmem:[%s1803 + $0x44] sm:$0x1]
      %v2207 = vld [vmem:[%s1803 + $0x48] sm:$0xf]
      %v2208 = vld [vmem:[%s1803 + $0x4c] sm:$0xf]
      %v2209 = vld [vmem:[%s1803 + $0x50] sm:$0x1]
      %v2210 = vld [vmem:[%s1803 + $0x54] sm:$0xf]
      %v2211 = vld [vmem:[%s1803 + $0x58] sm:$0xf]
      %v2212 = vld [vmem:[%s1803 + $0x5c] sm:$0x1]
      %v2213 = vld [vmem:[%s1803 + $0x60] sm:$0xf]
      %v2214 = vld [vmem:[%s1803 + $0x64] sm:$0xf]
      %v2215 = vld [vmem:[%s1803 + $0x68] sm:$0x1]
      %v2216 = vld [vmem:[%s1803 + $0x6c] sm:$0xf]
      %v2217 = vld [vmem:[%s1803 + $0x70] sm:$0xf]
      %v2218 = vld [vmem:[%s1803 + $0x74] sm:$0x1]
      %v2219 = vld [vmem:[%s1803 + $0x78] sm:$0xf]
      %v2220 = vld [vmem:[%s1803 + $0x7c] sm:$0xf]
      %v2221 = vld [vmem:[%s1803 + $0x80] sm:$0x1]
      %v2222 = vld [vmem:[%s1803 + $0x84] sm:$0xf]
      %v2223 = vld [vmem:[%s1803 + $0x88] sm:$0xf]
      %v2224 = vld [vmem:[%s1803 + $0x8c] sm:$0x1]
      %v2225 = vld [vmem:[%s1803 + $0x90] sm:$0xf]
      %v2226 = vld [vmem:[%s1803 + $0x94] sm:$0xf]
      %v2227 = vld [vmem:[%s1803 + $0x98] sm:$0x1]
      %v2228 = vld [vmem:[%s1803 + $0x9c] sm:$0xf]
      %v2229 = vld [vmem:[%s1803 + $0xa0] sm:$0xf]
      %v2230 = vld [vmem:[%s1803 + $0xa4] sm:$0x1]
      %v2231 = vld [vmem:[%s1803 + $0xa8] sm:$0xf]
      %v2232 = vld [vmem:[%s1803 + $0xac] sm:$0xf]
      %v2233 = vld [vmem:[%s1803 + $0xb0] sm:$0x1]
      %v2234 = vld [vmem:[%s1803 + $0xb4] sm:$0xf]
      %v2235 = vld [vmem:[%s1803 + $0xb8] sm:$0xf]
      %v2236 = vld [vmem:[%s1803 + $0xbc] sm:$0x1]
      %v2238 = vshrl.u32 %v2189, 16
      %v2240 = vrot.slane %v2238, 4
      %v2241 = vshll.u32 %v2189, 16
      %v2243 = vrot.slane %v2241, 5
      %v2244 = vor.u32 %v2240, %v2243
      %v2245 = vrot.slane %v2244, 4
      %v2247 = vshll.u32 %v2190, 16
      %v2249 = vrot.slane %v2247, 5
      %v2250 = vsel %vm340, %v2245, %v2249
      %v2251 = vshrl.u32 %v2190, 16
      %v2253 = vrot.slane %v2251, 4
      %v2254 = vor.u32 %v2253, %v2249
      %v2255 = vrot.slane %v2254, 4
      %v2257 = vshll.u32 %v2191, 16
      %v2259 = vrot.slane %v2257, 5
      %v2260 = vsel %vm340, %v2255, %v2259
      %v2262 = vshrl.u32 %v2192, 16
      %v2264 = vrot.slane %v2262, 4
      %v2265 = vshll.u32 %v2192, 16
      %v2267 = vrot.slane %v2265, 5
      %v2268 = vor.u32 %v2264, %v2267
      %v2269 = vrot.slane %v2268, 4
      %v2271 = vshll.u32 %v2193, 16
      %v2273 = vrot.slane %v2271, 5
      %v2274 = vsel %vm340, %v2269, %v2273
      %v2275 = vshrl.u32 %v2193, 16
      %v2277 = vrot.slane %v2275, 4
      %v2278 = vor.u32 %v2277, %v2273
      %v2279 = vrot.slane %v2278, 4
      %v2281 = vshll.u32 %v2194, 16
      %v2283 = vrot.slane %v2281, 5
      %v2284 = vsel %vm340, %v2279, %v2283
      %v2286 = vshrl.u32 %v2195, 16
      %v2288 = vrot.slane %v2286, 4
      %v2289 = vshll.u32 %v2195, 16
      %v2291 = vrot.slane %v2289, 5
      %v2292 = vor.u32 %v2288, %v2291
      %v2293 = vrot.slane %v2292, 4
      %v2295 = vshll.u32 %v2196, 16
      %v2297 = vrot.slane %v2295, 5
      %v2298 = vsel %vm340, %v2293, %v2297
      %v2299 = vshrl.u32 %v2196, 16
      %v2301 = vrot.slane %v2299, 4
      %v2302 = vor.u32 %v2301, %v2297
      %v2303 = vrot.slane %v2302, 4
      %v2305 = vshll.u32 %v2197, 16
      %v2307 = vrot.slane %v2305, 5
      %v2308 = vsel %vm340, %v2303, %v2307
      %v2310 = vshrl.u32 %v2198, 16
      %v2312 = vrot.slane %v2310, 4
      %v2313 = vshll.u32 %v2198, 16
      %v2315 = vrot.slane %v2313, 5
      %v2316 = vor.u32 %v2312, %v2315
      %v2317 = vrot.slane %v2316, 4
      %v2319 = vshll.u32 %v2199, 16
      %v2321 = vrot.slane %v2319, 5
      %v2322 = vsel %vm340, %v2317, %v2321
      %v2323 = vshrl.u32 %v2199, 16
      %v2325 = vrot.slane %v2323, 4
      %v2326 = vor.u32 %v2325, %v2321
      %v2327 = vrot.slane %v2326, 4
      %v2329 = vshll.u32 %v2200, 16
      %v2331 = vrot.slane %v2329, 5
      %v2332 = vsel %vm340, %v2327, %v2331
      %v2334 = vshrl.u32 %v2201, 16
      %v2336 = vrot.slane %v2334, 4
      %v2337 = vshll.u32 %v2201, 16
      %v2339 = vrot.slane %v2337, 5
      %v2340 = vor.u32 %v2336, %v2339
      %v2341 = vrot.slane %v2340, 4
      %v2343 = vshll.u32 %v2202, 16
      %v2345 = vrot.slane %v2343, 5
      %v2346 = vsel %vm340, %v2341, %v2345
      %v2347 = vshrl.u32 %v2202, 16
      %v2349 = vrot.slane %v2347, 4
      %v2350 = vor.u32 %v2349, %v2345
      %v2351 = vrot.slane %v2350, 4
      %v2353 = vshll.u32 %v2203, 16
      %v2355 = vrot.slane %v2353, 5
      %v2356 = vsel %vm340, %v2351, %v2355
      %v2358 = vshrl.u32 %v2204, 16
      %v2360 = vrot.slane %v2358, 4
      %v2361 = vshll.u32 %v2204, 16
      %v2363 = vrot.slane %v2361, 5
      %v2364 = vor.u32 %v2360, %v2363
      %v2365 = vrot.slane %v2364, 4
      %v2367 = vshll.u32 %v2205, 16
      %v2369 = vrot.slane %v2367, 5
      %v2370 = vsel %vm340, %v2365, %v2369
      %v2371 = vshrl.u32 %v2205, 16
      %v2373 = vrot.slane %v2371, 4
      %v2374 = vor.u32 %v2373, %v2369
      %v2375 = vrot.slane %v2374, 4
      %v2377 = vshll.u32 %v2206, 16
      %v2379 = vrot.slane %v2377, 5
      %v2380 = vsel %vm340, %v2375, %v2379
      %v2382 = vshrl.u32 %v2207, 16
      %v2384 = vrot.slane %v2382, 4
      %v2385 = vshll.u32 %v2207, 16
      %v2387 = vrot.slane %v2385, 5
      %v2388 = vor.u32 %v2384, %v2387
      %v2389 = vrot.slane %v2388, 4
      %v2391 = vshll.u32 %v2208, 16
      %v2393 = vrot.slane %v2391, 5
      %v2394 = vsel %vm340, %v2389, %v2393
      %v2395 = vshrl.u32 %v2208, 16
      %v2397 = vrot.slane %v2395, 4
      %v2398 = vor.u32 %v2397, %v2393
      %v2399 = vrot.slane %v2398, 4
      %v2401 = vshll.u32 %v2209, 16
      %v2403 = vrot.slane %v2401, 5
      %v2404 = vsel %vm340, %v2399, %v2403
      %v2406 = vshrl.u32 %v2210, 16
      %v2408 = vrot.slane %v2406, 4
      %v2409 = vshll.u32 %v2210, 16
      %v2411 = vrot.slane %v2409, 5
      %v2412 = vor.u32 %v2408, %v2411
      %v2413 = vrot.slane %v2412, 4
      %v2415 = vshll.u32 %v2211, 16
      %v2417 = vrot.slane %v2415, 5
      %v2418 = vsel %vm340, %v2413, %v2417
      %v2419 = vshrl.u32 %v2211, 16
      %v2421 = vrot.slane %v2419, 4
      %v2422 = vor.u32 %v2421, %v2417
      %v2423 = vrot.slane %v2422, 4
      %v2425 = vshll.u32 %v2212, 16
      %v2427 = vrot.slane %v2425, 5
      %v2428 = vsel %vm340, %v2423, %v2427
      %v2430 = vshrl.u32 %v2213, 16
      %v2432 = vrot.slane %v2430, 4
      %v2433 = vshll.u32 %v2213, 16
      %v2435 = vrot.slane %v2433, 5
      %v2436 = vor.u32 %v2432, %v2435
      %v2437 = vrot.slane %v2436, 4
      %v2439 = vshll.u32 %v2214, 16
      %v2441 = vrot.slane %v2439, 5
      %v2442 = vsel %vm340, %v2437, %v2441
      %v2443 = vshrl.u32 %v2214, 16
      %v2445 = vrot.slane %v2443, 4
      %v2446 = vor.u32 %v2445, %v2441
      %v2447 = vrot.slane %v2446, 4
      %v2449 = vshll.u32 %v2215, 16
      %v2451 = vrot.slane %v2449, 5
      %v2452 = vsel %vm340, %v2447, %v2451
      %v2454 = vshrl.u32 %v2216, 16
      %v2456 = vrot.slane %v2454, 4
      %v2457 = vshll.u32 %v2216, 16
      %v2459 = vrot.slane %v2457, 5
      %v2460 = vor.u32 %v2456, %v2459
      %v2461 = vrot.slane %v2460, 4
      %v2463 = vshll.u32 %v2217, 16
      %v2465 = vrot.slane %v2463, 5
      %v2466 = vsel %vm340, %v2461, %v2465
      %v2467 = vshrl.u32 %v2217, 16
      %v2469 = vrot.slane %v2467, 4
      %v2470 = vor.u32 %v2469, %v2465
      %v2471 = vrot.slane %v2470, 4
      %v2473 = vshll.u32 %v2218, 16
      %v2475 = vrot.slane %v2473, 5
      %v2476 = vsel %vm340, %v2471, %v2475
      %v2478 = vshrl.u32 %v2219, 16
      %v2480 = vrot.slane %v2478, 4
      %v2481 = vshll.u32 %v2219, 16
      %v2483 = vrot.slane %v2481, 5
      %v2484 = vor.u32 %v2480, %v2483
      %v2485 = vrot.slane %v2484, 4
      %v2487 = vshll.u32 %v2220, 16
      %v2489 = vrot.slane %v2487, 5
      %v2490 = vsel %vm340, %v2485, %v2489
      %v2491 = vshrl.u32 %v2220, 16
      %v2493 = vrot.slane %v2491, 4
      %v2494 = vor.u32 %v2493, %v2489
      %v2495 = vrot.slane %v2494, 4
      %v2497 = vshll.u32 %v2221, 16
      %v2499 = vrot.slane %v2497, 5
      %v2500 = vsel %vm340, %v2495, %v2499
      %v2502 = vshrl.u32 %v2222, 16
      %v2504 = vrot.slane %v2502, 4
      %v2505 = vshll.u32 %v2222, 16
      %v2507 = vrot.slane %v2505, 5
      %v2508 = vor.u32 %v2504, %v2507
      %v2509 = vrot.slane %v2508, 4
      %v2511 = vshll.u32 %v2223, 16
      %v2513 = vrot.slane %v2511, 5
      %v2514 = vsel %vm340, %v2509, %v2513
      %v2515 = vshrl.u32 %v2223, 16
      %v2517 = vrot.slane %v2515, 4
      %v2518 = vor.u32 %v2517, %v2513
      %v2519 = vrot.slane %v2518, 4
      %v2521 = vshll.u32 %v2224, 16
      %v2523 = vrot.slane %v2521, 5
      %v2524 = vsel %vm340, %v2519, %v2523
      %v2526 = vshrl.u32 %v2225, 16
      %v2528 = vrot.slane %v2526, 4
      %v2529 = vshll.u32 %v2225, 16
      %v2531 = vrot.slane %v2529, 5
      %v2532 = vor.u32 %v2528, %v2531
      %v2533 = vrot.slane %v2532, 4
      %v2535 = vshll.u32 %v2226, 16
      %v2537 = vrot.slane %v2535, 5
      %v2538 = vsel %vm340, %v2533, %v2537
      %v2539 = vshrl.u32 %v2226, 16
      %v2541 = vrot.slane %v2539, 4
      %v2542 = vor.u32 %v2541, %v2537
      %v2543 = vrot.slane %v2542, 4
      %v2545 = vshll.u32 %v2227, 16
      %v2547 = vrot.slane %v2545, 5
      %v2548 = vsel %vm340, %v2543, %v2547
      %v2550 = vshrl.u32 %v2228, 16
      %v2552 = vrot.slane %v2550, 4
      %v2553 = vshll.u32 %v2228, 16
      %v2555 = vrot.slane %v2553, 5
      %v2556 = vor.u32 %v2552, %v2555
      %v2557 = vrot.slane %v2556, 4
      %v2559 = vshll.u32 %v2229, 16
      %v2561 = vrot.slane %v2559, 5
      %v2562 = vsel %vm340, %v2557, %v2561
      %v2563 = vshrl.u32 %v2229, 16
      %v2565 = vrot.slane %v2563, 4
      %v2566 = vor.u32 %v2565, %v2561
      %v2567 = vrot.slane %v2566, 4
      %v2569 = vshll.u32 %v2230, 16
      %v2571 = vrot.slane %v2569, 5
      %v2572 = vsel %vm340, %v2567, %v2571
      %v2574 = vshrl.u32 %v2231, 16
      %v2576 = vrot.slane %v2574, 4
      %v2577 = vshll.u32 %v2231, 16
      %v2579 = vrot.slane %v2577, 5
      %v2580 = vor.u32 %v2576, %v2579
      %v2581 = vrot.slane %v2580, 4
      %v2583 = vshll.u32 %v2232, 16
      %v2585 = vrot.slane %v2583, 5
      %v2586 = vsel %vm340, %v2581, %v2585
      %v2587 = vshrl.u32 %v2232, 16
      %v2589 = vrot.slane %v2587, 4
      %v2590 = vor.u32 %v2589, %v2585
      %v2591 = vrot.slane %v2590, 4
      %v2593 = vshll.u32 %v2233, 16
      %v2595 = vrot.slane %v2593, 5
      %v2596 = vsel %vm340, %v2591, %v2595
      %v2598 = vshrl.u32 %v2234, 16
      %v2600 = vrot.slane %v2598, 4
      %v2601 = vshll.u32 %v2234, 16
      %v2603 = vrot.slane %v2601, 5
      %v2604 = vor.u32 %v2600, %v2603
      %v2605 = vrot.slane %v2604, 4
      %v2607 = vshll.u32 %v2235, 16
      %v2609 = vrot.slane %v2607, 5
      %v2610 = vsel %vm340, %v2605, %v2609
      %v2611 = vshrl.u32 %v2235, 16
      %v2613 = vrot.slane %v2611, 4
      %v2614 = vor.u32 %v2613, %v2609
      %v2615 = vrot.slane %v2614, 4
      %v2617 = vshll.u32 %v2236, 16
      %v2619 = vrot.slane %v2617, 5
      %v2620 = vsel %vm340, %v2615, %v2619
      %v2621 = vld [vmem:[%s1 + $0x100] sm:$0xf]
      %v2622 = vld [vmem:[%s1 + $0x104] sm:$0xf]
      %v2623 = vld [vmem:[%s1 + $0x108] sm:$0xf]
      %v2624 = vld [vmem:[%s1 + $0x10c] sm:$0xf]
      %v2625 = vld [vmem:[%s1 + $0x110] sm:$0xf]
      %v2626 = vld [vmem:[%s1 + $0x114] sm:$0xf]
      %v2627 = vld [vmem:[%s1 + $0x118] sm:$0xf]
      %v2628 = vld [vmem:[%s1 + $0x11c] sm:$0xf]
      %v2629 = vld [vmem:[%s1 + $0x120] sm:$0xf]
      %v2630 = vld [vmem:[%s1 + $0x124] sm:$0xf]
      %v2631 = vld [vmem:[%s1 + $0x128] sm:$0xf]
      %v2632 = vld [vmem:[%s1 + $0x12c] sm:$0xf]
      %v2633 = vld [vmem:[%s1 + $0x130] sm:$0xf]
      %v2634 = vld [vmem:[%s1 + $0x134] sm:$0xf]
      %v2635 = vld [vmem:[%s1 + $0x138] sm:$0xf]
      %v2636 = vld [vmem:[%s1 + $0x13c] sm:$0xf]
      %v2637 = vunpack.c.l.b16 %v2250
      %v2638 = vunpack.c.l.b16 %v2260
      %v2639 = vunpack.c.l.b16 %v2274
      %v2640 = vunpack.c.l.b16 %v2284
      %v2641 = vunpack.c.l.b16 %v2298
      %v2642 = vunpack.c.l.b16 %v2308
      %v2643 = vunpack.c.l.b16 %v2322
      %v2644 = vunpack.c.l.b16 %v2332
      %v2645 = vunpack.c.l.b16 %v2346
      %v2646 = vunpack.c.l.b16 %v2356
      %v2647 = vunpack.c.l.b16 %v2370
      %v2648 = vunpack.c.l.b16 %v2380
      %v2649 = vunpack.c.l.b16 %v2394
      %v2650 = vunpack.c.l.b16 %v2404
      %v2651 = vunpack.c.l.b16 %v2418
      %v2652 = vunpack.c.l.b16 %v2428
      %v2653 = vunpack.c.l.b16 %v2442
      %v2654 = vunpack.c.l.b16 %v2452
      %v2655 = vunpack.c.l.b16 %v2466
      %v2656 = vunpack.c.l.b16 %v2476
      %v2657 = vunpack.c.l.b16 %v2490
      %v2658 = vunpack.c.l.b16 %v2500
      %v2659 = vunpack.c.l.b16 %v2514
      %v2660 = vunpack.c.l.b16 %v2524
      %v2661 = vunpack.c.l.b16 %v2538
      %v2662 = vunpack.c.l.b16 %v2548
      %v2663 = vunpack.c.l.b16 %v2562
      %v2664 = vunpack.c.l.b16 %v2572
      %v2665 = vunpack.c.l.b16 %v2586
      %v2666 = vunpack.c.l.b16 %v2596
      %v2667 = vunpack.c.l.b16 %v2610
      %v2668 = vunpack.c.l.b16 %v2620
      %v2669 = vpack.c.b16 %v2638, %v2637
      %v2670 = vpack.c.b16 %v2640, %v2639
      %v2671 = vpack.c.b16 %v2642, %v2641
      %v2672 = vpack.c.b16 %v2644, %v2643
      %v2673 = vpack.c.b16 %v2646, %v2645
      %v2674 = vpack.c.b16 %v2648, %v2647
      %v2675 = vpack.c.b16 %v2650, %v2649
      %v2676 = vpack.c.b16 %v2652, %v2651
      %v2677 = vpack.c.b16 %v2654, %v2653
      %v2678 = vpack.c.b16 %v2656, %v2655
      %v2679 = vpack.c.b16 %v2658, %v2657
      %v2680 = vpack.c.b16 %v2660, %v2659
      %v2681 = vpack.c.b16 %v2662, %v2661
      %v2682 = vpack.c.b16 %v2664, %v2663
      %v2683 = vpack.c.b16 %v2666, %v2665
      %v2684 = vpack.c.b16 %v2668, %v2667
      %v2717 = vunpack.c.l.b16 %v2621
      %v2718 = vunpack.c.l.b16 %v2622
      %v2719 = vunpack.c.l.b16 %v2623
      %v2720 = vunpack.c.l.b16 %v2624
      %v2721 = vunpack.c.l.b16 %v2625
      %v2722 = vunpack.c.l.b16 %v2626
      %v2723 = vunpack.c.l.b16 %v2627
      %v2724 = vunpack.c.l.b16 %v2628
      %v2725 = vunpack.c.l.b16 %v2629
      %v2726 = vunpack.c.l.b16 %v2630
      %v2727 = vunpack.c.l.b16 %v2631
      %v2728 = vunpack.c.l.b16 %v2632
      %v2729 = vunpack.c.l.b16 %v2633
      %v2730 = vunpack.c.l.b16 %v2634
      %v2731 = vunpack.c.l.b16 %v2635
      %v2732 = vunpack.c.l.b16 %v2636
      %v2733 = vpack.c.b16 %v2718, %v2717
      %v2734 = vpack.c.b16 %v2720, %v2719
      %v2735 = vpack.c.b16 %v2722, %v2721
      %v2736 = vpack.c.b16 %v2724, %v2723
      %v2737 = vpack.c.b16 %v2726, %v2725
      %v2738 = vpack.c.b16 %v2728, %v2727
      %v2739 = vpack.c.b16 %v2730, %v2729
      %v2740 = vpack.c.b16 %v2732, %v2731
      %2749 = vmatprep.subr.bf16.mxu0 0
      %2750 = vmatpush1.bf16.msra.mxu0 %v2733
      %2751 = vmatprep.subr.bf16.mxu0 0
      %2752 = vmatpush1.bf16.msra.mxu0 %v2734
      %2753 = vmatprep.subr.bf16.mxu0 0
      %2754 = vmatpush1.bf16.msra.mxu0 %v2735
      %2755 = vmatprep.subr.bf16.mxu0 0
      %2756 = vmatpush1.bf16.msra.mxu0 %v2736
      %2757 = vmatprep.subr.bf16.mxu0 0
      %2758 = vmatpush1.bf16.msra.mxu0 %v2737
      %2759 = vmatprep.subr.bf16.mxu0 0
      %2760 = vmatpush1.bf16.msra.mxu0 %v2738
      %2761 = vmatprep.subr.bf16.mxu0 0
      %2762 = vmatpush1.bf16.msra.mxu0 %v2739
      %2763 = vmatprep.subr.bf16.mxu0 0
      %2764 = vmatpush1.bf16.msra.mxu0 %v2740
      %2765 = vmatprep.subr.bf16.mxu0 0
      %2766 = vmatpush1.bf16.msra.mxu0 0
      %2767 = vmatprep.subr.bf16.mxu0 0
      %2768 = vmatpush1.bf16.msra.mxu0 0
      %2769 = vmatprep.subr.bf16.mxu0 0
      %2770 = vmatpush1.bf16.msra.mxu0 0
      %2771 = vmatprep.subr.bf16.mxu0 0
      %2772 = vmatpush1.bf16.msra.mxu0 0
      %2773 = vmatprep.subr.bf16.mxu0 0
      %2774 = vmatpush1.bf16.msra.mxu0 0
      %2775 = vmatprep.subr.bf16.mxu0 0
      %2776 = vmatpush1.bf16.msra.mxu0 0
      %2777 = vmatprep.subr.bf16.mxu0 0
      %2778 = vmatpush1.bf16.msra.mxu0 0
      %2779 = vmatprep.subr.bf16.mxu0 0
      %2780 = vmatpush1.bf16.msra.mxu0 0
      %2781 = vmatprep.mubr.bf16.mxu0 0
      %2782 = vmatmul.mubr.bf16.gmra.mrb[0].mxu0 %v2669
      %v2783 = vpop.f32.mrb[0].mxu0
      %v2784 = vadd.f32 0.0, %v2783
      %v2785 = vpop.f32.mrb[0].mxu0
      %v2786 = vpop.f32.mrb[0].mxu0
      %v2787 = vadd.f32 0.0, %v2786
      %v2788 = vpop.f32.mrb[0].mxu0
      %2789 = vmatprep.mubr.bf16.mxu0 0
      %2790 = vmatmul.mubr.bf16.gmra.mrb[0].mxu0 %v2670
      %v2791 = vpop.f32.mrb[0].mxu0
      %v2792 = vadd.f32 0.0, %v2791
      %v2793 = vpop.f32.mrb[0].mxu0
      %v2794 = vpop.f32.mrb[0].mxu0
      %v2795 = vadd.f32 0.0, %v2794
      %v2796 = vpop.f32.mrb[0].mxu0
      %2797 = vmatprep.mubr.bf16.mxu0 0
      %2798 = vmatmul.mubr.bf16.gmra.mrb[0].mxu0 %v2671
      %v2799 = vpop.f32.mrb[0].mxu0
      %v2800 = vadd.f32 0.0, %v2799
      %v2801 = vpop.f32.mrb[0].mxu0
      %v2802 = vpop.f32.mrb[0].mxu0
      %v2803 = vadd.f32 0.0, %v2802
      %v2804 = vpop.f32.mrb[0].mxu0
      %2805 = vmatprep.mubr.bf16.mxu0 0
      %2806 = vmatmul.mubr.bf16.gmra.mrb[0].mxu0 %v2672
      %v2807 = vpop.f32.mrb[0].mxu0
      %v2808 = vadd.f32 0.0, %v2807
      %v2809 = vpop.f32.mrb[0].mxu0
      %v2810 = vpop.f32.mrb[0].mxu0
      %v2811 = vadd.f32 0.0, %v2810
      %v2812 = vpop.f32.mrb[0].mxu0
      %2813 = vmatprep.mubr.bf16.mxu0 0
      %2814 = vmatmul.mubr.bf16.gmra.mrb[0].mxu0 %v2673
      %v2815 = vpop.f32.mrb[0].mxu0
      %v2816 = vadd.f32 0.0, %v2815
      %v2817 = vpop.f32.mrb[0].mxu0
      %v2818 = vpop.f32.mrb[0].mxu0
      %v2819 = vadd.f32 0.0, %v2818
      %v2820 = vpop.f32.mrb[0].mxu0
      %2821 = vmatprep.mubr.bf16.mxu0 0
      %2822 = vmatmul.mubr.bf16.gmra.mrb[0].mxu0 %v2674
      %v2823 = vpop.f32.mrb[0].mxu0
      %v2824 = vadd.f32 0.0, %v2823
      %v2825 = vpop.f32.mrb[0].mxu0
      %v2826 = vpop.f32.mrb[0].mxu0
      %v2827 = vadd.f32 0.0, %v2826
      %v2828 = vpop.f32.mrb[0].mxu0
      %2829 = vmatprep.mubr.bf16.mxu0 0
      %2830 = vmatmul.mubr.bf16.gmra.mrb[0].mxu0 %v2675
      %v2831 = vpop.f32.mrb[0].mxu0
      %v2832 = vadd.f32 0.0, %v2831
      %v2833 = vpop.f32.mrb[0].mxu0
      %v2834 = vpop.f32.mrb[0].mxu0
      %v2835 = vadd.f32 0.0, %v2834
      %v2836 = vpop.f32.mrb[0].mxu0
      %2837 = vmatprep.mubr.bf16.mxu0 0
      %2838 = vmatmul.mubr.bf16.gmra.mrb[0].mxu0 %v2676
      %v2839 = vpop.f32.mrb[0].mxu0
      %v2840 = vadd.f32 0.0, %v2839
      %v2841 = vpop.f32.mrb[0].mxu0
      %v2842 = vpop.f32.mrb[0].mxu0
      %v2843 = vadd.f32 0.0, %v2842
      %v2844 = vpop.f32.mrb[0].mxu0
      %2845 = vmatprep.mubr.bf16.mxu0 0
      %2846 = vmatmul.mubr.bf16.gmra.mrb[0].mxu0 %v2677
      %v2847 = vpop.f32.mrb[0].mxu0
      %v2848 = vadd.f32 0.0, %v2847
      %v2849 = vpop.f32.mrb[0].mxu0
      %v2850 = vpop.f32.mrb[0].mxu0
      %v2851 = vadd.f32 0.0, %v2850
      %v2852 = vpop.f32.mrb[0].mxu0
      %2853 = vmatprep.mubr.bf16.mxu0 0
      %2854 = vmatmul.mubr.bf16.gmra.mrb[0].mxu0 %v2678
      %v2855 = vpop.f32.mrb[0].mxu0
      %v2856 = vadd.f32 0.0, %v2855
      %v2857 = vpop.f32.mrb[0].mxu0
      %v2858 = vpop.f32.mrb[0].mxu0
      %v2859 = vadd.f32 0.0, %v2858
      %v2860 = vpop.f32.mrb[0].mxu0
      %2861 = vmatprep.mubr.bf16.mxu0 0
      %2862 = vmatmul.mubr.bf16.gmra.mrb[0].mxu0 %v2679
      %v2863 = vpop.f32.mrb[0].mxu0
      %v2864 = vadd.f32 0.0, %v2863
      %v2865 = vpop.f32.mrb[0].mxu0
      %v2866 = vpop.f32.mrb[0].mxu0
      %v2867 = vadd.f32 0.0, %v2866
      %v2868 = vpop.f32.mrb[0].mxu0
      %2869 = vmatprep.mubr.bf16.mxu0 0
      %2870 = vmatmul.mubr.bf16.gmra.mrb[0].mxu0 %v2680
      %v2871 = vpop.f32.mrb[0].mxu0
      %v2872 = vadd.f32 0.0, %v2871
      %v2873 = vpop.f32.mrb[0].mxu0
      %v2874 = vpop.f32.mrb[0].mxu0
      %v2875 = vadd.f32 0.0, %v2874
      %v2876 = vpop.f32.mrb[0].mxu0
      %2877 = vmatprep.mubr.bf16.mxu0 0
      %2878 = vmatmul.mubr.bf16.gmra.mrb[0].mxu0 %v2681
      %v2879 = vpop.f32.mrb[0].mxu0
      %v2880 = vadd.f32 0.0, %v2879
      %v2881 = vpop.f32.mrb[0].mxu0
      %v2882 = vpop.f32.mrb[0].mxu0
      %v2883 = vadd.f32 0.0, %v2882
      %v2884 = vpop.f32.mrb[0].mxu0
      %2885 = vmatprep.mubr.bf16.mxu0 0
      %2886 = vmatmul.mubr.bf16.gmra.mrb[0].mxu0 %v2682
      %v2887 = vpop.f32.mrb[0].mxu0
      %v2888 = vadd.f32 0.0, %v2887
      %v2889 = vpop.f32.mrb[0].mxu0
      %v2890 = vpop.f32.mrb[0].mxu0
      %v2891 = vadd.f32 0.0, %v2890
      %v2892 = vpop.f32.mrb[0].mxu0
      %2893 = vmatprep.mubr.bf16.mxu0 0
      %2894 = vmatmul.mubr.bf16.gmra.mrb[0].mxu0 %v2683
      %v2895 = vpop.f32.mrb[0].mxu0
      %v2896 = vadd.f32 0.0, %v2895
      %v2897 = vpop.f32.mrb[0].mxu0
      %v2898 = vpop.f32.mrb[0].mxu0
      %v2899 = vadd.f32 0.0, %v2898
      %v2900 = vpop.f32.mrb[0].mxu0
      %2901 = vmatprep.mubr.bf16.mxu0 0
      %2902 = vmatmul.mubr.bf16.gmra.mrb[0].mxu0 %v2684
      %v2903 = vpop.f32.mrb[0].mxu0
      %v2904 = vadd.f32 0.0, %v2903
      %v2905 = vpop.f32.mrb[0].mxu0
      %v2906 = vpop.f32.mrb[0].mxu0
      %v2907 = vadd.f32 0.0, %v2906
      %v2908 = vpop.f32.mrb[0].mxu0
      %2909 = vdwg.mxu0
      %v2910 = vadd.f32 %v2157, %v2784
      %v2911 = vadd.f32 %v2158, %v2787
      %v2912 = vadd.f32 %v2159, %v2792
      %v2913 = vadd.f32 %v2160, %v2795
      %v2914 = vadd.f32 %v2161, %v2800
      %v2915 = vadd.f32 %v2162, %v2803
      %v2916 = vadd.f32 %v2163, %v2808
      %v2917 = vadd.f32 %v2164, %v2811
      %v2918 = vadd.f32 %v2165, %v2816
      %v2919 = vadd.f32 %v2166, %v2819
      %v2920 = vadd.f32 %v2167, %v2824
      %v2921 = vadd.f32 %v2168, %v2827
      %v2922 = vadd.f32 %v2169, %v2832
      %v2923 = vadd.f32 %v2170, %v2835
      %v2924 = vadd.f32 %v2171, %v2840
      %v2925 = vadd.f32 %v2172, %v2843
      %v2926 = vadd.f32 %v2173, %v2848
      %v2927 = vadd.f32 %v2174, %v2851
      %v2928 = vadd.f32 %v2175, %v2856
      %v2929 = vadd.f32 %v2176, %v2859
      %v2930 = vadd.f32 %v2177, %v2864
      %v2931 = vadd.f32 %v2178, %v2867
      %v2932 = vadd.f32 %v2179, %v2872
      %v2933 = vadd.f32 %v2180, %v2875
      %v2934 = vadd.f32 %v2181, %v2880
      %v2935 = vadd.f32 %v2182, %v2883
      %v2936 = vadd.f32 %v2183, %v2888
      %v2937 = vadd.f32 %v2184, %v2891
      %v2938 = vadd.f32 %v2185, %v2896
      %v2939 = vadd.f32 %v2186, %v2899
      %v2940 = vadd.f32 %v2187, %v2904
      %v2941 = vadd.f32 %v2188, %v2907
      %v2942 = vld [vmem:[%s1803] sm:$0xe]
      %v2943 = vld [vmem:[%s1803 + $0xc] sm:$0xe]
      %v2944 = vld [vmem:[%s1803 + $0x18] sm:$0xe]
      %v2945 = vld [vmem:[%s1803 + $0x24] sm:$0xe]
      %v2946 = vld [vmem:[%s1803 + $0x30] sm:$0xe]
      %v2947 = vld [vmem:[%s1803 + $0x3c] sm:$0xe]
      %v2948 = vld [vmem:[%s1803 + $0x48] sm:$0xe]
      %v2949 = vld [vmem:[%s1803 + $0x54] sm:$0xe]
      %v2950 = vld [vmem:[%s1803 + $0x60] sm:$0xe]
      %v2951 = vld [vmem:[%s1803 + $0x6c] sm:$0xe]
      %v2952 = vld [vmem:[%s1803 + $0x78] sm:$0xe]
      %v2953 = vld [vmem:[%s1803 + $0x84] sm:$0xe]
      %v2954 = vld [vmem:[%s1803 + $0x90] sm:$0xe]
      %v2955 = vld [vmem:[%s1803 + $0x9c] sm:$0xe]
      %v2956 = vld [vmem:[%s1803 + $0xa8] sm:$0xe]
      %v2957 = vld [vmem:[%s1803 + $0xb4] sm:$0xe]
      %v3006 = vrot.slane %v2942, 5
      %v3007 = vrot.slane %v3006, 4
      %v3008 = vrot.slane %v2190, 5
      %v3009 = vsel %vm1369, %v3007, %v3008
      %v3010 = vrot.slane %v3008, 4
      %v3011 = vrot.slane %v2191, 5
      %v3012 = vsel %vm1369, %v3010, %v3011
      %v3013 = vrot.slane %v2943, 5
      %v3014 = vrot.slane %v3013, 4
      %v3015 = vrot.slane %v2193, 5
      %v3016 = vsel %vm1369, %v3014, %v3015
      %v3017 = vrot.slane %v3015, 4
      %v3018 = vrot.slane %v2194, 5
      %v3019 = vsel %vm1369, %v3017, %v3018
      %v3020 = vrot.slane %v2944, 5
      %v3021 = vrot.slane %v3020, 4
      %v3022 = vrot.slane %v2196, 5
      %v3023 = vsel %vm1369, %v3021, %v3022
      %v3024 = vrot.slane %v3022, 4
      %v3025 = vrot.slane %v2197, 5
      %v3026 = vsel %vm1369, %v3024, %v3025
      %v3027 = vrot.slane %v2945, 5
      %v3028 = vrot.slane %v3027, 4
      %v3029 = vrot.slane %v2199, 5
      %v3030 = vsel %vm1369, %v3028, %v3029
      %v3031 = vrot.slane %v3029, 4
      %v3032 = vrot.slane %v2200, 5
      %v3033 = vsel %vm1369, %v3031, %v3032
      %v3034 = vrot.slane %v2946, 5
      %v3035 = vrot.slane %v3034, 4
      %v3036 = vrot.slane %v2202, 5
      %v3037 = vsel %vm1369, %v3035, %v3036
      %v3038 = vrot.slane %v3036, 4
      %v3039 = vrot.slane %v2203, 5
      %v3040 = vsel %vm1369, %v3038, %v3039
      %v3041 = vrot.slane %v2947, 5
      %v3042 = vrot.slane %v3041, 4
      %v3043 = vrot.slane %v2205, 5
      %v3044 = vsel %vm1369, %v3042, %v3043
      %v3045 = vrot.slane %v3043, 4
      %v3046 = vrot.slane %v2206, 5
      %v3047 = vsel %vm1369, %v3045, %v3046
      %v3048 = vrot.slane %v2948, 5
      %v3049 = vrot.slane %v3048, 4
      %v3050 = vrot.slane %v2208, 5
      %v3051 = vsel %vm1369, %v3049, %v3050
      %v3052 = vrot.slane %v3050, 4
      %v3053 = vrot.slane %v2209, 5
      %v3054 = vsel %vm1369, %v3052, %v3053
      %v3055 = vrot.slane %v2949, 5
      %v3056 = vrot.slane %v3055, 4
      %v3057 = vrot.slane %v2211, 5
      %v3058 = vsel %vm1369, %v3056, %v3057
      %v3059 = vrot.slane %v3057, 4
      %v3060 = vrot.slane %v2212, 5
      %v3061 = vsel %vm1369, %v3059, %v3060
      %v3062 = vrot.slane %v2950, 5
      %v3063 = vrot.slane %v3062, 4
      %v3064 = vrot.slane %v2214, 5
      %v3065 = vsel %vm1369, %v3063, %v3064
      %v3066 = vrot.slane %v3064, 4
      %v3067 = vrot.slane %v2215, 5
      %v3068 = vsel %vm1369, %v3066, %v3067
      %v3069 = vrot.slane %v2951, 5
      %v3070 = vrot.slane %v3069, 4
      %v3071 = vrot.slane %v2217, 5
      %v3072 = vsel %vm1369, %v3070, %v3071
      %v3073 = vrot.slane %v3071, 4
      %v3074 = vrot.slane %v2218, 5
      %v3075 = vsel %vm1369, %v3073, %v3074
      %v3076 = vrot.slane %v2952, 5
      %v3077 = vrot.slane %v3076, 4
      %v3078 = vrot.slane %v2220, 5
      %v3079 = vsel %vm1369, %v3077, %v3078
      %v3080 = vrot.slane %v3078, 4
      %v3081 = vrot.slane %v2221, 5
      %v3082 = vsel %vm1369, %v3080, %v3081
      %v3083 = vrot.slane %v2953, 5
      %v3084 = vrot.slane %v3083, 4
      %v3085 = vrot.slane %v2223, 5
      %v3086 = vsel %vm1369, %v3084, %v3085
      %v3087 = vrot.slane %v3085, 4
      %v3088 = vrot.slane %v2224, 5
      %v3089 = vsel %vm1369, %v3087, %v3088
      %v3090 = vrot.slane %v2954, 5
      %v3091 = vrot.slane %v3090, 4
      %v3092 = vrot.slane %v2226, 5
      %v3093 = vsel %vm1369, %v3091, %v3092
      %v3094 = vrot.slane %v3092, 4
      %v3095 = vrot.slane %v2227, 5
      %v3096 = vsel %vm1369, %v3094, %v3095
      %v3097 = vrot.slane %v2955, 5
      %v3098 = vrot.slane %v3097, 4
      %v3099 = vrot.slane %v2229, 5
      %v3100 = vsel %vm1369, %v3098, %v3099
      %v3101 = vrot.slane %v3099, 4
      %v3102 = vrot.slane %v2230, 5
      %v3103 = vsel %vm1369, %v3101, %v3102
      %v3104 = vrot.slane %v2956, 5
      %v3105 = vrot.slane %v3104, 4
      %v3106 = vrot.slane %v2232, 5
      %v3107 = vsel %vm1369, %v3105, %v3106
      %v3108 = vrot.slane %v3106, 4
      %v3109 = vrot.slane %v2233, 5
      %v3110 = vsel %vm1369, %v3108, %v3109
      %v3111 = vrot.slane %v2957, 5
      %v3112 = vrot.slane %v3111, 4
      %v3113 = vrot.slane %v2235, 5
      %v3114 = vsel %vm1369, %v3112, %v3113
      %v3115 = vrot.slane %v3113, 4
      %v3116 = vrot.slane %v2236, 5
      %v3117 = vsel %vm1369, %v3115, %v3116
      %v3118 = vld [vmem:[%s1 + $0x140] sm:$0xf]
      %v3119 = vld [vmem:[%s1 + $0x144] sm:$0xf]
      %v3120 = vld [vmem:[%s1 + $0x148] sm:$0xf]
      %v3121 = vld [vmem:[%s1 + $0x14c] sm:$0xf]
      %v3122 = vld [vmem:[%s1 + $0x150] sm:$0xf]
      %v3123 = vld [vmem:[%s1 + $0x154] sm:$0xf]
      %v3124 = vld [vmem:[%s1 + $0x158] sm:$0xf]
      %v3125 = vld [vmem:[%s1 + $0x15c] sm:$0xf]
      %v3126 = vld [vmem:[%s1 + $0x160] sm:$0xf]
      %v3127 = vld [vmem:[%s1 + $0x164] sm:$0xf]
      %v3128 = vld [vmem:[%s1 + $0x168] sm:$0xf]
      %v3129 = vld [vmem:[%s1 + $0x16c] sm:$0xf]
      %v3130 = vld [vmem:[%s1 + $0x170] sm:$0xf]
      %v3131 = vld [vmem:[%s1 + $0x174] sm:$0xf]
      %v3132 = vld [vmem:[%s1 + $0x178] sm:$0xf]
      %v3133 = vld [vmem:[%s1 + $0x17c] sm:$0xf]
      %v3134 = vunpack.c.l.b16 %v3009
      %v3135 = vunpack.c.l.b16 %v3012
      %v3136 = vunpack.c.l.b16 %v3016
      %v3137 = vunpack.c.l.b16 %v3019
      %v3138 = vunpack.c.l.b16 %v3023
      %v3139 = vunpack.c.l.b16 %v3026
      %v3140 = vunpack.c.l.b16 %v3030
      %v3141 = vunpack.c.l.b16 %v3033
      %v3142 = vunpack.c.l.b16 %v3037
      %v3143 = vunpack.c.l.b16 %v3040
      %v3144 = vunpack.c.l.b16 %v3044
      %v3145 = vunpack.c.l.b16 %v3047
      %v3146 = vunpack.c.l.b16 %v3051
      %v3147 = vunpack.c.l.b16 %v3054
      %v3148 = vunpack.c.l.b16 %v3058
      %v3149 = vunpack.c.l.b16 %v3061
      %v3150 = vunpack.c.l.b16 %v3065
      %v3151 = vunpack.c.l.b16 %v3068
      %v3152 = vunpack.c.l.b16 %v3072
      %v3153 = vunpack.c.l.b16 %v3075
      %v3154 = vunpack.c.l.b16 %v3079
      %v3155 = vunpack.c.l.b16 %v3082
      %v3156 = vunpack.c.l.b16 %v3086
      %v3157 = vunpack.c.l.b16 %v3089
      %v3158 = vunpack.c.l.b16 %v3093
      %v3159 = vunpack.c.l.b16 %v3096
      %v3160 = vunpack.c.l.b16 %v3100
      %v3161 = vunpack.c.l.b16 %v3103
      %v3162 = vunpack.c.l.b16 %v3107
      %v3163 = vunpack.c.l.b16 %v3110
      %v3164 = vunpack.c.l.b16 %v3114
      %v3165 = vunpack.c.l.b16 %v3117
      %v3166 = vpack.c.b16 %v3135, %v3134
      %v3167 = vpack.c.b16 %v3137, %v3136
      %v3168 = vpack.c.b16 %v3139, %v3138
      %v3169 = vpack.c.b16 %v3141, %v3140
      %v3170 = vpack.c.b16 %v3143, %v3142
      %v3171 = vpack.c.b16 %v3145, %v3144
      %v3172 = vpack.c.b16 %v3147, %v3146
      %v3173 = vpack.c.b16 %v3149, %v3148
      %v3174 = vpack.c.b16 %v3151, %v3150
      %v3175 = vpack.c.b16 %v3153, %v3152
      %v3176 = vpack.c.b16 %v3155, %v3154
      %v3177 = vpack.c.b16 %v3157, %v3156
      %v3178 = vpack.c.b16 %v3159, %v3158
      %v3179 = vpack.c.b16 %v3161, %v3160
      %v3180 = vpack.c.b16 %v3163, %v3162
      %v3181 = vpack.c.b16 %v3165, %v3164
      %v3214 = vunpack.c.l.b16 %v3118
      %v3215 = vunpack.c.l.b16 %v3119
      %v3216 = vunpack.c.l.b16 %v3120
      %v3217 = vunpack.c.l.b16 %v3121
      %v3218 = vunpack.c.l.b16 %v3122
      %v3219 = vunpack.c.l.b16 %v3123
      %v3220 = vunpack.c.l.b16 %v3124
      %v3221 = vunpack.c.l.b16 %v3125
      %v3222 = vunpack.c.l.b16 %v3126
      %v3223 = vunpack.c.l.b16 %v3127
      %v3224 = vunpack.c.l.b16 %v3128
      %v3225 = vunpack.c.l.b16 %v3129
      %v3226 = vunpack.c.l.b16 %v3130
      %v3227 = vunpack.c.l.b16 %v3131
      %v3228 = vunpack.c.l.b16 %v3132
      %v3229 = vunpack.c.l.b16 %v3133
      %v3230 = vpack.c.b16 %v3215, %v3214
      %v3231 = vpack.c.b16 %v3217, %v3216
      %v3232 = vpack.c.b16 %v3219, %v3218
      %v3233 = vpack.c.b16 %v3221, %v3220
      %v3234 = vpack.c.b16 %v3223, %v3222
      %v3235 = vpack.c.b16 %v3225, %v3224
      %v3236 = vpack.c.b16 %v3227, %v3226
      %v3237 = vpack.c.b16 %v3229, %v3228
      %3246 = vmatprep.subr.bf16.mxu0 0
      %3247 = vmatpush1.bf16.msra.mxu0 %v3230
      %3248 = vmatprep.subr.bf16.mxu0 0
      %3249 = vmatpush1.bf16.msra.mxu0 %v3231
      %3250 = vmatprep.subr.bf16.mxu0 0
      %3251 = vmatpush1.bf16.msra.mxu0 %v3232
      %3252 = vmatprep.subr.bf16.mxu0 0
      %3253 = vmatpush1.bf16.msra.mxu0 %v3233
      %3254 = vmatprep.subr.bf16.mxu0 0
      %3255 = vmatpush1.bf16.msra.mxu0 %v3234
      %3256 = vmatprep.subr.bf16.mxu0 0
      %3257 = vmatpush1.bf16.msra.mxu0 %v3235
      %3258 = vmatprep.subr.bf16.mxu0 0
      %3259 = vmatpush1.bf16.msra.mxu0 %v3236
      %3260 = vmatprep.subr.bf16.mxu0 0
      %3261 = vmatpush1.bf16.msra.mxu0 %v3237
      %3262 = vmatprep.subr.bf16.mxu0 0
      %3263 = vmatpush1.bf16.msra.mxu0 0
      %3264 = vmatprep.subr.bf16.mxu0 0
      %3265 = vmatpush1.bf16.msra.mxu0 0
      %3266 = vmatprep.subr.bf16.mxu0 0
      %3267 = vmatpush1.bf16.msra.mxu0 0
      %3268 = vmatprep.subr.bf16.mxu0 0
      %3269 = vmatpush1.bf16.msra.mxu0 0
      %3270 = vmatprep.subr.bf16.mxu0 0
      %3271 = vmatpush1.bf16.msra.mxu0 0
      %3272 = vmatprep.subr.bf16.mxu0 0
      %3273 = vmatpush1.bf16.msra.mxu0 0
      %3274 = vmatprep.subr.bf16.mxu0 0
      %3275 = vmatpush1.bf16.msra.mxu0 0
      %3276 = vmatprep.subr.bf16.mxu0 0
      %3277 = vmatpush1.bf16.msra.mxu0 0
      %3278 = vmatprep.mubr.bf16.mxu0 0
      %3279 = vmatmul.mubr.bf16.gmra.mrb[0].mxu0 %v3166
      %v3280 = vpop.f32.mrb[0].mxu0
      %v3281 = vadd.f32 0.0, %v3280
      %v3282 = vpop.f32.mrb[0].mxu0
      %v3283 = vpop.f32.mrb[0].mxu0
      %v3284 = vadd.f32 0.0, %v3283
      %v3285 = vpop.f32.mrb[0].mxu0
      %3286 = vmatprep.mubr.bf16.mxu0 0
      %3287 = vmatmul.mubr.bf16.gmra.mrb[0].mxu0 %v3167
      %v3288 = vpop.f32.mrb[0].mxu0
      %v3289 = vadd.f32 0.0, %v3288
      %v3290 = vpop.f32.mrb[0].mxu0
      %v3291 = vpop.f32.mrb[0].mxu0
      %v3292 = vadd.f32 0.0, %v3291
      %v3293 = vpop.f32.mrb[0].mxu0
      %3294 = vmatprep.mubr.bf16.mxu0 0
      %3295 = vmatmul.mubr.bf16.gmra.mrb[0].mxu0 %v3168
      %v3296 = vpop.f32.mrb[0].mxu0
      %v3297 = vadd.f32 0.0, %v3296
      %v3298 = vpop.f32.mrb[0].mxu0
      %v3299 = vpop.f32.mrb[0].mxu0
      %v3300 = vadd.f32 0.0, %v3299
      %v3301 = vpop.f32.mrb[0].mxu0
      %3302 = vmatprep.mubr.bf16.mxu0 0
      %3303 = vmatmul.mubr.bf16.gmra.mrb[0].mxu0 %v3169
      %v3304 = vpop.f32.mrb[0].mxu0
      %v3305 = vadd.f32 0.0, %v3304
      %v3306 = vpop.f32.mrb[0].mxu0
      %v3307 = vpop.f32.mrb[0].mxu0
      %v3308 = vadd.f32 0.0, %v3307
      %v3309 = vpop.f32.mrb[0].mxu0
      %3310 = vmatprep.mubr.bf16.mxu0 0
      %3311 = vmatmul.mubr.bf16.gmra.mrb[0].mxu0 %v3170
      %v3312 = vpop.f32.mrb[0].mxu0
      %v3313 = vadd.f32 0.0, %v3312
      %v3314 = vpop.f32.mrb[0].mxu0
      %v3315 = vpop.f32.mrb[0].mxu0
      %v3316 = vadd.f32 0.0, %v3315
      %v3317 = vpop.f32.mrb[0].mxu0
      %3318 = vmatprep.mubr.bf16.mxu0 0
      %3319 = vmatmul.mubr.bf16.gmra.mrb[0].mxu0 %v3171
      %v3320 = vpop.f32.mrb[0].mxu0
      %v3321 = vadd.f32 0.0, %v3320
      %v3322 = vpop.f32.mrb[0].mxu0
      %v3323 = vpop.f32.mrb[0].mxu0
      %v3324 = vadd.f32 0.0, %v3323
      %v3325 = vpop.f32.mrb[0].mxu0
      %3326 = vmatprep.mubr.bf16.mxu0 0
      %3327 = vmatmul.mubr.bf16.gmra.mrb[0].mxu0 %v3172
      %v3328 = vpop.f32.mrb[0].mxu0
      %v3329 = vadd.f32 0.0, %v3328
      %v3330 = vpop.f32.mrb[0].mxu0
      %v3331 = vpop.f32.mrb[0].mxu0
      %v3332 = vadd.f32 0.0, %v3331
      %v3333 = vpop.f32.mrb[0].mxu0
      %3334 = vmatprep.mubr.bf16.mxu0 0
      %3335 = vmatmul.mubr.bf16.gmra.mrb[0].mxu0 %v3173
      %v3336 = vpop.f32.mrb[0].mxu0
      %v3337 = vadd.f32 0.0, %v3336
      %v3338 = vpop.f32.mrb[0].mxu0
      %v3339 = vpop.f32.mrb[0].mxu0
      %v3340 = vadd.f32 0.0, %v3339
      %v3341 = vpop.f32.mrb[0].mxu0
      %3342 = vmatprep.mubr.bf16.mxu0 0
      %3343 = vmatmul.mubr.bf16.gmra.mrb[0].mxu0 %v3174
      %v3344 = vpop.f32.mrb[0].mxu0
      %v3345 = vadd.f32 0.0, %v3344
      %v3346 = vpop.f32.mrb[0].mxu0
      %v3347 = vpop.f32.mrb[0].mxu0
      %v3348 = vadd.f32 0.0, %v3347
      %v3349 = vpop.f32.mrb[0].mxu0
      %3350 = vmatprep.mubr.bf16.mxu0 0
      %3351 = vmatmul.mubr.bf16.gmra.mrb[0].mxu0 %v3175
      %v3352 = vpop.f32.mrb[0].mxu0
      %v3353 = vadd.f32 0.0, %v3352
      %v3354 = vpop.f32.mrb[0].mxu0
      %v3355 = vpop.f32.mrb[0].mxu0
      %v3356 = vadd.f32 0.0, %v3355
      %v3357 = vpop.f32.mrb[0].mxu0
      %3358 = vmatprep.mubr.bf16.mxu0 0
      %3359 = vmatmul.mubr.bf16.gmra.mrb[0].mxu0 %v3176
      %v3360 = vpop.f32.mrb[0].mxu0
      %v3361 = vadd.f32 0.0, %v3360
      %v3362 = vpop.f32.mrb[0].mxu0
      %v3363 = vpop.f32.mrb[0].mxu0
      %v3364 = vadd.f32 0.0, %v3363
      %v3365 = vpop.f32.mrb[0].mxu0
      %3366 = vmatprep.mubr.bf16.mxu0 0
      %3367 = vmatmul.mubr.bf16.gmra.mrb[0].mxu0 %v3177
      %v3368 = vpop.f32.mrb[0].mxu0
      %v3369 = vadd.f32 0.0, %v3368
      %v3370 = vpop.f32.mrb[0].mxu0
      %v3371 = vpop.f32.mrb[0].mxu0
      %v3372 = vadd.f32 0.0, %v3371
      %v3373 = vpop.f32.mrb[0].mxu0
      %3374 = vmatprep.mubr.bf16.mxu0 0
      %3375 = vmatmul.mubr.bf16.gmra.mrb[0].mxu0 %v3178
      %v3376 = vpop.f32.mrb[0].mxu0
      %v3377 = vadd.f32 0.0, %v3376
      %v3378 = vpop.f32.mrb[0].mxu0
      %v3379 = vpop.f32.mrb[0].mxu0
      %v3380 = vadd.f32 0.0, %v3379
      %v3381 = vpop.f32.mrb[0].mxu0
      %3382 = vmatprep.mubr.bf16.mxu0 0
      %3383 = vmatmul.mubr.bf16.gmra.mrb[0].mxu0 %v3179
      %v3384 = vpop.f32.mrb[0].mxu0
      %v3385 = vadd.f32 0.0, %v3384
      %v3386 = vpop.f32.mrb[0].mxu0
      %v3387 = vpop.f32.mrb[0].mxu0
      %v3388 = vadd.f32 0.0, %v3387
      %v3389 = vpop.f32.mrb[0].mxu0
      %3390 = vmatprep.mubr.bf16.mxu0 0
      %3391 = vmatmul.mubr.bf16.gmra.mrb[0].mxu0 %v3180
      %v3392 = vpop.f32.mrb[0].mxu0
      %v3393 = vadd.f32 0.0, %v3392
      %v3394 = vpop.f32.mrb[0].mxu0
      %v3395 = vpop.f32.mrb[0].mxu0
      %v3396 = vadd.f32 0.0, %v3395
      %v3397 = vpop.f32.mrb[0].mxu0
      %3398 = vmatprep.mubr.bf16.mxu0 0
      %3399 = vmatmul.mubr.bf16.gmra.mrb[0].mxu0 %v3181
      %v3400 = vpop.f32.mrb[0].mxu0
      %v3401 = vadd.f32 0.0, %v3400
      %v3402 = vpop.f32.mrb[0].mxu0
      %v3403 = vpop.f32.mrb[0].mxu0
      %v3404 = vadd.f32 0.0, %v3403
      %v3405 = vpop.f32.mrb[0].mxu0
      %3406 = vdwg.mxu0
      %v3407 = vadd.f32 %v2910, %v3281
      %v3408 = vadd.f32 %v2911, %v3284
      %v3409 = vadd.f32 %v2912, %v3289
      %v3410 = vadd.f32 %v2913, %v3292
      %v3411 = vadd.f32 %v2914, %v3297
      %v3412 = vadd.f32 %v2915, %v3300
      %v3413 = vadd.f32 %v2916, %v3305
      %v3414 = vadd.f32 %v2917, %v3308
      %v3415 = vadd.f32 %v2918, %v3313
      %v3416 = vadd.f32 %v2919, %v3316
      %v3417 = vadd.f32 %v2920, %v3321
      %v3418 = vadd.f32 %v2921, %v3324
      %v3419 = vadd.f32 %v2922, %v3329
      %v3420 = vadd.f32 %v2923, %v3332
      %v3421 = vadd.f32 %v2924, %v3337
      %v3422 = vadd.f32 %v2925, %v3340
      %v3423 = vadd.f32 %v2926, %v3345
      %v3424 = vadd.f32 %v2927, %v3348
      %v3425 = vadd.f32 %v2928, %v3353
      %v3426 = vadd.f32 %v2929, %v3356
      %v3427 = vadd.f32 %v2930, %v3361
      %v3428 = vadd.f32 %v2931, %v3364
      %v3429 = vadd.f32 %v2932, %v3369
      %v3430 = vadd.f32 %v2933, %v3372
      %v3431 = vadd.f32 %v2934, %v3377
      %v3432 = vadd.f32 %v2935, %v3380
      %v3433 = vadd.f32 %v2936, %v3385
      %v3434 = vadd.f32 %v2937, %v3388
      %v3435 = vadd.f32 %v2938, %v3393
      %v3436 = vadd.f32 %v2939, %v3396
      %v3437 = vadd.f32 %v2940, %v3401
      %v3438 = vadd.f32 %v2941, %v3404
      %s3439 = scalar_lea.vmem %s261, 24
      %v3440 = vld [vmem:[%s3439] sm:$0xf]
      %v3441 = vld [vmem:[%s3439 + $0x4] sm:$0xf]
      %v3442 = vld [vmem:[%s3439 + $0xc] sm:$0xf]
      %v3443 = vld [vmem:[%s3439 + $0x10] sm:$0xf]
      %v3444 = vld [vmem:[%s3439 + $0x18] sm:$0xf]
      %v3445 = vld [vmem:[%s3439 + $0x1c] sm:$0xf]
      %v3446 = vld [vmem:[%s3439 + $0x24] sm:$0xf]
      %v3447 = vld [vmem:[%s3439 + $0x28] sm:$0xf]
      %v3448 = vld [vmem:[%s3439 + $0x30] sm:$0xf]
      %v3449 = vld [vmem:[%s3439 + $0x34] sm:$0xf]
      %v3450 = vld [vmem:[%s3439 + $0x3c] sm:$0xf]
      %v3451 = vld [vmem:[%s3439 + $0x40] sm:$0xf]
      %v3452 = vld [vmem:[%s3439 + $0x48] sm:$0xf]
      %v3453 = vld [vmem:[%s3439 + $0x4c] sm:$0xf]
      %v3454 = vld [vmem:[%s3439 + $0x54] sm:$0xf]
      %v3455 = vld [vmem:[%s3439 + $0x58] sm:$0xf]
      %v3456 = vld [vmem:[%s3439 + $0x60] sm:$0xf]
      %v3457 = vld [vmem:[%s3439 + $0x64] sm:$0xf]
      %v3458 = vld [vmem:[%s3439 + $0x6c] sm:$0xf]
      %v3459 = vld [vmem:[%s3439 + $0x70] sm:$0xf]
      %v3460 = vld [vmem:[%s3439 + $0x78] sm:$0xf]
      %v3461 = vld [vmem:[%s3439 + $0x7c] sm:$0xf]
      %v3462 = vld [vmem:[%s3439 + $0x84] sm:$0xf]
      %v3463 = vld [vmem:[%s3439 + $0x88] sm:$0xf]
      %v3464 = vld [vmem:[%s3439 + $0x90] sm:$0xf]
      %v3465 = vld [vmem:[%s3439 + $0x94] sm:$0xf]
      %v3466 = vld [vmem:[%s3439 + $0x9c] sm:$0xf]
      %v3467 = vld [vmem:[%s3439 + $0xa0] sm:$0xf]
      %v3468 = vld [vmem:[%s3439 + $0xa8] sm:$0xf]
      %v3469 = vld [vmem:[%s3439 + $0xac] sm:$0xf]
      %v3470 = vld [vmem:[%s3439 + $0xb4] sm:$0xf]
      %v3471 = vld [vmem:[%s3439 + $0xb8] sm:$0xf]
      %v3472 = vld [vmem:[%s1 + $0x180] sm:$0xf]
      %v3473 = vld [vmem:[%s1 + $0x184] sm:$0xf]
      %v3474 = vld [vmem:[%s1 + $0x188] sm:$0xf]
      %v3475 = vld [vmem:[%s1 + $0x18c] sm:$0xf]
      %v3476 = vld [vmem:[%s1 + $0x190] sm:$0xf]
      %v3477 = vld [vmem:[%s1 + $0x194] sm:$0xf]
      %v3478 = vld [vmem:[%s1 + $0x198] sm:$0xf]
      %v3479 = vld [vmem:[%s1 + $0x19c] sm:$0xf]
      %v3480 = vld [vmem:[%s1 + $0x1a0] sm:$0xf]
      %v3481 = vld [vmem:[%s1 + $0x1a4] sm:$0xf]
      %v3482 = vld [vmem:[%s1 + $0x1a8] sm:$0xf]
      %v3483 = vld [vmem:[%s1 + $0x1ac] sm:$0xf]
      %v3484 = vld [vmem:[%s1 + $0x1b0] sm:$0xf]
      %v3485 = vld [vmem:[%s1 + $0x1b4] sm:$0xf]
      %v3486 = vld [vmem:[%s1 + $0x1b8] sm:$0xf]
      %v3487 = vld [vmem:[%s1 + $0x1bc] sm:$0xf]
      %v3520 = vunpack.c.l.b16 %v3440
      %v3521 = vunpack.c.l.b16 %v3441
      %v3522 = vunpack.c.l.b16 %v3442
      %v3523 = vunpack.c.l.b16 %v3443
      %v3524 = vunpack.c.l.b16 %v3444
      %v3525 = vunpack.c.l.b16 %v3445
      %v3526 = vunpack.c.l.b16 %v3446
      %v3527 = vunpack.c.l.b16 %v3447
      %v3528 = vunpack.c.l.b16 %v3448
      %v3529 = vunpack.c.l.b16 %v3449
      %v3530 = vunpack.c.l.b16 %v3450
      %v3531 = vunpack.c.l.b16 %v3451
      %v3532 = vunpack.c.l.b16 %v3452
      %v3533 = vunpack.c.l.b16 %v3453
      %v3534 = vunpack.c.l.b16 %v3454
      %v3535 = vunpack.c.l.b16 %v3455
      %v3536 = vunpack.c.l.b16 %v3456
      %v3537 = vunpack.c.l.b16 %v3457
      %v3538 = vunpack.c.l.b16 %v3458
      %v3539 = vunpack.c.l.b16 %v3459
      %v3540 = vunpack.c.l.b16 %v3460
      %v3541 = vunpack.c.l.b16 %v3461
      %v3542 = vunpack.c.l.b16 %v3462
      %v3543 = vunpack.c.l.b16 %v3463
      %v3544 = vunpack.c.l.b16 %v3464
      %v3545 = vunpack.c.l.b16 %v3465
      %v3546 = vunpack.c.l.b16 %v3466
      %v3547 = vunpack.c.l.b16 %v3467
      %v3548 = vunpack.c.l.b16 %v3468
      %v3549 = vunpack.c.l.b16 %v3469
      %v3550 = vunpack.c.l.b16 %v3470
      %v3551 = vunpack.c.l.b16 %v3471
      %v3552 = vpack.c.b16 %v3521, %v3520
      %v3553 = vpack.c.b16 %v3523, %v3522
      %v3554 = vpack.c.b16 %v3525, %v3524
      %v3555 = vpack.c.b16 %v3527, %v3526
      %v3556 = vpack.c.b16 %v3529, %v3528
      %v3557 = vpack.c.b16 %v3531, %v3530
      %v3558 = vpack.c.b16 %v3533, %v3532
      %v3559 = vpack.c.b16 %v3535, %v3534
      %v3560 = vpack.c.b16 %v3537, %v3536
      %v3561 = vpack.c.b16 %v3539, %v3538
      %v3562 = vpack.c.b16 %v3541, %v3540
      %v3563 = vpack.c.b16 %v3543, %v3542
      %v3564 = vpack.c.b16 %v3545, %v3544
      %v3565 = vpack.c.b16 %v3547, %v3546
      %v3566 = vpack.c.b16 %v3549, %v3548
      %v3567 = vpack.c.b16 %v3551, %v3550
      %v3600 = vunpack.c.l.b16 %v3472
      %v3601 = vunpack.c.l.b16 %v3473
      %v3602 = vunpack.c.l.b16 %v3474
      %v3603 = vunpack.c.l.b16 %v3475
      %v3604 = vunpack.c.l.b16 %v3476
      %v3605 = vunpack.c.l.b16 %v3477
      %v3606 = vunpack.c.l.b16 %v3478
      %v3607 = vunpack.c.l.b16 %v3479
      %v3608 = vunpack.c.l.b16 %v3480
      %v3609 = vunpack.c.l.b16 %v3481
      %v3610 = vunpack.c.l.b16 %v3482
      %v3611 = vunpack.c.l.b16 %v3483
      %v3612 = vunpack.c.l.b16 %v3484
      %v3613 = vunpack.c.l.b16 %v3485
      %v3614 = vunpack.c.l.b16 %v3486
      %v3615 = vunpack.c.l.b16 %v3487
      %v3616 = vpack.c.b16 %v3601, %v3600
      %v3617 = vpack.c.b16 %v3603, %v3602
      %v3618 = vpack.c.b16 %v3605, %v3604
      %v3619 = vpack.c.b16 %v3607, %v3606
      %v3620 = vpack.c.b16 %v3609, %v3608
      %v3621 = vpack.c.b16 %v3611, %v3610
      %v3622 = vpack.c.b16 %v3613, %v3612
      %v3623 = vpack.c.b16 %v3615, %v3614
      %3632 = vmatprep.subr.bf16.mxu0 0
      %3633 = vmatpush1.bf16.msra.mxu0 %v3616
      %3634 = vmatprep.subr.bf16.mxu0 0
      %3635 = vmatpush1.bf16.msra.mxu0 %v3617
      %3636 = vmatprep.subr.bf16.mxu0 0
      %3637 = vmatpush1.bf16.msra.mxu0 %v3618
      %3638 = vmatprep.subr.bf16.mxu0 0
      %3639 = vmatpush1.bf16.msra.mxu0 %v3619
      %3640 = vmatprep.subr.bf16.mxu0 0
      %3641 = vmatpush1.bf16.msra.mxu0 %v3620
      %3642 = vmatprep.subr.bf16.mxu0 0
      %3643 = vmatpush1.bf16.msra.mxu0 %v3621
      %3644 = vmatprep.subr.bf16.mxu0 0
      %3645 = vmatpush1.bf16.msra.mxu0 %v3622
      %3646 = vmatprep.subr.bf16.mxu0 0
      %3647 = vmatpush1.bf16.msra.mxu0 %v3623
      %3648 = vmatprep.subr.bf16.mxu0 0
      %3649 = vmatpush1.bf16.msra.mxu0 0
      %3650 = vmatprep.subr.bf16.mxu0 0
      %3651 = vmatpush1.bf16.msra.mxu0 0
      %3652 = vmatprep.subr.bf16.mxu0 0
      %3653 = vmatpush1.bf16.msra.mxu0 0
      %3654 = vmatprep.subr.bf16.mxu0 0
      %3655 = vmatpush1.bf16.msra.mxu0 0
      %3656 = vmatprep.subr.bf16.mxu0 0
      %3657 = vmatpush1.bf16.msra.mxu0 0
      %3658 = vmatprep.subr.bf16.mxu0 0
      %3659 = vmatpush1.bf16.msra.mxu0 0
      %3660 = vmatprep.subr.bf16.mxu0 0
      %3661 = vmatpush1.bf16.msra.mxu0 0
      %3662 = vmatprep.subr.bf16.mxu0 0
      %3663 = vmatpush1.bf16.msra.mxu0 0
      %3664 = vmatprep.mubr.bf16.mxu0 0
      %3665 = vmatmul.mubr.bf16.gmra.mrb[0].mxu0 %v3552
      %v3666 = vpop.f32.mrb[0].mxu0
      %v3667 = vadd.f32 0.0, %v3666
      %v3668 = vpop.f32.mrb[0].mxu0
      %v3669 = vpop.f32.mrb[0].mxu0
      %v3670 = vadd.f32 0.0, %v3669
      %v3671 = vpop.f32.mrb[0].mxu0
      %3672 = vmatprep.mubr.bf16.mxu0 0
      %3673 = vmatmul.mubr.bf16.gmra.mrb[0].mxu0 %v3553
      %v3674 = vpop.f32.mrb[0].mxu0
      %v3675 = vadd.f32 0.0, %v3674
      %v3676 = vpop.f32.mrb[0].mxu0
      %v3677 = vpop.f32.mrb[0].mxu0
      %v3678 = vadd.f32 0.0, %v3677
      %v3679 = vpop.f32.mrb[0].mxu0
      %3680 = vmatprep.mubr.bf16.mxu0 0
      %3681 = vmatmul.mubr.bf16.gmra.mrb[0].mxu0 %v3554
      %v3682 = vpop.f32.mrb[0].mxu0
      %v3683 = vadd.f32 0.0, %v3682
      %v3684 = vpop.f32.mrb[0].mxu0
      %v3685 = vpop.f32.mrb[0].mxu0
      %v3686 = vadd.f32 0.0, %v3685
      %v3687 = vpop.f32.mrb[0].mxu0
      %3688 = vmatprep.mubr.bf16.mxu0 0
      %3689 = vmatmul.mubr.bf16.gmra.mrb[0].mxu0 %v3555
      %v3690 = vpop.f32.mrb[0].mxu0
      %v3691 = vadd.f32 0.0, %v3690
      %v3692 = vpop.f32.mrb[0].mxu0
      %v3693 = vpop.f32.mrb[0].mxu0
      %v3694 = vadd.f32 0.0, %v3693
      %v3695 = vpop.f32.mrb[0].mxu0
      %3696 = vmatprep.mubr.bf16.mxu0 0
      %3697 = vmatmul.mubr.bf16.gmra.mrb[0].mxu0 %v3556
      %v3698 = vpop.f32.mrb[0].mxu0
      %v3699 = vadd.f32 0.0, %v3698
      %v3700 = vpop.f32.mrb[0].mxu0
      %v3701 = vpop.f32.mrb[0].mxu0
      %v3702 = vadd.f32 0.0, %v3701
      %v3703 = vpop.f32.mrb[0].mxu0
      %3704 = vmatprep.mubr.bf16.mxu0 0
      %3705 = vmatmul.mubr.bf16.gmra.mrb[0].mxu0 %v3557
      %v3706 = vpop.f32.mrb[0].mxu0
      %v3707 = vadd.f32 0.0, %v3706
      %v3708 = vpop.f32.mrb[0].mxu0
      %v3709 = vpop.f32.mrb[0].mxu0
      %v3710 = vadd.f32 0.0, %v3709
      %v3711 = vpop.f32.mrb[0].mxu0
      %3712 = vmatprep.mubr.bf16.mxu0 0
      %3713 = vmatmul.mubr.bf16.gmra.mrb[0].mxu0 %v3558
      %v3714 = vpop.f32.mrb[0].mxu0
      %v3715 = vadd.f32 0.0, %v3714
      %v3716 = vpop.f32.mrb[0].mxu0
      %v3717 = vpop.f32.mrb[0].mxu0
      %v3718 = vadd.f32 0.0, %v3717
      %v3719 = vpop.f32.mrb[0].mxu0
      %3720 = vmatprep.mubr.bf16.mxu0 0
      %3721 = vmatmul.mubr.bf16.gmra.mrb[0].mxu0 %v3559
      %v3722 = vpop.f32.mrb[0].mxu0
      %v3723 = vadd.f32 0.0, %v3722
      %v3724 = vpop.f32.mrb[0].mxu0
      %v3725 = vpop.f32.mrb[0].mxu0
      %v3726 = vadd.f32 0.0, %v3725
      %v3727 = vpop.f32.mrb[0].mxu0
      %3728 = vmatprep.mubr.bf16.mxu0 0
      %3729 = vmatmul.mubr.bf16.gmra.mrb[0].mxu0 %v3560
      %v3730 = vpop.f32.mrb[0].mxu0
      %v3731 = vadd.f32 0.0, %v3730
      %v3732 = vpop.f32.mrb[0].mxu0
      %v3733 = vpop.f32.mrb[0].mxu0
      %v3734 = vadd.f32 0.0, %v3733
      %v3735 = vpop.f32.mrb[0].mxu0
      %3736 = vmatprep.mubr.bf16.mxu0 0
      %3737 = vmatmul.mubr.bf16.gmra.mrb[0].mxu0 %v3561
      %v3738 = vpop.f32.mrb[0].mxu0
      %v3739 = vadd.f32 0.0, %v3738
      %v3740 = vpop.f32.mrb[0].mxu0
      %v3741 = vpop.f32.mrb[0].mxu0
      %v3742 = vadd.f32 0.0, %v3741
      %v3743 = vpop.f32.mrb[0].mxu0
      %3744 = vmatprep.mubr.bf16.mxu0 0
      %3745 = vmatmul.mubr.bf16.gmra.mrb[0].mxu0 %v3562
      %v3746 = vpop.f32.mrb[0].mxu0
      %v3747 = vadd.f32 0.0, %v3746
      %v3748 = vpop.f32.mrb[0].mxu0
      %v3749 = vpop.f32.mrb[0].mxu0
      %v3750 = vadd.f32 0.0, %v3749
      %v3751 = vpop.f32.mrb[0].mxu0
      %3752 = vmatprep.mubr.bf16.mxu0 0
      %3753 = vmatmul.mubr.bf16.gmra.mrb[0].mxu0 %v3563
      %v3754 = vpop.f32.mrb[0].mxu0
      %v3755 = vadd.f32 0.0, %v3754
      %v3756 = vpop.f32.mrb[0].mxu0
      %v3757 = vpop.f32.mrb[0].mxu0
      %v3758 = vadd.f32 0.0, %v3757
      %v3759 = vpop.f32.mrb[0].mxu0
      %3760 = vmatprep.mubr.bf16.mxu0 0
      %3761 = vmatmul.mubr.bf16.gmra.mrb[0].mxu0 %v3564
      %v3762 = vpop.f32.mrb[0].mxu0
      %v3763 = vadd.f32 0.0, %v3762
      %v3764 = vpop.f32.mrb[0].mxu0
      %v3765 = vpop.f32.mrb[0].mxu0
      %v3766 = vadd.f32 0.0, %v3765
      %v3767 = vpop.f32.mrb[0].mxu0
      %3768 = vmatprep.mubr.bf16.mxu0 0
      %3769 = vmatmul.mubr.bf16.gmra.mrb[0].mxu0 %v3565
      %v3770 = vpop.f32.mrb[0].mxu0
      %v3771 = vadd.f32 0.0, %v3770
      %v3772 = vpop.f32.mrb[0].mxu0
      %v3773 = vpop.f32.mrb[0].mxu0
      %v3774 = vadd.f32 0.0, %v3773
      %v3775 = vpop.f32.mrb[0].mxu0
      %3776 = vmatprep.mubr.bf16.mxu0 0
      %3777 = vmatmul.mubr.bf16.gmra.mrb[0].mxu0 %v3566
      %v3778 = vpop.f32.mrb[0].mxu0
      %v3779 = vadd.f32 0.0, %v3778
      %v3780 = vpop.f32.mrb[0].mxu0
      %v3781 = vpop.f32.mrb[0].mxu0
      %v3782 = vadd.f32 0.0, %v3781
      %v3783 = vpop.f32.mrb[0].mxu0
      %3784 = vmatprep.mubr.bf16.mxu0 0
      %3785 = vmatmul.mubr.bf16.gmra.mrb[0].mxu0 %v3567
      %v3786 = vpop.f32.mrb[0].mxu0
      %v3787 = vadd.f32 0.0, %v3786
      %v3788 = vpop.f32.mrb[0].mxu0
      %v3789 = vpop.f32.mrb[0].mxu0
      %v3790 = vadd.f32 0.0, %v3789
      %v3791 = vpop.f32.mrb[0].mxu0
      %3792 = vdwg.mxu0
      %v3793 = vadd.f32 %v3407, %v3667
      %v3794 = vadd.f32 %v3408, %v3670
      %v3795 = vadd.f32 %v3409, %v3675
      %v3796 = vadd.f32 %v3410, %v3678
      %v3797 = vadd.f32 %v3411, %v3683
      %v3798 = vadd.f32 %v3412, %v3686
      %v3799 = vadd.f32 %v3413, %v3691
      %v3800 = vadd.f32 %v3414, %v3694
      %v3801 = vadd.f32 %v3415, %v3699
      %v3802 = vadd.f32 %v3416, %v3702
      %v3803 = vadd.f32 %v3417, %v3707
      %v3804 = vadd.f32 %v3418, %v3710
      %v3805 = vadd.f32 %v3419, %v3715
      %v3806 = vadd.f32 %v3420, %v3718
      %v3807 = vadd.f32 %v3421, %v3723
      %v3808 = vadd.f32 %v3422, %v3726
      %v3809 = vadd.f32 %v3423, %v3731
      %v3810 = vadd.f32 %v3424, %v3734
      %v3811 = vadd.f32 %v3425, %v3739
      %v3812 = vadd.f32 %v3426, %v3742
      %v3813 = vadd.f32 %v3427, %v3747
      %v3814 = vadd.f32 %v3428, %v3750
      %v3815 = vadd.f32 %v3429, %v3755
      %v3816 = vadd.f32 %v3430, %v3758
      %v3817 = vadd.f32 %v3431, %v3763
      %v3818 = vadd.f32 %v3432, %v3766
      %v3819 = vadd.f32 %v3433, %v3771
      %v3820 = vadd.f32 %v3434, %v3774
      %v3821 = vadd.f32 %v3435, %v3779
      %v3822 = vadd.f32 %v3436, %v3782
      %v3823 = vadd.f32 %v3437, %v3787
      %v3824 = vadd.f32 %v3438, %v3790
      %v3825 = vld [vmem:[%s3439] sm:$0xf]
      %v3826 = vld [vmem:[%s3439 + $0x4] sm:$0xf]
      %v3827 = vld [vmem:[%s3439 + $0x8] sm:$0x1]
      %v3828 = vld [vmem:[%s3439 + $0xc] sm:$0xf]
      %v3829 = vld [vmem:[%s3439 + $0x10] sm:$0xf]
      %v3830 = vld [vmem:[%s3439 + $0x14] sm:$0x1]
      %v3831 = vld [vmem:[%s3439 + $0x18] sm:$0xf]
      %v3832 = vld [vmem:[%s3439 + $0x1c] sm:$0xf]
      %v3833 = vld [vmem:[%s3439 + $0x20] sm:$0x1]
      %v3834 = vld [vmem:[%s3439 + $0x24] sm:$0xf]
      %v3835 = vld [vmem:[%s3439 + $0x28] sm:$0xf]
      %v3836 = vld [vmem:[%s3439 + $0x2c] sm:$0x1]
      %v3837 = vld [vmem:[%s3439 + $0x30] sm:$0xf]
      %v3838 = vld [vmem:[%s3439 + $0x34] sm:$0xf]
      %v3839 = vld [vmem:[%s3439 + $0x38] sm:$0x1]
      %v3840 = vld [vmem:[%s3439 + $0x3c] sm:$0xf]
      %v3841 = vld [vmem:[%s3439 + $0x40] sm:$0xf]
      %v3842 = vld [vmem:[%s3439 + $0x44] sm:$0x1]
      %v3843 = vld [vmem:[%s3439 + $0x48] sm:$0xf]
      %v3844 = vld [vmem:[%s3439 + $0x4c] sm:$0xf]
      %v3845 = vld [vmem:[%s3439 + $0x50] sm:$0x1]
      %v3846 = vld [vmem:[%s3439 + $0x54] sm:$0xf]
      %v3847 = vld [vmem:[%s3439 + $0x58] sm:$0xf]
      %v3848 = vld [vmem:[%s3439 + $0x5c] sm:$0x1]
      %v3849 = vld [vmem:[%s3439 + $0x60] sm:$0xf]
      %v3850 = vld [vmem:[%s3439 + $0x64] sm:$0xf]
      %v3851 = vld [vmem:[%s3439 + $0x68] sm:$0x1]
      %v3852 = vld [vmem:[%s3439 + $0x6c] sm:$0xf]
      %v3853 = vld [vmem:[%s3439 + $0x70] sm:$0xf]
      %v3854 = vld [vmem:[%s3439 + $0x74] sm:$0x1]
      %v3855 = vld [vmem:[%s3439 + $0x78] sm:$0xf]
      %v3856 = vld [vmem:[%s3439 + $0x7c] sm:$0xf]
      %v3857 = vld [vmem:[%s3439 + $0x80] sm:$0x1]
      %v3858 = vld [vmem:[%s3439 + $0x84] sm:$0xf]
      %v3859 = vld [vmem:[%s3439 + $0x88] sm:$0xf]
      %v3860 = vld [vmem:[%s3439 + $0x8c] sm:$0x1]
      %v3861 = vld [vmem:[%s3439 + $0x90] sm:$0xf]
      %v3862 = vld [vmem:[%s3439 + $0x94] sm:$0xf]
      %v3863 = vld [vmem:[%s3439 + $0x98] sm:$0x1]
      %v3864 = vld [vmem:[%s3439 + $0x9c] sm:$0xf]
      %v3865 = vld [vmem:[%s3439 + $0xa0] sm:$0xf]
      %v3866 = vld [vmem:[%s3439 + $0xa4] sm:$0x1]
      %v3867 = vld [vmem:[%s3439 + $0xa8] sm:$0xf]
      %v3868 = vld [vmem:[%s3439 + $0xac] sm:$0xf]
      %v3869 = vld [vmem:[%s3439 + $0xb0] sm:$0x1]
      %v3870 = vld [vmem:[%s3439 + $0xb4] sm:$0xf]
      %v3871 = vld [vmem:[%s3439 + $0xb8] sm:$0xf]
      %v3872 = vld [vmem:[%s3439 + $0xbc] sm:$0x1]
      %v3874 = vshrl.u32 %v3825, 16
      %v3876 = vrot.slane %v3874, 4
      %v3877 = vshll.u32 %v3825, 16
      %v3879 = vrot.slane %v3877, 5
      %v3880 = vor.u32 %v3876, %v3879
      %v3881 = vrot.slane %v3880, 4
      %v3883 = vshll.u32 %v3826, 16
      %v3885 = vrot.slane %v3883, 5
      %v3886 = vsel %vm340, %v3881, %v3885
      %v3887 = vshrl.u32 %v3826, 16
      %v3889 = vrot.slane %v3887, 4
      %v3890 = vor.u32 %v3889, %v3885
      %v3891 = vrot.slane %v3890, 4
      %v3893 = vshll.u32 %v3827, 16
      %v3895 = vrot.slane %v3893, 5
      %v3896 = vsel %vm340, %v3891, %v3895
      %v3898 = vshrl.u32 %v3828, 16
      %v3900 = vrot.slane %v3898, 4
      %v3901 = vshll.u32 %v3828, 16
      %v3903 = vrot.slane %v3901, 5
      %v3904 = vor.u32 %v3900, %v3903
      %v3905 = vrot.slane %v3904, 4
      %v3907 = vshll.u32 %v3829, 16
      %v3909 = vrot.slane %v3907, 5
      %v3910 = vsel %vm340, %v3905, %v3909
      %v3911 = vshrl.u32 %v3829, 16
      %v3913 = vrot.slane %v3911, 4
      %v3914 = vor.u32 %v3913, %v3909
      %v3915 = vrot.slane %v3914, 4
      %v3917 = vshll.u32 %v3830, 16
      %v3919 = vrot.slane %v3917, 5
      %v3920 = vsel %vm340, %v3915, %v3919
      %v3922 = vshrl.u32 %v3831, 16
      %v3924 = vrot.slane %v3922, 4
      %v3925 = vshll.u32 %v3831, 16
      %v3927 = vrot.slane %v3925, 5
      %v3928 = vor.u32 %v3924, %v3927
      %v3929 = vrot.slane %v3928, 4
      %v3931 = vshll.u32 %v3832, 16
      %v3933 = vrot.slane %v3931, 5
      %v3934 = vsel %vm340, %v3929, %v3933
      %v3935 = vshrl.u32 %v3832, 16
      %v3937 = vrot.slane %v3935, 4
      %v3938 = vor.u32 %v3937, %v3933
      %v3939 = vrot.slane %v3938, 4
      %v3941 = vshll.u32 %v3833, 16
      %v3943 = vrot.slane %v3941, 5
      %v3944 = vsel %vm340, %v3939, %v3943
      %v3946 = vshrl.u32 %v3834, 16
      %v3948 = vrot.slane %v3946, 4
      %v3949 = vshll.u32 %v3834, 16
      %v3951 = vrot.slane %v3949, 5
      %v3952 = vor.u32 %v3948, %v3951
      %v3953 = vrot.slane %v3952, 4
      %v3955 = vshll.u32 %v3835, 16
      %v3957 = vrot.slane %v3955, 5
      %v3958 = vsel %vm340, %v3953, %v3957
      %v3959 = vshrl.u32 %v3835, 16
      %v3961 = vrot.slane %v3959, 4
      %v3962 = vor.u32 %v3961, %v3957
      %v3963 = vrot.slane %v3962, 4
      %v3965 = vshll.u32 %v3836, 16
      %v3967 = vrot.slane %v3965, 5
      %v3968 = vsel %vm340, %v3963, %v3967
      %v3970 = vshrl.u32 %v3837, 16
      %v3972 = vrot.slane %v3970, 4
      %v3973 = vshll.u32 %v3837, 16
      %v3975 = vrot.slane %v3973, 5
      %v3976 = vor.u32 %v3972, %v3975
      %v3977 = vrot.slane %v3976, 4
      %v3979 = vshll.u32 %v3838, 16
      %v3981 = vrot.slane %v3979, 5
      %v3982 = vsel %vm340, %v3977, %v3981
      %v3983 = vshrl.u32 %v3838, 16
      %v3985 = vrot.slane %v3983, 4
      %v3986 = vor.u32 %v3985, %v3981
      %v3987 = vrot.slane %v3986, 4
      %v3989 = vshll.u32 %v3839, 16
      %v3991 = vrot.slane %v3989, 5
      %v3992 = vsel %vm340, %v3987, %v3991
      %v3994 = vshrl.u32 %v3840, 16
      %v3996 = vrot.slane %v3994, 4
      %v3997 = vshll.u32 %v3840, 16
      %v3999 = vrot.slane %v3997, 5
      %v4000 = vor.u32 %v3996, %v3999
      %v4001 = vrot.slane %v4000, 4
      %v4003 = vshll.u32 %v3841, 16
      %v4005 = vrot.slane %v4003, 5
      %v4006 = vsel %vm340, %v4001, %v4005
      %v4007 = vshrl.u32 %v3841, 16
      %v4009 = vrot.slane %v4007, 4
      %v4010 = vor.u32 %v4009, %v4005
      %v4011 = vrot.slane %v4010, 4
      %v4013 = vshll.u32 %v3842, 16
      %v4015 = vrot.slane %v4013, 5
      %v4016 = vsel %vm340, %v4011, %v4015
      %v4018 = vshrl.u32 %v3843, 16
      %v4020 = vrot.slane %v4018, 4
      %v4021 = vshll.u32 %v3843, 16
      %v4023 = vrot.slane %v4021, 5
      %v4024 = vor.u32 %v4020, %v4023
      %v4025 = vrot.slane %v4024, 4
      %v4027 = vshll.u32 %v3844, 16
      %v4029 = vrot.slane %v4027, 5
      %v4030 = vsel %vm340, %v4025, %v4029
      %v4031 = vshrl.u32 %v3844, 16
      %v4033 = vrot.slane %v4031, 4
      %v4034 = vor.u32 %v4033, %v4029
      %v4035 = vrot.slane %v4034, 4
      %v4037 = vshll.u32 %v3845, 16
      %v4039 = vrot.slane %v4037, 5
      %v4040 = vsel %vm340, %v4035, %v4039
      %v4042 = vshrl.u32 %v3846, 16
      %v4044 = vrot.slane %v4042, 4
      %v4045 = vshll.u32 %v3846, 16
      %v4047 = vrot.slane %v4045, 5
      %v4048 = vor.u32 %v4044, %v4047
      %v4049 = vrot.slane %v4048, 4
      %v4051 = vshll.u32 %v3847, 16
      %v4053 = vrot.slane %v4051, 5
      %v4054 = vsel %vm340, %v4049, %v4053
      %v4055 = vshrl.u32 %v3847, 16
      %v4057 = vrot.slane %v4055, 4
      %v4058 = vor.u32 %v4057, %v4053
      %v4059 = vrot.slane %v4058, 4
      %v4061 = vshll.u32 %v3848, 16
      %v4063 = vrot.slane %v4061, 5
      %v4064 = vsel %vm340, %v4059, %v4063
      %v4066 = vshrl.u32 %v3849, 16
      %v4068 = vrot.slane %v4066, 4
      %v4069 = vshll.u32 %v3849, 16
      %v4071 = vrot.slane %v4069, 5
      %v4072 = vor.u32 %v4068, %v4071
      %v4073 = vrot.slane %v4072, 4
      %v4075 = vshll.u32 %v3850, 16
      %v4077 = vrot.slane %v4075, 5
      %v4078 = vsel %vm340, %v4073, %v4077
      %v4079 = vshrl.u32 %v3850, 16
      %v4081 = vrot.slane %v4079, 4
      %v4082 = vor.u32 %v4081, %v4077
      %v4083 = vrot.slane %v4082, 4
      %v4085 = vshll.u32 %v3851, 16
      %v4087 = vrot.slane %v4085, 5
      %v4088 = vsel %vm340, %v4083, %v4087
      %v4090 = vshrl.u32 %v3852, 16
      %v4092 = vrot.slane %v4090, 4
      %v4093 = vshll.u32 %v3852, 16
      %v4095 = vrot.slane %v4093, 5
      %v4096 = vor.u32 %v4092, %v4095
      %v4097 = vrot.slane %v4096, 4
      %v4099 = vshll.u32 %v3853, 16
      %v4101 = vrot.slane %v4099, 5
      %v4102 = vsel %vm340, %v4097, %v4101
      %v4103 = vshrl.u32 %v3853, 16
      %v4105 = vrot.slane %v4103, 4
      %v4106 = vor.u32 %v4105, %v4101
      %v4107 = vrot.slane %v4106, 4
      %v4109 = vshll.u32 %v3854, 16
      %v4111 = vrot.slane %v4109, 5
      %v4112 = vsel %vm340, %v4107, %v4111
      %v4114 = vshrl.u32 %v3855, 16
      %v4116 = vrot.slane %v4114, 4
      %v4117 = vshll.u32 %v3855, 16
      %v4119 = vrot.slane %v4117, 5
      %v4120 = vor.u32 %v4116, %v4119
      %v4121 = vrot.slane %v4120, 4
      %v4123 = vshll.u32 %v3856, 16
      %v4125 = vrot.slane %v4123, 5
      %v4126 = vsel %vm340, %v4121, %v4125
      %v4127 = vshrl.u32 %v3856, 16
      %v4129 = vrot.slane %v4127, 4
      %v4130 = vor.u32 %v4129, %v4125
      %v4131 = vrot.slane %v4130, 4
      %v4133 = vshll.u32 %v3857, 16
      %v4135 = vrot.slane %v4133, 5
      %v4136 = vsel %vm340, %v4131, %v4135
      %v4138 = vshrl.u32 %v3858, 16
      %v4140 = vrot.slane %v4138, 4
      %v4141 = vshll.u32 %v3858, 16
      %v4143 = vrot.slane %v4141, 5
      %v4144 = vor.u32 %v4140, %v4143
      %v4145 = vrot.slane %v4144, 4
      %v4147 = vshll.u32 %v3859, 16
      %v4149 = vrot.slane %v4147, 5
      %v4150 = vsel %vm340, %v4145, %v4149
      %v4151 = vshrl.u32 %v3859, 16
      %v4153 = vrot.slane %v4151, 4
      %v4154 = vor.u32 %v4153, %v4149
      %v4155 = vrot.slane %v4154, 4
      %v4157 = vshll.u32 %v3860, 16
      %v4159 = vrot.slane %v4157, 5
      %v4160 = vsel %vm340, %v4155, %v4159
      %v4162 = vshrl.u32 %v3861, 16
      %v4164 = vrot.slane %v4162, 4
      %v4165 = vshll.u32 %v3861, 16
      %v4167 = vrot.slane %v4165, 5
      %v4168 = vor.u32 %v4164, %v4167
      %v4169 = vrot.slane %v4168, 4
      %v4171 = vshll.u32 %v3862, 16
      %v4173 = vrot.slane %v4171, 5
      %v4174 = vsel %vm340, %v4169, %v4173
      %v4175 = vshrl.u32 %v3862, 16
      %v4177 = vrot.slane %v4175, 4
      %v4178 = vor.u32 %v4177, %v4173
      %v4179 = vrot.slane %v4178, 4
      %v4181 = vshll.u32 %v3863, 16
      %v4183 = vrot.slane %v4181, 5
      %v4184 = vsel %vm340, %v4179, %v4183
      %v4186 = vshrl.u32 %v3864, 16
      %v4188 = vrot.slane %v4186, 4
      %v4189 = vshll.u32 %v3864, 16
      %v4191 = vrot.slane %v4189, 5
      %v4192 = vor.u32 %v4188, %v4191
      %v4193 = vrot.slane %v4192, 4
      %v4195 = vshll.u32 %v3865, 16
      %v4197 = vrot.slane %v4195, 5
      %v4198 = vsel %vm340, %v4193, %v4197
      %v4199 = vshrl.u32 %v3865, 16
      %v4201 = vrot.slane %v4199, 4
      %v4202 = vor.u32 %v4201, %v4197
      %v4203 = vrot.slane %v4202, 4
      %v4205 = vshll.u32 %v3866, 16
      %v4207 = vrot.slane %v4205, 5
      %v4208 = vsel %vm340, %v4203, %v4207
      %v4210 = vshrl.u32 %v3867, 16
      %v4212 = vrot.slane %v4210, 4
      %v4213 = vshll.u32 %v3867, 16
      %v4215 = vrot.slane %v4213, 5
      %v4216 = vor.u32 %v4212, %v4215
      %v4217 = vrot.slane %v4216, 4
      %v4219 = vshll.u32 %v3868, 16
      %v4221 = vrot.slane %v4219, 5
      %v4222 = vsel %vm340, %v4217, %v4221
      %v4223 = vshrl.u32 %v3868, 16
      %v4225 = vrot.slane %v4223, 4
      %v4226 = vor.u32 %v4225, %v4221
      %v4227 = vrot.slane %v4226, 4
      %v4229 = vshll.u32 %v3869, 16
      %v4231 = vrot.slane %v4229, 5
      %v4232 = vsel %vm340, %v4227, %v4231
      %v4234 = vshrl.u32 %v3870, 16
      %v4236 = vrot.slane %v4234, 4
      %v4237 = vshll.u32 %v3870, 16
      %v4239 = vrot.slane %v4237, 5
      %v4240 = vor.u32 %v4236, %v4239
      %v4241 = vrot.slane %v4240, 4
      %v4243 = vshll.u32 %v3871, 16
      %v4245 = vrot.slane %v4243, 5
      %v4246 = vsel %vm340, %v4241, %v4245
      %v4247 = vshrl.u32 %v3871, 16
      %v4249 = vrot.slane %v4247, 4
      %v4250 = vor.u32 %v4249, %v4245
      %v4251 = vrot.slane %v4250, 4
      %v4253 = vshll.u32 %v3872, 16
      %v4255 = vrot.slane %v4253, 5
      %v4256 = vsel %vm340, %v4251, %v4255
      %v4257 = vld [vmem:[%s1 + $0x1c0] sm:$0xf]
      %v4258 = vld [vmem:[%s1 + $0x1c4] sm:$0xf]
      %v4259 = vld [vmem:[%s1 + $0x1c8] sm:$0xf]
      %v4260 = vld [vmem:[%s1 + $0x1cc] sm:$0xf]
      %v4261 = vld [vmem:[%s1 + $0x1d0] sm:$0xf]
      %v4262 = vld [vmem:[%s1 + $0x1d4] sm:$0xf]
      %v4263 = vld [vmem:[%s1 + $0x1d8] sm:$0xf]
      %v4264 = vld [vmem:[%s1 + $0x1dc] sm:$0xf]
      %v4265 = vld [vmem:[%s1 + $0x1e0] sm:$0xf]
      %v4266 = vld [vmem:[%s1 + $0x1e4] sm:$0xf]
      %v4267 = vld [vmem:[%s1 + $0x1e8] sm:$0xf]
      %v4268 = vld [vmem:[%s1 + $0x1ec] sm:$0xf]
      %v4269 = vld [vmem:[%s1 + $0x1f0] sm:$0xf]
      %v4270 = vld [vmem:[%s1 + $0x1f4] sm:$0xf]
      %v4271 = vld [vmem:[%s1 + $0x1f8] sm:$0xf]
      %v4272 = vld [vmem:[%s1 + $0x1fc] sm:$0xf]
      %v4273 = vunpack.c.l.b16 %v3886
      %v4274 = vunpack.c.l.b16 %v3896
      %v4275 = vunpack.c.l.b16 %v3910
      %v4276 = vunpack.c.l.b16 %v3920
      %v4277 = vunpack.c.l.b16 %v3934
      %v4278 = vunpack.c.l.b16 %v3944
      %v4279 = vunpack.c.l.b16 %v3958
      %v4280 = vunpack.c.l.b16 %v3968
      %v4281 = vunpack.c.l.b16 %v3982
      %v4282 = vunpack.c.l.b16 %v3992
      %v4283 = vunpack.c.l.b16 %v4006
      %v4284 = vunpack.c.l.b16 %v4016
      %v4285 = vunpack.c.l.b16 %v4030
      %v4286 = vunpack.c.l.b16 %v4040
      %v4287 = vunpack.c.l.b16 %v4054
      %v4288 = vunpack.c.l.b16 %v4064
      %v4289 = vunpack.c.l.b16 %v4078
      %v4290 = vunpack.c.l.b16 %v4088
      %v4291 = vunpack.c.l.b16 %v4102
      %v4292 = vunpack.c.l.b16 %v4112
      %v4293 = vunpack.c.l.b16 %v4126
      %v4294 = vunpack.c.l.b16 %v4136
      %v4295 = vunpack.c.l.b16 %v4150
      %v4296 = vunpack.c.l.b16 %v4160
      %v4297 = vunpack.c.l.b16 %v4174
      %v4298 = vunpack.c.l.b16 %v4184
      %v4299 = vunpack.c.l.b16 %v4198
      %v4300 = vunpack.c.l.b16 %v4208
      %v4301 = vunpack.c.l.b16 %v4222
      %v4302 = vunpack.c.l.b16 %v4232
      %v4303 = vunpack.c.l.b16 %v4246
      %v4304 = vunpack.c.l.b16 %v4256
      %v4305 = vpack.c.b16 %v4274, %v4273
      %v4306 = vpack.c.b16 %v4276, %v4275
      %v4307 = vpack.c.b16 %v4278, %v4277
      %v4308 = vpack.c.b16 %v4280, %v4279
      %v4309 = vpack.c.b16 %v4282, %v4281
      %v4310 = vpack.c.b16 %v4284, %v4283
      %v4311 = vpack.c.b16 %v4286, %v4285
      %v4312 = vpack.c.b16 %v4288, %v4287
      %v4313 = vpack.c.b16 %v4290, %v4289
      %v4314 = vpack.c.b16 %v4292, %v4291
      %v4315 = vpack.c.b16 %v4294, %v4293
      %v4316 = vpack.c.b16 %v4296, %v4295
      %v4317 = vpack.c.b16 %v4298, %v4297
      %v4318 = vpack.c.b16 %v4300, %v4299
      %v4319 = vpack.c.b16 %v4302, %v4301
      %v4320 = vpack.c.b16 %v4304, %v4303
      %v4353 = vunpack.c.l.b16 %v4257
      %v4354 = vunpack.c.l.b16 %v4258
      %v4355 = vunpack.c.l.b16 %v4259
      %v4356 = vunpack.c.l.b16 %v4260
      %v4357 = vunpack.c.l.b16 %v4261
      %v4358 = vunpack.c.l.b16 %v4262
      %v4359 = vunpack.c.l.b16 %v4263
      %v4360 = vunpack.c.l.b16 %v4264
      %v4361 = vunpack.c.l.b16 %v4265
      %v4362 = vunpack.c.l.b16 %v4266
      %v4363 = vunpack.c.l.b16 %v4267
      %v4364 = vunpack.c.l.b16 %v4268
      %v4365 = vunpack.c.l.b16 %v4269
      %v4366 = vunpack.c.l.b16 %v4270
      %v4367 = vunpack.c.l.b16 %v4271
      %v4368 = vunpack.c.l.b16 %v4272
      %v4369 = vpack.c.b16 %v4354, %v4353
      %v4370 = vpack.c.b16 %v4356, %v4355
      %v4371 = vpack.c.b16 %v4358, %v4357
      %v4372 = vpack.c.b16 %v4360, %v4359
      %v4373 = vpack.c.b16 %v4362, %v4361
      %v4374 = vpack.c.b16 %v4364, %v4363
      %v4375 = vpack.c.b16 %v4366, %v4365
      %v4376 = vpack.c.b16 %v4368, %v4367
      %4385 = vmatprep.subr.bf16.mxu0 0
      %4386 = vmatpush1.bf16.msra.mxu0 %v4369
      %4387 = vmatprep.subr.bf16.mxu0 0
      %4388 = vmatpush1.bf16.msra.mxu0 %v4370
      %4389 = vmatprep.subr.bf16.mxu0 0
      %4390 = vmatpush1.bf16.msra.mxu0 %v4371
      %4391 = vmatprep.subr.bf16.mxu0 0
      %4392 = vmatpush1.bf16.msra.mxu0 %v4372
      %4393 = vmatprep.subr.bf16.mxu0 0
      %4394 = vmatpush1.bf16.msra.mxu0 %v4373
      %4395 = vmatprep.subr.bf16.mxu0 0
      %4396 = vmatpush1.bf16.msra.mxu0 %v4374
      %4397 = vmatprep.subr.bf16.mxu0 0
      %4398 = vmatpush1.bf16.msra.mxu0 %v4375
      %4399 = vmatprep.subr.bf16.mxu0 0
      %4400 = vmatpush1.bf16.msra.mxu0 %v4376
      %4401 = vmatprep.subr.bf16.mxu0 0
      %4402 = vmatpush1.bf16.msra.mxu0 0
      %4403 = vmatprep.subr.bf16.mxu0 0
      %4404 = vmatpush1.bf16.msra.mxu0 0
      %4405 = vmatprep.subr.bf16.mxu0 0
      %4406 = vmatpush1.bf16.msra.mxu0 0
      %4407 = vmatprep.subr.bf16.mxu0 0
      %4408 = vmatpush1.bf16.msra.mxu0 0
      %4409 = vmatprep.subr.bf16.mxu0 0
      %4410 = vmatpush1.bf16.msra.mxu0 0
      %4411 = vmatprep.subr.bf16.mxu0 0
      %4412 = vmatpush1.bf16.msra.mxu0 0
      %4413 = vmatprep.subr.bf16.mxu0 0
      %4414 = vmatpush1.bf16.msra.mxu0 0
      %4415 = vmatprep.subr.bf16.mxu0 0
      %4416 = vmatpush1.bf16.msra.mxu0 0
      %4417 = vmatprep.mubr.bf16.mxu0 0
      %4418 = vmatmul.mubr.bf16.gmra.mrb[0].mxu0 %v4305
      %v4419 = vpop.f32.mrb[0].mxu0
      %v4420 = vadd.f32 0.0, %v4419
      %v4421 = vpop.f32.mrb[0].mxu0
      %v4422 = vpop.f32.mrb[0].mxu0
      %v4423 = vadd.f32 0.0, %v4422
      %v4424 = vpop.f32.mrb[0].mxu0
      %4425 = vmatprep.mubr.bf16.mxu0 0
      %4426 = vmatmul.mubr.bf16.gmra.mrb[0].mxu0 %v4306
      %v4427 = vpop.f32.mrb[0].mxu0
      %v4428 = vadd.f32 0.0, %v4427
      %v4429 = vpop.f32.mrb[0].mxu0
      %v4430 = vpop.f32.mrb[0].mxu0
      %v4431 = vadd.f32 0.0, %v4430
      %v4432 = vpop.f32.mrb[0].mxu0
      %4433 = vmatprep.mubr.bf16.mxu0 0
      %4434 = vmatmul.mubr.bf16.gmra.mrb[0].mxu0 %v4307
      %v4435 = vpop.f32.mrb[0].mxu0
      %v4436 = vadd.f32 0.0, %v4435
      %v4437 = vpop.f32.mrb[0].mxu0
      %v4438 = vpop.f32.mrb[0].mxu0
      %v4439 = vadd.f32 0.0, %v4438
      %v4440 = vpop.f32.mrb[0].mxu0
      %4441 = vmatprep.mubr.bf16.mxu0 0
      %4442 = vmatmul.mubr.bf16.gmra.mrb[0].mxu0 %v4308
      %v4443 = vpop.f32.mrb[0].mxu0
      %v4444 = vadd.f32 0.0, %v4443
      %v4445 = vpop.f32.mrb[0].mxu0
      %v4446 = vpop.f32.mrb[0].mxu0
      %v4447 = vadd.f32 0.0, %v4446
      %v4448 = vpop.f32.mrb[0].mxu0
      %4449 = vmatprep.mubr.bf16.mxu0 0
      %4450 = vmatmul.mubr.bf16.gmra.mrb[0].mxu0 %v4309
      %v4451 = vpop.f32.mrb[0].mxu0
      %v4452 = vadd.f32 0.0, %v4451
      %v4453 = vpop.f32.mrb[0].mxu0
      %v4454 = vpop.f32.mrb[0].mxu0
      %v4455 = vadd.f32 0.0, %v4454
      %v4456 = vpop.f32.mrb[0].mxu0
      %4457 = vmatprep.mubr.bf16.mxu0 0
      %4458 = vmatmul.mubr.bf16.gmra.mrb[0].mxu0 %v4310
      %v4459 = vpop.f32.mrb[0].mxu0
      %v4460 = vadd.f32 0.0, %v4459
      %v4461 = vpop.f32.mrb[0].mxu0
      %v4462 = vpop.f32.mrb[0].mxu0
      %v4463 = vadd.f32 0.0, %v4462
      %v4464 = vpop.f32.mrb[0].mxu0
      %4465 = vmatprep.mubr.bf16.mxu0 0
      %4466 = vmatmul.mubr.bf16.gmra.mrb[0].mxu0 %v4311
      %v4467 = vpop.f32.mrb[0].mxu0
      %v4468 = vadd.f32 0.0, %v4467
      %v4469 = vpop.f32.mrb[0].mxu0
      %v4470 = vpop.f32.mrb[0].mxu0
      %v4471 = vadd.f32 0.0, %v4470
      %v4472 = vpop.f32.mrb[0].mxu0
      %4473 = vmatprep.mubr.bf16.mxu0 0
      %4474 = vmatmul.mubr.bf16.gmra.mrb[0].mxu0 %v4312
      %v4475 = vpop.f32.mrb[0].mxu0
      %v4476 = vadd.f32 0.0, %v4475
      %v4477 = vpop.f32.mrb[0].mxu0
      %v4478 = vpop.f32.mrb[0].mxu0
      %v4479 = vadd.f32 0.0, %v4478
      %v4480 = vpop.f32.mrb[0].mxu0
      %4481 = vmatprep.mubr.bf16.mxu0 0
      %4482 = vmatmul.mubr.bf16.gmra.mrb[0].mxu0 %v4313
      %v4483 = vpop.f32.mrb[0].mxu0
      %v4484 = vadd.f32 0.0, %v4483
      %v4485 = vpop.f32.mrb[0].mxu0
      %v4486 = vpop.f32.mrb[0].mxu0
      %v4487 = vadd.f32 0.0, %v4486
      %v4488 = vpop.f32.mrb[0].mxu0
      %4489 = vmatprep.mubr.bf16.mxu0 0
      %4490 = vmatmul.mubr.bf16.gmra.mrb[0].mxu0 %v4314
      %v4491 = vpop.f32.mrb[0].mxu0
      %v4492 = vadd.f32 0.0, %v4491
      %v4493 = vpop.f32.mrb[0].mxu0
      %v4494 = vpop.f32.mrb[0].mxu0
      %v4495 = vadd.f32 0.0, %v4494
      %v4496 = vpop.f32.mrb[0].mxu0
      %4497 = vmatprep.mubr.bf16.mxu0 0
      %4498 = vmatmul.mubr.bf16.gmra.mrb[0].mxu0 %v4315
      %v4499 = vpop.f32.mrb[0].mxu0
      %v4500 = vadd.f32 0.0, %v4499
      %v4501 = vpop.f32.mrb[0].mxu0
      %v4502 = vpop.f32.mrb[0].mxu0
      %v4503 = vadd.f32 0.0, %v4502
      %v4504 = vpop.f32.mrb[0].mxu0
      %4505 = vmatprep.mubr.bf16.mxu0 0
      %4506 = vmatmul.mubr.bf16.gmra.mrb[0].mxu0 %v4316
      %v4507 = vpop.f32.mrb[0].mxu0
      %v4508 = vadd.f32 0.0, %v4507
      %v4509 = vpop.f32.mrb[0].mxu0
      %v4510 = vpop.f32.mrb[0].mxu0
      %v4511 = vadd.f32 0.0, %v4510
      %v4512 = vpop.f32.mrb[0].mxu0
      %4513 = vmatprep.mubr.bf16.mxu0 0
      %4514 = vmatmul.mubr.bf16.gmra.mrb[0].mxu0 %v4317
      %v4515 = vpop.f32.mrb[0].mxu0
      %v4516 = vadd.f32 0.0, %v4515
      %v4517 = vpop.f32.mrb[0].mxu0
      %v4518 = vpop.f32.mrb[0].mxu0
      %v4519 = vadd.f32 0.0, %v4518
      %v4520 = vpop.f32.mrb[0].mxu0
      %4521 = vmatprep.mubr.bf16.mxu0 0
      %4522 = vmatmul.mubr.bf16.gmra.mrb[0].mxu0 %v4318
      %v4523 = vpop.f32.mrb[0].mxu0
      %v4524 = vadd.f32 0.0, %v4523
      %v4525 = vpop.f32.mrb[0].mxu0
      %v4526 = vpop.f32.mrb[0].mxu0
      %v4527 = vadd.f32 0.0, %v4526
      %v4528 = vpop.f32.mrb[0].mxu0
      %4529 = vmatprep.mubr.bf16.mxu0 0
      %4530 = vmatmul.mubr.bf16.gmra.mrb[0].mxu0 %v4319
      %v4531 = vpop.f32.mrb[0].mxu0
      %v4532 = vadd.f32 0.0, %v4531
      %v4533 = vpop.f32.mrb[0].mxu0
      %v4534 = vpop.f32.mrb[0].mxu0
      %v4535 = vadd.f32 0.0, %v4534
      %v4536 = vpop.f32.mrb[0].mxu0
      %4537 = vmatprep.mubr.bf16.mxu0 0
      %4538 = vmatmul.mubr.bf16.gmra.mrb[0].mxu0 %v4320
      %v4539 = vpop.f32.mrb[0].mxu0
      %v4540 = vadd.f32 0.0, %v4539
      %v4541 = vpop.f32.mrb[0].mxu0
      %v4542 = vpop.f32.mrb[0].mxu0
      %v4543 = vadd.f32 0.0, %v4542
      %v4544 = vpop.f32.mrb[0].mxu0
      %4545 = vdwg.mxu0
      %v4546 = vadd.f32 %v3793, %v4420
      %v4547 = vadd.f32 %v3794, %v4423
      %v4548 = vadd.f32 %v3795, %v4428
      %v4549 = vadd.f32 %v3796, %v4431
      %v4550 = vadd.f32 %v3797, %v4436
      %v4551 = vadd.f32 %v3798, %v4439
      %v4552 = vadd.f32 %v3799, %v4444
      %v4553 = vadd.f32 %v3800, %v4447
      %v4554 = vadd.f32 %v3801, %v4452
      %v4555 = vadd.f32 %v3802, %v4455
      %v4556 = vadd.f32 %v3803, %v4460
      %v4557 = vadd.f32 %v3804, %v4463
      %v4558 = vadd.f32 %v3805, %v4468
      %v4559 = vadd.f32 %v3806, %v4471
      %v4560 = vadd.f32 %v3807, %v4476
      %v4561 = vadd.f32 %v3808, %v4479
      %v4562 = vadd.f32 %v3809, %v4484
      %v4563 = vadd.f32 %v3810, %v4487
      %v4564 = vadd.f32 %v3811, %v4492
      %v4565 = vadd.f32 %v3812, %v4495
      %v4566 = vadd.f32 %v3813, %v4500
      %v4567 = vadd.f32 %v3814, %v4503
      %v4568 = vadd.f32 %v3815, %v4508
      %v4569 = vadd.f32 %v3816, %v4511
      %v4570 = vadd.f32 %v3817, %v4516
      %v4571 = vadd.f32 %v3818, %v4519
      %v4572 = vadd.f32 %v3819, %v4524
      %v4573 = vadd.f32 %v3820, %v4527
      %v4574 = vadd.f32 %v3821, %v4532
      %v4575 = vadd.f32 %v3822, %v4535
      %v4576 = vadd.f32 %v3823, %v4540
      %v4577 = vadd.f32 %v3824, %v4543
      %v4578 = vld [vmem:[%s3439] sm:$0xe]
      %v4579 = vld [vmem:[%s3439 + $0xc] sm:$0xe]
      %v4580 = vld [vmem:[%s3439 + $0x18] sm:$0xe]
      %v4581 = vld [vmem:[%s3439 + $0x24] sm:$0xe]
      %v4582 = vld [vmem:[%s3439 + $0x30] sm:$0xe]
      %v4583 = vld [vmem:[%s3439 + $0x3c] sm:$0xe]
      %v4584 = vld [vmem:[%s3439 + $0x48] sm:$0xe]
      %v4585 = vld [vmem:[%s3439 + $0x54] sm:$0xe]
      %v4586 = vld [vmem:[%s3439 + $0x60] sm:$0xe]
      %v4587 = vld [vmem:[%s3439 + $0x6c] sm:$0xe]
      %v4588 = vld [vmem:[%s3439 + $0x78] sm:$0xe]
      %v4589 = vld [vmem:[%s3439 + $0x84] sm:$0xe]
      %v4590 = vld [vmem:[%s3439 + $0x90] sm:$0xe]
      %v4591 = vld [vmem:[%s3439 + $0x9c] sm:$0xe]
      %v4592 = vld [vmem:[%s3439 + $0xa8] sm:$0xe]
      %v4593 = vld [vmem:[%s3439 + $0xb4] sm:$0xe]
      %v4642 = vrot.slane %v4578, 5
      %v4643 = vrot.slane %v4642, 4
      %v4644 = vrot.slane %v3826, 5
      %v4645 = vsel %vm1369, %v4643, %v4644
      %v4646 = vrot.slane %v4644, 4
      %v4647 = vrot.slane %v3827, 5
      %v4648 = vsel %vm1369, %v4646, %v4647
      %v4649 = vrot.slane %v4579, 5
      %v4650 = vrot.slane %v4649, 4
      %v4651 = vrot.slane %v3829, 5
      %v4652 = vsel %vm1369, %v4650, %v4651
      %v4653 = vrot.slane %v4651, 4
      %v4654 = vrot.slane %v3830, 5
      %v4655 = vsel %vm1369, %v4653, %v4654
      %v4656 = vrot.slane %v4580, 5
      %v4657 = vrot.slane %v4656, 4
      %v4658 = vrot.slane %v3832, 5
      %v4659 = vsel %vm1369, %v4657, %v4658
      %v4660 = vrot.slane %v4658, 4
      %v4661 = vrot.slane %v3833, 5
      %v4662 = vsel %vm1369, %v4660, %v4661
      %v4663 = vrot.slane %v4581, 5
      %v4664 = vrot.slane %v4663, 4
      %v4665 = vrot.slane %v3835, 5
      %v4666 = vsel %vm1369, %v4664, %v4665
      %v4667 = vrot.slane %v4665, 4
      %v4668 = vrot.slane %v3836, 5
      %v4669 = vsel %vm1369, %v4667, %v4668
      %v4670 = vrot.slane %v4582, 5
      %v4671 = vrot.slane %v4670, 4
      %v4672 = vrot.slane %v3838, 5
      %v4673 = vsel %vm1369, %v4671, %v4672
      %v4674 = vrot.slane %v4672, 4
      %v4675 = vrot.slane %v3839, 5
      %v4676 = vsel %vm1369, %v4674, %v4675
      %v4677 = vrot.slane %v4583, 5
      %v4678 = vrot.slane %v4677, 4
      %v4679 = vrot.slane %v3841, 5
      %v4680 = vsel %vm1369, %v4678, %v4679
      %v4681 = vrot.slane %v4679, 4
      %v4682 = vrot.slane %v3842, 5
      %v4683 = vsel %vm1369, %v4681, %v4682
      %v4684 = vrot.slane %v4584, 5
      %v4685 = vrot.slane %v4684, 4
      %v4686 = vrot.slane %v3844, 5
      %v4687 = vsel %vm1369, %v4685, %v4686
      %v4688 = vrot.slane %v4686, 4
      %v4689 = vrot.slane %v3845, 5
      %v4690 = vsel %vm1369, %v4688, %v4689
      %v4691 = vrot.slane %v4585, 5
      %v4692 = vrot.slane %v4691, 4
      %v4693 = vrot.slane %v3847, 5
      %v4694 = vsel %vm1369, %v4692, %v4693
      %v4695 = vrot.slane %v4693, 4
      %v4696 = vrot.slane %v3848, 5
      %v4697 = vsel %vm1369, %v4695, %v4696
      %v4698 = vrot.slane %v4586, 5
      %v4699 = vrot.slane %v4698, 4
      %v4700 = vrot.slane %v3850, 5
      %v4701 = vsel %vm1369, %v4699, %v4700
      %v4702 = vrot.slane %v4700, 4
      %v4703 = vrot.slane %v3851, 5
      %v4704 = vsel %vm1369, %v4702, %v4703
      %v4705 = vrot.slane %v4587, 5
      %v4706 = vrot.slane %v4705, 4
      %v4707 = vrot.slane %v3853, 5
      %v4708 = vsel %vm1369, %v4706, %v4707
      %v4709 = vrot.slane %v4707, 4
      %v4710 = vrot.slane %v3854, 5
      %v4711 = vsel %vm1369, %v4709, %v4710
      %v4712 = vrot.slane %v4588, 5
      %v4713 = vrot.slane %v4712, 4
      %v4714 = vrot.slane %v3856, 5
      %v4715 = vsel %vm1369, %v4713, %v4714
      %v4716 = vrot.slane %v4714, 4
      %v4717 = vrot.slane %v3857, 5
      %v4718 = vsel %vm1369, %v4716, %v4717
      %v4719 = vrot.slane %v4589, 5
      %v4720 = vrot.slane %v4719, 4
      %v4721 = vrot.slane %v3859, 5
      %v4722 = vsel %vm1369, %v4720, %v4721
      %v4723 = vrot.slane %v4721, 4
      %v4724 = vrot.slane %v3860, 5
      %v4725 = vsel %vm1369, %v4723, %v4724
      %v4726 = vrot.slane %v4590, 5
      %v4727 = vrot.slane %v4726, 4
      %v4728 = vrot.slane %v3862, 5
      %v4729 = vsel %vm1369, %v4727, %v4728
      %v4730 = vrot.slane %v4728, 4
      %v4731 = vrot.slane %v3863, 5
      %v4732 = vsel %vm1369, %v4730, %v4731
      %v4733 = vrot.slane %v4591, 5
      %v4734 = vrot.slane %v4733, 4
      %v4735 = vrot.slane %v3865, 5
      %v4736 = vsel %vm1369, %v4734, %v4735
      %v4737 = vrot.slane %v4735, 4
      %v4738 = vrot.slane %v3866, 5
      %v4739 = vsel %vm1369, %v4737, %v4738
      %v4740 = vrot.slane %v4592, 5
      %v4741 = vrot.slane %v4740, 4
      %v4742 = vrot.slane %v3868, 5
      %v4743 = vsel %vm1369, %v4741, %v4742
      %v4744 = vrot.slane %v4742, 4
      %v4745 = vrot.slane %v3869, 5
      %v4746 = vsel %vm1369, %v4744, %v4745
      %v4747 = vrot.slane %v4593, 5
      %v4748 = vrot.slane %v4747, 4
      %v4749 = vrot.slane %v3871, 5
      %v4750 = vsel %vm1369, %v4748, %v4749
      %v4751 = vrot.slane %v4749, 4
      %v4752 = vrot.slane %v3872, 5
      %v4753 = vsel %vm1369, %v4751, %v4752
      %v4754 = vld [vmem:[%s1 + $0x200] sm:$0xf]
      %v4755 = vld [vmem:[%s1 + $0x204] sm:$0xf]
      %v4756 = vld [vmem:[%s1 + $0x208] sm:$0xf]
      %v4757 = vld [vmem:[%s1 + $0x20c] sm:$0xf]
      %v4758 = vld [vmem:[%s1 + $0x210] sm:$0xf]
      %v4759 = vld [vmem:[%s1 + $0x214] sm:$0xf]
      %v4760 = vld [vmem:[%s1 + $0x218] sm:$0xf]
      %v4761 = vld [vmem:[%s1 + $0x21c] sm:$0xf]
      %v4762 = vld [vmem:[%s1 + $0x220] sm:$0xf]
      %v4763 = vld [vmem:[%s1 + $0x224] sm:$0xf]
      %v4764 = vld [vmem:[%s1 + $0x228] sm:$0xf]
      %v4765 = vld [vmem:[%s1 + $0x22c] sm:$0xf]
      %v4766 = vld [vmem:[%s1 + $0x230] sm:$0xf]
      %v4767 = vld [vmem:[%s1 + $0x234] sm:$0xf]
      %v4768 = vld [vmem:[%s1 + $0x238] sm:$0xf]
      %v4769 = vld [vmem:[%s1 + $0x23c] sm:$0xf]
      %v4770 = vunpack.c.l.b16 %v4645
      %v4771 = vunpack.c.l.b16 %v4648
      %v4772 = vunpack.c.l.b16 %v4652
      %v4773 = vunpack.c.l.b16 %v4655
      %v4774 = vunpack.c.l.b16 %v4659
      %v4775 = vunpack.c.l.b16 %v4662
      %v4776 = vunpack.c.l.b16 %v4666
      %v4777 = vunpack.c.l.b16 %v4669
      %v4778 = vunpack.c.l.b16 %v4673
      %v4779 = vunpack.c.l.b16 %v4676
      %v4780 = vunpack.c.l.b16 %v4680
      %v4781 = vunpack.c.l.b16 %v4683
      %v4782 = vunpack.c.l.b16 %v4687
      %v4783 = vunpack.c.l.b16 %v4690
      %v4784 = vunpack.c.l.b16 %v4694
      %v4785 = vunpack.c.l.b16 %v4697
      %v4786 = vunpack.c.l.b16 %v4701
      %v4787 = vunpack.c.l.b16 %v4704
      %v4788 = vunpack.c.l.b16 %v4708
      %v4789 = vunpack.c.l.b16 %v4711
      %v4790 = vunpack.c.l.b16 %v4715
      %v4791 = vunpack.c.l.b16 %v4718
      %v4792 = vunpack.c.l.b16 %v4722
      %v4793 = vunpack.c.l.b16 %v4725
      %v4794 = vunpack.c.l.b16 %v4729
      %v4795 = vunpack.c.l.b16 %v4732
      %v4796 = vunpack.c.l.b16 %v4736
      %v4797 = vunpack.c.l.b16 %v4739
      %v4798 = vunpack.c.l.b16 %v4743
      %v4799 = vunpack.c.l.b16 %v4746
      %v4800 = vunpack.c.l.b16 %v4750
      %v4801 = vunpack.c.l.b16 %v4753
      %v4802 = vpack.c.b16 %v4771, %v4770
      %v4803 = vpack.c.b16 %v4773, %v4772
      %v4804 = vpack.c.b16 %v4775, %v4774
      %v4805 = vpack.c.b16 %v4777, %v4776
      %v4806 = vpack.c.b16 %v4779, %v4778
      %v4807 = vpack.c.b16 %v4781, %v4780
      %v4808 = vpack.c.b16 %v4783, %v4782
      %v4809 = vpack.c.b16 %v4785, %v4784
      %v4810 = vpack.c.b16 %v4787, %v4786
      %v4811 = vpack.c.b16 %v4789, %v4788
      %v4812 = vpack.c.b16 %v4791, %v4790
      %v4813 = vpack.c.b16 %v4793, %v4792
      %v4814 = vpack.c.b16 %v4795, %v4794
      %v4815 = vpack.c.b16 %v4797, %v4796
      %v4816 = vpack.c.b16 %v4799, %v4798
      %v4817 = vpack.c.b16 %v4801, %v4800
      %v4850 = vunpack.c.l.b16 %v4754
      %v4851 = vunpack.c.l.b16 %v4755
      %v4852 = vunpack.c.l.b16 %v4756
      %v4853 = vunpack.c.l.b16 %v4757
      %v4854 = vunpack.c.l.b16 %v4758
      %v4855 = vunpack.c.l.b16 %v4759
      %v4856 = vunpack.c.l.b16 %v4760
      %v4857 = vunpack.c.l.b16 %v4761
      %v4858 = vunpack.c.l.b16 %v4762
      %v4859 = vunpack.c.l.b16 %v4763
      %v4860 = vunpack.c.l.b16 %v4764
      %v4861 = vunpack.c.l.b16 %v4765
      %v4862 = vunpack.c.l.b16 %v4766
      %v4863 = vunpack.c.l.b16 %v4767
      %v4864 = vunpack.c.l.b16 %v4768
      %v4865 = vunpack.c.l.b16 %v4769
      %v4866 = vpack.c.b16 %v4851, %v4850
      %v4867 = vpack.c.b16 %v4853, %v4852
      %v4868 = vpack.c.b16 %v4855, %v4854
      %v4869 = vpack.c.b16 %v4857, %v4856
      %v4870 = vpack.c.b16 %v4859, %v4858
      %v4871 = vpack.c.b16 %v4861, %v4860
      %v4872 = vpack.c.b16 %v4863, %v4862
      %v4873 = vpack.c.b16 %v4865, %v4864
      %4882 = vmatprep.subr.bf16.mxu0 0
      %4883 = vmatpush1.bf16.msra.mxu0 %v4866
      %4884 = vmatprep.subr.bf16.mxu0 0
      %4885 = vmatpush1.bf16.msra.mxu0 %v4867
      %4886 = vmatprep.subr.bf16.mxu0 0
      %4887 = vmatpush1.bf16.msra.mxu0 %v4868
      %4888 = vmatprep.subr.bf16.mxu0 0
      %4889 = vmatpush1.bf16.msra.mxu0 %v4869
      %4890 = vmatprep.subr.bf16.mxu0 0
      %4891 = vmatpush1.bf16.msra.mxu0 %v4870
      %4892 = vmatprep.subr.bf16.mxu0 0
      %4893 = vmatpush1.bf16.msra.mxu0 %v4871
      %4894 = vmatprep.subr.bf16.mxu0 0
      %4895 = vmatpush1.bf16.msra.mxu0 %v4872
      %4896 = vmatprep.subr.bf16.mxu0 0
      %4897 = vmatpush1.bf16.msra.mxu0 %v4873
      %4898 = vmatprep.subr.bf16.mxu0 0
      %4899 = vmatpush1.bf16.msra.mxu0 0
      %4900 = vmatprep.subr.bf16.mxu0 0
      %4901 = vmatpush1.bf16.msra.mxu0 0
      %4902 = vmatprep.subr.bf16.mxu0 0
      %4903 = vmatpush1.bf16.msra.mxu0 0
      %4904 = vmatprep.subr.bf16.mxu0 0
      %4905 = vmatpush1.bf16.msra.mxu0 0
      %4906 = vmatprep.subr.bf16.mxu0 0
      %4907 = vmatpush1.bf16.msra.mxu0 0
      %4908 = vmatprep.subr.bf16.mxu0 0
      %4909 = vmatpush1.bf16.msra.mxu0 0
      %4910 = vmatprep.subr.bf16.mxu0 0
      %4911 = vmatpush1.bf16.msra.mxu0 0
      %4912 = vmatprep.subr.bf16.mxu0 0
      %4913 = vmatpush1.bf16.msra.mxu0 0
      %4914 = vmatprep.mubr.bf16.mxu0 0
      %4915 = vmatmul.mubr.bf16.gmra.mrb[0].mxu0 %v4802
      %v4916 = vpop.f32.mrb[0].mxu0
      %v4917 = vadd.f32 0.0, %v4916
      %v4918 = vpop.f32.mrb[0].mxu0
      %v4919 = vpop.f32.mrb[0].mxu0
      %v4920 = vadd.f32 0.0, %v4919
      %v4921 = vpop.f32.mrb[0].mxu0
      %4922 = vmatprep.mubr.bf16.mxu0 0
      %4923 = vmatmul.mubr.bf16.gmra.mrb[0].mxu0 %v4803
      %v4924 = vpop.f32.mrb[0].mxu0
      %v4925 = vadd.f32 0.0, %v4924
      %v4926 = vpop.f32.mrb[0].mxu0
      %v4927 = vpop.f32.mrb[0].mxu0
      %v4928 = vadd.f32 0.0, %v4927
      %v4929 = vpop.f32.mrb[0].mxu0
      %4930 = vmatprep.mubr.bf16.mxu0 0
      %4931 = vmatmul.mubr.bf16.gmra.mrb[0].mxu0 %v4804
      %v4932 = vpop.f32.mrb[0].mxu0
      %v4933 = vadd.f32 0.0, %v4932
      %v4934 = vpop.f32.mrb[0].mxu0
      %v4935 = vpop.f32.mrb[0].mxu0
      %v4936 = vadd.f32 0.0, %v4935
      %v4937 = vpop.f32.mrb[0].mxu0
      %4938 = vmatprep.mubr.bf16.mxu0 0
      %4939 = vmatmul.mubr.bf16.gmra.mrb[0].mxu0 %v4805
      %v4940 = vpop.f32.mrb[0].mxu0
      %v4941 = vadd.f32 0.0, %v4940
      %v4942 = vpop.f32.mrb[0].mxu0
      %v4943 = vpop.f32.mrb[0].mxu0
      %v4944 = vadd.f32 0.0, %v4943
      %v4945 = vpop.f32.mrb[0].mxu0
      %4946 = vmatprep.mubr.bf16.mxu0 0
      %4947 = vmatmul.mubr.bf16.gmra.mrb[0].mxu0 %v4806
      %v4948 = vpop.f32.mrb[0].mxu0
      %v4949 = vadd.f32 0.0, %v4948
      %v4950 = vpop.f32.mrb[0].mxu0
      %v4951 = vpop.f32.mrb[0].mxu0
      %v4952 = vadd.f32 0.0, %v4951
      %v4953 = vpop.f32.mrb[0].mxu0
      %4954 = vmatprep.mubr.bf16.mxu0 0
      %4955 = vmatmul.mubr.bf16.gmra.mrb[0].mxu0 %v4807
      %v4956 = vpop.f32.mrb[0].mxu0
      %v4957 = vadd.f32 0.0, %v4956
      %v4958 = vpop.f32.mrb[0].mxu0
      %v4959 = vpop.f32.mrb[0].mxu0
      %v4960 = vadd.f32 0.0, %v4959
      %v4961 = vpop.f32.mrb[0].mxu0
      %4962 = vmatprep.mubr.bf16.mxu0 0
      %4963 = vmatmul.mubr.bf16.gmra.mrb[0].mxu0 %v4808
      %v4964 = vpop.f32.mrb[0].mxu0
      %v4965 = vadd.f32 0.0, %v4964
      %v4966 = vpop.f32.mrb[0].mxu0
      %v4967 = vpop.f32.mrb[0].mxu0
      %v4968 = vadd.f32 0.0, %v4967
      %v4969 = vpop.f32.mrb[0].mxu0
      %4970 = vmatprep.mubr.bf16.mxu0 0
      %4971 = vmatmul.mubr.bf16.gmra.mrb[0].mxu0 %v4809
      %v4972 = vpop.f32.mrb[0].mxu0
      %v4973 = vadd.f32 0.0, %v4972
      %v4974 = vpop.f32.mrb[0].mxu0
      %v4975 = vpop.f32.mrb[0].mxu0
      %v4976 = vadd.f32 0.0, %v4975
      %v4977 = vpop.f32.mrb[0].mxu0
      %4978 = vmatprep.mubr.bf16.mxu0 0
      %4979 = vmatmul.mubr.bf16.gmra.mrb[0].mxu0 %v4810
      %v4980 = vpop.f32.mrb[0].mxu0
      %v4981 = vadd.f32 0.0, %v4980
      %v4982 = vpop.f32.mrb[0].mxu0
      %v4983 = vpop.f32.mrb[0].mxu0
      %v4984 = vadd.f32 0.0, %v4983
      %v4985 = vpop.f32.mrb[0].mxu0
      %4986 = vmatprep.mubr.bf16.mxu0 0
      %4987 = vmatmul.mubr.bf16.gmra.mrb[0].mxu0 %v4811
      %v4988 = vpop.f32.mrb[0].mxu0
      %v4989 = vadd.f32 0.0, %v4988
      %v4990 = vpop.f32.mrb[0].mxu0
      %v4991 = vpop.f32.mrb[0].mxu0
      %v4992 = vadd.f32 0.0, %v4991
      %v4993 = vpop.f32.mrb[0].mxu0
      %4994 = vmatprep.mubr.bf16.mxu0 0
      %4995 = vmatmul.mubr.bf16.gmra.mrb[0].mxu0 %v4812
      %v4996 = vpop.f32.mrb[0].mxu0
      %v4997 = vadd.f32 0.0, %v4996
      %v4998 = vpop.f32.mrb[0].mxu0
      %v4999 = vpop.f32.mrb[0].mxu0
      %v5000 = vadd.f32 0.0, %v4999
      %v5001 = vpop.f32.mrb[0].mxu0
      %5002 = vmatprep.mubr.bf16.mxu0 0
      %5003 = vmatmul.mubr.bf16.gmra.mrb[0].mxu0 %v4813
      %v5004 = vpop.f32.mrb[0].mxu0
      %v5005 = vadd.f32 0.0, %v5004
      %v5006 = vpop.f32.mrb[0].mxu0
      %v5007 = vpop.f32.mrb[0].mxu0
      %v5008 = vadd.f32 0.0, %v5007
      %v5009 = vpop.f32.mrb[0].mxu0
      %5010 = vmatprep.mubr.bf16.mxu0 0
      %5011 = vmatmul.mubr.bf16.gmra.mrb[0].mxu0 %v4814
      %v5012 = vpop.f32.mrb[0].mxu0
      %v5013 = vadd.f32 0.0, %v5012
      %v5014 = vpop.f32.mrb[0].mxu0
      %v5015 = vpop.f32.mrb[0].mxu0
      %v5016 = vadd.f32 0.0, %v5015
      %v5017 = vpop.f32.mrb[0].mxu0
      %5018 = vmatprep.mubr.bf16.mxu0 0
      %5019 = vmatmul.mubr.bf16.gmra.mrb[0].mxu0 %v4815
      %v5020 = vpop.f32.mrb[0].mxu0
      %v5021 = vadd.f32 0.0, %v5020
      %v5022 = vpop.f32.mrb[0].mxu0
      %v5023 = vpop.f32.mrb[0].mxu0
      %v5024 = vadd.f32 0.0, %v5023
      %v5025 = vpop.f32.mrb[0].mxu0
      %5026 = vmatprep.mubr.bf16.mxu0 0
      %5027 = vmatmul.mubr.bf16.gmra.mrb[0].mxu0 %v4816
      %v5028 = vpop.f32.mrb[0].mxu0
      %v5029 = vadd.f32 0.0, %v5028
      %v5030 = vpop.f32.mrb[0].mxu0
      %v5031 = vpop.f32.mrb[0].mxu0
      %v5032 = vadd.f32 0.0, %v5031
      %v5033 = vpop.f32.mrb[0].mxu0
      %5034 = vmatprep.mubr.bf16.mxu0 0
      %5035 = vmatmul.mubr.bf16.gmra.mrb[0].mxu0 %v4817
      %v5036 = vpop.f32.mrb[0].mxu0
      %v5037 = vadd.f32 0.0, %v5036
      %v5038 = vpop.f32.mrb[0].mxu0
      %v5039 = vpop.f32.mrb[0].mxu0
      %v5040 = vadd.f32 0.0, %v5039
      %v5041 = vpop.f32.mrb[0].mxu0
      %5042 = vdwg.mxu0
      %v5043 = vadd.f32 %v4546, %v4917
      %v5044 = vadd.f32 %v4547, %v4920
      %v5045 = vadd.f32 %v4548, %v4925
      %v5046 = vadd.f32 %v4549, %v4928
      %v5047 = vadd.f32 %v4550, %v4933
      %v5048 = vadd.f32 %v4551, %v4936
      %v5049 = vadd.f32 %v4552, %v4941
      %v5050 = vadd.f32 %v4553, %v4944
      %v5051 = vadd.f32 %v4554, %v4949
      %v5052 = vadd.f32 %v4555, %v4952
      %v5053 = vadd.f32 %v4556, %v4957
      %v5054 = vadd.f32 %v4557, %v4960
      %v5055 = vadd.f32 %v4558, %v4965
      %v5056 = vadd.f32 %v4559, %v4968
      %v5057 = vadd.f32 %v4560, %v4973
      %v5058 = vadd.f32 %v4561, %v4976
      %v5059 = vadd.f32 %v4562, %v4981
      %v5060 = vadd.f32 %v4563, %v4984
      %v5061 = vadd.f32 %v4564, %v4989
      %v5062 = vadd.f32 %v4565, %v4992
      %v5063 = vadd.f32 %v4566, %v4997
      %v5064 = vadd.f32 %v4567, %v5000
      %v5065 = vadd.f32 %v4568, %v5005
      %v5066 = vadd.f32 %v4569, %v5008
      %v5067 = vadd.f32 %v4570, %v5013
      %v5068 = vadd.f32 %v4571, %v5016
      %v5069 = vadd.f32 %v4572, %v5021
      %v5070 = vadd.f32 %v4573, %v5024
      %v5071 = vadd.f32 %v4574, %v5029
      %v5072 = vadd.f32 %v4575, %v5032
      %v5073 = vadd.f32 %v4576, %v5037
      %v5074 = vadd.f32 %v4577, %v5040
      %v5075 = vld [vmem:[%s2] sm:$0x1]
      %v5077 = vlaneseq
      %v5078 = vshrl.u32 %v5077, 7
      %v5079 = vsub.s32 0, %v5078
      %v5080 = vrot.slane %v5075, %v5079
      %v5082 = vadd.f32 %v5043, %v5080
      %v5083 = vadd.f32 %v5044, %v5080
      %v5084 = vadd.f32 %v5045, %v5080
      %v5085 = vadd.f32 %v5046, %v5080
      %v5086 = vadd.f32 %v5047, %v5080
      %v5087 = vadd.f32 %v5048, %v5080
      %v5088 = vadd.f32 %v5049, %v5080
      %v5089 = vadd.f32 %v5050, %v5080
      %v5090 = vadd.f32 %v5051, %v5080
      %v5091 = vadd.f32 %v5052, %v5080
      %v5092 = vadd.f32 %v5053, %v5080
      %v5093 = vadd.f32 %v5054, %v5080
      %v5094 = vadd.f32 %v5055, %v5080
      %v5095 = vadd.f32 %v5056, %v5080
      %v5096 = vadd.f32 %v5057, %v5080
      %v5097 = vadd.f32 %v5058, %v5080
      %v5098 = vadd.f32 %v5059, %v5080
      %v5099 = vadd.f32 %v5060, %v5080
      %v5100 = vadd.f32 %v5061, %v5080
      %v5101 = vadd.f32 %v5062, %v5080
      %v5102 = vadd.f32 %v5063, %v5080
      %v5103 = vadd.f32 %v5064, %v5080
      %v5104 = vadd.f32 %v5065, %v5080
      %v5105 = vadd.f32 %v5066, %v5080
      %v5106 = vadd.f32 %v5067, %v5080
      %v5107 = vadd.f32 %v5068, %v5080
      %v5108 = vadd.f32 %v5069, %v5080
      %v5109 = vadd.f32 %v5070, %v5080
      %v5110 = vadd.f32 %v5071, %v5080
      %v5111 = vadd.f32 %v5072, %v5080
      %v5112 = vadd.f32 %v5073, %v5080
      %v5113 = vadd.f32 %v5074, %v5080
      %s5114 = scalar_lea.vmem %s266, 12
      %v5115 = vld [vmem:[%s5114] sm:$0xf]
      %v5116 = vld [vmem:[%s5114 + $0x4] sm:$0xf]
      %v5117 = vld [vmem:[%s5114 + $0x8] sm:$0x1]
      %v5118 = vld [vmem:[%s5114 + $0xc] sm:$0xf]
      %v5119 = vld [vmem:[%s5114 + $0x10] sm:$0xf]
      %v5120 = vld [vmem:[%s5114 + $0x14] sm:$0x1]
      %v5121 = vld [vmem:[%s5114 + $0x18] sm:$0xf]
      %v5122 = vld [vmem:[%s5114 + $0x1c] sm:$0xf]
      %v5123 = vld [vmem:[%s5114 + $0x20] sm:$0x1]
      %v5124 = vld [vmem:[%s5114 + $0x24] sm:$0xf]
      %v5125 = vld [vmem:[%s5114 + $0x28] sm:$0xf]
      %v5126 = vld [vmem:[%s5114 + $0x2c] sm:$0x1]
      %v5127 = vld [vmem:[%s5114 + $0x30] sm:$0xf]
      %v5128 = vld [vmem:[%s5114 + $0x34] sm:$0xf]
      %v5129 = vld [vmem:[%s5114 + $0x38] sm:$0x1]
      %v5130 = vld [vmem:[%s5114 + $0x3c] sm:$0xf]
      %v5131 = vld [vmem:[%s5114 + $0x40] sm:$0xf]
      %v5132 = vld [vmem:[%s5114 + $0x44] sm:$0x1]
      %v5133 = vld [vmem:[%s5114 + $0x48] sm:$0xf]
      %v5134 = vld [vmem:[%s5114 + $0x4c] sm:$0xf]
      %v5135 = vld [vmem:[%s5114 + $0x50] sm:$0x1]
      %v5136 = vld [vmem:[%s5114 + $0x54] sm:$0xf]
      %v5137 = vld [vmem:[%s5114 + $0x58] sm:$0xf]
      %v5138 = vld [vmem:[%s5114 + $0x5c] sm:$0x1]
      %v5139 = vld [vmem:[%s5114 + $0x60] sm:$0xf]
      %v5140 = vld [vmem:[%s5114 + $0x64] sm:$0xf]
      %v5141 = vld [vmem:[%s5114 + $0x68] sm:$0x1]
      %v5142 = vld [vmem:[%s5114 + $0x6c] sm:$0xf]
      %v5143 = vld [vmem:[%s5114 + $0x70] sm:$0xf]
      %v5144 = vld [vmem:[%s5114 + $0x74] sm:$0x1]
      %v5145 = vld [vmem:[%s5114 + $0x78] sm:$0xf]
      %v5146 = vld [vmem:[%s5114 + $0x7c] sm:$0xf]
      %v5147 = vld [vmem:[%s5114 + $0x80] sm:$0x1]
      %v5148 = vld [vmem:[%s5114 + $0x84] sm:$0xf]
      %v5149 = vld [vmem:[%s5114 + $0x88] sm:$0xf]
      %v5150 = vld [vmem:[%s5114 + $0x8c] sm:$0x1]
      %v5151 = vld [vmem:[%s5114 + $0x90] sm:$0xf]
      %v5152 = vld [vmem:[%s5114 + $0x94] sm:$0xf]
      %v5153 = vld [vmem:[%s5114 + $0x98] sm:$0x1]
      %v5154 = vld [vmem:[%s5114 + $0x9c] sm:$0xf]
      %v5155 = vld [vmem:[%s5114 + $0xa0] sm:$0xf]
      %v5156 = vld [vmem:[%s5114 + $0xa4] sm:$0x1]
      %v5157 = vld [vmem:[%s5114 + $0xa8] sm:$0xf]
      %v5158 = vld [vmem:[%s5114 + $0xac] sm:$0xf]
      %v5159 = vld [vmem:[%s5114 + $0xb0] sm:$0x1]
      %v5160 = vld [vmem:[%s5114 + $0xb4] sm:$0xf]
      %v5161 = vld [vmem:[%s5114 + $0xb8] sm:$0xf]
      %v5162 = vld [vmem:[%s5114 + $0xbc] sm:$0x1]
      %v5164 = vshrl.u32 %v5115, 16
      %v5166 = vrot.slane %v5164, 4
      %v5167 = vshll.u32 %v5115, 16
      %v5169 = vrot.slane %v5167, 5
      %v5170 = vor.u32 %v5166, %v5169
      %v5171 = vrot.slane %v5170, 4
      %v5173 = vshll.u32 %v5116, 16
      %v5175 = vrot.slane %v5173, 5
      %v5176 = vsel %vm340, %v5171, %v5175
      %v5177 = vshrl.u32 %v5116, 16
      %v5179 = vrot.slane %v5177, 4
      %v5180 = vor.u32 %v5179, %v5175
      %v5181 = vrot.slane %v5180, 4
      %v5183 = vshll.u32 %v5117, 16
      %v5185 = vrot.slane %v5183, 5
      %v5186 = vsel %vm340, %v5181, %v5185
      %v5188 = vshrl.u32 %v5118, 16
      %v5190 = vrot.slane %v5188, 4
      %v5191 = vshll.u32 %v5118, 16
      %v5193 = vrot.slane %v5191, 5
      %v5194 = vor.u32 %v5190, %v5193
      %v5195 = vrot.slane %v5194, 4
      %v5197 = vshll.u32 %v5119, 16
      %v5199 = vrot.slane %v5197, 5
      %v5200 = vsel %vm340, %v5195, %v5199
      %v5201 = vshrl.u32 %v5119, 16
      %v5203 = vrot.slane %v5201, 4
      %v5204 = vor.u32 %v5203, %v5199
      %v5205 = vrot.slane %v5204, 4
      %v5207 = vshll.u32 %v5120, 16
      %v5209 = vrot.slane %v5207, 5
      %v5210 = vsel %vm340, %v5205, %v5209
      %v5212 = vshrl.u32 %v5121, 16
      %v5214 = vrot.slane %v5212, 4
      %v5215 = vshll.u32 %v5121, 16
      %v5217 = vrot.slane %v5215, 5
      %v5218 = vor.u32 %v5214, %v5217
      %v5219 = vrot.slane %v5218, 4
      %v5221 = vshll.u32 %v5122, 16
      %v5223 = vrot.slane %v5221, 5
      %v5224 = vsel %vm340, %v5219, %v5223
      %v5225 = vshrl.u32 %v5122, 16
      %v5227 = vrot.slane %v5225, 4
      %v5228 = vor.u32 %v5227, %v5223
      %v5229 = vrot.slane %v5228, 4
      %v5231 = vshll.u32 %v5123, 16
      %v5233 = vrot.slane %v5231, 5
      %v5234 = vsel %vm340, %v5229, %v5233
      %v5236 = vshrl.u32 %v5124, 16
      %v5238 = vrot.slane %v5236, 4
      %v5239 = vshll.u32 %v5124, 16
      %v5241 = vrot.slane %v5239, 5
      %v5242 = vor.u32 %v5238, %v5241
      %v5243 = vrot.slane %v5242, 4
      %v5245 = vshll.u32 %v5125, 16
      %v5247 = vrot.slane %v5245, 5
      %v5248 = vsel %vm340, %v5243, %v5247
      %v5249 = vshrl.u32 %v5125, 16
      %v5251 = vrot.slane %v5249, 4
      %v5252 = vor.u32 %v5251, %v5247
      %v5253 = vrot.slane %v5252, 4
      %v5255 = vshll.u32 %v5126, 16
      %v5257 = vrot.slane %v5255, 5
      %v5258 = vsel %vm340, %v5253, %v5257
      %v5260 = vshrl.u32 %v5127, 16
      %v5262 = vrot.slane %v5260, 4
      %v5263 = vshll.u32 %v5127, 16
      %v5265 = vrot.slane %v5263, 5
      %v5266 = vor.u32 %v5262, %v5265
      %v5267 = vrot.slane %v5266, 4
      %v5269 = vshll.u32 %v5128, 16
      %v5271 = vrot.slane %v5269, 5
      %v5272 = vsel %vm340, %v5267, %v5271
      %v5273 = vshrl.u32 %v5128, 16
      %v5275 = vrot.slane %v5273, 4
      %v5276 = vor.u32 %v5275, %v5271
      %v5277 = vrot.slane %v5276, 4
      %v5279 = vshll.u32 %v5129, 16
      %v5281 = vrot.slane %v5279, 5
      %v5282 = vsel %vm340, %v5277, %v5281
      %v5284 = vshrl.u32 %v5130, 16
      %v5286 = vrot.slane %v5284, 4
      %v5287 = vshll.u32 %v5130, 16
      %v5289 = vrot.slane %v5287, 5
      %v5290 = vor.u32 %v5286, %v5289
      %v5291 = vrot.slane %v5290, 4
      %v5293 = vshll.u32 %v5131, 16
      %v5295 = vrot.slane %v5293, 5
      %v5296 = vsel %vm340, %v5291, %v5295
      %v5297 = vshrl.u32 %v5131, 16
      %v5299 = vrot.slane %v5297, 4
      %v5300 = vor.u32 %v5299, %v5295
      %v5301 = vrot.slane %v5300, 4
      %v5303 = vshll.u32 %v5132, 16
      %v5305 = vrot.slane %v5303, 5
      %v5306 = vsel %vm340, %v5301, %v5305
      %v5308 = vshrl.u32 %v5133, 16
      %v5310 = vrot.slane %v5308, 4
      %v5311 = vshll.u32 %v5133, 16
      %v5313 = vrot.slane %v5311, 5
      %v5314 = vor.u32 %v5310, %v5313
      %v5315 = vrot.slane %v5314, 4
      %v5317 = vshll.u32 %v5134, 16
      %v5319 = vrot.slane %v5317, 5
      %v5320 = vsel %vm340, %v5315, %v5319
      %v5321 = vshrl.u32 %v5134, 16
      %v5323 = vrot.slane %v5321, 4
      %v5324 = vor.u32 %v5323, %v5319
      %v5325 = vrot.slane %v5324, 4
      %v5327 = vshll.u32 %v5135, 16
      %v5329 = vrot.slane %v5327, 5
      %v5330 = vsel %vm340, %v5325, %v5329
      %v5332 = vshrl.u32 %v5136, 16
      %v5334 = vrot.slane %v5332, 4
      %v5335 = vshll.u32 %v5136, 16
      %v5337 = vrot.slane %v5335, 5
      %v5338 = vor.u32 %v5334, %v5337
      %v5339 = vrot.slane %v5338, 4
      %v5341 = vshll.u32 %v5137, 16
      %v5343 = vrot.slane %v5341, 5
      %v5344 = vsel %vm340, %v5339, %v5343
      %v5345 = vshrl.u32 %v5137, 16
      %v5347 = vrot.slane %v5345, 4
      %v5348 = vor.u32 %v5347, %v5343
      %v5349 = vrot.slane %v5348, 4
      %v5351 = vshll.u32 %v5138, 16
      %v5353 = vrot.slane %v5351, 5
      %v5354 = vsel %vm340, %v5349, %v5353
      %v5356 = vshrl.u32 %v5139, 16
      %v5358 = vrot.slane %v5356, 4
      %v5359 = vshll.u32 %v5139, 16
      %v5361 = vrot.slane %v5359, 5
      %v5362 = vor.u32 %v5358, %v5361
      %v5363 = vrot.slane %v5362, 4
      %v5365 = vshll.u32 %v5140, 16
      %v5367 = vrot.slane %v5365, 5
      %v5368 = vsel %vm340, %v5363, %v5367
      %v5369 = vshrl.u32 %v5140, 16
      %v5371 = vrot.slane %v5369, 4
      %v5372 = vor.u32 %v5371, %v5367
      %v5373 = vrot.slane %v5372, 4
      %v5375 = vshll.u32 %v5141, 16
      %v5377 = vrot.slane %v5375, 5
      %v5378 = vsel %vm340, %v5373, %v5377
      %v5380 = vshrl.u32 %v5142, 16
      %v5382 = vrot.slane %v5380, 4
      %v5383 = vshll.u32 %v5142, 16
      %v5385 = vrot.slane %v5383, 5
      %v5386 = vor.u32 %v5382, %v5385
      %v5387 = vrot.slane %v5386, 4
      %v5389 = vshll.u32 %v5143, 16
      %v5391 = vrot.slane %v5389, 5
      %v5392 = vsel %vm340, %v5387, %v5391
      %v5393 = vshrl.u32 %v5143, 16
      %v5395 = vrot.slane %v5393, 4
      %v5396 = vor.u32 %v5395, %v5391
      %v5397 = vrot.slane %v5396, 4
      %v5399 = vshll.u32 %v5144, 16
      %v5401 = vrot.slane %v5399, 5
      %v5402 = vsel %vm340, %v5397, %v5401
      %v5404 = vshrl.u32 %v5145, 16
      %v5406 = vrot.slane %v5404, 4
      %v5407 = vshll.u32 %v5145, 16
      %v5409 = vrot.slane %v5407, 5
      %v5410 = vor.u32 %v5406, %v5409
      %v5411 = vrot.slane %v5410, 4
      %v5413 = vshll.u32 %v5146, 16
      %v5415 = vrot.slane %v5413, 5
      %v5416 = vsel %vm340, %v5411, %v5415
      %v5417 = vshrl.u32 %v5146, 16
      %v5419 = vrot.slane %v5417, 4
      %v5420 = vor.u32 %v5419, %v5415
      %v5421 = vrot.slane %v5420, 4
      %v5423 = vshll.u32 %v5147, 16
      %v5425 = vrot.slane %v5423, 5
      %v5426 = vsel %vm340, %v5421, %v5425
      %v5428 = vshrl.u32 %v5148, 16
      %v5430 = vrot.slane %v5428, 4
      %v5431 = vshll.u32 %v5148, 16
      %v5433 = vrot.slane %v5431, 5
      %v5434 = vor.u32 %v5430, %v5433
      %v5435 = vrot.slane %v5434, 4
      %v5437 = vshll.u32 %v5149, 16
      %v5439 = vrot.slane %v5437, 5
      %v5440 = vsel %vm340, %v5435, %v5439
      %v5441 = vshrl.u32 %v5149, 16
      %v5443 = vrot.slane %v5441, 4
      %v5444 = vor.u32 %v5443, %v5439
      %v5445 = vrot.slane %v5444, 4
      %v5447 = vshll.u32 %v5150, 16
      %v5449 = vrot.slane %v5447, 5
      %v5450 = vsel %vm340, %v5445, %v5449
      %v5452 = vshrl.u32 %v5151, 16
      %v5454 = vrot.slane %v5452, 4
      %v5455 = vshll.u32 %v5151, 16
      %v5457 = vrot.slane %v5455, 5
      %v5458 = vor.u32 %v5454, %v5457
      %v5459 = vrot.slane %v5458, 4
      %v5461 = vshll.u32 %v5152, 16
      %v5463 = vrot.slane %v5461, 5
      %v5464 = vsel %vm340, %v5459, %v5463
      %v5465 = vshrl.u32 %v5152, 16
      %v5467 = vrot.slane %v5465, 4
      %v5468 = vor.u32 %v5467, %v5463
      %v5469 = vrot.slane %v5468, 4
      %v5471 = vshll.u32 %v5153, 16
      %v5473 = vrot.slane %v5471, 5
      %v5474 = vsel %vm340, %v5469, %v5473
      %v5476 = vshrl.u32 %v5154, 16
      %v5478 = vrot.slane %v5476, 4
      %v5479 = vshll.u32 %v5154, 16
      %v5481 = vrot.slane %v5479, 5
      %v5482 = vor.u32 %v5478, %v5481
      %v5483 = vrot.slane %v5482, 4
      %v5485 = vshll.u32 %v5155, 16
      %v5487 = vrot.slane %v5485, 5
      %v5488 = vsel %vm340, %v5483, %v5487
      %v5489 = vshrl.u32 %v5155, 16
      %v5491 = vrot.slane %v5489, 4
      %v5492 = vor.u32 %v5491, %v5487
      %v5493 = vrot.slane %v5492, 4
      %v5495 = vshll.u32 %v5156, 16
      %v5497 = vrot.slane %v5495, 5
      %v5498 = vsel %vm340, %v5493, %v5497
      %v5500 = vshrl.u32 %v5157, 16
      %v5502 = vrot.slane %v5500, 4
      %v5503 = vshll.u32 %v5157, 16
      %v5505 = vrot.slane %v5503, 5
      %v5506 = vor.u32 %v5502, %v5505
      %v5507 = vrot.slane %v5506, 4
      %v5509 = vshll.u32 %v5158, 16
      %v5511 = vrot.slane %v5509, 5
      %v5512 = vsel %vm340, %v5507, %v5511
      %v5513 = vshrl.u32 %v5158, 16
      %v5515 = vrot.slane %v5513, 4
      %v5516 = vor.u32 %v5515, %v5511
      %v5517 = vrot.slane %v5516, 4
      %v5519 = vshll.u32 %v5159, 16
      %v5521 = vrot.slane %v5519, 5
      %v5522 = vsel %vm340, %v5517, %v5521
      %v5524 = vshrl.u32 %v5160, 16
      %v5526 = vrot.slane %v5524, 4
      %v5527 = vshll.u32 %v5160, 16
      %v5529 = vrot.slane %v5527, 5
      %v5530 = vor.u32 %v5526, %v5529
      %v5531 = vrot.slane %v5530, 4
      %v5533 = vshll.u32 %v5161, 16
      %v5535 = vrot.slane %v5533, 5
      %v5536 = vsel %vm340, %v5531, %v5535
      %v5537 = vshrl.u32 %v5161, 16
      %v5539 = vrot.slane %v5537, 4
      %v5540 = vor.u32 %v5539, %v5535
      %v5541 = vrot.slane %v5540, 4
      %v5543 = vshll.u32 %v5162, 16
      %v5545 = vrot.slane %v5543, 5
      %v5546 = vsel %vm340, %v5541, %v5545
      %v5547 = vld [vmem:[%s4] sm:$0x3]
      %v5548 = vunpack.c.l.b16 %v5176
      %v5549 = vunpack.c.l.b16 %v5186
      %v5550 = vunpack.c.l.b16 %v5200
      %v5551 = vunpack.c.l.b16 %v5210
      %v5552 = vunpack.c.l.b16 %v5224
      %v5553 = vunpack.c.l.b16 %v5234
      %v5554 = vunpack.c.l.b16 %v5248
      %v5555 = vunpack.c.l.b16 %v5258
      %v5556 = vunpack.c.l.b16 %v5272
      %v5557 = vunpack.c.l.b16 %v5282
      %v5558 = vunpack.c.l.b16 %v5296
      %v5559 = vunpack.c.l.b16 %v5306
      %v5560 = vunpack.c.l.b16 %v5320
      %v5561 = vunpack.c.l.b16 %v5330
      %v5562 = vunpack.c.l.b16 %v5344
      %v5563 = vunpack.c.l.b16 %v5354
      %v5564 = vunpack.c.l.b16 %v5368
      %v5565 = vunpack.c.l.b16 %v5378
      %v5566 = vunpack.c.l.b16 %v5392
      %v5567 = vunpack.c.l.b16 %v5402
      %v5568 = vunpack.c.l.b16 %v5416
      %v5569 = vunpack.c.l.b16 %v5426
      %v5570 = vunpack.c.l.b16 %v5440
      %v5571 = vunpack.c.l.b16 %v5450
      %v5572 = vunpack.c.l.b16 %v5464
      %v5573 = vunpack.c.l.b16 %v5474
      %v5574 = vunpack.c.l.b16 %v5488
      %v5575 = vunpack.c.l.b16 %v5498
      %v5576 = vunpack.c.l.b16 %v5512
      %v5577 = vunpack.c.l.b16 %v5522
      %v5578 = vunpack.c.l.b16 %v5536
      %v5579 = vunpack.c.l.b16 %v5546
      %v5580 = vpack.c.b16 %v5549, %v5548
      %v5581 = vpack.c.b16 %v5551, %v5550
      %v5582 = vpack.c.b16 %v5553, %v5552
      %v5583 = vpack.c.b16 %v5555, %v5554
      %v5584 = vpack.c.b16 %v5557, %v5556
      %v5585 = vpack.c.b16 %v5559, %v5558
      %v5586 = vpack.c.b16 %v5561, %v5560
      %v5587 = vpack.c.b16 %v5563, %v5562
      %v5588 = vpack.c.b16 %v5565, %v5564
      %v5589 = vpack.c.b16 %v5567, %v5566
      %v5590 = vpack.c.b16 %v5569, %v5568
      %v5591 = vpack.c.b16 %v5571, %v5570
      %v5592 = vpack.c.b16 %v5573, %v5572
      %v5593 = vpack.c.b16 %v5575, %v5574
      %v5594 = vpack.c.b16 %v5577, %v5576
      %v5595 = vpack.c.b16 %v5579, %v5578
      %vm5596 = vcmask 31744
      %v5598 = vsel %vm5596, %v5580, 0
      %v5601 = vsel %vm5596, %v5581, 0
      %v5604 = vsel %vm5596, %v5582, 0
      %v5607 = vsel %vm5596, %v5583, 0
      %v5610 = vsel %vm5596, %v5584, 0
      %v5613 = vsel %vm5596, %v5585, 0
      %v5616 = vsel %vm5596, %v5586, 0
      %v5619 = vsel %vm5596, %v5587, 0
      %v5622 = vsel %vm5596, %v5588, 0
      %v5625 = vsel %vm5596, %v5589, 0
      %v5628 = vsel %vm5596, %v5590, 0
      %v5631 = vsel %vm5596, %v5591, 0
      %v5634 = vsel %vm5596, %v5592, 0
      %v5637 = vsel %vm5596, %v5593, 0
      %v5640 = vsel %vm5596, %v5594, 0
      %v5643 = vsel %vm5596, %v5595, 0
      %vm5645 = vcmask 1041408
      %v5647 = vsel %vm5645, %v5547, 0
      %5649 = vmatprep.subr.bf16.mxu0 0
      %5650 = vmatpush1.bf16.msra.mxu0 %v5647
      %5651 = vmatprep.subr.bf16.mxu0 0
      %5652 = vmatpush1.bf16.msra.mxu0 0
      %5653 = vmatprep.subr.bf16.mxu0 0
      %5654 = vmatpush1.bf16.msra.mxu0 0
      %5655 = vmatprep.subr.bf16.mxu0 0
      %5656 = vmatpush1.bf16.msra.mxu0 0
      %5657 = vmatprep.subr.bf16.mxu0 0
      %5658 = vmatpush1.bf16.msra.mxu0 0
      %5659 = vmatprep.subr.bf16.mxu0 0
      %5660 = vmatpush1.bf16.msra.mxu0 0
      %5661 = vmatprep.subr.bf16.mxu0 0
      %5662 = vmatpush1.bf16.msra.mxu0 0
      %5663 = vmatprep.subr.bf16.mxu0 0
      %5664 = vmatpush1.bf16.msra.mxu0 0
      %5665 = vmatprep.subr.bf16.mxu0 0
      %5666 = vmatpush1.bf16.msra.mxu0 0
      %5667 = vmatprep.subr.bf16.mxu0 0
      %5668 = vmatpush1.bf16.msra.mxu0 0
      %5669 = vmatprep.subr.bf16.mxu0 0
      %5670 = vmatpush1.bf16.msra.mxu0 0
      %5671 = vmatprep.subr.bf16.mxu0 0
      %5672 = vmatpush1.bf16.msra.mxu0 0
      %5673 = vmatprep.subr.bf16.mxu0 0
      %5674 = vmatpush1.bf16.msra.mxu0 0
      %5675 = vmatprep.subr.bf16.mxu0 0
      %5676 = vmatpush1.bf16.msra.mxu0 0
      %5677 = vmatprep.subr.bf16.mxu0 0
      %5678 = vmatpush1.bf16.msra.mxu0 0
      %5679 = vmatprep.subr.bf16.mxu0 0
      %5680 = vmatpush1.bf16.msra.mxu0 0
      %5681 = vmatprep.mubr.bf16.mxu0 0
      %5682 = vmatmul.mubr.bf16.gmra.mrb[0].mxu0 %v5598
      %v5683 = vpop.f32.mrb[0].mxu0
      %v5684 = vadd.f32 0.0, %v5683
      %v5685 = vpop.f32.mrb[0].mxu0
      %v5686 = vpop.f32.mrb[0].mxu0
      %v5687 = vadd.f32 0.0, %v5686
      %v5688 = vpop.f32.mrb[0].mxu0
      %5689 = vmatprep.mubr.bf16.mxu0 0
      %5690 = vmatmul.mubr.bf16.gmra.mrb[0].mxu0 %v5601
      %v5691 = vpop.f32.mrb[0].mxu0
      %v5692 = vadd.f32 0.0, %v5691
      %v5693 = vpop.f32.mrb[0].mxu0
      %v5694 = vpop.f32.mrb[0].mxu0
      %v5695 = vadd.f32 0.0, %v5694
      %v5696 = vpop.f32.mrb[0].mxu0
      %5697 = vmatprep.mubr.bf16.mxu0 0
      %5698 = vmatmul.mubr.bf16.gmra.mrb[0].mxu0 %v5604
      %v5699 = vpop.f32.mrb[0].mxu0
      %v5700 = vadd.f32 0.0, %v5699
      %v5701 = vpop.f32.mrb[0].mxu0
      %v5702 = vpop.f32.mrb[0].mxu0
      %v5703 = vadd.f32 0.0, %v5702
      %v5704 = vpop.f32.mrb[0].mxu0
      %5705 = vmatprep.mubr.bf16.mxu0 0
      %5706 = vmatmul.mubr.bf16.gmra.mrb[0].mxu0 %v5607
      %v5707 = vpop.f32.mrb[0].mxu0
      %v5708 = vadd.f32 0.0, %v5707
      %v5709 = vpop.f32.mrb[0].mxu0
      %v5710 = vpop.f32.mrb[0].mxu0
      %v5711 = vadd.f32 0.0, %v5710
      %v5712 = vpop.f32.mrb[0].mxu0
      %5713 = vmatprep.mubr.bf16.mxu0 0
      %5714 = vmatmul.mubr.bf16.gmra.mrb[0].mxu0 %v5610
      %v5715 = vpop.f32.mrb[0].mxu0
      %v5716 = vadd.f32 0.0, %v5715
      %v5717 = vpop.f32.mrb[0].mxu0
      %v5718 = vpop.f32.mrb[0].mxu0
      %v5719 = vadd.f32 0.0, %v5718
      %v5720 = vpop.f32.mrb[0].mxu0
      %5721 = vmatprep.mubr.bf16.mxu0 0
      %5722 = vmatmul.mubr.bf16.gmra.mrb[0].mxu0 %v5613
      %v5723 = vpop.f32.mrb[0].mxu0
      %v5724 = vadd.f32 0.0, %v5723
      %v5725 = vpop.f32.mrb[0].mxu0
      %v5726 = vpop.f32.mrb[0].mxu0
      %v5727 = vadd.f32 0.0, %v5726
      %v5728 = vpop.f32.mrb[0].mxu0
      %5729 = vmatprep.mubr.bf16.mxu0 0
      %5730 = vmatmul.mubr.bf16.gmra.mrb[0].mxu0 %v5616
      %v5731 = vpop.f32.mrb[0].mxu0
      %v5732 = vadd.f32 0.0, %v5731
      %v5733 = vpop.f32.mrb[0].mxu0
      %v5734 = vpop.f32.mrb[0].mxu0
      %v5735 = vadd.f32 0.0, %v5734
      %v5736 = vpop.f32.mrb[0].mxu0
      %5737 = vmatprep.mubr.bf16.mxu0 0
      %5738 = vmatmul.mubr.bf16.gmra.mrb[0].mxu0 %v5619
      %v5739 = vpop.f32.mrb[0].mxu0
      %v5740 = vadd.f32 0.0, %v5739
      %v5741 = vpop.f32.mrb[0].mxu0
      %v5742 = vpop.f32.mrb[0].mxu0
      %v5743 = vadd.f32 0.0, %v5742
      %v5744 = vpop.f32.mrb[0].mxu0
      %5745 = vmatprep.mubr.bf16.mxu0 0
      %5746 = vmatmul.mubr.bf16.gmra.mrb[0].mxu0 %v5622
      %v5747 = vpop.f32.mrb[0].mxu0
      %v5748 = vadd.f32 0.0, %v5747
      %v5749 = vpop.f32.mrb[0].mxu0
      %v5750 = vpop.f32.mrb[0].mxu0
      %v5751 = vadd.f32 0.0, %v5750
      %v5752 = vpop.f32.mrb[0].mxu0
      %5753 = vmatprep.mubr.bf16.mxu0 0
      %5754 = vmatmul.mubr.bf16.gmra.mrb[0].mxu0 %v5625
      %v5755 = vpop.f32.mrb[0].mxu0
      %v5756 = vadd.f32 0.0, %v5755
      %v5757 = vpop.f32.mrb[0].mxu0
      %v5758 = vpop.f32.mrb[0].mxu0
      %v5759 = vadd.f32 0.0, %v5758
      %v5760 = vpop.f32.mrb[0].mxu0
      %5761 = vmatprep.mubr.bf16.mxu0 0
      %5762 = vmatmul.mubr.bf16.gmra.mrb[0].mxu0 %v5628
      %v5763 = vpop.f32.mrb[0].mxu0
      %v5764 = vadd.f32 0.0, %v5763
      %v5765 = vpop.f32.mrb[0].mxu0
      %v5766 = vpop.f32.mrb[0].mxu0
      %v5767 = vadd.f32 0.0, %v5766
      %v5768 = vpop.f32.mrb[0].mxu0
      %5769 = vmatprep.mubr.bf16.mxu0 0
      %5770 = vmatmul.mubr.bf16.gmra.mrb[0].mxu0 %v5631
      %v5771 = vpop.f32.mrb[0].mxu0
      %v5772 = vadd.f32 0.0, %v5771
      %v5773 = vpop.f32.mrb[0].mxu0
      %v5774 = vpop.f32.mrb[0].mxu0
      %v5775 = vadd.f32 0.0, %v5774
      %v5776 = vpop.f32.mrb[0].mxu0
      %5777 = vmatprep.mubr.bf16.mxu0 0
      %5778 = vmatmul.mubr.bf16.gmra.mrb[0].mxu0 %v5634
      %v5779 = vpop.f32.mrb[0].mxu0
      %v5780 = vadd.f32 0.0, %v5779
      %v5781 = vpop.f32.mrb[0].mxu0
      %v5782 = vpop.f32.mrb[0].mxu0
      %v5783 = vadd.f32 0.0, %v5782
      %v5784 = vpop.f32.mrb[0].mxu0
      %5785 = vmatprep.mubr.bf16.mxu0 0
      %5786 = vmatmul.mubr.bf16.gmra.mrb[0].mxu0 %v5637
      %v5787 = vpop.f32.mrb[0].mxu0
      %v5788 = vadd.f32 0.0, %v5787
      %v5789 = vpop.f32.mrb[0].mxu0
      %v5790 = vpop.f32.mrb[0].mxu0
      %v5791 = vadd.f32 0.0, %v5790
      %v5792 = vpop.f32.mrb[0].mxu0
      %5793 = vmatprep.mubr.bf16.mxu0 0
      %5794 = vmatmul.mubr.bf16.gmra.mrb[0].mxu0 %v5640
      %v5795 = vpop.f32.mrb[0].mxu0
      %v5796 = vadd.f32 0.0, %v5795
      %v5797 = vpop.f32.mrb[0].mxu0
      %v5798 = vpop.f32.mrb[0].mxu0
      %v5799 = vadd.f32 0.0, %v5798
      %v5800 = vpop.f32.mrb[0].mxu0
      %5801 = vmatprep.mubr.bf16.mxu0 0
      %5802 = vmatmul.mubr.bf16.gmra.mrb[0].mxu0 %v5643
      %v5803 = vpop.f32.mrb[0].mxu0
      %v5804 = vadd.f32 0.0, %v5803
      %v5805 = vpop.f32.mrb[0].mxu0
      %v5806 = vpop.f32.mrb[0].mxu0
      %v5807 = vadd.f32 0.0, %v5806
      %v5808 = vpop.f32.mrb[0].mxu0
      %5809 = vdwg.mxu0
      %v5810 = vadd.f32 %v5082, %v5684
      %v5811 = vadd.f32 %v5083, %v5687
      %v5812 = vadd.f32 %v5084, %v5692
      %v5813 = vadd.f32 %v5085, %v5695
      %v5814 = vadd.f32 %v5086, %v5700
      %v5815 = vadd.f32 %v5087, %v5703
      %v5816 = vadd.f32 %v5088, %v5708
      %v5817 = vadd.f32 %v5089, %v5711
      %v5818 = vadd.f32 %v5090, %v5716
      %v5819 = vadd.f32 %v5091, %v5719
      %v5820 = vadd.f32 %v5092, %v5724
      %v5821 = vadd.f32 %v5093, %v5727
      %v5822 = vadd.f32 %v5094, %v5732
      %v5823 = vadd.f32 %v5095, %v5735
      %v5824 = vadd.f32 %v5096, %v5740
      %v5825 = vadd.f32 %v5097, %v5743
      %v5826 = vadd.f32 %v5098, %v5748
      %v5827 = vadd.f32 %v5099, %v5751
      %v5828 = vadd.f32 %v5100, %v5756
      %v5829 = vadd.f32 %v5101, %v5759
      %v5830 = vadd.f32 %v5102, %v5764
      %v5831 = vadd.f32 %v5103, %v5767
      %v5832 = vadd.f32 %v5104, %v5772
      %v5833 = vadd.f32 %v5105, %v5775
      %v5834 = vadd.f32 %v5106, %v5780
      %v5835 = vadd.f32 %v5107, %v5783
      %v5836 = vadd.f32 %v5108, %v5788
      %v5837 = vadd.f32 %v5109, %v5791
      %v5838 = vadd.f32 %v5110, %v5796
      %v5839 = vadd.f32 %v5111, %v5799
      %v5840 = vadd.f32 %v5112, %v5804
      %v5841 = vadd.f32 %v5113, %v5807
      %v5842 = vld [vmem:[%s5] sm:$0x1]
      %v5844 = vlaneseq
      %v5845 = vshrl.u32 %v5844, 7
      %v5846 = vsub.s32 0, %v5845
      %v5847 = vrot.slane %v5842, %v5846
      %v5849 = vadd.f32 %v5810, %v5847
      %v5850 = vadd.f32 %v5811, %v5847
      %v5851 = vadd.f32 %v5812, %v5847
      %v5852 = vadd.f32 %v5813, %v5847
      %v5853 = vadd.f32 %v5814, %v5847
      %v5854 = vadd.f32 %v5815, %v5847
      %v5855 = vadd.f32 %v5816, %v5847
      %v5856 = vadd.f32 %v5817, %v5847
      %v5857 = vadd.f32 %v5818, %v5847
      %v5858 = vadd.f32 %v5819, %v5847
      %v5859 = vadd.f32 %v5820, %v5847
      %v5860 = vadd.f32 %v5821, %v5847
      %v5861 = vadd.f32 %v5822, %v5847
      %v5862 = vadd.f32 %v5823, %v5847
      %v5863 = vadd.f32 %v5824, %v5847
      %v5864 = vadd.f32 %v5825, %v5847
      %v5865 = vadd.f32 %v5826, %v5847
      %v5866 = vadd.f32 %v5827, %v5847
      %v5867 = vadd.f32 %v5828, %v5847
      %v5868 = vadd.f32 %v5829, %v5847
      %v5869 = vadd.f32 %v5830, %v5847
      %v5870 = vadd.f32 %v5831, %v5847
      %v5871 = vadd.f32 %v5832, %v5847
      %v5872 = vadd.f32 %v5833, %v5847
      %v5873 = vadd.f32 %v5834, %v5847
      %v5874 = vadd.f32 %v5835, %v5847
      %v5875 = vadd.f32 %v5836, %v5847
      %v5876 = vadd.f32 %v5837, %v5847
      %v5877 = vadd.f32 %v5838, %v5847
      %v5878 = vadd.f32 %v5839, %v5847
      %v5879 = vadd.f32 %v5840, %v5847
      %v5880 = vadd.f32 %v5841, %v5847
      %v5881 = vmax.f32 %v5849, 0.0
      %v5882 = vmax.f32 %v5850, 0.0
      %v5883 = vmax.f32 %v5851, 0.0
      %v5884 = vmax.f32 %v5852, 0.0
      %v5885 = vmax.f32 %v5853, 0.0
      %v5886 = vmax.f32 %v5854, 0.0
      %v5887 = vmax.f32 %v5855, 0.0
      %v5888 = vmax.f32 %v5856, 0.0
      %v5889 = vmax.f32 %v5857, 0.0
      %v5890 = vmax.f32 %v5858, 0.0
      %v5891 = vmax.f32 %v5859, 0.0
      %v5892 = vmax.f32 %v5860, 0.0
      %v5893 = vmax.f32 %v5861, 0.0
      %v5894 = vmax.f32 %v5862, 0.0
      %v5895 = vmax.f32 %v5863, 0.0
      %v5896 = vmax.f32 %v5864, 0.0
      %v5897 = vmax.f32 %v5865, 0.0
      %v5898 = vmax.f32 %v5866, 0.0
      %v5899 = vmax.f32 %v5867, 0.0
      %v5900 = vmax.f32 %v5868, 0.0
      %v5901 = vmax.f32 %v5869, 0.0
      %v5902 = vmax.f32 %v5870, 0.0
      %v5903 = vmax.f32 %v5871, 0.0
      %v5904 = vmax.f32 %v5872, 0.0
      %v5905 = vmax.f32 %v5873, 0.0
      %v5906 = vmax.f32 %v5874, 0.0
      %v5907 = vmax.f32 %v5875, 0.0
      %v5908 = vmax.f32 %v5876, 0.0
      %v5909 = vmax.f32 %v5877, 0.0
      %v5910 = vmax.f32 %v5878, 0.0
      %v5911 = vmax.f32 %v5879, 0.0
      %v5912 = vmax.f32 %v5880, 0.0
      %5913 = vst [vmem:[%s271] sm:$0xff] %v5881
      %5914 = vst [vmem:[%s271 + $0x8] sm:$0xff] %v5882
      %5915 = vst [vmem:[%s271 + $0x10] sm:$0xff] %v5883
      %5916 = vst [vmem:[%s271 + $0x18] sm:$0xff] %v5884
      %5917 = vst [vmem:[%s271 + $0x20] sm:$0xff] %v5885
      %5918 = vst [vmem:[%s271 + $0x28] sm:$0xff] %v5886
      %5919 = vst [vmem:[%s271 + $0x30] sm:$0xff] %v5887
      %5920 = vst [vmem:[%s271 + $0x38] sm:$0xff] %v5888
      %5921 = vst [vmem:[%s271 + $0x40] sm:$0xff] %v5889
      %5922 = vst [vmem:[%s271 + $0x48] sm:$0xff] %v5890
      %5923 = vst [vmem:[%s271 + $0x50] sm:$0xff] %v5891
      %5924 = vst [vmem:[%s271 + $0x58] sm:$0xff] %v5892
      %5925 = vst [vmem:[%s271 + $0x60] sm:$0xff] %v5893
      %5926 = vst [vmem:[%s271 + $0x68] sm:$0xff] %v5894
      %5927 = vst [vmem:[%s271 + $0x70] sm:$0xff] %v5895
      %5928 = vst [vmem:[%s271 + $0x78] sm:$0xff] %v5896
      %5929 = vst [vmem:[%s271 + $0x80] sm:$0xff] %v5897
      %5930 = vst [vmem:[%s271 + $0x88] sm:$0xff] %v5898
      %5931 = vst [vmem:[%s271 + $0x90] sm:$0xff] %v5899
      %5932 = vst [vmem:[%s271 + $0x98] sm:$0xff] %v5900
      %5933 = vst [vmem:[%s271 + $0xa0] sm:$0xff] %v5901
      %5934 = vst [vmem:[%s271 + $0xa8] sm:$0xff] %v5902
      %5935 = vst [vmem:[%s271 + $0xb0] sm:$0xff] %v5903
      %5936 = vst [vmem:[%s271 + $0xb8] sm:$0xff] %v5904
      %5937 = vst [vmem:[%s271 + $0xc0] sm:$0xff] %v5905
      %5938 = vst [vmem:[%s271 + $0xc8] sm:$0xff] %v5906
      %5939 = vst [vmem:[%s271 + $0xd0] sm:$0xff] %v5907
      %5940 = vst [vmem:[%s271 + $0xd8] sm:$0xff] %v5908
      %5941 = vst [vmem:[%s271 + $0xe0] sm:$0xff] %v5909
      %5942 = vst [vmem:[%s271 + $0xe8] sm:$0xff] %v5910
      %5943 = vst [vmem:[%s271 + $0xf0] sm:$0xff] %v5911
      %5944 = vst [vmem:[%s271 + $0xf8] sm:$0xff] %v5912
      %s5945 = smul.u32 32, %s17
      %p5946 = scmp.lt.s32.totalorder %s5945, 63
      %s5947 = scalar_select %p5946, %s5945, 63
      %s5948 = smul.addr %s5947, 8
      %s5949 = scalar_lea.vmem %s6, %s5948
      // Predicated region
      $region45: #{basic_block_forward.3} parent=43 // pred_check
        %p5950 = pneg %p171
      $region46: #{basic_block_forward.3} parent=43 // pred_check_branch
        %5952 = sbr.rel (%p5950) target = $region48
      $region47: #{basic_block_forward.3} parent=43 // pred_region
        %s5953 = smul.u32 32, %s17
      $region48: #{basic_block_forward.3} parent=43 // pred_fallthru
        _
    $region44: #{basic_block_forward.3} parent=5 // pred_fallthru
      _
    %p5954 = scmp.le.s32.totalorder 2, %s12
    // Predicated region
    $region49: #{basic_block_forward.3} parent=5 // pred_check
      %p5955 = pneg %p5954
    $region50: #{basic_block_forward.3} parent=5 // pred_check_branch
      %5957 = sbr.rel (%p5955) target = $region52
    $region51: #{basic_block_forward.3} parent=5 // pred_region
      %s5958 = ssub.s32 %s12, 2
      // Predicated region
      $region53: #{basic_block_forward.3} parent=51 // pred_check
        %p5959 = pneg %p177
      $region54: #{basic_block_forward.3} parent=51 // pred_check_branch
        %5961 = sbr.rel (%p5959) target = $region56
      $region55: #{basic_block_forward.3} parent=51 // pred_region
        %s5962 = smul.u32 32, %s18
        %p5963 = scmp.lt.s32.totalorder %s5962, 63
        %s5964 = scalar_select %p5963, %s5962, 63
        %s5965 = smul.addr %s5964, 8
        %s5966 = scalar_lea.vmem %s6, %s5965
      $region56: #{basic_block_forward.3} parent=51 // pred_fallthru
        _
    $region52: #{basic_block_forward.3} parent=5 // pred_fallthru
      _
  $region6: #{basic_block_forward.3} parent=0 // loop_footer
    %s16 = sadd.s32 1, %s12
  $region7: #{basic_block_forward.3} parent=0 // loop_footer_branch
    %11 = sbr.rel target = $region3
  $region8: #{basic_block_forward.3} parent=0 // loop_exit
    _

</llo_original>
